<compile_context>
chip_gen: v7x
topology: tpu7x:2x2x1
jax: 0.10.0
libtpu: 0.0.40
codegen_flags: <defaults>
</compile_context>

<pallas_src>
import functools

import jax
import jax.numpy as jnp
from jax.experimental import pallas as pl
from jax.experimental.pallas import tpu as pltpu

# ---------------- configuration (small synthetic sizes) ----------------
BATCH = 2
NX, NY, NZ = 32, 32, 1            # BEV grid
MAX_PTS = 8                       # points per pillar
NUM_VOXELS = 40                   # total pillars (both batch elements)
ANCHOR_NUM = 2                    # args['anchor_number'] == args['anchor_num']
VOXEL_SIZE = (0.4, 0.4, 4.0)
PC_RANGE = (0.0, -6.4, -2.0, 12.8, 6.4, 2.0)
C_PFN = 64                        # real pillar feature channels
CP = 128                          # lane-dense padded channel count inside conv kernels
F_PFN = 10                        # real PFN input features
F_PAD = 16                        # PFN input features padded to a lane-friendly K


@functools.lru_cache(maxsize=None)
def _vmem_limit():
    """Derive the scoped-VMEM budget from the chip (32 MiB fallback, v7x-safe)."""
    try:
        cap = int(pltpu.get_tpu_info().vmem_capacity_bytes)
    except Exception:
        return 32 * 1024 * 1024
    return min((cap * 3) // 4, 96 * 1024 * 1024)


def _full_spec(arr):
    """BlockSpec that maps the whole (small) array into VMEM (constant block index)."""
    nd = arr.ndim
    return pl.BlockSpec(arr.shape, lambda *_: (0,) * nd)


# ---------------- PFN kernel (Linear -> BN -> ReLU -> max over points) ----------------
def _pfn_kernel(x_ref, w_ref, s_ref, b_ref, o_ref):
    # x_ref: (P, tm, F) point-major so the per-slot max uses leading-dim indexing only.
    P, tm, F = x_ref.shape
    C = w_ref.shape[-1]
    x = x_ref[...].reshape(P * tm, F)                                  # bf16, tile-aligned flatten
    y = jnp.dot(x, w_ref[...], preferred_element_type=jnp.float32)    # single MXU matmul per tile
    y = jnp.maximum(y * s_ref[...] + b_ref[...], 0.0)                 # folded BN + ReLU (f32)
    y = y.reshape(P, tm, C)
    m = y[0]
    for p in range(1, P):                                             # P-1 cheap VPU maxes
        m = jnp.maximum(m, y[p])
    o_ref[...] = m.astype(o_ref.dtype)


def pfn_layer(feats, w, scale, bias):
    """feats: (M, P, F_PAD) masked point features (f32) -> (M, 128) bf16 pillar features."""
    M, P, F = feats.shape
    C = w.shape[1]
    Mp = ((M + 31) // 32) * 32
    tm = Mp // 4                                   # 4 parallel grid steps
    fp = jnp.transpose(jnp.pad(feats, ((0, Mp - M), (0, 0), (0, 0))),
                       (1, 0, 2)).astype(jnp.bfloat16)                 # (P, Mp, F) bf16 (cast once)
    out = pl.pallas_call(
        _pfn_kernel,
        out_shape=jax.ShapeDtypeStruct((Mp, C), jnp.bfloat16),
        grid=(Mp // tm,),
        in_specs=[
            pl.BlockSpec((P, tm, F), lambda i: (0, i, 0)),
            pl.BlockSpec((F, C), lambda i: (0, 0)),
            pl.BlockSpec((1, C), lambda i: (0, 0)),
            pl.BlockSpec((1, C), lambda i: (0, 0)),
        ],
        out_specs=pl.BlockSpec((tm, C), lambda i: (i, 0)),
        compiler_params=pltpu.CompilerParams(dimension_semantics=("parallel",)),
    )(fp, w, scale, bias)
    return out[:M]


# ---------------- fused backbone-block kernel ----------------
def _block_kernel(x0_ref, w0_ref, wt_ref, s_ref, b_ref, o_ref, act_ref, *, ho, wo):
    """One grid step = one conv layer of a BaseBEVBackbone block for one batch element.

    l == 0 : 3x3 stride-2 conv (+BN+ReLU) from the host-im2col'd input -> bf16 halo scratch.
    l >= 1 : 3x3 stride-1 conv (+BN+ReLU): the (M, 9*128) im2col slab is assembled from the
             zero-halo scratch and contracted with ONE wide-K matmul (K = 1152).
    The (1, M, 128) output block keeps the same index across the layer axis, so it is
    flushed to HBM once per batch element, carrying the last layer's activations.
    """
    l = pl.program_id(1)
    m = ho * wo
    cp = w0_ref.shape[-1]

    @pl.when(l == 0)
    def _():
        # Zero only the 1-px halo border; the interior is fully rewritten every layer.
        zrow = jnp.zeros((1, wo + 2, cp), act_ref.dtype)
        zcol = jnp.zeros((ho + 2, 1, cp), act_ref.dtype)
        act_ref[0:1, :, :] = zrow
        act_ref[ho + 1:ho + 2, :, :] = zrow
        act_ref[:, 0:1, :] = zcol
        act_ref[:, wo + 1:wo + 2, :] = zcol
        y = jnp.dot(x0_ref[0], w0_ref[...], preferred_element_type=jnp.float32)
        y = jnp.maximum(y * s_ref[0:1] + b_ref[0:1], 0.0)
        act_ref[1:ho + 1, 1:wo + 1, :] = y.reshape(ho, wo, cp).astype(act_ref.dtype)

    @pl.when(l > 0)
    def _():
        xp = act_ref[...]                                              # (ho+2, wo+2, 128) bf16
        taps = [xp[dy:dy + ho, dx:dx + wo, :] for dy in range(3) for dx in range(3)]
        slab = jnp.concatenate(taps, axis=-1).reshape(m, 9 * cp)       # (M, 1152) bf16 im2col slab
        y = jnp.dot(slab, wt_ref[0], preferred_element_type=jnp.float32)
        y = jnp.maximum(y * s_ref[pl.ds(l, 1)] + b_ref[pl.ds(l, 1)], 0.0)
        act_ref[1:ho + 1, 1:wo + 1, :] = y.reshape(ho, wo, cp).astype(act_ref.dtype)
        o_ref[0] = y.astype(o_ref.dtype)                               # last layer's write is flushed


def fused_block(x_col, w0, wt, scales, biases, ho, wo):
    """x_col: (B, M, 9*Cin) bf16 im2col'd stride-2 input -> (B, M, 128) bf16 block output."""
    B, M, K0 = x_col.shape
    n_tail = wt.shape[0]
    n_layers = n_tail + 1
    return pl.pallas_call(
        functools.partial(_block_kernel, ho=ho, wo=wo),
        out_shape=jax.ShapeDtypeStruct((B, M, CP), jnp.bfloat16),
        grid=(B, n_layers),
        in_specs=[
            pl.BlockSpec((1, M, K0), lambda b, l: (b, 0, 0)),          # fetched once per batch elem
            pl.BlockSpec((K0, CP), lambda b, l: (0, 0)),               # fetched once
            pl.BlockSpec((1, 9 * CP, CP),                              # per-layer weight streaming
                         lambda b, l: (jnp.maximum(l - 1, 0), 0, 0)),
            _full_spec(scales),
            _full_spec(biases),
        ],
        out_specs=pl.BlockSpec((1, M, CP), lambda b, l: (b, 0, 0)),
        scratch_shapes=[pltpu.VMEM((ho + 2, wo + 2, CP), jnp.bfloat16)],
        compiler_params=pltpu.CompilerParams(
            dimension_semantics=("parallel", "arbitrary"),
            vmem_limit_bytes=_vmem_limit()),
    )(x_col, w0, wt, scales, biases)


# ---------------- fused deblocks + cls/reg heads kernel ----------------
def _neck_head_kernel(x1_ref, x2_ref, wde1_ref, sde1_ref, bde1_ref,
                      wde2_ref, sde2_ref, bde2_ref, wh1_ref, wh2_ref, hb_ref, o_ref):
    # deblock1 (1x1 ConvT + BN + ReLU) evaluated on the phase-major x1, then its head part.
    u1 = jnp.dot(x1_ref[0], wde1_ref[...], preferred_element_type=jnp.float32)    # (M2, 512)
    u1 = jnp.maximum(u1 * sde1_ref[...] + bde1_ref[...], 0.0)
    h = jnp.dot(u1.astype(jnp.bfloat16), wh1_ref[...], preferred_element_type=jnp.float32)
    # deblock2 (2x2 s2 ConvT, phase-major) + BN + ReLU, then its per-phase head part.
    u2 = jnp.dot(x2_ref[0], wde2_ref[...], preferred_element_type=jnp.float32)    # (M2, 512)
    u2 = jnp.maximum(u2 * sde2_ref[...] + bde2_ref[...], 0.0)
    h = h + jnp.dot(u2.astype(jnp.bfloat16), wh2_ref[...], preferred_element_type=jnp.float32)
    o_ref[0] = (h + hb_ref[...]).astype(o_ref.dtype)                   # fused head bias add


def neck_and_heads(x1r, x2, q):
    B, M2, K1 = x1r.shape
    _, _, K2 = x2.shape
    nho4 = q['wh1'].shape[1]
    return pl.pallas_call(
        _neck_head_kernel,
        out_shape=jax.ShapeDtypeStruct((B, M2, nho4), jnp.float32),
        grid=(B,),
        in_specs=[pl.BlockSpec((1, M2, K1), lambda b: (b, 0, 0)),
                  pl.BlockSpec((1, M2, K2), lambda b: (b, 0, 0)),
                  _full_spec(q['de1_w']), _full_spec(q['de1_s']), _full_spec(q['de1_b']),
                  _full_spec(q['de2_w']), _full_spec(q['de2_s']), _full_spec(q['de2_b']),
                  _full_spec(q['wh1']), _full_spec(q['wh2']), _full_spec(q['head_b'])],
        out_specs=pl.BlockSpec((1, M2, nho4), lambda b: (b, 0, 0)),
        compiler_params=pltpu.CompilerParams(
            dimension_semantics=("parallel",),
            vmem_limit_bytes=_vmem_limit()),
    )(x1r, x2, q['de1_w'], q['de1_s'], q['de1_b'],
      q['de2_w'], q['de2_s'], q['de2_b'], q['wh1'], q['wh2'], q['head_b'])


# ---------------- XLA glue ----------------
def _im2col_s2(x):
    """(B, H, W, C) -> (B, (H//2)*(W//2), 9*C) bf16 patches of a 3x3 / stride-2 / pad-1 conv."""
    B, H, W, C = x.shape
    xp = jnp.pad(x, ((0, 0), (1, 1), (1, 1), (0, 0)))
    taps = [xp[:, dy:dy + H:2, dx:dx + W:2, :] for dy in range(3) for dx in range(3)]
    col = jnp.concatenate(taps, axis=-1)
    return col.reshape(B, (H // 2) * (W // 2), 9 * C).astype(jnp.bfloat16)


def pillar_vfe(voxel_features, voxel_num_points, voxel_coords, q):
    vx, vy, vz = VOXEL_SIZE
    x_off = vx / 2 + PC_RANGE[0]
    y_off = vy / 2 + PC_RANGE[1]
    z_off = vz / 2 + PC_RANGE[2]
    M, P, _ = voxel_features.shape
    npts = jnp.maximum(voxel_num_points, 1).astype(jnp.float32).reshape(M, 1, 1)  # clamp (no NaNs)
    points_mean = voxel_features[:, :, :3].sum(axis=1, keepdims=True) / npts
    f_cluster = voxel_features[:, :, :3] - points_mean
    cf = voxel_coords.astype(jnp.float32)
    cx = voxel_features[:, :, 0] - (cf[:, 3:4] * vx + x_off)
    cy = voxel_features[:, :, 1] - (cf[:, 2:3] * vy + y_off)
    cz = voxel_features[:, :, 2] - (cf[:, 1:2] * vz + z_off)
    f_center = jnp.stack([cx, cy, cz], axis=-1)
    feats = jnp.concatenate([voxel_features, f_cluster, f_center], axis=-1)       # (M, P, 10)
    # mask applied to inputs, max over all slots (empty slots contribute relu(folded BN bias)),
    # matching the OpenPCDet-style PillarVFE reference.
    mask = (jnp.arange(P)[None, :] < voxel_num_points[:, None]).astype(feats.dtype)
    feats = feats * mask[:, :, None]
    feats = jnp.pad(feats, ((0, 0), (0, 0), (0, F_PAD - F_PFN)))                  # lane-friendly K
    return pfn_layer(feats, q['pfn_w'], q['pfn_s'], q['pfn_b'])[:, :C_PFN]        # (M, 64) bf16


def point_pillar_scatter(pillar_features, coords):
    # spatial index = z + y*nx + x (nz == 1), one canvas per batch element.
    # Data-dependent scatter: kept as XLA glue (negligible at this size).
    flat = coords[:, 0] * (NY * NX) + coords[:, 1] + coords[:, 2] * NX + coords[:, 3]
    canvas = jnp.zeros((BATCH * NY * NX, C_PFN), pillar_features.dtype)
    canvas = canvas.at[flat].set(pillar_features)
    return canvas.reshape(BATCH, NY, NX, C_PFN)       # NHWC, bf16


def point_pillar_forward(voxel_features, voxel_coords, voxel_num_points, q):
    pillar_features = pillar_vfe(voxel_features, voxel_num_points, voxel_coords, q)
    spatial = point_pillar_scatter(pillar_features, voxel_coords)                 # (B, 32, 32, 64)
    H1, W1 = NY // 2, NX // 2
    H2, W2 = NY // 4, NX // 4
    # BaseBEVBackbone: two fused, VMEM-resident conv stacks (one wide-K matmul per layer).
    x1 = fused_block(_im2col_s2(spatial), q['b1_w0'], q['b1_wt'], q['b1_s'], q['b1_b'],
                     H1, W1).reshape(BATCH, H1, W1, CP)                           # lanes 64+ are 0
    x2 = fused_block(_im2col_s2(x1[..., :C_PFN]), q['b2_w0'], q['b2_wt'], q['b2_s'], q['b2_b'],
                     H2, W2)                                                      # (B, H2*W2, 128)
    # phase-major pixel-unshuffle of x1 so deblock1 / deblock2 / heads share one layout.
    x1r = x1.reshape(BATCH, H2, 2, W2, 2, CP).transpose(0, 1, 3, 2, 4, 5)
    x1r = x1r.reshape(BATCH, H2 * W2, 4 * CP)
    h = neck_and_heads(x1r, x2, q)                                                # (B, H2*W2, 4*nho)
    nho = q['head_b'].shape[-1] // 4
    out = h.reshape(BATCH, H2, W2, 2, 2, nho).transpose(0, 1, 3, 2, 4, 5)
    out = out.reshape(BATCH, H1, W1, nho)
    # shrink_flag = False -> no shrink_conv
    # TODO(synk): post_processor is constructed in __init__ but not used in forward(); omitted.
    psm = jnp.transpose(out[..., :ANCHOR_NUM], (0, 3, 1, 2))                      # NCHW
    rm = jnp.transpose(out[..., ANCHOR_NUM:], (0, 3, 1, 2))
    return psm, rm


# ---------------- deterministic parameter init + packing ----------------
def _bn_fold(key, c):
    k1, k2, k3, k4 = jax.random.split(key, 4)
    gamma = jax.random.uniform(k1, (c,), minval=0.5, maxval=1.5)
    beta = jax.random.normal(k2, (c,)) * 0.1
    mean = jax.random.normal(k3, (c,)) * 0.1
    var = jax.random.uniform(k4, (c,), minval=0.5, maxval=1.5)
    scale = gamma / jnp.sqrt(var + 1e-3)
    return scale.astype(jnp.float32), (beta - mean * scale).astype(jnp.float32)


def _conv_w(key, cin, cout):
    return jax.random.normal(key, (3, 3, cin, cout), jnp.float32) / jnp.sqrt(9.0 * cin)


def make_params(key):
    keys = iter(jax.random.split(key, 64))
    nk = lambda: next(keys)
    p = {}
    p['pfn_w'] = jax.random.normal(nk(), (F_PFN, C_PFN), jnp.float32) / jnp.sqrt(10.0)
    p['pfn_s'], p['pfn_b'] = _bn_fold(nk(), C_PFN)
    p['b1_w'] = [_conv_w(nk(), 64, 64) for _ in range(4)]
    b1 = [_bn_fold(nk(), 64) for _ in range(4)]
    p['b1_s'], p['b1_b'] = [s for s, _ in b1], [b for _, b in b1]
    cins2 = [64] + [128] * 5
    p['b2_w'] = [_conv_w(nk(), c, 128) for c in cins2]
    b2 = [_bn_fold(nk(), 128) for _ in range(6)]
    p['b2_s'], p['b2_b'] = [s for s, _ in b2], [b for _, b in b2]
    p['de1_w'] = jax.random.normal(nk(), (64, 128), jnp.float32) / jnp.sqrt(64.0)
    p['de1_s'], p['de1_b'] = _bn_fold(nk(), 128)
    p['de2_w'] = jax.random.normal(nk(), (128, 128, 2, 2), jnp.float32) / jnp.sqrt(128.0)
    p['de2_s'], p['de2_b'] = _bn_fold(nk(), 128)
    p['cls_w'] = jax.random.normal(nk(), (256, ANCHOR_NUM), jnp.float32) / 16.0
    p['cls_b'] = jax.random.normal(nk(), (ANCHOR_NUM,), jnp.float32) * 0.01
    p['reg_w'] = jax.random.normal(nk(), (256, 7 * ANCHOR_NUM), jnp.float32) / 16.0
    p['reg_b'] = jax.random.normal(nk(), (7 * ANCHOR_NUM,), jnp.float32) * 0.01
    return p


def _block_diag(w, n):
    r, c = w.shape
    out = jnp.zeros((n * r, n * c), w.dtype)
    for i in range(n):
        out = out.at[i * r:(i + 1) * r, i * c:(i + 1) * c].set(w)
    return out


def pack_params(p):
    """Kernel-layout params: bf16 matmul weights, f32 folded-BN affines, im2col-ordered taps,
    and everything channel-padded to 128 lanes (zero pads keep padded lanes exactly 0)."""
    bf16 = jnp.bfloat16
    q = {}
    # PFN Linear(10->64): pad K to 16 and the output to 128 lanes.
    q['pfn_w'] = jnp.zeros((F_PAD, CP), jnp.float32).at[:F_PFN, :C_PFN].set(p['pfn_w']).astype(bf16)
    q['pfn_s'] = jnp.zeros((1, CP), jnp.float32).at[0, :C_PFN].set(p['pfn_s'])
    q['pfn_b'] = jnp.zeros((1, CP), jnp.float32).at[0, :C_PFN].set(p['pfn_b'])

    def pack_w0(w):                        # stride-2 conv weight -> (9*Cin, 128)
        _, _, cin, cout = w.shape
        out = jnp.zeros((9 * cin, CP), jnp.float32)
        return out.at[:, :cout].set(w.reshape(9 * cin, cout)).astype(bf16)

    def pack_wt(ws):                       # tail conv weights -> (n_tail, 9*128, 128)
        packed = []
        for w in ws:
            _, _, cin, cout = w.shape
            full = jnp.zeros((9, CP, CP), jnp.float32)
            full = full.at[:, :cin, :cout].set(w.reshape(9, cin, cout))
            packed.append(full.reshape(9 * CP, CP))
        return jnp.stack(packed).astype(bf16)

    def pack_bn(ss, bs, cout):
        S = jnp.zeros((len(ss), CP), jnp.float32).at[:, :cout].set(jnp.stack(ss))
        Bb = jnp.zeros((len(bs), CP), jnp.float32).at[:, :cout].set(jnp.stack(bs))
        return S, Bb

    q['b1_w0'] = pack_w0(p['b1_w'][0])                        # (576, 128)
    q['b1_wt'] = pack_wt(p['b1_w'][1:])                        # (3, 1152, 128)
    q['b1_s'], q['b1_b'] = pack_bn(p['b1_s'], p['b1_b'], 64)
    q['b2_w0'] = pack_w0(p['b2_w'][0])                         # (576, 128)
    q['b2_wt'] = pack_wt(p['b2_w'][1:])                        # (5, 1152, 128)
    q['b2_s'], q['b2_b'] = pack_bn(p['b2_s'], p['b2_b'], 128)

    # deblock1: 1x1 ConvTranspose(64->128); pad rows to 128 and replicate block-diagonally over
    # the 4 deconv phases so it runs on the shared phase-major layout.
    de1 = jnp.zeros((CP, CP), jnp.float32).at[:C_PFN, :].set(p['de1_w'])
    q['de1_w'] = _block_diag(de1, 4).astype(bf16)              # (512, 512)
    q['de1_s'] = jnp.tile(p['de1_s'], 4).reshape(1, -1)        # (1, 512)
    q['de1_b'] = jnp.tile(p['de1_b'], 4).reshape(1, -1)
    # deblock2: ConvTranspose2d(128->128, k=2, s=2): flatten phase-major (ky, kx, cout).
    q['de2_w'] = jnp.transpose(p['de2_w'], (0, 2, 3, 1)).reshape(CP, 4 * CP).astype(bf16)
    q['de2_s'] = jnp.tile(p['de2_s'], 4).reshape(1, -1)
    q['de2_b'] = jnp.tile(p['de2_b'], 4).reshape(1, -1)
    # Fused cls+reg 1x1 heads: rows 0:128 act on the deblock1 path, rows 128:256 on deblock2,
    # replicated block-diagonally so each deconv phase gets its own head copy.
    wh = jnp.concatenate([p['cls_w'], p['reg_w']], axis=1)     # (256, 16)
    q['wh1'] = _block_diag(wh[:CP], 4).astype(bf16)            # (512, 64)
    q['wh2'] = _block_diag(wh[CP:], 4).astype(bf16)            # (512, 64)
    q['head_b'] = jnp.tile(jnp.concatenate([p['cls_b'], p['reg_b']]), 4).reshape(1, -1)  # (1, 64)
    return q


# ---------------- main ----------------
if __name__ == "__main__":
    key = jax.random.PRNGKey(0)
    kp, k1, k2, k3, k4 = jax.random.split(key, 5)
    params = pack_params(make_params(kp))

    # synthetic voxelized lidar input
    per_batch = NUM_VOXELS // BATCH
    coords_list = []
    cell_keys = jax.random.split(k1, BATCH)
    for b in range(BATCH):
        cells = jax.random.permutation(cell_keys[b], NY * NX)[:per_batch]
        ys, xs = cells // NX, cells % NX
        coords_list.append(jnp.stack(
            [jnp.full_like(ys, b), jnp.zeros_like(ys), ys, xs], axis=-1))
    voxel_coords = jnp.concatenate(coords_list, axis=0).astype(jnp.int32)         # (M, 4)
    voxel_num_points = jax.random.randint(k2, (NUM_VOXELS,), 1, MAX_PTS + 1,
                                          dtype=jnp.int32)                        # (M,)
    xyz = jax.random.uniform(
        k3, (NUM_VOXELS, MAX_PTS, 3),
        minval=jnp.array(PC_RANGE[:3]), maxval=jnp.array(PC_RANGE[3:]))
    intensity = jax.random.uniform(k4, (NUM_VOXELS, MAX_PTS, 1))
    voxel_features = jnp.concatenate([xyz, intensity], axis=-1).astype(jnp.float32)

    fwd = jax.jit(point_pillar_forward)
    psm, rm = fwd(voxel_features, voxel_coords, voxel_num_points, params)
    jax.block_until_ready((psm, rm))

    assert psm.shape == (BATCH, ANCHOR_NUM, NY // 2, NX // 2), psm.shape
    assert rm.shape == (BATCH, 7 * ANCHOR_NUM, NY // 2, NX // 2), rm.shape
    assert bool(jnp.isfinite(psm).all()) and bool(jnp.isfinite(rm).all())
    print("KERNEL_OK")
</pallas_src>

<mosaic_0001>
module attributes {stable_mosaic.version = 11 : i64} {
  func.func @_pfn_kernel(%arg0: i32, %arg1: memref<8x16x16xbf16, #tpu.memory_space<vmem>>, %arg2: memref<16x128xbf16, #tpu.memory_space<vmem>>, %arg3: memref<1x128xf32, #tpu.memory_space<vmem>>, %arg4: memref<1x128xf32, #tpu.memory_space<vmem>>, %arg5: memref<16x128xbf16, #tpu.memory_space<vmem>>) attributes {dimension_semantics = [#tpu.dimension_semantics<parallel>], iteration_bounds = array<i64: 4>, scalar_prefetch = 0 : i64, scratch_operands = 0 : i64, tpu.core_type = #tpu.core_type<tc>, window_params = [{transform_indices = @transform_0, window_bounds = array<i64: 8, 16, 16>}, {pipeline_mode = #tpu.pipeline_mode<synchronous>, transform_indices = @transform_1, window_bounds = array<i64: 16, 128>}, {pipeline_mode = #tpu.pipeline_mode<synchronous>, transform_indices = @transform_2, window_bounds = array<i64: 1, 128>}, {pipeline_mode = #tpu.pipeline_mode<synchronous>, transform_indices = @transform_3, window_bounds = array<i64: 1, 128>}, {transform_indices = @transform_4, window_bounds = array<i64: 16, 128>}]} {
    %c0 = arith.constant 0 : index
    %c0_0 = arith.constant 0 : index
    %c0_1 = arith.constant 0 : index
    %0 = vector.load %arg1[%c0, %c0_0, %c0_1] : memref<8x16x16xbf16, #tpu.memory_space<vmem>>, vector<8x16x16xbf16>
    %1 = vector.shape_cast %0 : vector<8x16x16xbf16> to vector<128x16xbf16>
    %c0_2 = arith.constant 0 : index
    %c0_3 = arith.constant 0 : index
    %2 = vector.load %arg2[%c0_2, %c0_3] : memref<16x128xbf16, #tpu.memory_space<vmem>>, vector<16x128xbf16>
    %cst = arith.constant dense<0.000000e+00> : vector<128x128xf32>
    %3 = tpu.matmul %1, %2, %cst {dimension_numbers = #tpu.dot_dimension_numbers<[1], [0], [0], [1], [0, 0, 1, 1], [], []>} : vector<128x16xbf16>, vector<16x128xbf16>, vector<128x128xf32> -> vector<128x128xf32>
    %c0_4 = arith.constant 0 : index
    %c0_5 = arith.constant 0 : index
    %4 = vector.load %arg3[%c0_4, %c0_5] : memref<1x128xf32, #tpu.memory_space<vmem>>, vector<1x128xf32>
    %5 = vector.broadcast %4 : vector<1x128xf32> to vector<128x128xf32>
    %6 = arith.mulf %3, %5 : vector<128x128xf32>
    %c0_6 = arith.constant 0 : index
    %c0_7 = arith.constant 0 : index
    %7 = vector.load %arg4[%c0_6, %c0_7] : memref<1x128xf32, #tpu.memory_space<vmem>>, vector<1x128xf32>
    %8 = vector.broadcast %7 : vector<1x128xf32> to vector<128x128xf32>
    %9 = arith.addf %6, %8 : vector<128x128xf32>
    %cst_8 = arith.constant 0.000000e+00 : f32
    %10 = vector.broadcast %cst_8 : f32 to vector<128x128xf32>
    %11 = arith.maximumf %9, %10 : vector<128x128xf32>
    %12 = vector.shape_cast %11 : vector<128x128xf32> to vector<8x16x128xf32>
    %13 = vector.extract_strided_slice %12 {offsets = [0, 0, 0], sizes = [1, 16, 128], strides = [1, 1, 1]} : vector<8x16x128xf32> to vector<1x16x128xf32>
    %14 = vector.shape_cast %13 : vector<1x16x128xf32> to vector<16x128xf32>
    %15 = vector.extract_strided_slice %12 {offsets = [1, 0, 0], sizes = [1, 16, 128], strides = [1, 1, 1]} : vector<8x16x128xf32> to vector<1x16x128xf32>
    %16 = vector.shape_cast %15 : vector<1x16x128xf32> to vector<16x128xf32>
    %17 = arith.maximumf %14, %16 : vector<16x128xf32>
    %18 = vector.extract_strided_slice %12 {offsets = [2, 0, 0], sizes = [1, 16, 128], strides = [1, 1, 1]} : vector<8x16x128xf32> to vector<1x16x128xf32>
    %19 = vector.shape_cast %18 : vector<1x16x128xf32> to vector<16x128xf32>
    %20 = arith.maximumf %17, %19 : vector<16x128xf32>
    %21 = vector.extract_strided_slice %12 {offsets = [3, 0, 0], sizes = [1, 16, 128], strides = [1, 1, 1]} : vector<8x16x128xf32> to vector<1x16x128xf32>
    %22 = vector.shape_cast %21 : vector<1x16x128xf32> to vector<16x128xf32>
    %23 = arith.maximumf %20, %22 : vector<16x128xf32>
    %24 = vector.extract_strided_slice %12 {offsets = [4, 0, 0], sizes = [1, 16, 128], strides = [1, 1, 1]} : vector<8x16x128xf32> to vector<1x16x128xf32>
    %25 = vector.shape_cast %24 : vector<1x16x128xf32> to vector<16x128xf32>
    %26 = arith.maximumf %23, %25 : vector<16x128xf32>
    %27 = vector.extract_strided_slice %12 {offsets = [5, 0, 0], sizes = [1, 16, 128], strides = [1, 1, 1]} : vector<8x16x128xf32> to vector<1x16x128xf32>
    %28 = vector.shape_cast %27 : vector<1x16x128xf32> to vector<16x128xf32>
    %29 = arith.maximumf %26, %28 : vector<16x128xf32>
    %30 = vector.extract_strided_slice %12 {offsets = [6, 0, 0], sizes = [1, 16, 128], strides = [1, 1, 1]} : vector<8x16x128xf32> to vector<1x16x128xf32>
    %31 = vector.shape_cast %30 : vector<1x16x128xf32> to vector<16x128xf32>
    %32 = arith.maximumf %29, %31 : vector<16x128xf32>
    %33 = vector.extract_strided_slice %12 {offsets = [7, 0, 0], sizes = [1, 16, 128], strides = [1, 1, 1]} : vector<8x16x128xf32> to vector<1x16x128xf32>
    %34 = vector.shape_cast %33 : vector<1x16x128xf32> to vector<16x128xf32>
    %35 = arith.maximumf %32, %34 : vector<16x128xf32>
    %36 = arith.truncf %35 : vector<16x128xf32> to vector<16x128xbf16>
    %c0_9 = arith.constant 0 : index
    %c0_10 = arith.constant 0 : index
    %37 = vector.load %arg5[%c0_9, %c0_10] : memref<16x128xbf16, #tpu.memory_space<vmem>>, vector<16x128xbf16>
    tpu.vector_store %arg5[%c0_9, %c0_10], %36 {strides = array<i32>} : memref<16x128xbf16, #tpu.memory_space<vmem>>, vector<16x128xbf16>,
    return
  }
  func.func @transform_0(%arg0: i32) -> (i32, i32, i32) {
    %c0_i32 = arith.constant 0 : i32
    %c0_i32_0 = arith.constant 0 : i32
    %c0_i32_1 = arith.constant 0 : i32
    return %c0_i32, %arg0, %c0_i32_0 : i32, i32, i32
  }
  func.func @transform_1(%arg0: i32) -> (i32, i32) {
    %c0_i32 = arith.constant 0 : i32
    %c0_i32_0 = arith.constant 0 : i32
    %c0_i32_1 = arith.constant 0 : i32
    return %c0_i32, %c0_i32_0 : i32, i32
  }
  func.func @transform_2(%arg0: i32) -> (i32, i32) {
    %c0_i32 = arith.constant 0 : i32
    %c0_i32_0 = arith.constant 0 : i32
    %c0_i32_1 = arith.constant 0 : i32
    return %c0_i32, %c0_i32_0 : i32, i32
  }
  func.func @transform_3(%arg0: i32) -> (i32, i32) {
    %c0_i32 = arith.constant 0 : i32
    %c0_i32_0 = arith.constant 0 : i32
    %c0_i32_1 = arith.constant 0 : i32
    return %c0_i32, %c0_i32_0 : i32, i32
  }
  func.func @transform_4(%arg0: i32) -> (i32, i32) {
    %c0_i32 = arith.constant 0 : i32
    %c0_i32_0 = arith.constant 0 : i32
    return %arg0, %c0_i32 : i32, i32
  }
}

module attributes {stable_mosaic.version = 11 : i64} {
  func.func @_block_kernel(%arg0: i32, %arg1: i32, %arg2: memref<1x256x576xbf16, #tpu.memory_space<vmem>>, %arg3: memref<576x128xbf16, #tpu.memory_space<vmem>>, %arg4: memref<1x1152x128xbf16, #tpu.memory_space<vmem>>, %arg5: memref<4x128xf32, #tpu.memory_space<vmem>>, %arg6: memref<4x128xf32, #tpu.memory_space<vmem>>, %arg7: memref<1x256x128xbf16, #tpu.memory_space<vmem>>, %arg8: memref<18x18x128xbf16, #tpu.memory_space<vmem>>) attributes {dimension_semantics = [#tpu.dimension_semantics<parallel>, #tpu.dimension_semantics<arbitrary>], iteration_bounds = array<i64: 2, 4>, scalar_prefetch = 0 : i64, scratch_operands = 1 : i64, tpu.core_type = #tpu.core_type<tc>, window_params = [{transform_indices = @transform_0, window_bounds = array<i64: 1, 256, 576>}, {pipeline_mode = #tpu.pipeline_mode<synchronous>, transform_indices = @transform_1, window_bounds = array<i64: 576, 128>}, {transform_indices = @transform_2, window_bounds = array<i64: 1, 1152, 128>}, {pipeline_mode = #tpu.pipeline_mode<synchronous>, transform_indices = @transform_3, window_bounds = array<i64: 4, 128>}, {pipeline_mode = #tpu.pipeline_mode<synchronous>, transform_indices = @transform_4, window_bounds = array<i64: 4, 128>}, {transform_indices = @transform_5, window_bounds = array<i64: 1, 256, 128>}]} {
    %c0_i32 = arith.constant 0 : i32
    %0 = arith.cmpi eq, %arg1, %c0_i32 : i32
    %1 = arith.extui %0 : i1 to i32
    %c0_i32_0 = arith.constant 0 : i32
    %2 = arith.cmpi ne, %1, %c0_i32_0 : i32
    scf.if %2 {
      %cst = arith.constant 0.000000e+00 : bf16
      %6 = vector.broadcast %cst : bf16 to vector<1x18x128xbf16>
      %cst_3 = arith.constant 0.000000e+00 : bf16
      %7 = vector.broadcast %cst_3 : bf16 to vector<18x1x128xbf16>
      %c0 = arith.constant 0 : index
      %c0_4 = arith.constant 0 : index
      %c0_5 = arith.constant 0 : index
      %8 = vector.load %arg8[%c0, %c0_4, %c0_5] : memref<18x18x128xbf16, #tpu.memory_space<vmem>>, vector<1x18x128xbf16>
      tpu.vector_store %arg8[%c0, %c0_4, %c0_5], %6 {strides = array<i32>} : memref<18x18x128xbf16, #tpu.memory_space<vmem>>, vector<1x18x128xbf16>,
      %c17 = arith.constant 17 : index
      %c0_6 = arith.constant 0 : index
      %c0_7 = arith.constant 0 : index
      %9 = vector.load %arg8[%c17, %c0_6, %c0_7] : memref<18x18x128xbf16, #tpu.memory_space<vmem>>, vector<1x18x128xbf16>
      tpu.vector_store %arg8[%c17, %c0_6, %c0_7], %6 {strides = array<i32>} : memref<18x18x128xbf16, #tpu.memory_space<vmem>>, vector<1x18x128xbf16>,
      %c0_8 = arith.constant 0 : index
      %c0_9 = arith.constant 0 : index
      %c0_10 = arith.constant 0 : index
      %10 = vector.load %arg8[%c0_8, %c0_9, %c0_10] : memref<18x18x128xbf16, #tpu.memory_space<vmem>>, vector<18x1x128xbf16>
      tpu.vector_store %arg8[%c0_8, %c0_9, %c0_10], %7 {strides = array<i32>} : memref<18x18x128xbf16, #tpu.memory_space<vmem>>, vector<18x1x128xbf16>,
      %c0_11 = arith.constant 0 : index
      %c17_12 = arith.constant 17 : index
      %c0_13 = arith.constant 0 : index
      %11 = vector.load %arg8[%c0_11, %c17_12, %c0_13] : memref<18x18x128xbf16, #tpu.memory_space<vmem>>, vector<18x1x128xbf16>
      tpu.vector_store %arg8[%c0_11, %c17_12, %c0_13], %7 {strides = array<i32>} : memref<18x18x128xbf16, #tpu.memory_space<vmem>>, vector<18x1x128xbf16>,
      %c0_14 = arith.constant 0 : index
      %c0_15 = arith.constant 0 : index
      %c0_16 = arith.constant 0 : index
      %12 = vector.load %arg2[%c0_14, %c0_15, %c0_16] : memref<1x256x576xbf16, #tpu.memory_space<vmem>>, vector<1x256x576xbf16>
      %13 = vector.shape_cast %12 : vector<1x256x576xbf16> to vector<256x576xbf16>
      %c0_17 = arith.constant 0 : index
      %c0_18 = arith.constant 0 : index
      %14 = vector.load %arg3[%c0_17, %c0_18] : memref<576x128xbf16, #tpu.memory_space<vmem>>, vector<576x128xbf16>
      %cst_19 = arith.constant dense<0.000000e+00> : vector<256x128xf32>
      %15 = tpu.matmul %13, %14, %cst_19 {dimension_numbers = #tpu.dot_dimension_numbers<[1], [0], [0], [1], [0, 0, 1, 1], [], []>} : vector<256x576xbf16>, vector<576x128xbf16>, vector<256x128xf32> -> vector<256x128xf32>
      %c0_20 = arith.constant 0 : index
      %c0_21 = arith.constant 0 : index
      %16 = vector.load %arg5[%c0_20, %c0_21] : memref<4x128xf32, #tpu.memory_space<vmem>>, vector<1x128xf32>
      %17 = vector.broadcast %16 : vector<1x128xf32> to vector<256x128xf32>
      %18 = arith.mulf %15, %17 : vector<256x128xf32>
      %c0_22 = arith.constant 0 : index
      %c0_23 = arith.constant 0 : index
      %19 = vector.load %arg6[%c0_22, %c0_23] : memref<4x128xf32, #tpu.memory_space<vmem>>, vector<1x128xf32>
      %20 = vector.broadcast %19 : vector<1x128xf32> to vector<256x128xf32>
      %21 = arith.addf %18, %20 : vector<256x128xf32>
      %cst_24 = arith.constant 0.000000e+00 : f32
      %22 = vector.broadcast %cst_24 : f32 to vector<256x128xf32>
      %23 = arith.maximumf %21, %22 : vector<256x128xf32>
      %24 = vector.shape_cast %23 : vector<256x128xf32> to vector<16x16x128xf32>
      %25 = arith.truncf %24 : vector<16x16x128xf32> to vector<16x16x128xbf16>
      %c1 = arith.constant 1 : index
      %c1_25 = arith.constant 1 : index
      %c0_26 = arith.constant 0 : index
      %26 = vector.load %arg8[%c1, %c1_25, %c0_26] : memref<18x18x128xbf16, #tpu.memory_space<vmem>>, vector<16x16x128xbf16>
      tpu.vector_store %arg8[%c1, %c1_25, %c0_26], %25 {strides = array<i32>} : memref<18x18x128xbf16, #tpu.memory_space<vmem>>, vector<16x16x128xbf16>,
    } else {
    }
    %c0_i32_1 = arith.constant 0 : i32
    %3 = arith.cmpi sgt, %arg1, %c0_i32_1 : i32
    %4 = arith.extui %3 : i1 to i32
    %c0_i32_2 = arith.constant 0 : i32
    %5 = arith.cmpi ne, %4, %c0_i32_2 : i32
    scf.if %5 {
      %c0 = arith.constant 0 : index
      %c0_3 = arith.constant 0 : index
      %c0_4 = arith.constant 0 : index
      %6 = vector.load %arg8[%c0, %c0_3, %c0_4] : memref<18x18x128xbf16, #tpu.memory_space<vmem>>, vector<18x18x128xbf16>
      %7 = vector.extract_strided_slice %6 {offsets = [0, 0, 0], sizes = [16, 16, 128], strides = [1, 1, 1]} : vector<18x18x128xbf16> to vector<16x16x128xbf16>
      %8 = vector.extract_strided_slice %6 {offsets = [0, 1, 0], sizes = [16, 16, 128], strides = [1, 1, 1]} : vector<18x18x128xbf16> to vector<16x16x128xbf16>
      %9 = vector.extract_strided_slice %6 {offsets = [0, 2, 0], sizes = [16, 16, 128], strides = [1, 1, 1]} : vector<18x18x128xbf16> to vector<16x16x128xbf16>
      %10 = vector.extract_strided_slice %6 {offsets = [1, 0, 0], sizes = [16, 16, 128], strides = [1, 1, 1]} : vector<18x18x128xbf16> to vector<16x16x128xbf16>
      %11 = vector.extract_strided_slice %6 {offsets = [1, 1, 0], sizes = [16, 16, 128], strides = [1, 1, 1]} : vector<18x18x128xbf16> to vector<16x16x128xbf16>
      %12 = vector.extract_strided_slice %6 {offsets = [1, 2, 0], sizes = [16, 16, 128], strides = [1, 1, 1]} : vector<18x18x128xbf16> to vector<16x16x128xbf16>
      %13 = vector.extract_strided_slice %6 {offsets = [2, 0, 0], sizes = [16, 16, 128], strides = [1, 1, 1]} : vector<18x18x128xbf16> to vector<16x16x128xbf16>
      %14 = vector.extract_strided_slice %6 {offsets = [2, 1, 0], sizes = [16, 16, 128], strides = [1, 1, 1]} : vector<18x18x128xbf16> to vector<16x16x128xbf16>
      %15 = vector.extract_strided_slice %6 {offsets = [2, 2, 0], sizes = [16, 16, 128], strides = [1, 1, 1]} : vector<18x18x128xbf16> to vector<16x16x128xbf16>
      %16 = tpu.concatenate %7, %8, %9, %10, %11, %12, %13, %14, %15 in 2 : vector<16x16x128xbf16>, vector<16x16x128xbf16>, vector<16x16x128xbf16>, vector<16x16x128xbf16>, vector<16x16x128xbf16>, vector<16x16x128xbf16>, vector<16x16x128xbf16>, vector<16x16x128xbf16>, vector<16x16x128xbf16> -> vector<16x16x1152xbf16>
      %17 = vector.shape_cast %16 : vector<16x16x1152xbf16> to vector<256x1152xbf16>
      %c0_5 = arith.constant 0 : index
      %c0_6 = arith.constant 0 : index
      %c0_7 = arith.constant 0 : index
      %18 = vector.load %arg4[%c0_5, %c0_6, %c0_7] : memref<1x1152x128xbf16, #tpu.memory_space<vmem>>, vector<1x1152x128xbf16>
      %19 = vector.shape_cast %18 : vector<1x1152x128xbf16> to vector<1152x128xbf16>
      %cst = arith.constant dense<0.000000e+00> : vector<256x128xf32>
      %20 = tpu.matmul %17, %19, %cst {dimension_numbers = #tpu.dot_dimension_numbers<[1], [0], [0], [1], [0, 0, 1, 1], [], []>} : vector<256x1152xbf16>, vector<1152x128xbf16>, vector<256x128xf32> -> vector<256x128xf32>
      %21 = arith.index_cast %arg1 : i32 to index
      %c0_8 = arith.constant 0 : index
      %22 = vector.load %arg5[%21, %c0_8] : memref<4x128xf32, #tpu.memory_space<vmem>>, vector<1x128xf32>
      %23 = vector.broadcast %22 : vector<1x128xf32> to vector<256x128xf32>
      %24 = arith.mulf %20, %23 : vector<256x128xf32>
      %25 = arith.index_cast %arg1 : i32 to index
      %c0_9 = arith.constant 0 : index
      %26 = vector.load %arg6[%25, %c0_9] : memref<4x128xf32, #tpu.memory_space<vmem>>, vector<1x128xf32>
      %27 = vector.broadcast %26 : vector<1x128xf32> to vector<256x128xf32>
      %28 = arith.addf %24, %27 : vector<256x128xf32>
      %cst_10 = arith.constant 0.000000e+00 : f32
      %29 = vector.broadcast %cst_10 : f32 to vector<256x128xf32>
      %30 = arith.maximumf %28, %29 : vector<256x128xf32>
      %31 = vector.shape_cast %30 : vector<256x128xf32> to vector<16x16x128xf32>
      %32 = arith.truncf %31 : vector<16x16x128xf32> to vector<16x16x128xbf16>
      %c1 = arith.constant 1 : index
      %c1_11 = arith.constant 1 : index
      %c0_12 = arith.constant 0 : index
      %33 = vector.load %arg8[%c1, %c1_11, %c0_12] : memref<18x18x128xbf16, #tpu.memory_space<vmem>>, vector<16x16x128xbf16>
      tpu.vector_store %arg8[%c1, %c1_11, %c0_12], %32 {strides = array<i32>} : memref<18x18x128xbf16, #tpu.memory_space<vmem>>, vector<16x16x128xbf16>,
      %34 = arith.truncf %30 : vector<256x128xf32> to vector<256x128xbf16>
      %c0_13 = arith.constant 0 : index
      %c0_14 = arith.constant 0 : index
      %c0_15 = arith.constant 0 : index
      %35 = vector.load %arg7[%c0_13, %c0_14, %c0_15] : memref<1x256x128xbf16, #tpu.memory_space<vmem>>, vector<1x256x128xbf16>
      %36 = vector.shape_cast %35 : vector<1x256x128xbf16> to vector<256x128xbf16>
      %37 = vector.shape_cast %34 : vector<256x128xbf16> to vector<1x256x128xbf16>
      tpu.vector_store %arg7[%c0_13, %c0_14, %c0_15], %37 {strides = array<i32>} : memref<1x256x128xbf16, #tpu.memory_space<vmem>>, vector<1x256x128xbf16>,
    } else {
    }
    return
  }
  func.func @transform_0(%arg0: i32, %arg1: i32) -> (i32, i32, i32) {
    %c0_i32 = arith.constant 0 : i32
    %c0_i32_0 = arith.constant 0 : i32
    %c0_i32_1 = arith.constant 0 : i32
    return %arg0, %c0_i32, %c0_i32_0 : i32, i32, i32
  }
  func.func @transform_1(%arg0: i32, %arg1: i32) -> (i32, i32) {
    %c0_i32 = arith.constant 0 : i32
    %c0_i32_0 = arith.constant 0 : i32
    %c0_i32_1 = arith.constant 0 : i32
    return %c0_i32, %c0_i32_0 : i32, i32
  }
  func.func @transform_2(%arg0: i32, %arg1: i32) -> (i32, i32, i32) {
    %c1_i32 = arith.constant 1 : i32
    %0 = arith.subi %arg1, %c1_i32 : i32
    %c0_i32 = arith.constant 0 : i32
    %1 = arith.maxsi %0, %c0_i32 : i32
    %c0_i32_0 = arith.constant 0 : i32
    %c0_i32_1 = arith.constant 0 : i32
    %c0_i32_2 = arith.constant 0 : i32
    return %1, %c0_i32_0, %c0_i32_1 : i32, i32, i32
  }
  func.func @transform_3(%arg0: i32, %arg1: i32) -> (i32, i32) {
    %c0_i32 = arith.constant 0 : i32
    %c0_i32_0 = arith.constant 0 : i32
    %c0_i32_1 = arith.constant 0 : i32
    return %c0_i32, %c0_i32_0 : i32, i32
  }
  func.func @transform_4(%arg0: i32, %arg1: i32) -> (i32, i32) {
    %c0_i32 = arith.constant 0 : i32
    %c0_i32_0 = arith.constant 0 : i32
    %c0_i32_1 = arith.constant 0 : i32
    return %c0_i32, %c0_i32_0 : i32, i32
  }
  func.func @transform_5(%arg0: i32, %arg1: i32) -> (i32, i32, i32) {
    %c0_i32 = arith.constant 0 : i32
    %c0_i32_0 = arith.constant 0 : i32
    %c0_i32_1 = arith.constant 0 : i32
    return %arg0, %c0_i32, %c0_i32_0 : i32, i32, i32
  }
}

module attributes {stable_mosaic.version = 11 : i64} {
  func.func @_block_kernel(%arg0: i32, %arg1: i32, %arg2: memref<1x64x576xbf16, #tpu.memory_space<vmem>>, %arg3: memref<576x128xbf16, #tpu.memory_space<vmem>>, %arg4: memref<1x1152x128xbf16, #tpu.memory_space<vmem>>, %arg5: memref<6x128xf32, #tpu.memory_space<vmem>>, %arg6: memref<6x128xf32, #tpu.memory_space<vmem>>, %arg7: memref<1x64x128xbf16, #tpu.memory_space<vmem>>, %arg8: memref<10x10x128xbf16, #tpu.memory_space<vmem>>) attributes {dimension_semantics = [#tpu.dimension_semantics<parallel>, #tpu.dimension_semantics<arbitrary>], iteration_bounds = array<i64: 2, 6>, scalar_prefetch = 0 : i64, scratch_operands = 1 : i64, tpu.core_type = #tpu.core_type<tc>, window_params = [{transform_indices = @transform_0, window_bounds = array<i64: 1, 64, 576>}, {pipeline_mode = #tpu.pipeline_mode<synchronous>, transform_indices = @transform_1, window_bounds = array<i64: 576, 128>}, {transform_indices = @transform_2, window_bounds = array<i64: 1, 1152, 128>}, {pipeline_mode = #tpu.pipeline_mode<synchronous>, transform_indices = @transform_3, window_bounds = array<i64: 6, 128>}, {pipeline_mode = #tpu.pipeline_mode<synchronous>, transform_indices = @transform_4, window_bounds = array<i64: 6, 128>}, {transform_indices = @transform_5, window_bounds = array<i64: 1, 64, 128>}]} {
    %c0_i32 = arith.constant 0 : i32
    %0 = arith.cmpi eq, %arg1, %c0_i32 : i32
    %1 = arith.extui %0 : i1 to i32
    %c0_i32_0 = arith.constant 0 : i32
    %2 = arith.cmpi ne, %1, %c0_i32_0 : i32
    scf.if %2 {
      %cst = arith.constant 0.000000e+00 : bf16
      %6 = vector.broadcast %cst : bf16 to vector<1x10x128xbf16>
      %cst_3 = arith.constant 0.000000e+00 : bf16
      %7 = vector.broadcast %cst_3 : bf16 to vector<10x1x128xbf16>
      %c0 = arith.constant 0 : index
      %c0_4 = arith.constant 0 : index
      %c0_5 = arith.constant 0 : index
      %8 = vector.load %arg8[%c0, %c0_4, %c0_5] : memref<10x10x128xbf16, #tpu.memory_space<vmem>>, vector<1x10x128xbf16>
      tpu.vector_store %arg8[%c0, %c0_4, %c0_5], %6 {strides = array<i32>} : memref<10x10x128xbf16, #tpu.memory_space<vmem>>, vector<1x10x128xbf16>,
      %c9 = arith.constant 9 : index
      %c0_6 = arith.constant 0 : index
      %c0_7 = arith.constant 0 : index
      %9 = vector.load %arg8[%c9, %c0_6, %c0_7] : memref<10x10x128xbf16, #tpu.memory_space<vmem>>, vector<1x10x128xbf16>
      tpu.vector_store %arg8[%c9, %c0_6, %c0_7], %6 {strides = array<i32>} : memref<10x10x128xbf16, #tpu.memory_space<vmem>>, vector<1x10x128xbf16>,
      %c0_8 = arith.constant 0 : index
      %c0_9 = arith.constant 0 : index
      %c0_10 = arith.constant 0 : index
      %10 = vector.load %arg8[%c0_8, %c0_9, %c0_10] : memref<10x10x128xbf16, #tpu.memory_space<vmem>>, vector<10x1x128xbf16>
      tpu.vector_store %arg8[%c0_8, %c0_9, %c0_10], %7 {strides = array<i32>} : memref<10x10x128xbf16, #tpu.memory_space<vmem>>, vector<10x1x128xbf16>,
      %c0_11 = arith.constant 0 : index
      %c9_12 = arith.constant 9 : index
      %c0_13 = arith.constant 0 : index
      %11 = vector.load %arg8[%c0_11, %c9_12, %c0_13] : memref<10x10x128xbf16, #tpu.memory_space<vmem>>, vector<10x1x128xbf16>
      tpu.vector_store %arg8[%c0_11, %c9_12, %c0_13], %7 {strides = array<i32>} : memref<10x10x128xbf16, #tpu.memory_space<vmem>>, vector<10x1x128xbf16>,
      %c0_14 = arith.constant 0 : index
      %c0_15 = arith.constant 0 : index
      %c0_16 = arith.constant 0 : index
      %12 = vector.load %arg2[%c0_14, %c0_15, %c0_16] : memref<1x64x576xbf16, #tpu.memory_space<vmem>>, vector<1x64x576xbf16>
      %13 = vector.shape_cast %12 : vector<1x64x576xbf16> to vector<64x576xbf16>
      %c0_17 = arith.constant 0 : index
      %c0_18 = arith.constant 0 : index
      %14 = vector.load %arg3[%c0_17, %c0_18] : memref<576x128xbf16, #tpu.memory_space<vmem>>, vector<576x128xbf16>
      %cst_19 = arith.constant dense<0.000000e+00> : vector<64x128xf32>
      %15 = tpu.matmul %13, %14, %cst_19 {dimension_numbers = #tpu.dot_dimension_numbers<[1], [0], [0], [1], [0, 0, 1, 1], [], []>} : vector<64x576xbf16>, vector<576x128xbf16>, vector<64x128xf32> -> vector<64x128xf32>
      %c0_20 = arith.constant 0 : index
      %c0_21 = arith.constant 0 : index
      %16 = vector.load %arg5[%c0_20, %c0_21] : memref<6x128xf32, #tpu.memory_space<vmem>>, vector<1x128xf32>
      %17 = vector.broadcast %16 : vector<1x128xf32> to vector<64x128xf32>
      %18 = arith.mulf %15, %17 : vector<64x128xf32>
      %c0_22 = arith.constant 0 : index
      %c0_23 = arith.constant 0 : index
      %19 = vector.load %arg6[%c0_22, %c0_23] : memref<6x128xf32, #tpu.memory_space<vmem>>, vector<1x128xf32>
      %20 = vector.broadcast %19 : vector<1x128xf32> to vector<64x128xf32>
      %21 = arith.addf %18, %20 : vector<64x128xf32>
      %cst_24 = arith.constant 0.000000e+00 : f32
      %22 = vector.broadcast %cst_24 : f32 to vector<64x128xf32>
      %23 = arith.maximumf %21, %22 : vector<64x128xf32>
      %24 = vector.shape_cast %23 : vector<64x128xf32> to vector<8x8x128xf32>
      %25 = arith.truncf %24 : vector<8x8x128xf32> to vector<8x8x128xbf16>
      %c1 = arith.constant 1 : index
      %c1_25 = arith.constant 1 : index
      %c0_26 = arith.constant 0 : index
      %26 = vector.load %arg8[%c1, %c1_25, %c0_26] : memref<10x10x128xbf16, #tpu.memory_space<vmem>>, vector<8x8x128xbf16>
      tpu.vector_store %arg8[%c1, %c1_25, %c0_26], %25 {strides = array<i32>} : memref<10x10x128xbf16, #tpu.memory_space<vmem>>, vector<8x8x128xbf16>,
    } else {
    }
    %c0_i32_1 = arith.constant 0 : i32
    %3 = arith.cmpi sgt, %arg1, %c0_i32_1 : i32
    %4 = arith.extui %3 : i1 to i32
    %c0_i32_2 = arith.constant 0 : i32
    %5 = arith.cmpi ne, %4, %c0_i32_2 : i32
    scf.if %5 {
      %c0 = arith.constant 0 : index
      %c0_3 = arith.constant 0 : index
      %c0_4 = arith.constant 0 : index
      %6 = vector.load %arg8[%c0, %c0_3, %c0_4] : memref<10x10x128xbf16, #tpu.memory_space<vmem>>, vector<10x10x128xbf16>
      %7 = vector.extract_strided_slice %6 {offsets = [0, 0, 0], sizes = [8, 8, 128], strides = [1, 1, 1]} : vector<10x10x128xbf16> to vector<8x8x128xbf16>
      %8 = vector.extract_strided_slice %6 {offsets = [0, 1, 0], sizes = [8, 8, 128], strides = [1, 1, 1]} : vector<10x10x128xbf16> to vector<8x8x128xbf16>
      %9 = vector.extract_strided_slice %6 {offsets = [0, 2, 0], sizes = [8, 8, 128], strides = [1, 1, 1]} : vector<10x10x128xbf16> to vector<8x8x128xbf16>
      %10 = vector.extract_strided_slice %6 {offsets = [1, 0, 0], sizes = [8, 8, 128], strides = [1, 1, 1]} : vector<10x10x128xbf16> to vector<8x8x128xbf16>
      %11 = vector.extract_strided_slice %6 {offsets = [1, 1, 0], sizes = [8, 8, 128], strides = [1, 1, 1]} : vector<10x10x128xbf16> to vector<8x8x128xbf16>
      %12 = vector.extract_strided_slice %6 {offsets = [1, 2, 0], sizes = [8, 8, 128], strides = [1, 1, 1]} : vector<10x10x128xbf16> to vector<8x8x128xbf16>
      %13 = vector.extract_strided_slice %6 {offsets = [2, 0, 0], sizes = [8, 8, 128], strides = [1, 1, 1]} : vector<10x10x128xbf16> to vector<8x8x128xbf16>
      %14 = vector.extract_strided_slice %6 {offsets = [2, 1, 0], sizes = [8, 8, 128], strides = [1, 1, 1]} : vector<10x10x128xbf16> to vector<8x8x128xbf16>
      %15 = vector.extract_strided_slice %6 {offsets = [2, 2, 0], sizes = [8, 8, 128], strides = [1, 1, 1]} : vector<10x10x128xbf16> to vector<8x8x128xbf16>
      %16 = tpu.concatenate %7, %8, %9, %10, %11, %12, %13, %14, %15 in 2 : vector<8x8x128xbf16>, vector<8x8x128xbf16>, vector<8x8x128xbf16>, vector<8x8x128xbf16>, vector<8x8x128xbf16>, vector<8x8x128xbf16>, vector<8x8x128xbf16>, vector<8x8x128xbf16>, vector<8x8x128xbf16> -> vector<8x8x1152xbf16>
      %17 = vector.shape_cast %16 : vector<8x8x1152xbf16> to vector<64x1152xbf16>
      %c0_5 = arith.constant 0 : index
      %c0_6 = arith.constant 0 : index
      %c0_7 = arith.constant 0 : index
      %18 = vector.load %arg4[%c0_5, %c0_6, %c0_7] : memref<1x1152x128xbf16, #tpu.memory_space<vmem>>, vector<1x1152x128xbf16>
      %19 = vector.shape_cast %18 : vector<1x1152x128xbf16> to vector<1152x128xbf16>
      %cst = arith.constant dense<0.000000e+00> : vector<64x128xf32>
      %20 = tpu.matmul %17, %19, %cst {dimension_numbers = #tpu.dot_dimension_numbers<[1], [0], [0], [1], [0, 0, 1, 1], [], []>} : vector<64x1152xbf16>, vector<1152x128xbf16>, vector<64x128xf32> -> vector<64x128xf32>
      %21 = arith.index_cast %arg1 : i32 to index
      %c0_8 = arith.constant 0 : index
      %22 = vector.load %arg5[%21, %c0_8] : memref<6x128xf32, #tpu.memory_space<vmem>>, vector<1x128xf32>
      %23 = vector.broadcast %22 : vector<1x128xf32> to vector<64x128xf32>
      %24 = arith.mulf %20, %23 : vector<64x128xf32>
      %25 = arith.index_cast %arg1 : i32 to index
      %c0_9 = arith.constant 0 : index
      %26 = vector.load %arg6[%25, %c0_9] : memref<6x128xf32, #tpu.memory_space<vmem>>, vector<1x128xf32>
      %27 = vector.broadcast %26 : vector<1x128xf32> to vector<64x128xf32>
      %28 = arith.addf %24, %27 : vector<64x128xf32>
      %cst_10 = arith.constant 0.000000e+00 : f32
      %29 = vector.broadcast %cst_10 : f32 to vector<64x128xf32>
      %30 = arith.maximumf %28, %29 : vector<64x128xf32>
      %31 = vector.shape_cast %30 : vector<64x128xf32> to vector<8x8x128xf32>
      %32 = arith.truncf %31 : vector<8x8x128xf32> to vector<8x8x128xbf16>
      %c1 = arith.constant 1 : index
      %c1_11 = arith.constant 1 : index
      %c0_12 = arith.constant 0 : index
      %33 = vector.load %arg8[%c1, %c1_11, %c0_12] : memref<10x10x128xbf16, #tpu.memory_space<vmem>>, vector<8x8x128xbf16>
      tpu.vector_store %arg8[%c1, %c1_11, %c0_12], %32 {strides = array<i32>} : memref<10x10x128xbf16, #tpu.memory_space<vmem>>, vector<8x8x128xbf16>,
      %34 = arith.truncf %30 : vector<64x128xf32> to vector<64x128xbf16>
      %c0_13 = arith.constant 0 : index
      %c0_14 = arith.constant 0 : index
      %c0_15 = arith.constant 0 : index
      %35 = vector.load %arg7[%c0_13, %c0_14, %c0_15] : memref<1x64x128xbf16, #tpu.memory_space<vmem>>, vector<1x64x128xbf16>
      %36 = vector.shape_cast %35 : vector<1x64x128xbf16> to vector<64x128xbf16>
      %37 = vector.shape_cast %34 : vector<64x128xbf16> to vector<1x64x128xbf16>
      tpu.vector_store %arg7[%c0_13, %c0_14, %c0_15], %37 {strides = array<i32>} : memref<1x64x128xbf16, #tpu.memory_space<vmem>>, vector<1x64x128xbf16>,
    } else {
    }
    return
  }
  func.func @transform_0(%arg0: i32, %arg1: i32) -> (i32, i32, i32) {
    %c0_i32 = arith.constant 0 : i32
    %c0_i32_0 = arith.constant 0 : i32
    %c0_i32_1 = arith.constant 0 : i32
    return %arg0, %c0_i32, %c0_i32_0 : i32, i32, i32
  }
  func.func @transform_1(%arg0: i32, %arg1: i32) -> (i32, i32) {
    %c0_i32 = arith.constant 0 : i32
    %c0_i32_0 = arith.constant 0 : i32
    %c0_i32_1 = arith.constant 0 : i32
    return %c0_i32, %c0_i32_0 : i32, i32
  }
  func.func @transform_2(%arg0: i32, %arg1: i32) -> (i32, i32, i32) {
    %c1_i32 = arith.constant 1 : i32
    %0 = arith.subi %arg1, %c1_i32 : i32
    %c0_i32 = arith.constant 0 : i32
    %1 = arith.maxsi %0, %c0_i32 : i32
    %c0_i32_0 = arith.constant 0 : i32
    %c0_i32_1 = arith.constant 0 : i32
    %c0_i32_2 = arith.constant 0 : i32
    return %1, %c0_i32_0, %c0_i32_1 : i32, i32, i32
  }
  func.func @transform_3(%arg0: i32, %arg1: i32) -> (i32, i32) {
    %c0_i32 = arith.constant 0 : i32
    %c0_i32_0 = arith.constant 0 : i32
    %c0_i32_1 = arith.constant 0 : i32
    return %c0_i32, %c0_i32_0 : i32, i32
  }
  func.func @transform_4(%arg0: i32, %arg1: i32) -> (i32, i32) {
    %c0_i32 = arith.constant 0 : i32
    %c0_i32_0 = arith.constant 0 : i32
    %c0_i32_1 = arith.constant 0 : i32
    return %c0_i32, %c0_i32_0 : i32, i32
  }
  func.func @transform_5(%arg0: i32, %arg1: i32) -> (i32, i32, i32) {
    %c0_i32 = arith.constant 0 : i32
    %c0_i32_0 = arith.constant 0 : i32
    %c0_i32_1 = arith.constant 0 : i32
    return %arg0, %c0_i32, %c0_i32_0 : i32, i32, i32
  }
}

module attributes {stable_mosaic.version = 11 : i64} {
  func.func @_neck_head_kernel(%arg0: i32, %arg1: memref<1x64x512xbf16, #tpu.memory_space<vmem>>, %arg2: memref<1x64x128xbf16, #tpu.memory_space<vmem>>, %arg3: memref<512x512xbf16, #tpu.memory_space<vmem>>, %arg4: memref<1x512xf32, #tpu.memory_space<vmem>>, %arg5: memref<1x512xf32, #tpu.memory_space<vmem>>, %arg6: memref<128x512xbf16, #tpu.memory_space<vmem>>, %arg7: memref<1x512xf32, #tpu.memory_space<vmem>>, %arg8: memref<1x512xf32, #tpu.memory_space<vmem>>, %arg9: memref<512x64xbf16, #tpu.memory_space<vmem>>, %arg10: memref<512x64xbf16, #tpu.memory_space<vmem>>, %arg11: memref<1x64xf32, #tpu.memory_space<vmem>>, %arg12: memref<1x64x64xf32, #tpu.memory_space<vmem>>) attributes {dimension_semantics = [#tpu.dimension_semantics<parallel>], iteration_bounds = array<i64: 2>, scalar_prefetch = 0 : i64, scratch_operands = 0 : i64, tpu.core_type = #tpu.core_type<tc>, window_params = [{transform_indices = @transform_0, window_bounds = array<i64: 1, 64, 512>}, {transform_indices = @transform_1, window_bounds = array<i64: 1, 64, 128>}, {pipeline_mode = #tpu.pipeline_mode<synchronous>, transform_indices = @transform_2, window_bounds = array<i64: 512, 512>}, {pipeline_mode = #tpu.pipeline_mode<synchronous>, transform_indices = @transform_3, window_bounds = array<i64: 1, 512>}, {pipeline_mode = #tpu.pipeline_mode<synchronous>, transform_indices = @transform_4, window_bounds = array<i64: 1, 512>}, {pipeline_mode = #tpu.pipeline_mode<synchronous>, transform_indices = @transform_5, window_bounds = array<i64: 128, 512>}, {pipeline_mode = #tpu.pipeline_mode<synchronous>, transform_indices = @transform_6, window_bounds = array<i64: 1, 512>}, {pipeline_mode = #tpu.pipeline_mode<synchronous>, transform_indices = @transform_7, window_bounds = array<i64: 1, 512>}, {pipeline_mode = #tpu.pipeline_mode<synchronous>, transform_indices = @transform_8, window_bounds = array<i64: 512, 64>}, {pipeline_mode = #tpu.pipeline_mode<synchronous>, transform_indices = @transform_9, window_bounds = array<i64: 512, 64>}, {pipeline_mode = #tpu.pipeline_mode<synchronous>, transform_indices = @transform_10, window_bounds = array<i64: 1, 64>}, {transform_indices = @transform_11, window_bounds = array<i64: 1, 64, 64>}]} {
    %c0 = arith.constant 0 : index
    %c0_0 = arith.constant 0 : index
    %c0_1 = arith.constant 0 : index
    %0 = vector.load %arg1[%c0, %c0_0, %c0_1] : memref<1x64x512xbf16, #tpu.memory_space<vmem>>, vector<1x64x512xbf16>
    %1 = vector.shape_cast %0 : vector<1x64x512xbf16> to vector<64x512xbf16>
    %c0_2 = arith.constant 0 : index
    %c0_3 = arith.constant 0 : index
    %2 = vector.load %arg3[%c0_2, %c0_3] : memref<512x512xbf16, #tpu.memory_space<vmem>>, vector<512x512xbf16>
    %cst = arith.constant dense<0.000000e+00> : vector<64x512xf32>
    %3 = tpu.matmul %1, %2, %cst {dimension_numbers = #tpu.dot_dimension_numbers<[1], [0], [0], [1], [0, 0, 1, 1], [], []>} : vector<64x512xbf16>, vector<512x512xbf16>, vector<64x512xf32> -> vector<64x512xf32>
    %c0_4 = arith.constant 0 : index
    %c0_5 = arith.constant 0 : index
    %4 = vector.load %arg4[%c0_4, %c0_5] : memref<1x512xf32, #tpu.memory_space<vmem>>, vector<1x512xf32>
    %5 = vector.broadcast %4 : vector<1x512xf32> to vector<64x512xf32>
    %6 = arith.mulf %3, %5 : vector<64x512xf32>
    %c0_6 = arith.constant 0 : index
    %c0_7 = arith.constant 0 : index
    %7 = vector.load %arg5[%c0_6, %c0_7] : memref<1x512xf32, #tpu.memory_space<vmem>>, vector<1x512xf32>
    %8 = vector.broadcast %7 : vector<1x512xf32> to vector<64x512xf32>
    %9 = arith.addf %6, %8 : vector<64x512xf32>
    %cst_8 = arith.constant 0.000000e+00 : f32
    %10 = vector.broadcast %cst_8 : f32 to vector<64x512xf32>
    %11 = arith.maximumf %9, %10 : vector<64x512xf32>
    %12 = arith.truncf %11 : vector<64x512xf32> to vector<64x512xbf16>
    %c0_9 = arith.constant 0 : index
    %c0_10 = arith.constant 0 : index
    %13 = vector.load %arg9[%c0_9, %c0_10] : memref<512x64xbf16, #tpu.memory_space<vmem>>, vector<512x64xbf16>
    %cst_11 = arith.constant dense<0.000000e+00> : vector<64x64xf32>
    %14 = tpu.matmul %12, %13, %cst_11 {dimension_numbers = #tpu.dot_dimension_numbers<[1], [0], [0], [1], [0, 0, 1, 1], [], []>} : vector<64x512xbf16>, vector<512x64xbf16>, vector<64x64xf32> -> vector<64x64xf32>
    %c0_12 = arith.constant 0 : index
    %c0_13 = arith.constant 0 : index
    %c0_14 = arith.constant 0 : index
    %15 = vector.load %arg2[%c0_12, %c0_13, %c0_14] : memref<1x64x128xbf16, #tpu.memory_space<vmem>>, vector<1x64x128xbf16>
    %16 = vector.shape_cast %15 : vector<1x64x128xbf16> to vector<64x128xbf16>
    %c0_15 = arith.constant 0 : index
    %c0_16 = arith.constant 0 : index
    %17 = vector.load %arg6[%c0_15, %c0_16] : memref<128x512xbf16, #tpu.memory_space<vmem>>, vector<128x512xbf16>
    %cst_17 = arith.constant dense<0.000000e+00> : vector<64x512xf32>
    %18 = tpu.matmul %16, %17, %cst_17 {dimension_numbers = #tpu.dot_dimension_numbers<[1], [0], [0], [1], [0, 0, 1, 1], [], []>} : vector<64x128xbf16>, vector<128x512xbf16>, vector<64x512xf32> -> vector<64x512xf32>
    %c0_18 = arith.constant 0 : index
    %c0_19 = arith.constant 0 : index
    %19 = vector.load %arg7[%c0_18, %c0_19] : memref<1x512xf32, #tpu.memory_space<vmem>>, vector<1x512xf32>
    %20 = vector.broadcast %19 : vector<1x512xf32> to vector<64x512xf32>
    %21 = arith.mulf %18, %20 : vector<64x512xf32>
    %c0_20 = arith.constant 0 : index
    %c0_21 = arith.constant 0 : index
    %22 = vector.load %arg8[%c0_20, %c0_21] : memref<1x512xf32, #tpu.memory_space<vmem>>, vector<1x512xf32>
    %23 = vector.broadcast %22 : vector<1x512xf32> to vector<64x512xf32>
    %24 = arith.addf %21, %23 : vector<64x512xf32>
    %cst_22 = arith.constant 0.000000e+00 : f32
    %25 = vector.broadcast %cst_22 : f32 to vector<64x512xf32>
    %26 = arith.maximumf %24, %25 : vector<64x512xf32>
    %27 = arith.truncf %26 : vector<64x512xf32> to vector<64x512xbf16>
    %c0_23 = arith.constant 0 : index
    %c0_24 = arith.constant 0 : index
    %28 = vector.load %arg10[%c0_23, %c0_24] : memref<512x64xbf16, #tpu.memory_space<vmem>>, vector<512x64xbf16>
    %cst_25 = arith.constant dense<0.000000e+00> : vector<64x64xf32>
    %29 = tpu.matmul %27, %28, %cst_25 {dimension_numbers = #tpu.dot_dimension_numbers<[1], [0], [0], [1], [0, 0, 1, 1], [], []>} : vector<64x512xbf16>, vector<512x64xbf16>, vector<64x64xf32> -> vector<64x64xf32>
    %30 = arith.addf %14, %29 : vector<64x64xf32>
    %c0_26 = arith.constant 0 : index
    %c0_27 = arith.constant 0 : index
    %31 = vector.load %arg11[%c0_26, %c0_27] : memref<1x64xf32, #tpu.memory_space<vmem>>, vector<1x64xf32>
    %32 = vector.broadcast %31 : vector<1x64xf32> to vector<64x64xf32>
    %33 = arith.addf %30, %32 : vector<64x64xf32>
    %c0_28 = arith.constant 0 : index
    %c0_29 = arith.constant 0 : index
    %c0_30 = arith.constant 0 : index
    %34 = vector.load %arg12[%c0_28, %c0_29, %c0_30] : memref<1x64x64xf32, #tpu.memory_space<vmem>>, vector<1x64x64xf32>
    %35 = vector.shape_cast %34 : vector<1x64x64xf32> to vector<64x64xf32>
    %36 = vector.shape_cast %33 : vector<64x64xf32> to vector<1x64x64xf32>
    tpu.vector_store %arg12[%c0_28, %c0_29, %c0_30], %36 {strides = array<i32>} : memref<1x64x64xf32, #tpu.memory_space<vmem>>, vector<1x64x64xf32>,
    return
  }
  func.func @transform_0(%arg0: i32) -> (i32, i32, i32) {
    %c0_i32 = arith.constant 0 : i32
    %c0_i32_0 = arith.constant 0 : i32
    %c0_i32_1 = arith.constant 0 : i32
    return %arg0, %c0_i32, %c0_i32_0 : i32, i32, i32
  }
  func.func @transform_1(%arg0: i32) -> (i32, i32, i32) {
    %c0_i32 = arith.constant 0 : i32
    %c0_i32_0 = arith.constant 0 : i32
    %c0_i32_1 = arith.constant 0 : i32
    return %arg0, %c0_i32, %c0_i32_0 : i32, i32, i32
  }
  func.func @transform_2(%arg0: i32) -> (i32, i32) {
    %c0_i32 = arith.constant 0 : i32
    %c0_i32_0 = arith.constant 0 : i32
    %c0_i32_1 = arith.constant 0 : i32
    return %c0_i32, %c0_i32_0 : i32, i32
  }
  func.func @transform_3(%arg0: i32) -> (i32, i32) {
    %c0_i32 = arith.constant 0 : i32
    %c0_i32_0 = arith.constant 0 : i32
    %c0_i32_1 = arith.constant 0 : i32
    return %c0_i32, %c0_i32_0 : i32, i32
  }
  func.func @transform_4(%arg0: i32) -> (i32, i32) {
    %c0_i32 = arith.constant 0 : i32
    %c0_i32_0 = arith.constant 0 : i32
    %c0_i32_1 = arith.constant 0 : i32
    return %c0_i32, %c0_i32_0 : i32, i32
  }
  func.func @transform_5(%arg0: i32) -> (i32, i32) {
    %c0_i32 = arith.constant 0 : i32
    %c0_i32_0 = arith.constant 0 : i32
    %c0_i32_1 = arith.constant 0 : i32
    return %c0_i32, %c0_i32_0 : i32, i32
  }
  func.func @transform_6(%arg0: i32) -> (i32, i32) {
    %c0_i32 = arith.constant 0 : i32
    %c0_i32_0 = arith.constant 0 : i32
    %c0_i32_1 = arith.constant 0 : i32
    return %c0_i32, %c0_i32_0 : i32, i32
  }
  func.func @transform_7(%arg0: i32) -> (i32, i32) {
    %c0_i32 = arith.constant 0 : i32
    %c0_i32_0 = arith.constant 0 : i32
    %c0_i32_1 = arith.constant 0 : i32
    return %c0_i32, %c0_i32_0 : i32, i32
  }
  func.func @transform_8(%arg0: i32) -> (i32, i32) {
    %c0_i32 = arith.constant 0 : i32
    %c0_i32_0 = arith.constant 0 : i32
    %c0_i32_1 = arith.constant 0 : i32
    return %c0_i32, %c0_i32_0 : i32, i32
  }
  func.func @transform_9(%arg0: i32) -> (i32, i32) {
    %c0_i32 = arith.constant 0 : i32
    %c0_i32_0 = arith.constant 0 : i32
    %c0_i32_1 = arith.constant 0 : i32
    return %c0_i32, %c0_i32_0 : i32, i32
  }
  func.func @transform_10(%arg0: i32) -> (i32, i32) {
    %c0_i32 = arith.constant 0 : i32
    %c0_i32_0 = arith.constant 0 : i32
    %c0_i32_1 = arith.constant 0 : i32
    return %c0_i32, %c0_i32_0 : i32, i32
  }
  func.func @transform_11(%arg0: i32) -> (i32, i32, i32) {
    %c0_i32 = arith.constant 0 : i32
    %c0_i32_0 = arith.constant 0 : i32
    %c0_i32_1 = arith.constant 0 : i32
    return %arg0, %c0_i32, %c0_i32_0 : i32, i32, i32
  }
}

</mosaic_0001>

<llo_original>
// kernel: point_pillar_forward.4
$region0: #{point_pillar_forward.4}
  #allocation0 [shape = 'u32[]', space=smem, size = 0x4, offset = 0x4, fixed_abs, tag = 'smem constant byte address 0x4 - core index']
  #allocation1 [shape = 'u32[144,128]{1,0:T(1,128)}', space=vmem, size = 0x12000, scoped, tag = 'internal scratch']
  %s0 = inlined_call_operand.vmem [shape: bf16[8,64,16], index: 0, kind: input, shape index: {}]
  %s1 = inlined_call_operand.vmem [shape: bf16[16,128], index: 1, kind: input, shape index: {}]
  %s2 = inlined_call_operand.vmem [shape: f32[1,128], index: 2, kind: input, shape index: {}]
  %s3 = inlined_call_operand.vmem [shape: f32[1,128], index: 3, kind: input, shape index: {}]
  %s4 = inlined_call_operand.vmem [shape: bf16[64,128], index: 4, kind: output, shape index: {}]
  %s5 = sld [smem:[#allocation0]]
  $region90: #{point_pillar_forward.4} parent=0
    _
  %s7 = ssub.s32 1, %s5
  %s8 = scalar_select 0, %s7, %s5
  $region1: #{point_pillar_forward.4} parent=0
    #allocation2 [shape = 'u8[65536]{0}', space=vmem, size = 0x10000, scoped, tag = 'input window, operand 0']
    loop: start=0, step=1, limit=6
    $region2: #{point_pillar_forward.4} parent=1 // loop_pre_header
      _
    $region3: #{point_pillar_forward.4} parent=1 // loop_header
      %s10 = sphi 0, %s14
      %p11 = scmp.ge.s32.totalorder %s10, 6
      %s20 = sphi 0, %s22
      %s23 = sphi 0, %s20
      %s24 = sphi 0, %s23
      %s40 = sphi 0, %s24
      %s44 = sphi 0, %s44
      %s46 = sphi 0, %s44
      %s47 = sphi 0, %s46
      %s61 = sphi 0, %s47
      %s65 = sphi 0, %s65
      %s67 = sphi 0, %s65
      %s68 = sphi 0, %s67
      %s82 = sphi 0, %s68
      %s86 = sphi 0, %s86
      %s88 = sphi 0, %s86
      %s89 = sphi 0, %s88
      %s103 = sphi 0, %s89
      %s109 = sphi 0, %s111
      %s112 = sphi 0, %s109
      %s113 = sphi 0, %s112
      %s129 = sphi 0, %s113
    $region4: #{point_pillar_forward.4} parent=1 // loop_header_branch
      %13 = sbr.rel (%p11) target = $region8
    $region5: #{point_pillar_forward.4} parent=1 // loop_body
      %s15 = ssub.s32 %s10, 1
      %s16 = ssub.s32 %s10, 2
      %s17 = sadd.s32 %s10, 1
      %s18 = ssub.s32 %s10, %s17
      %p19 = scmp.eq.s32.totalorder %s18, 0
      %s21 = sadd.s32 %s20, 1
      %s22 = scalar_select %p19, %s20, %s21
      %p25 = pneg %p19
      %p26 = scmp.eq.s32.totalorder %s10, 3
      %p27 = por %p25, %p26
      %p28 = scmp.ne.s32.totalorder %s20, %s23
      %p29 = scmp.eq.s32.totalorder %s10, 0
      %p30 = por %p28, %p29
      %p31 = scmp.ne.s32.totalorder %s20, %s23
      %p32 = scmp.eq.s32.totalorder %s15, 3
      %p33 = por %p31, %p32
      %p34 = scmp.ne.s32.totalorder %s23, %s24
      %p35 = scmp.eq.s32.totalorder %s15, 0
      %p36 = por %p34, %p35
      %p37 = scmp.ne.s32.totalorder %s23, %s24
      %p38 = scmp.eq.s32.totalorder %s16, 3
      %p39 = por %p37, %p38
      %p41 = scmp.ne.s32.totalorder %s24, %s40
      %p42 = scmp.eq.s32.totalorder %s16, 0
      %p43 = por %p41, %p42
      %s45 = sadd.s32 %s44, 1
      %p48 = scmp.eq.s32.totalorder %s10, 3
      %p49 = scmp.ne.s32.totalorder %s44, %s46
      %p50 = scmp.eq.s32.totalorder %s10, 0
      %p51 = por %p49, %p50
      %p52 = scmp.ne.s32.totalorder %s44, %s46
      %p53 = scmp.eq.s32.totalorder %s15, 3
      %p54 = por %p52, %p53
      %p55 = scmp.ne.s32.totalorder %s46, %s47
      %p56 = scmp.eq.s32.totalorder %s15, 0
      %p57 = por %p55, %p56
      %p58 = scmp.ne.s32.totalorder %s46, %s47
      %p59 = scmp.eq.s32.totalorder %s16, 3
      %p60 = por %p58, %p59
      %p62 = scmp.ne.s32.totalorder %s47, %s61
      %p63 = scmp.eq.s32.totalorder %s16, 0
      %p64 = por %p62, %p63
      %s66 = sadd.s32 %s65, 1
      %p69 = scmp.eq.s32.totalorder %s10, 3
      %p70 = scmp.ne.s32.totalorder %s65, %s67
      %p71 = scmp.eq.s32.totalorder %s10, 0
      %p72 = por %p70, %p71
      %p73 = scmp.ne.s32.totalorder %s65, %s67
      %p74 = scmp.eq.s32.totalorder %s15, 3
      %p75 = por %p73, %p74
      %p76 = scmp.ne.s32.totalorder %s67, %s68
      %p77 = scmp.eq.s32.totalorder %s15, 0
      %p78 = por %p76, %p77
      %p79 = scmp.ne.s32.totalorder %s67, %s68
      %p80 = scmp.eq.s32.totalorder %s16, 3
      %p81 = por %p79, %p80
      %p83 = scmp.ne.s32.totalorder %s68, %s82
      %p84 = scmp.eq.s32.totalorder %s16, 0
      %p85 = por %p83, %p84
      %s87 = sadd.s32 %s86, 1
      %p90 = scmp.eq.s32.totalorder %s10, 3
      %p91 = scmp.ne.s32.totalorder %s86, %s88
      %p92 = scmp.eq.s32.totalorder %s10, 0
      %p93 = por %p91, %p92
      %p94 = scmp.ne.s32.totalorder %s86, %s88
      %p95 = scmp.eq.s32.totalorder %s15, 3
      %p96 = por %p94, %p95
      %p97 = scmp.ne.s32.totalorder %s88, %s89
      %p98 = scmp.eq.s32.totalorder %s15, 0
      %p99 = por %p97, %p98
      %p100 = scmp.ne.s32.totalorder %s88, %s89
      %p101 = scmp.eq.s32.totalorder %s16, 3
      %p102 = por %p100, %p101
      %p104 = scmp.ne.s32.totalorder %s89, %s103
      %p105 = scmp.eq.s32.totalorder %s16, 0
      %p106 = por %p104, %p105
      %s107 = ssub.s32 %s10, %s17
      %p108 = scmp.eq.s32.totalorder %s107, 0
      %s110 = sadd.s32 %s109, 1
      %s111 = scalar_select %p108, %s109, %s110
      %p114 = pneg %p108
      %p115 = scmp.eq.s32.totalorder %s10, 3
      %p116 = por %p114, %p115
      %p117 = scmp.ne.s32.totalorder %s109, %s112
      %p118 = scmp.eq.s32.totalorder %s10, 0
      %p119 = por %p117, %p118
      %p120 = scmp.ne.s32.totalorder %s109, %s112
      %p121 = scmp.eq.s32.totalorder %s15, 3
      %p122 = por %p120, %p121
      %p123 = scmp.ne.s32.totalorder %s112, %s113
      %p124 = scmp.eq.s32.totalorder %s15, 0
      %p125 = por %p123, %p124
      %p126 = scmp.ne.s32.totalorder %s112, %s113
      %p127 = scmp.eq.s32.totalorder %s16, 3
      %p128 = por %p126, %p127
      %p130 = scmp.ne.s32.totalorder %s113, %s129
      %p131 = scmp.eq.s32.totalorder %s16, 0
      %p132 = por %p130, %p131
      %p133 = scmp.le.s32.totalorder 1, %s10
      %p134 = scmp.lt.s32.totalorder %s10, 5
      %p135 = pnand %p133, %p134
      %p136 = pneg %p135
      // Predicated region
      $region9: #{point_pillar_forward.4} parent=5 // pred_check
        _
      $region10: #{point_pillar_forward.4} parent=5 // pred_check_branch
        %138 = sbr.rel (%p135) target = $region12
      $region11: #{point_pillar_forward.4} parent=5 // pred_region
        %s139 = ssub.s32 %s10, 1
        // Predicated region
        $region13: #{point_pillar_forward.4} parent=11 // pred_check
          %p140 = pneg %p57
        $region14: #{point_pillar_forward.4} parent=11 // pred_check_branch
          %142 = sbr.rel (%p140) target = $region16
        $region15: #{point_pillar_forward.4} parent=11 // pred_region
          _
        $region16: #{point_pillar_forward.4} parent=11 // pred_fallthru
          _
        // Predicated region
        $region17: #{point_pillar_forward.4} parent=11 // pred_check
          %p143 = pneg %p78
        $region18: #{point_pillar_forward.4} parent=11 // pred_check_branch
          %145 = sbr.rel (%p143) target = $region20
        $region19: #{point_pillar_forward.4} parent=11 // pred_region
          _
        $region20: #{point_pillar_forward.4} parent=11 // pred_fallthru
          _
        // Predicated region
        $region21: #{point_pillar_forward.4} parent=11 // pred_check
          %p146 = pneg %p99
        $region22: #{point_pillar_forward.4} parent=11 // pred_check_branch
          %148 = sbr.rel (%p146) target = $region24
        $region23: #{point_pillar_forward.4} parent=11 // pred_region
          _
        $region24: #{point_pillar_forward.4} parent=11 // pred_fallthru
          _
      $region12: #{point_pillar_forward.4} parent=5 // pred_fallthru
        _
      %p149 = scmp.lt.s32.totalorder %s10, 4
      // Predicated region
      $region25: #{point_pillar_forward.4} parent=5 // pred_check
        %p150 = pneg %p149
      $region26: #{point_pillar_forward.4} parent=5 // pred_check_branch
        %152 = sbr.rel (%p150) target = $region28
      $region27: #{point_pillar_forward.4} parent=5 // pred_region
        // Predicated region
        $region29: #{point_pillar_forward.4} parent=27 // pred_check
          %p153 = pneg %p30
        $region30: #{point_pillar_forward.4} parent=27 // pred_check_branch
          %155 = sbr.rel (%p153) target = $region32
        $region31: #{point_pillar_forward.4} parent=27 // pred_region
          %s156 = sand.u32 %s20, 1
          %s157 = sand.u32 %s20, 1
          %s158 = smul.addr %s157, 64
          %s159 = scalar_lea.vmem [#allocation2], %s158
          %s160 = smul.u32 2, %s10
          %s161 = smul.addr %s160, 4
          %s162 = scalar_lea.vmem %s0, %s161
          // Predicated region
          $region33: #{point_pillar_forward.4} parent=31 // pred_check
            _
          $region34: #{point_pillar_forward.4} parent=31 // pred_check_branch
            %164 = sbr.rel (0) target = $region36
          $region35: #{point_pillar_forward.4} parent=31 // pred_region
            // Predicated region
            $region37: #{point_pillar_forward.4} parent=35 // pred_check
              _
            $region38: #{point_pillar_forward.4} parent=35 // pred_check_branch
              %166 = sbr.rel target = $region40
            $region39: #{point_pillar_forward.4} parent=35 // pred_region
              // Predicated region
              $region52: #{point_pillar_forward.4} parent=39 // pred_check
                _
              $region53: #{point_pillar_forward.4} parent=39 // pred_check_branch
                %211 = sbr.rel (0) target = $region55
              $region54: #{point_pillar_forward.4} parent=39 // pred_region
                loop: start=0, step=1, limit=1
                $region56: #{point_pillar_forward.4} parent=54 // loop_pre_header
                  _
                $region57: #{point_pillar_forward.4} parent=54 // loop_header
                  %s213 = sphi 0, %s217
                  %p214 = scmp.ge.s32.totalorder %s213, 1
                  %s218 = sphi %s162, %s162
                  %s219 = sphi %s159, %s159
                $region58: #{point_pillar_forward.4} parent=54 // loop_header_branch
                  %216 = sbr.rel (%p214) target = $region62
                $region59: #{point_pillar_forward.4} parent=54 // loop_body
                  _
                $region60: #{point_pillar_forward.4} parent=54 // loop_footer
                  %s217 = sadd.s32 1, %s213
                $region61: #{point_pillar_forward.4} parent=54 // loop_footer_branch
                  %212 = sbr.rel target = $region57
                $region62: #{point_pillar_forward.4} parent=54 // loop_exit
                  _
                loop: start=0, step=1, limit=1
                $region63: #{point_pillar_forward.4} parent=54 // loop_pre_header
                  _
                $region64: #{point_pillar_forward.4} parent=54 // loop_header
                  %s222 = sphi 0, %s226
                  %p223 = scmp.ge.s32.totalorder %s222, 1
                  %s227 = sphi %s162, %s162
                  %s228 = sphi %s159, %s159
                $region65: #{point_pillar_forward.4} parent=54 // loop_header_branch
                  %225 = sbr.rel (%p223) target = $region69
                $region66: #{point_pillar_forward.4} parent=54 // loop_body
                  %v229 = vld [vmem:[%s227] sm:$0xf]
                  %230 = vst [vmem:[%s228] sm:$0xf] %v229
                  %v231 = vld [vmem:[%s227 + $0x4] sm:$0xf]
                  %232 = vst [vmem:[%s228 + $0x4] sm:$0xf] %v231
                  %v233 = vld [vmem:[%s227 + $0x20] sm:$0xf]
                  %234 = vst [vmem:[%s228 + $0x8] sm:$0xf] %v233
                  %v235 = vld [vmem:[%s227 + $0x24] sm:$0xf]
                  %236 = vst [vmem:[%s228 + $0xc] sm:$0xf] %v235
                  %v237 = vld [vmem:[%s227 + $0x40] sm:$0xf]
                  %238 = vst [vmem:[%s228 + $0x10] sm:$0xf] %v237
                  %v239 = vld [vmem:[%s227 + $0x44] sm:$0xf]
                  %240 = vst [vmem:[%s228 + $0x14] sm:$0xf] %v239
                  %v241 = vld [vmem:[%s227 + $0x60] sm:$0xf]
                  %242 = vst [vmem:[%s228 + $0x18] sm:$0xf] %v241
                  %v243 = vld [vmem:[%s227 + $0x64] sm:$0xf]
                  %244 = vst [vmem:[%s228 + $0x1c] sm:$0xf] %v243
                  %v245 = vld [vmem:[%s227 + $0x80] sm:$0xf]
                  %246 = vst [vmem:[%s228 + $0x20] sm:$0xf] %v245
                  %v247 = vld [vmem:[%s227 + $0x84] sm:$0xf]
                  %248 = vst [vmem:[%s228 + $0x24] sm:$0xf] %v247
                  %v249 = vld [vmem:[%s227 + $0xa0] sm:$0xf]
                  %250 = vst [vmem:[%s228 + $0x28] sm:$0xf] %v249
                  %v251 = vld [vmem:[%s227 + $0xa4] sm:$0xf]
                  %252 = vst [vmem:[%s228 + $0x2c] sm:$0xf] %v251
                  %v253 = vld [vmem:[%s227 + $0xc0] sm:$0xf]
                  %254 = vst [vmem:[%s228 + $0x30] sm:$0xf] %v253
                  %v255 = vld [vmem:[%s227 + $0xc4] sm:$0xf]
                  %256 = vst [vmem:[%s228 + $0x34] sm:$0xf] %v255
                  %v257 = vld [vmem:[%s227 + $0xe0] sm:$0xf]
                  %258 = vst [vmem:[%s228 + $0x38] sm:$0xf] %v257
                  %v259 = vld [vmem:[%s227 + $0xe4] sm:$0xf]
                  %260 = vst [vmem:[%s228 + $0x3c] sm:$0xf] %v259
                $region67: #{point_pillar_forward.4} parent=54 // loop_footer
                  %s226 = sadd.s32 1, %s222
                $region68: #{point_pillar_forward.4} parent=54 // loop_footer_branch
                  %221 = sbr.rel target = $region64
                $region69: #{point_pillar_forward.4} parent=54 // loop_exit
                  _
              $region55: #{point_pillar_forward.4} parent=39 // pred_fallthru
                _
            $region40: #{point_pillar_forward.4} parent=35 // pred_fallthru
              _
            // Predicated region
            $region41: #{point_pillar_forward.4} parent=35 // pred_check
              _
            $region42: #{point_pillar_forward.4} parent=35 // pred_check_branch
              %168 = sbr.rel (0) target = $region44
            $region43: #{point_pillar_forward.4} parent=35 // pred_region
              loop: start=0, step=1, limit=1
              $region45: #{point_pillar_forward.4} parent=43 // loop_pre_header
                _
              $region46: #{point_pillar_forward.4} parent=43 // loop_header
                %s171 = sphi 0, %s175
                %p172 = scmp.ge.s32.totalorder %s171, 1
                %s176 = sphi %s162, %s162
                %s177 = sphi %s159, %s159
              $region47: #{point_pillar_forward.4} parent=43 // loop_header_branch
                %174 = sbr.rel (%p172) target = $region51
              $region48: #{point_pillar_forward.4} parent=43 // loop_body
                %v178 = vld [vmem:[%s176] sm:$0xf]
                %179 = vst [vmem:[%s177] sm:$0xf] %v178
                %v180 = vld [vmem:[%s176 + $0x4] sm:$0xf]
                %181 = vst [vmem:[%s177 + $0x4] sm:$0xf] %v180
                %v182 = vld [vmem:[%s176 + $0x20] sm:$0xf]
                %183 = vst [vmem:[%s177 + $0x8] sm:$0xf] %v182
                %v184 = vld [vmem:[%s176 + $0x24] sm:$0xf]
                %185 = vst [vmem:[%s177 + $0xc] sm:$0xf] %v184
                %v186 = vld [vmem:[%s176 + $0x40] sm:$0xf]
                %187 = vst [vmem:[%s177 + $0x10] sm:$0xf] %v186
                %v188 = vld [vmem:[%s176 + $0x44] sm:$0xf]
                %189 = vst [vmem:[%s177 + $0x14] sm:$0xf] %v188
                %v190 = vld [vmem:[%s176 + $0x60] sm:$0xf]
                %191 = vst [vmem:[%s177 + $0x18] sm:$0xf] %v190
                %v192 = vld [vmem:[%s176 + $0x64] sm:$0xf]
                %193 = vst [vmem:[%s177 + $0x1c] sm:$0xf] %v192
                %v194 = vld [vmem:[%s176 + $0x80] sm:$0xf]
                %195 = vst [vmem:[%s177 + $0x20] sm:$0xf] %v194
                %v196 = vld [vmem:[%s176 + $0x84] sm:$0xf]
                %197 = vst [vmem:[%s177 + $0x24] sm:$0xf] %v196
                %v198 = vld [vmem:[%s176 + $0xa0] sm:$0xf]
                %199 = vst [vmem:[%s177 + $0x28] sm:$0xf] %v198
                %v200 = vld [vmem:[%s176 + $0xa4] sm:$0xf]
                %201 = vst [vmem:[%s177 + $0x2c] sm:$0xf] %v200
                %v202 = vld [vmem:[%s176 + $0xc0] sm:$0xf]
                %203 = vst [vmem:[%s177 + $0x30] sm:$0xf] %v202
                %v204 = vld [vmem:[%s176 + $0xc4] sm:$0xf]
                %205 = vst [vmem:[%s177 + $0x34] sm:$0xf] %v204
                %v206 = vld [vmem:[%s176 + $0xe0] sm:$0xf]
                %207 = vst [vmem:[%s177 + $0x38] sm:$0xf] %v206
                %v208 = vld [vmem:[%s176 + $0xe4] sm:$0xf]
                %209 = vst [vmem:[%s177 + $0x3c] sm:$0xf] %v208
              $region49: #{point_pillar_forward.4} parent=43 // loop_footer
                %s175 = sadd.s32 1, %s171
              $region50: #{point_pillar_forward.4} parent=43 // loop_footer_branch
                %170 = sbr.rel target = $region46
              $region51: #{point_pillar_forward.4} parent=43 // loop_exit
                _
            $region44: #{point_pillar_forward.4} parent=35 // pred_fallthru
              _
          $region36: #{point_pillar_forward.4} parent=31 // pred_fallthru
            _
          %261 = vnop
        $region32: #{point_pillar_forward.4} parent=27 // pred_fallthru
          _
      $region28: #{point_pillar_forward.4} parent=5 // pred_fallthru
        _
      %p262 = scmp.le.s32.totalorder 1, %s10
      %p263 = scmp.lt.s32.totalorder %s10, 5
      %p264 = pnand %p262, %p263
      %p265 = pneg %p264
      // Predicated region
      $region70: #{point_pillar_forward.4} parent=5 // pred_check
        _
      $region71: #{point_pillar_forward.4} parent=5 // pred_check_branch
        %267 = sbr.rel (%p264) target = $region73
      $region72: #{point_pillar_forward.4} parent=5 // pred_region
        %s268 = ssub.s32 %s10, 1
        %s269 = sand.u32 %s23, 1
        %s270 = sand.u32 %s23, 1
        %s271 = smul.addr %s270, 64
        %s272 = scalar_lea.vmem [#allocation2], %s271
        // Predicated region
        $region74: #{point_pillar_forward.4} parent=72 // pred_check
          %p273 = pneg %p36
        $region75: #{point_pillar_forward.4} parent=72 // pred_check_branch
          %275 = sbr.rel (%p273) target = $region77
        $region76: #{point_pillar_forward.4} parent=72 // pred_region
          _
        $region77: #{point_pillar_forward.4} parent=72 // pred_fallthru
          _
        %s276 = sand.u32 %s23, 1
        %s277 = sand.u32 %s23, 1
        %s278 = smul.addr %s277, 64
        %s279 = scalar_lea.vmem [#allocation2], %s278
        %p280 = pneg %p36
        %p281 = pneg %p33
        %p282 = pneg %p57
        %p283 = pneg %p54
        %p284 = pneg %p78
        %p285 = pneg %p75
        %p286 = pneg %p99
        %p287 = pneg %p96
        %p288 = pneg %p125
        %p289 = pneg %p122
        %s290 = smul.u32 2, %s15
        %p291 = scmp.lt.s32.totalorder %s290, 7
        %s292 = scalar_select %p291, %s290, 7
        %s293 = smul.addr %s292, 4
        %s294 = scalar_lea.vmem %s4, %s293
        %s295 = smul.u32 2, %s15
        %s296 = smul.u32 2, %s15
        %p297 = scmp.lt.s32.totalorder %s296, 7
        %s298 = scalar_select %p297, %s296, 7
        %s299 = smul.addr %s298, 4
        %s300 = scalar_lea.vmem %s4, %s299
        %s301 = smul.u32 2, %s15
        %v303 = vld [vmem:[%s272] sm:$0xf]
        %v304 = vld [vmem:[%s272 + $0x4] sm:$0xf]
        %v305 = vld [vmem:[%s272 + $0x8] sm:$0xf]
        %v306 = vld [vmem:[%s272 + $0xc] sm:$0xf]
        %v307 = vld [vmem:[%s272 + $0x10] sm:$0xf]
        %v308 = vld [vmem:[%s272 + $0x14] sm:$0xf]
        %v309 = vld [vmem:[%s272 + $0x18] sm:$0xf]
        %v310 = vld [vmem:[%s272 + $0x1c] sm:$0xf]
        %v311 = vld [vmem:[%s272 + $0x20] sm:$0xf]
        %v312 = vld [vmem:[%s272 + $0x24] sm:$0xf]
        %v313 = vld [vmem:[%s272 + $0x28] sm:$0xf]
        %v314 = vld [vmem:[%s272 + $0x2c] sm:$0xf]
        %v315 = vld [vmem:[%s272 + $0x30] sm:$0xf]
        %v316 = vld [vmem:[%s272 + $0x34] sm:$0xf]
        %v317 = vld [vmem:[%s272 + $0x38] sm:$0xf]
        %v318 = vld [vmem:[%s272 + $0x3c] sm:$0xf]
        %v319 = vld [vmem:[%s1] sm:$0xf]
        %v320 = vld [vmem:[%s1 + $0x4] sm:$0xf]
        %v337 = vunpack.c.l.b16 %v303
        %v338 = vunpack.c.l.b16 %v304
        %v339 = vunpack.c.l.b16 %v305
        %v340 = vunpack.c.l.b16 %v306
        %v341 = vunpack.c.l.b16 %v307
        %v342 = vunpack.c.l.b16 %v308
        %v343 = vunpack.c.l.b16 %v309
        %v344 = vunpack.c.l.b16 %v310
        %v345 = vunpack.c.l.b16 %v311
        %v346 = vunpack.c.l.b16 %v312
        %v347 = vunpack.c.l.b16 %v313
        %v348 = vunpack.c.l.b16 %v314
        %v349 = vunpack.c.l.b16 %v315
        %v350 = vunpack.c.l.b16 %v316
        %v351 = vunpack.c.l.b16 %v317
        %v352 = vunpack.c.l.b16 %v318
        %v353 = vpack.c.b16 %v338, %v337
        %v354 = vpack.c.b16 %v340, %v339
        %v355 = vpack.c.b16 %v342, %v341
        %v356 = vpack.c.b16 %v344, %v343
        %v357 = vpack.c.b16 %v346, %v345
        %v358 = vpack.c.b16 %v348, %v347
        %v359 = vpack.c.b16 %v350, %v349
        %v360 = vpack.c.b16 %v352, %v351
        %v363 = vunpack.c.l.b16 %v319
        %v364 = vunpack.c.l.b16 %v320
        %v365 = vpack.c.b16 %v364, %v363
        %vm367 = vcmask 130048
        %v369 = vsel %vm367, %v353, 0
        %v372 = vsel %vm367, %v354, 0
        %v375 = vsel %vm367, %v355, 0
        %v378 = vsel %vm367, %v356, 0
        %v381 = vsel %vm367, %v357, 0
        %v384 = vsel %vm367, %v358, 0
        %v387 = vsel %vm367, %v359, 0
        %v390 = vsel %vm367, %v360, 0
        %392 = vmatprep.subr.bf16.mxu0 0
        %393 = vmatpush1.bf16.msra.mxu0 %v365
        %394 = vmatprep.subr.bf16.mxu0 0
        %395 = vmatpush1.bf16.msra.mxu0 0
        %396 = vmatprep.subr.bf16.mxu0 0
        %397 = vmatpush1.bf16.msra.mxu0 0
        %398 = vmatprep.subr.bf16.mxu0 0
        %399 = vmatpush1.bf16.msra.mxu0 0
        %400 = vmatprep.subr.bf16.mxu0 0
        %401 = vmatpush1.bf16.msra.mxu0 0
        %402 = vmatprep.subr.bf16.mxu0 0
        %403 = vmatpush1.bf16.msra.mxu0 0
        %404 = vmatprep.subr.bf16.mxu0 0
        %405 = vmatpush1.bf16.msra.mxu0 0
        %406 = vmatprep.subr.bf16.mxu0 0
        %407 = vmatpush1.bf16.msra.mxu0 0
        %408 = vmatprep.subr.bf16.mxu0 0
        %409 = vmatpush1.bf16.msra.mxu0 0
        %410 = vmatprep.subr.bf16.mxu0 0
        %411 = vmatpush1.bf16.msra.mxu0 0
        %412 = vmatprep.subr.bf16.mxu0 0
        %413 = vmatpush1.bf16.msra.mxu0 0
        %414 = vmatprep.subr.bf16.mxu0 0
        %415 = vmatpush1.bf16.msra.mxu0 0
        %416 = vmatprep.subr.bf16.mxu0 0
        %417 = vmatpush1.bf16.msra.mxu0 0
        %418 = vmatprep.subr.bf16.mxu0 0
        %419 = vmatpush1.bf16.msra.mxu0 0
        %420 = vmatprep.subr.bf16.mxu0 0
        %421 = vmatpush1.bf16.msra.mxu0 0
        %422 = vmatprep.subr.bf16.mxu0 0
        %423 = vmatpush1.bf16.msra.mxu0 0
        %424 = vmatprep.mubr.bf16.mxu0 0
        %425 = vmatmul.mubr.bf16.gmra.mrb[0].mxu0 %v369
        %v426 = vpop.f32.mrb[0].mxu0
        %v427 = vadd.f32 0.0, %v426
        %v428 = vpop.f32.mrb[0].mxu0
        %v429 = vpop.f32.mrb[0].mxu0
        %v430 = vadd.f32 0.0, %v429
        %v431 = vpop.f32.mrb[0].mxu0
        %432 = vmatprep.mubr.bf16.mxu0 0
        %433 = vmatmul.mubr.bf16.gmra.mrb[0].mxu0 %v372
        %v434 = vpop.f32.mrb[0].mxu0
        %v435 = vadd.f32 0.0, %v434
        %v436 = vpop.f32.mrb[0].mxu0
        %v437 = vpop.f32.mrb[0].mxu0
        %v438 = vadd.f32 0.0, %v437
        %v439 = vpop.f32.mrb[0].mxu0
        %440 = vmatprep.mubr.bf16.mxu0 0
        %441 = vmatmul.mubr.bf16.gmra.mrb[0].mxu0 %v375
        %v442 = vpop.f32.mrb[0].mxu0
        %v443 = vadd.f32 0.0, %v442
        %v444 = vpop.f32.mrb[0].mxu0
        %v445 = vpop.f32.mrb[0].mxu0
        %v446 = vadd.f32 0.0, %v445
        %v447 = vpop.f32.mrb[0].mxu0
        %448 = vmatprep.mubr.bf16.mxu0 0
        %449 = vmatmul.mubr.bf16.gmra.mrb[0].mxu0 %v378
        %v450 = vpop.f32.mrb[0].mxu0
        %v451 = vadd.f32 0.0, %v450
        %v452 = vpop.f32.mrb[0].mxu0
        %v453 = vpop.f32.mrb[0].mxu0
        %v454 = vadd.f32 0.0, %v453
        %v455 = vpop.f32.mrb[0].mxu0
        %456 = vmatprep.mubr.bf16.mxu0 0
        %457 = vmatmul.mubr.bf16.gmra.mrb[0].mxu0 %v381
        %v458 = vpop.f32.mrb[0].mxu0
        %v459 = vadd.f32 0.0, %v458
        %v460 = vpop.f32.mrb[0].mxu0
        %v461 = vpop.f32.mrb[0].mxu0
        %v462 = vadd.f32 0.0, %v461
        %v463 = vpop.f32.mrb[0].mxu0
        %464 = vmatprep.mubr.bf16.mxu0 0
        %465 = vmatmul.mubr.bf16.gmra.mrb[0].mxu0 %v384
        %v466 = vpop.f32.mrb[0].mxu0
        %v467 = vadd.f32 0.0, %v466
        %v468 = vpop.f32.mrb[0].mxu0
        %v469 = vpop.f32.mrb[0].mxu0
        %v470 = vadd.f32 0.0, %v469
        %v471 = vpop.f32.mrb[0].mxu0
        %472 = vmatprep.mubr.bf16.mxu0 0
        %473 = vmatmul.mubr.bf16.gmra.mrb[0].mxu0 %v387
        %v474 = vpop.f32.mrb[0].mxu0
        %v475 = vadd.f32 0.0, %v474
        %v476 = vpop.f32.mrb[0].mxu0
        %v477 = vpop.f32.mrb[0].mxu0
        %v478 = vadd.f32 0.0, %v477
        %v479 = vpop.f32.mrb[0].mxu0
        %480 = vmatprep.mubr.bf16.mxu0 0
        %481 = vmatmul.mubr.bf16.gmra.mrb[0].mxu0 %v390
        %v482 = vpop.f32.mrb[0].mxu0
        %v483 = vadd.f32 0.0, %v482
        %v484 = vpop.f32.mrb[0].mxu0
        %v485 = vpop.f32.mrb[0].mxu0
        %v486 = vadd.f32 0.0, %v485
        %v487 = vpop.f32.mrb[0].mxu0
        %488 = vdwg.mxu0
        %v489 = vld [vmem:[%s2] sm:$0x1]
        %v491 = vlaneseq
        %v492 = vshrl.u32 %v491, 7
        %v493 = vsub.s32 0, %v492
        %v494 = vrot.slane %v489, %v493
        %v496 = vmul.f32 %v427, %v494
        %v497 = vmul.f32 %v430, %v494
        %v498 = vmul.f32 %v435, %v494
        %v499 = vmul.f32 %v438, %v494
        %v500 = vmul.f32 %v443, %v494
        %v501 = vmul.f32 %v446, %v494
        %v502 = vmul.f32 %v451, %v494
        %v503 = vmul.f32 %v454, %v494
        %v504 = vmul.f32 %v459, %v494
        %v505 = vmul.f32 %v462, %v494
        %v506 = vmul.f32 %v467, %v494
        %v507 = vmul.f32 %v470, %v494
        %v508 = vmul.f32 %v475, %v494
        %v509 = vmul.f32 %v478, %v494
        %v510 = vmul.f32 %v483, %v494
        %v511 = vmul.f32 %v486, %v494
        %v512 = vld [vmem:[%s3] sm:$0x1]
        %v514 = vlaneseq
        %v515 = vshrl.u32 %v514, 7
        %v516 = vsub.s32 0, %v515
        %v517 = vrot.slane %v512, %v516
        %v519 = vadd.f32 %v496, %v517
        %v520 = vadd.f32 %v497, %v517
        %v521 = vadd.f32 %v498, %v517
        %v522 = vadd.f32 %v499, %v517
        %v523 = vadd.f32 %v500, %v517
        %v524 = vadd.f32 %v501, %v517
        %v525 = vadd.f32 %v502, %v517
        %v526 = vadd.f32 %v503, %v517
        %v527 = vadd.f32 %v504, %v517
        %v528 = vadd.f32 %v505, %v517
        %v529 = vadd.f32 %v506, %v517
        %v530 = vadd.f32 %v507, %v517
        %v531 = vadd.f32 %v508, %v517
        %v532 = vadd.f32 %v509, %v517
        %v533 = vadd.f32 %v510, %v517
        %v534 = vadd.f32 %v511, %v517
        %v535 = vmax.f32 %v519, 0.0
        %v536 = vmax.f32 %v520, 0.0
        %v537 = vmax.f32 %v521, 0.0
        %v538 = vmax.f32 %v522, 0.0
        %v539 = vmax.f32 %v523, 0.0
        %v540 = vmax.f32 %v524, 0.0
        %v541 = vmax.f32 %v525, 0.0
        %v542 = vmax.f32 %v526, 0.0
        %v543 = vmax.f32 %v527, 0.0
        %v544 = vmax.f32 %v528, 0.0
        %v545 = vmax.f32 %v529, 0.0
        %v546 = vmax.f32 %v530, 0.0
        %v547 = vmax.f32 %v531, 0.0
        %v548 = vmax.f32 %v532, 0.0
        %v549 = vmax.f32 %v533, 0.0
        %v550 = vmax.f32 %v534, 0.0
        %v551 = vmax.f32 %v535, %v537
        %v552 = vmax.f32 %v536, %v538
        %v553 = vmax.f32 %v551, %v539
        %v554 = vmax.f32 %v552, %v540
        %v555 = vmax.f32 %v553, %v541
        %v556 = vmax.f32 %v554, %v542
        %v557 = vmax.f32 %v555, %v543
        %v558 = vmax.f32 %v556, %v544
        %v559 = vmax.f32 %v557, %v545
        %v560 = vmax.f32 %v558, %v546
        %v561 = vmax.f32 %v559, %v547
        %v562 = vmax.f32 %v560, %v548
        %v563 = vmax.f32 %v561, %v549
        %v564 = vmax.f32 %v562, %v550
        %v565 = vpack.c.bf16 %v564, %v563
        %v567 = vunpack.c.l.b16 %v565
        %v568 = vunpack.c.h.b16 %v565
        %v569 = vpack.c.b16 %v567, %v567
        %v570 = vpack.c.b16 %v568, %v568
        %573 = vst [vmem:[%s300] sm:$0xf] %v569
        %574 = vst [vmem:[%s300 + $0x4] sm:$0xf] %v570
        %s575 = smul.u32 2, %s15
        %p576 = scmp.lt.s32.totalorder %s575, 7
        %s577 = scalar_select %p576, %s575, 7
        %s578 = smul.addr %s577, 4
        %s579 = scalar_lea.vmem %s4, %s578
        // Predicated region
        $region78: #{point_pillar_forward.4} parent=72 // pred_check
          %p580 = pneg %p122
        $region79: #{point_pillar_forward.4} parent=72 // pred_check_branch
          %582 = sbr.rel (%p580) target = $region81
        $region80: #{point_pillar_forward.4} parent=72 // pred_region
          %s583 = smul.u32 2, %s15
        $region81: #{point_pillar_forward.4} parent=72 // pred_fallthru
          _
      $region73: #{point_pillar_forward.4} parent=5 // pred_fallthru
        _
      %p584 = scmp.le.s32.totalorder 2, %s10
      // Predicated region
      $region82: #{point_pillar_forward.4} parent=5 // pred_check
        %p585 = pneg %p584
      $region83: #{point_pillar_forward.4} parent=5 // pred_check_branch
        %587 = sbr.rel (%p585) target = $region85
      $region84: #{point_pillar_forward.4} parent=5 // pred_region
        %s588 = ssub.s32 %s10, 2
        // Predicated region
        $region86: #{point_pillar_forward.4} parent=84 // pred_check
          %p589 = pneg %p128
        $region87: #{point_pillar_forward.4} parent=84 // pred_check_branch
          %591 = sbr.rel (%p589) target = $region89
        $region88: #{point_pillar_forward.4} parent=84 // pred_region
          %s592 = smul.u32 2, %s16
          %p593 = scmp.lt.s32.totalorder %s592, 7
          %s594 = scalar_select %p593, %s592, 7
          %s595 = smul.addr %s594, 4
          %s596 = scalar_lea.vmem %s4, %s595
        $region89: #{point_pillar_forward.4} parent=84 // pred_fallthru
          _
      $region85: #{point_pillar_forward.4} parent=5 // pred_fallthru
        _
    $region6: #{point_pillar_forward.4} parent=1 // loop_footer
      %s14 = sadd.s32 1, %s10
    $region7: #{point_pillar_forward.4} parent=1 // loop_footer_branch
      %9 = sbr.rel target = $region3
    $region8: #{point_pillar_forward.4} parent=1 // loop_exit
      _

// kernel: point_pillar_forward.5
$region0: #{point_pillar_forward.5}
  #allocation0 [shape = 'u32[]', space=smem, size = 0x4, offset = 0x4, fixed_abs, tag = 'smem constant byte address 0x4 - core index']
  #allocation1 [shape = 'u32[144,128]{1,0:T(1,128)}', space=vmem, size = 0x12000, scoped, tag = 'internal scratch']
  #allocation2 [shape = 'bf16[18,18,128]{2,1,0:T(8,128)(2,1)}', space=vmem, size = 0x1b000, scoped, tag = 'scratch operand']
  %s0 = inlined_call_operand.vmem [shape: bf16[2,256,576], index: 0, kind: input, shape index: {}]
  %s1 = inlined_call_operand.vmem [shape: bf16[576,128], index: 1, kind: input, shape index: {}]
  %s2 = inlined_call_operand.vmem [shape: bf16[3,1152,128], index: 2, kind: input, shape index: {}]
  %s3 = inlined_call_operand.vmem [shape: f32[4,128], index: 3, kind: input, shape index: {}]
  %s4 = inlined_call_operand.vmem [shape: f32[4,128], index: 4, kind: input, shape index: {}]
  %s5 = inlined_call_operand.vmem [shape: bf16[2,256,128], index: 5, kind: output, shape index: {}]
  %s6 = sld [smem:[#allocation0]]
  $region61: #{point_pillar_forward.5} parent=0
    _
  %s8 = ssub.s32 1, %s6
  %s9 = scalar_select 0, %s8, %s6
  loop: start=0, step=1, limit=10
  $region2: #{point_pillar_forward.5} parent=0 // loop_pre_header
    _
  $region3: #{point_pillar_forward.5} parent=0 // loop_header
    %s11 = sphi 0, %s15
    %p12 = scmp.ge.s32.totalorder %s11, 10
    %s18 = sphi 0, %s30
    %s19 = sphi 0, %s26
    %s20 = sphi 0, %s18
    %s21 = sphi 0, %s19
    %s22 = sphi 0, %s20
    %s23 = sphi 0, %s21
    %s33 = sphi 0, %s35
    %s36 = sphi 0, %s33
    %s37 = sphi 0, %s36
    %s53 = sphi 0, %s37
    %s57 = sphi 0, %s57
    %s59 = sphi 0, %s57
    %s60 = sphi 0, %s59
    %s74 = sphi 0, %s60
    %s86 = sphi 0, %s88
    %s89 = sphi 0, %s86
    %s90 = sphi 0, %s89
    %s106 = sphi 0, %s90
    %s110 = sphi 0, %s110
    %s112 = sphi 0, %s110
    %s113 = sphi 0, %s112
    %s127 = sphi 0, %s113
    %s131 = sphi 0, %s131
    %s133 = sphi 0, %s131
    %s134 = sphi 0, %s133
    %s148 = sphi 0, %s134
    %s154 = sphi 0, %s156
    %s157 = sphi 0, %s154
    %s158 = sphi 0, %s157
    %s174 = sphi 0, %s158
  $region4: #{point_pillar_forward.5} parent=0 // loop_header_branch
    %14 = sbr.rel (%p12) target = $region8
  $region5: #{point_pillar_forward.5} parent=0 // loop_body
    %s16 = ssub.s32 %s11, 1
    %s17 = ssub.s32 %s11, 2
    %s24 = sadd.s32 1, %s19
    %p25 = scmp.ge.s32.totalorder %s24, 4
    %s26 = scalar_select %p25, 0, %s24
    %s27 = sadd.s32 1, %s18
    %s28 = scalar_select %p25, %s27, %s18
    %p29 = scmp.ge.s32.totalorder %s28, 2
    %s30 = scalar_select %p29, 0, %s28
    %s31 = ssub.s32 %s18, %s30
    %p32 = scmp.eq.s32.totalorder %s31, 0
    %s34 = sadd.s32 %s33, 1
    %s35 = scalar_select %p32, %s33, %s34
    %p38 = pneg %p32
    %p39 = scmp.eq.s32.totalorder %s11, 7
    %p40 = por %p38, %p39
    %p41 = scmp.ne.s32.totalorder %s33, %s36
    %p42 = scmp.eq.s32.totalorder %s11, 0
    %p43 = por %p41, %p42
    %p44 = scmp.ne.s32.totalorder %s33, %s36
    %p45 = scmp.eq.s32.totalorder %s16, 7
    %p46 = por %p44, %p45
    %p47 = scmp.ne.s32.totalorder %s36, %s37
    %p48 = scmp.eq.s32.totalorder %s16, 0
    %p49 = por %p47, %p48
    %p50 = scmp.ne.s32.totalorder %s36, %s37
    %p51 = scmp.eq.s32.totalorder %s17, 7
    %p52 = por %p50, %p51
    %p54 = scmp.ne.s32.totalorder %s37, %s53
    %p55 = scmp.eq.s32.totalorder %s17, 0
    %p56 = por %p54, %p55
    %s58 = sadd.s32 %s57, 1
    %p61 = scmp.eq.s32.totalorder %s11, 7
    %p62 = scmp.ne.s32.totalorder %s57, %s59
    %p63 = scmp.eq.s32.totalorder %s11, 0
    %p64 = por %p62, %p63
    %p65 = scmp.ne.s32.totalorder %s57, %s59
    %p66 = scmp.eq.s32.totalorder %s16, 7
    %p67 = por %p65, %p66
    %p68 = scmp.ne.s32.totalorder %s59, %s60
    %p69 = scmp.eq.s32.totalorder %s16, 0
    %p70 = por %p68, %p69
    %p71 = scmp.ne.s32.totalorder %s59, %s60
    %p72 = scmp.eq.s32.totalorder %s17, 7
    %p73 = por %p71, %p72
    %p75 = scmp.ne.s32.totalorder %s60, %s74
    %p76 = scmp.eq.s32.totalorder %s17, 0
    %p77 = por %p75, %p76
    %s78 = ssub.s32 %s19, 1
    %p79 = scmp.gt.s32.totalorder %s78, 0
    %s80 = scalar_select %p79, %s78, 0
    %s81 = ssub.s32 %s26, 1
    %p82 = scmp.gt.s32.totalorder %s81, 0
    %s83 = scalar_select %p82, %s81, 0
    %s84 = ssub.s32 %s80, %s83
    %p85 = scmp.eq.s32.totalorder %s84, 0
    %s87 = sadd.s32 %s86, 1
    %s88 = scalar_select %p85, %s86, %s87
    %p91 = pneg %p85
    %p92 = scmp.eq.s32.totalorder %s11, 7
    %p93 = por %p91, %p92
    %p94 = scmp.ne.s32.totalorder %s86, %s89
    %p95 = scmp.eq.s32.totalorder %s11, 0
    %p96 = por %p94, %p95
    %p97 = scmp.ne.s32.totalorder %s86, %s89
    %p98 = scmp.eq.s32.totalorder %s16, 7
    %p99 = por %p97, %p98
    %p100 = scmp.ne.s32.totalorder %s89, %s90
    %p101 = scmp.eq.s32.totalorder %s16, 0
    %p102 = por %p100, %p101
    %p103 = scmp.ne.s32.totalorder %s89, %s90
    %p104 = scmp.eq.s32.totalorder %s17, 7
    %p105 = por %p103, %p104
    %p107 = scmp.ne.s32.totalorder %s90, %s106
    %p108 = scmp.eq.s32.totalorder %s17, 0
    %p109 = por %p107, %p108
    %s111 = sadd.s32 %s110, 1
    %p114 = scmp.eq.s32.totalorder %s11, 7
    %p115 = scmp.ne.s32.totalorder %s110, %s112
    %p116 = scmp.eq.s32.totalorder %s11, 0
    %p117 = por %p115, %p116
    %p118 = scmp.ne.s32.totalorder %s110, %s112
    %p119 = scmp.eq.s32.totalorder %s16, 7
    %p120 = por %p118, %p119
    %p121 = scmp.ne.s32.totalorder %s112, %s113
    %p122 = scmp.eq.s32.totalorder %s16, 0
    %p123 = por %p121, %p122
    %p124 = scmp.ne.s32.totalorder %s112, %s113
    %p125 = scmp.eq.s32.totalorder %s17, 7
    %p126 = por %p124, %p125
    %p128 = scmp.ne.s32.totalorder %s113, %s127
    %p129 = scmp.eq.s32.totalorder %s17, 0
    %p130 = por %p128, %p129
    %s132 = sadd.s32 %s131, 1
    %p135 = scmp.eq.s32.totalorder %s11, 7
    %p136 = scmp.ne.s32.totalorder %s131, %s133
    %p137 = scmp.eq.s32.totalorder %s11, 0
    %p138 = por %p136, %p137
    %p139 = scmp.ne.s32.totalorder %s131, %s133
    %p140 = scmp.eq.s32.totalorder %s16, 7
    %p141 = por %p139, %p140
    %p142 = scmp.ne.s32.totalorder %s133, %s134
    %p143 = scmp.eq.s32.totalorder %s16, 0
    %p144 = por %p142, %p143
    %p145 = scmp.ne.s32.totalorder %s133, %s134
    %p146 = scmp.eq.s32.totalorder %s17, 7
    %p147 = por %p145, %p146
    %p149 = scmp.ne.s32.totalorder %s134, %s148
    %p150 = scmp.eq.s32.totalorder %s17, 0
    %p151 = por %p149, %p150
    %s152 = ssub.s32 %s18, %s30
    %p153 = scmp.eq.s32.totalorder %s152, 0
    %s155 = sadd.s32 %s154, 1
    %s156 = scalar_select %p153, %s154, %s155
    %p159 = pneg %p153
    %p160 = scmp.eq.s32.totalorder %s11, 7
    %p161 = por %p159, %p160
    %p162 = scmp.ne.s32.totalorder %s154, %s157
    %p163 = scmp.eq.s32.totalorder %s11, 0
    %p164 = por %p162, %p163
    %p165 = scmp.ne.s32.totalorder %s154, %s157
    %p166 = scmp.eq.s32.totalorder %s16, 7
    %p167 = por %p165, %p166
    %p168 = scmp.ne.s32.totalorder %s157, %s158
    %p169 = scmp.eq.s32.totalorder %s16, 0
    %p170 = por %p168, %p169
    %p171 = scmp.ne.s32.totalorder %s157, %s158
    %p172 = scmp.eq.s32.totalorder %s17, 7
    %p173 = por %p171, %p172
    %p175 = scmp.ne.s32.totalorder %s158, %s174
    %p176 = scmp.eq.s32.totalorder %s17, 0
    %p177 = por %p175, %p176
    %p178 = scmp.le.s32.totalorder 1, %s11
    %p179 = scmp.lt.s32.totalorder %s11, 9
    %p180 = pnand %p178, %p179
    %p181 = pneg %p180
    // Predicated region
    $region9: #{point_pillar_forward.5} parent=5 // pred_check
      _
    $region10: #{point_pillar_forward.5} parent=5 // pred_check_branch
      %183 = sbr.rel (%p180) target = $region12
    $region11: #{point_pillar_forward.5} parent=5 // pred_region
      %s184 = ssub.s32 %s11, 1
      // Predicated region
      $region13: #{point_pillar_forward.5} parent=11 // pred_check
        %p185 = pneg %p70
      $region14: #{point_pillar_forward.5} parent=11 // pred_check_branch
        %187 = sbr.rel (%p185) target = $region16
      $region15: #{point_pillar_forward.5} parent=11 // pred_region
        _
      $region16: #{point_pillar_forward.5} parent=11 // pred_fallthru
        _
      // Predicated region
      $region17: #{point_pillar_forward.5} parent=11 // pred_check
        %p188 = pneg %p123
      $region18: #{point_pillar_forward.5} parent=11 // pred_check_branch
        %190 = sbr.rel (%p188) target = $region20
      $region19: #{point_pillar_forward.5} parent=11 // pred_region
        _
      $region20: #{point_pillar_forward.5} parent=11 // pred_fallthru
        _
      // Predicated region
      $region21: #{point_pillar_forward.5} parent=11 // pred_check
        %p191 = pneg %p144
      $region22: #{point_pillar_forward.5} parent=11 // pred_check_branch
        %193 = sbr.rel (%p191) target = $region24
      $region23: #{point_pillar_forward.5} parent=11 // pred_region
        _
      $region24: #{point_pillar_forward.5} parent=11 // pred_fallthru
        _
    $region12: #{point_pillar_forward.5} parent=5 // pred_fallthru
      _
    %p194 = scmp.lt.s32.totalorder %s11, 8
    // Predicated region
    $region25: #{point_pillar_forward.5} parent=5 // pred_check
      %p195 = pneg %p194
    $region26: #{point_pillar_forward.5} parent=5 // pred_check_branch
      %197 = sbr.rel (%p195) target = $region28
    $region27: #{point_pillar_forward.5} parent=5 // pred_region
      // Predicated region
      $region29: #{point_pillar_forward.5} parent=27 // pred_check
        %p198 = pneg %p43
      $region30: #{point_pillar_forward.5} parent=27 // pred_check_branch
        %200 = sbr.rel (%p198) target = $region32
      $region31: #{point_pillar_forward.5} parent=27 // pred_region
        %p201 = scmp.lt.s32.totalorder %s18, 1
        %s202 = scalar_select %p201, %s18, 1
        %s203 = smul.addr %s202, 160
        %s204 = smul.addr %s203, 4
        %s205 = scalar_lea.vmem %s0, %s204
      $region32: #{point_pillar_forward.5} parent=27 // pred_fallthru
        _
      // Predicated region
      $region33: #{point_pillar_forward.5} parent=27 // pred_check
        %p206 = pneg %p96
      $region34: #{point_pillar_forward.5} parent=27 // pred_check_branch
        %208 = sbr.rel (%p206) target = $region36
      $region35: #{point_pillar_forward.5} parent=27 // pred_region
        %s209 = ssub.s32 %s19, 1
        %p210 = scmp.gt.s32.totalorder %s209, 0
        %s211 = scalar_select %p210, %s209, 0
        %p212 = scmp.lt.s32.totalorder %s211, 2
        %s213 = scalar_select %p212, %s211, 2
        %s214 = smul.addr %s213, 144
        %s215 = smul.addr %s214, 4
        %s216 = scalar_lea.vmem %s2, %s215
        %s217 = ssub.s32 %s19, 1
        %p218 = scmp.gt.s32.totalorder %s217, 0
        %s219 = scalar_select %p218, %s217, 0
      $region36: #{point_pillar_forward.5} parent=27 // pred_fallthru
        _
    $region28: #{point_pillar_forward.5} parent=5 // pred_fallthru
      _
    %p220 = scmp.le.s32.totalorder 1, %s11
    %p221 = scmp.lt.s32.totalorder %s11, 9
    %p222 = pnand %p220, %p221
    %p223 = pneg %p222
    // Predicated region
    $region37: #{point_pillar_forward.5} parent=5 // pred_check
      _
    $region38: #{point_pillar_forward.5} parent=5 // pred_check_branch
      %225 = sbr.rel (%p222) target = $region40
    $region39: #{point_pillar_forward.5} parent=5 // pred_region
      %s226 = ssub.s32 %s11, 1
      %p227 = scmp.lt.s32.totalorder %s20, 1
      %s228 = scalar_select %p227, %s20, 1
      %s229 = smul.addr %s228, 160
      %s230 = smul.addr %s229, 4
      %s231 = scalar_lea.vmem %s0, %s230
      %p232 = pneg %p49
      %p233 = pneg %p46
      %p234 = pneg %p70
      %p235 = pneg %p67
      %s236 = ssub.s32 %s21, 1
      %p237 = scmp.gt.s32.totalorder %s236, 0
      %s238 = scalar_select %p237, %s236, 0
      %p239 = scmp.lt.s32.totalorder %s238, 2
      %s240 = scalar_select %p239, %s238, 2
      %s241 = smul.addr %s240, 144
      %s242 = smul.addr %s241, 4
      %s243 = scalar_lea.vmem %s2, %s242
      %p244 = pneg %p102
      %p245 = pneg %p99
      %p246 = pneg %p123
      %p247 = pneg %p120
      %p248 = pneg %p144
      %p249 = pneg %p141
      %p250 = pneg %p170
      %p251 = pneg %p167
      %p252 = scmp.lt.s32.totalorder %s20, 1
      %s253 = scalar_select %p252, %s20, 1
      %s254 = smul.addr %s253, 32
      %s255 = smul.addr %s254, 4
      %s256 = scalar_lea.vmem %s5, %s255
      %p257 = scmp.lt.s32.totalorder %s20, 1
      %s258 = scalar_select %p257, %s20, 1
      %s259 = smul.addr %s258, 160
      %s260 = smul.addr %s259, 4
      %s261 = scalar_lea.vmem %s0, %s260
      %s262 = ssub.s32 %s21, 1
      %p263 = scmp.gt.s32.totalorder %s262, 0
      %s264 = scalar_select %p263, %s262, 0
      %p265 = scmp.lt.s32.totalorder %s264, 2
      %s266 = scalar_select %p265, %s264, 2
      %s267 = smul.addr %s266, 144
      %s268 = smul.addr %s267, 4
      %s269 = scalar_lea.vmem %s2, %s268
      %s270 = ssub.s32 %s21, 1
      %p271 = scmp.gt.s32.totalorder %s270, 0
      %s272 = scalar_select %p271, %s270, 0
      %p273 = scmp.lt.s32.totalorder %s20, 1
      %s274 = scalar_select %p273, %s20, 1
      %s275 = smul.addr %s274, 32
      %s276 = smul.addr %s275, 4
      %s277 = scalar_lea.vmem %s5, %s276
      %p279 = scmp.eq.s32.totalorder %s21, 0
      // Predicated region
      $region41: #{point_pillar_forward.5} parent=39 // pred_check
        %p280 = pneg %p279
      $region42: #{point_pillar_forward.5} parent=39 // pred_check_branch
        %282 = sbr.rel (%p280) target = $region44
      $region43: #{point_pillar_forward.5} parent=39 // pred_region
        %283 = vst [vmem:[#allocation2] sm:$0xf] 0
        %284 = vst [vmem:[#allocation2 + $0x4] sm:$0xf] 0
        %285 = vst [vmem:[#allocation2 + $0x8] sm:$0x1] 0
        %s286 = scalar_lea.vmem [#allocation2], 204
        %287 = vst [vmem:[%s286] sm:$0xf] 0
        %288 = vst [vmem:[%s286 + $0x4] sm:$0xf] 0
        %289 = vst [vmem:[%s286 + $0x8] sm:$0x1] 0
        %vm290 = vcmask 1040384
        %vm291 = vsmask.f32 256
        %vm292 = vmand %vm290, %vm291
        %v293 = vld [vmem:[#allocation2] sm:$0x1]
        %v294 = vsel %vm292, 0, %v293
        %295 = vst [vmem:[#allocation2] sm:$0x1] %v294
        %v296 = vld [vmem:[#allocation2 + $0xc] sm:$0x1]
        %v297 = vsel %vm292, 0, %v296
        %298 = vst [vmem:[#allocation2 + $0xc] sm:$0x1] %v297
        %v299 = vld [vmem:[#allocation2 + $0x18] sm:$0x1]
        %v300 = vsel %vm292, 0, %v299
        %301 = vst [vmem:[#allocation2 + $0x18] sm:$0x1] %v300
        %v302 = vld [vmem:[#allocation2 + $0x24] sm:$0x1]
        %v303 = vsel %vm292, 0, %v302
        %304 = vst [vmem:[#allocation2 + $0x24] sm:$0x1] %v303
        %v305 = vld [vmem:[#allocation2 + $0x30] sm:$0x1]
        %v306 = vsel %vm292, 0, %v305
        %307 = vst [vmem:[#allocation2 + $0x30] sm:$0x1] %v306
        %v308 = vld [vmem:[#allocation2 + $0x3c] sm:$0x1]
        %v309 = vsel %vm292, 0, %v308
        %310 = vst [vmem:[#allocation2 + $0x3c] sm:$0x1] %v309
        %v311 = vld [vmem:[#allocation2 + $0x48] sm:$0x1]
        %v312 = vsel %vm292, 0, %v311
        %313 = vst [vmem:[#allocation2 + $0x48] sm:$0x1] %v312
        %v314 = vld [vmem:[#allocation2 + $0x54] sm:$0x1]
        %v315 = vsel %vm292, 0, %v314
        %316 = vst [vmem:[#allocation2 + $0x54] sm:$0x1] %v315
        %v317 = vld [vmem:[#allocation2 + $0x60] sm:$0x1]
        %v318 = vsel %vm292, 0, %v317
        %319 = vst [vmem:[#allocation2 + $0x60] sm:$0x1] %v318
        %v320 = vld [vmem:[#allocation2 + $0x6c] sm:$0x1]
        %v321 = vsel %vm292, 0, %v320
        %322 = vst [vmem:[#allocation2 + $0x6c] sm:$0x1] %v321
        %v323 = vld [vmem:[#allocation2 + $0x78] sm:$0x1]
        %v324 = vsel %vm292, 0, %v323
        %325 = vst [vmem:[#allocation2 + $0x78] sm:$0x1] %v324
        %v326 = vld [vmem:[#allocation2 + $0x84] sm:$0x1]
        %v327 = vsel %vm292, 0, %v326
        %328 = vst [vmem:[#allocation2 + $0x84] sm:$0x1] %v327
        %v329 = vld [vmem:[#allocation2 + $0x90] sm:$0x1]
        %v330 = vsel %vm292, 0, %v329
        %331 = vst [vmem:[#allocation2 + $0x90] sm:$0x1] %v330
        %v332 = vld [vmem:[#allocation2 + $0x9c] sm:$0x1]
        %v333 = vsel %vm292, 0, %v332
        %334 = vst [vmem:[#allocation2 + $0x9c] sm:$0x1] %v333
        %v335 = vld [vmem:[#allocation2 + $0xa8] sm:$0x1]
        %v336 = vsel %vm292, 0, %v335
        %337 = vst [vmem:[#allocation2 + $0xa8] sm:$0x1] %v336
        %v338 = vld [vmem:[#allocation2 + $0xb4] sm:$0x1]
        %v339 = vsel %vm292, 0, %v338
        %340 = vst [vmem:[#allocation2 + $0xb4] sm:$0x1] %v339
        %v341 = vld [vmem:[#allocation2 + $0xc0] sm:$0x1]
        %v342 = vsel %vm292, 0, %v341
        %343 = vst [vmem:[#allocation2 + $0xc0] sm:$0x1] %v342
        %v344 = vld [vmem:[#allocation2 + $0xcc] sm:$0x1]
        %v345 = vsel %vm292, 0, %v344
        %346 = vst [vmem:[#allocation2 + $0xcc] sm:$0x1] %v345
        %vm347 = vsmask.f32 7938
        %vm348 = vmand %vm290, %vm347
        %v349 = vld [vmem:[#allocation2 + $0x8] sm:$0x1]
        %v350 = vsel %vm348, 0, %v349
        %351 = vst [vmem:[#allocation2 + $0x8] sm:$0x1] %v350
        %v352 = vld [vmem:[#allocation2 + $0x14] sm:$0x1]
        %v353 = vsel %vm348, 0, %v352
        %354 = vst [vmem:[#allocation2 + $0x14] sm:$0x1] %v353
        %v355 = vld [vmem:[#allocation2 + $0x20] sm:$0x1]
        %v356 = vsel %vm348, 0, %v355
        %357 = vst [vmem:[#allocation2 + $0x20] sm:$0x1] %v356
        %v358 = vld [vmem:[#allocation2 + $0x2c] sm:$0x1]
        %v359 = vsel %vm348, 0, %v358
        %360 = vst [vmem:[#allocation2 + $0x2c] sm:$0x1] %v359
        %v361 = vld [vmem:[#allocation2 + $0x38] sm:$0x1]
        %v362 = vsel %vm348, 0, %v361
        %363 = vst [vmem:[#allocation2 + $0x38] sm:$0x1] %v362
        %v364 = vld [vmem:[#allocation2 + $0x44] sm:$0x1]
        %v365 = vsel %vm348, 0, %v364
        %366 = vst [vmem:[#allocation2 + $0x44] sm:$0x1] %v365
        %v367 = vld [vmem:[#allocation2 + $0x50] sm:$0x1]
        %v368 = vsel %vm348, 0, %v367
        %369 = vst [vmem:[#allocation2 + $0x50] sm:$0x1] %v368
        %v370 = vld [vmem:[#allocation2 + $0x5c] sm:$0x1]
        %v371 = vsel %vm348, 0, %v370
        %372 = vst [vmem:[#allocation2 + $0x5c] sm:$0x1] %v371
        %v373 = vld [vmem:[#allocation2 + $0x68] sm:$0x1]
        %v374 = vsel %vm348, 0, %v373
        %375 = vst [vmem:[#allocation2 + $0x68] sm:$0x1] %v374
        %v376 = vld [vmem:[#allocation2 + $0x74] sm:$0x1]
        %v377 = vsel %vm348, 0, %v376
        %378 = vst [vmem:[#allocation2 + $0x74] sm:$0x1] %v377
        %v379 = vld [vmem:[#allocation2 + $0x80] sm:$0x1]
        %v380 = vsel %vm348, 0, %v379
        %381 = vst [vmem:[#allocation2 + $0x80] sm:$0x1] %v380
        %v382 = vld [vmem:[#allocation2 + $0x8c] sm:$0x1]
        %v383 = vsel %vm348, 0, %v382
        %384 = vst [vmem:[#allocation2 + $0x8c] sm:$0x1] %v383
        %v385 = vld [vmem:[#allocation2 + $0x98] sm:$0x1]
        %v386 = vsel %vm348, 0, %v385
        %387 = vst [vmem:[#allocation2 + $0x98] sm:$0x1] %v386
        %v388 = vld [vmem:[#allocation2 + $0xa4] sm:$0x1]
        %v389 = vsel %vm348, 0, %v388
        %390 = vst [vmem:[#allocation2 + $0xa4] sm:$0x1] %v389
        %v391 = vld [vmem:[#allocation2 + $0xb0] sm:$0x1]
        %v392 = vsel %vm348, 0, %v391
        %393 = vst [vmem:[#allocation2 + $0xb0] sm:$0x1] %v392
        %v394 = vld [vmem:[#allocation2 + $0xbc] sm:$0x1]
        %v395 = vsel %vm348, 0, %v394
        %396 = vst [vmem:[#allocation2 + $0xbc] sm:$0x1] %v395
        %v397 = vld [vmem:[#allocation2 + $0xc8] sm:$0x1]
        %v398 = vsel %vm348, 0, %v397
        %399 = vst [vmem:[#allocation2 + $0xc8] sm:$0x1] %v398
        %v400 = vld [vmem:[#allocation2 + $0xd4] sm:$0x1]
        %v401 = vsel %vm348, 0, %v400
        %402 = vst [vmem:[#allocation2 + $0xd4] sm:$0x1] %v401
        %v403 = vld [vmem:[%s261] sm:$0xff]
        %v404 = vld [vmem:[%s261 + $0x8] sm:$0xff]
        %v405 = vld [vmem:[%s261 + $0x10] sm:$0xf]
        %v406 = vld [vmem:[%s261 + $0x14] sm:$0xff]
        %v407 = vld [vmem:[%s261 + $0x1c] sm:$0xff]
        %v408 = vld [vmem:[%s261 + $0x24] sm:$0xf]
        %v409 = vld [vmem:[%s261 + $0x28] sm:$0xff]
        %v410 = vld [vmem:[%s261 + $0x30] sm:$0xff]
        %v411 = vld [vmem:[%s261 + $0x38] sm:$0xf]
        %v412 = vld [vmem:[%s261 + $0x3c] sm:$0xff]
        %v413 = vld [vmem:[%s261 + $0x44] sm:$0xff]
        %v414 = vld [vmem:[%s261 + $0x4c] sm:$0xf]
        %v415 = vld [vmem:[%s261 + $0x50] sm:$0xff]
        %v416 = vld [vmem:[%s261 + $0x58] sm:$0xff]
        %v417 = vld [vmem:[%s261 + $0x60] sm:$0xf]
        %v418 = vld [vmem:[%s261 + $0x64] sm:$0xff]
        %v419 = vld [vmem:[%s261 + $0x6c] sm:$0xff]
        %v420 = vld [vmem:[%s261 + $0x74] sm:$0xf]
        %v421 = vld [vmem:[%s261 + $0x78] sm:$0xff]
        %v422 = vld [vmem:[%s261 + $0x80] sm:$0xff]
        %v423 = vld [vmem:[%s261 + $0x88] sm:$0xf]
        %v424 = vld [vmem:[%s261 + $0x8c] sm:$0xff]
        %v425 = vld [vmem:[%s261 + $0x94] sm:$0xff]
        %v426 = vld [vmem:[%s261 + $0x9c] sm:$0xf]
        %v427 = vld [vmem:[%s261 + $0xa0] sm:$0xff]
        %v428 = vld [vmem:[%s261 + $0xa8] sm:$0xff]
        %v429 = vld [vmem:[%s261 + $0xb0] sm:$0xf]
        %v430 = vld [vmem:[%s261 + $0xb4] sm:$0xff]
        %v431 = vld [vmem:[%s261 + $0xbc] sm:$0xff]
        %v432 = vld [vmem:[%s261 + $0xc4] sm:$0xf]
        %v433 = vld [vmem:[%s261 + $0xc8] sm:$0xff]
        %v434 = vld [vmem:[%s261 + $0xd0] sm:$0xff]
        %v435 = vld [vmem:[%s261 + $0xd8] sm:$0xf]
        %v436 = vld [vmem:[%s261 + $0xdc] sm:$0xff]
        %v437 = vld [vmem:[%s261 + $0xe4] sm:$0xff]
        %v438 = vld [vmem:[%s261 + $0xec] sm:$0xf]
        %v439 = vld [vmem:[%s261 + $0xf0] sm:$0xff]
        %v440 = vld [vmem:[%s261 + $0xf8] sm:$0xff]
        %v441 = vld [vmem:[%s261 + $0x100] sm:$0xf]
        %v442 = vld [vmem:[%s261 + $0x104] sm:$0xff]
        %v443 = vld [vmem:[%s261 + $0x10c] sm:$0xff]
        %v444 = vld [vmem:[%s261 + $0x114] sm:$0xf]
        %v445 = vld [vmem:[%s261 + $0x118] sm:$0xff]
        %v446 = vld [vmem:[%s261 + $0x120] sm:$0xff]
        %v447 = vld [vmem:[%s261 + $0x128] sm:$0xf]
        %v448 = vld [vmem:[%s261 + $0x12c] sm:$0xff]
        %v449 = vld [vmem:[%s261 + $0x134] sm:$0xff]
        %v450 = vld [vmem:[%s261 + $0x13c] sm:$0xf]
        %v451 = vld [vmem:[%s261 + $0x140] sm:$0xff]
        %v452 = vld [vmem:[%s261 + $0x148] sm:$0xff]
        %v453 = vld [vmem:[%s261 + $0x150] sm:$0xf]
        %v454 = vld [vmem:[%s261 + $0x154] sm:$0xff]
        %v455 = vld [vmem:[%s261 + $0x15c] sm:$0xff]
        %v456 = vld [vmem:[%s261 + $0x164] sm:$0xf]
        %v457 = vld [vmem:[%s261 + $0x168] sm:$0xff]
        %v458 = vld [vmem:[%s261 + $0x170] sm:$0xff]
        %v459 = vld [vmem:[%s261 + $0x178] sm:$0xf]
        %v460 = vld [vmem:[%s261 + $0x17c] sm:$0xff]
        %v461 = vld [vmem:[%s261 + $0x184] sm:$0xff]
        %v462 = vld [vmem:[%s261 + $0x18c] sm:$0xf]
        %v463 = vld [vmem:[%s261 + $0x190] sm:$0xff]
        %v464 = vld [vmem:[%s261 + $0x198] sm:$0xff]
        %v465 = vld [vmem:[%s261 + $0x1a0] sm:$0xf]
        %v466 = vld [vmem:[%s261 + $0x1a4] sm:$0xff]
        %v467 = vld [vmem:[%s261 + $0x1ac] sm:$0xff]
        %v468 = vld [vmem:[%s261 + $0x1b4] sm:$0xf]
        %v469 = vld [vmem:[%s261 + $0x1b8] sm:$0xff]
        %v470 = vld [vmem:[%s261 + $0x1c0] sm:$0xff]
        %v471 = vld [vmem:[%s261 + $0x1c8] sm:$0xf]
        %v472 = vld [vmem:[%s261 + $0x1cc] sm:$0xff]
        %v473 = vld [vmem:[%s261 + $0x1d4] sm:$0xff]
        %v474 = vld [vmem:[%s261 + $0x1dc] sm:$0xf]
        %v475 = vld [vmem:[%s261 + $0x1e0] sm:$0xff]
        %v476 = vld [vmem:[%s261 + $0x1e8] sm:$0xff]
        %v477 = vld [vmem:[%s261 + $0x1f0] sm:$0xf]
        %v478 = vld [vmem:[%s261 + $0x1f4] sm:$0xff]
        %v479 = vld [vmem:[%s261 + $0x1fc] sm:$0xff]
        %v480 = vld [vmem:[%s261 + $0x204] sm:$0xf]
        %v481 = vld [vmem:[%s261 + $0x208] sm:$0xff]
        %v482 = vld [vmem:[%s261 + $0x210] sm:$0xff]
        %v483 = vld [vmem:[%s261 + $0x218] sm:$0xf]
        %v484 = vld [vmem:[%s261 + $0x21c] sm:$0xff]
        %v485 = vld [vmem:[%s261 + $0x224] sm:$0xff]
        %v486 = vld [vmem:[%s261 + $0x22c] sm:$0xf]
        %v487 = vld [vmem:[%s261 + $0x230] sm:$0xff]
        %v488 = vld [vmem:[%s261 + $0x238] sm:$0xff]
        %v489 = vld [vmem:[%s261 + $0x240] sm:$0xf]
        %v490 = vld [vmem:[%s261 + $0x244] sm:$0xff]
        %v491 = vld [vmem:[%s261 + $0x24c] sm:$0xff]
        %v492 = vld [vmem:[%s261 + $0x254] sm:$0xf]
        %v493 = vld [vmem:[%s261 + $0x258] sm:$0xff]
        %v494 = vld [vmem:[%s261 + $0x260] sm:$0xff]
        %v495 = vld [vmem:[%s261 + $0x268] sm:$0xf]
        %v496 = vld [vmem:[%s261 + $0x26c] sm:$0xff]
        %v497 = vld [vmem:[%s261 + $0x274] sm:$0xff]
        %v498 = vld [vmem:[%s261 + $0x27c] sm:$0xf]
        %v499 = vld [vmem:[%s1] sm:$0xf]
        %v500 = vld [vmem:[%s1 + $0x4] sm:$0xf]
        %v501 = vld [vmem:[%s1 + $0x8] sm:$0xf]
        %v502 = vld [vmem:[%s1 + $0xc] sm:$0xf]
        %v503 = vld [vmem:[%s1 + $0x10] sm:$0xf]
        %v504 = vld [vmem:[%s1 + $0x14] sm:$0xf]
        %v505 = vld [vmem:[%s1 + $0x18] sm:$0xf]
        %v506 = vld [vmem:[%s1 + $0x1c] sm:$0xf]
        %v507 = vld [vmem:[%s1 + $0x20] sm:$0xf]
        %v508 = vld [vmem:[%s1 + $0x24] sm:$0xf]
        %v509 = vld [vmem:[%s1 + $0x28] sm:$0xf]
        %v510 = vld [vmem:[%s1 + $0x2c] sm:$0xf]
        %v511 = vld [vmem:[%s1 + $0x30] sm:$0xf]
        %v512 = vld [vmem:[%s1 + $0x34] sm:$0xf]
        %v513 = vld [vmem:[%s1 + $0x38] sm:$0xf]
        %v514 = vld [vmem:[%s1 + $0x3c] sm:$0xf]
        %v515 = vld [vmem:[%s1 + $0x40] sm:$0xf]
        %v516 = vld [vmem:[%s1 + $0x44] sm:$0xf]
        %v517 = vld [vmem:[%s1 + $0x48] sm:$0xf]
        %v518 = vld [vmem:[%s1 + $0x4c] sm:$0xf]
        %v519 = vld [vmem:[%s1 + $0x50] sm:$0xf]
        %v520 = vld [vmem:[%s1 + $0x54] sm:$0xf]
        %v521 = vld [vmem:[%s1 + $0x58] sm:$0xf]
        %v522 = vld [vmem:[%s1 + $0x5c] sm:$0xf]
        %v523 = vld [vmem:[%s1 + $0x60] sm:$0xf]
        %v524 = vld [vmem:[%s1 + $0x64] sm:$0xf]
        %v525 = vld [vmem:[%s1 + $0x68] sm:$0xf]
        %v526 = vld [vmem:[%s1 + $0x6c] sm:$0xf]
        %v527 = vld [vmem:[%s1 + $0x70] sm:$0xf]
        %v528 = vld [vmem:[%s1 + $0x74] sm:$0xf]
        %v529 = vld [vmem:[%s1 + $0x78] sm:$0xf]
        %v530 = vld [vmem:[%s1 + $0x7c] sm:$0xf]
        %v531 = vld [vmem:[%s1 + $0x80] sm:$0xf]
        %v532 = vld [vmem:[%s1 + $0x84] sm:$0xf]
        %v533 = vld [vmem:[%s1 + $0x88] sm:$0xf]
        %v534 = vld [vmem:[%s1 + $0x8c] sm:$0xf]
        %v535 = vld [vmem:[%s1 + $0x90] sm:$0xf]
        %v536 = vld [vmem:[%s1 + $0x94] sm:$0xf]
        %v537 = vld [vmem:[%s1 + $0x98] sm:$0xf]
        %v538 = vld [vmem:[%s1 + $0x9c] sm:$0xf]
        %v539 = vld [vmem:[%s1 + $0xa0] sm:$0xf]
        %v540 = vld [vmem:[%s1 + $0xa4] sm:$0xf]
        %v541 = vld [vmem:[%s1 + $0xa8] sm:$0xf]
        %v542 = vld [vmem:[%s1 + $0xac] sm:$0xf]
        %v543 = vld [vmem:[%s1 + $0xb0] sm:$0xf]
        %v544 = vld [vmem:[%s1 + $0xb4] sm:$0xf]
        %v545 = vld [vmem:[%s1 + $0xb8] sm:$0xf]
        %v546 = vld [vmem:[%s1 + $0xbc] sm:$0xf]
        %v547 = vld [vmem:[%s1 + $0xc0] sm:$0xf]
        %v548 = vld [vmem:[%s1 + $0xc4] sm:$0xf]
        %v549 = vld [vmem:[%s1 + $0xc8] sm:$0xf]
        %v550 = vld [vmem:[%s1 + $0xcc] sm:$0xf]
        %v551 = vld [vmem:[%s1 + $0xd0] sm:$0xf]
        %v552 = vld [vmem:[%s1 + $0xd4] sm:$0xf]
        %v553 = vld [vmem:[%s1 + $0xd8] sm:$0xf]
        %v554 = vld [vmem:[%s1 + $0xdc] sm:$0xf]
        %v555 = vld [vmem:[%s1 + $0xe0] sm:$0xf]
        %v556 = vld [vmem:[%s1 + $0xe4] sm:$0xf]
        %v557 = vld [vmem:[%s1 + $0xe8] sm:$0xf]
        %v558 = vld [vmem:[%s1 + $0xec] sm:$0xf]
        %v559 = vld [vmem:[%s1 + $0xf0] sm:$0xf]
        %v560 = vld [vmem:[%s1 + $0xf4] sm:$0xf]
        %v561 = vld [vmem:[%s1 + $0xf8] sm:$0xf]
        %v562 = vld [vmem:[%s1 + $0xfc] sm:$0xf]
        %v563 = vld [vmem:[%s1 + $0x100] sm:$0xf]
        %v564 = vld [vmem:[%s1 + $0x104] sm:$0xf]
        %v565 = vld [vmem:[%s1 + $0x108] sm:$0xf]
        %v566 = vld [vmem:[%s1 + $0x10c] sm:$0xf]
        %v567 = vld [vmem:[%s1 + $0x110] sm:$0xf]
        %v568 = vld [vmem:[%s1 + $0x114] sm:$0xf]
        %v569 = vld [vmem:[%s1 + $0x118] sm:$0xf]
        %v570 = vld [vmem:[%s1 + $0x11c] sm:$0xf]
        %v667 = vunpack.c.l.b16 %v403
        %v668 = vunpack.c.h.b16 %v403
        %v669 = vunpack.c.l.b16 %v404
        %v670 = vunpack.c.h.b16 %v404
        %v671 = vunpack.c.l.b16 %v405
        %v672 = vunpack.c.l.b16 %v406
        %v673 = vunpack.c.h.b16 %v406
        %v674 = vunpack.c.l.b16 %v407
        %v675 = vunpack.c.h.b16 %v407
        %v676 = vunpack.c.l.b16 %v408
        %v677 = vunpack.c.l.b16 %v409
        %v678 = vunpack.c.h.b16 %v409
        %v679 = vunpack.c.l.b16 %v410
        %v680 = vunpack.c.h.b16 %v410
        %v681 = vunpack.c.l.b16 %v411
        %v682 = vunpack.c.l.b16 %v412
        %v683 = vunpack.c.h.b16 %v412
        %v684 = vunpack.c.l.b16 %v413
        %v685 = vunpack.c.h.b16 %v413
        %v686 = vunpack.c.l.b16 %v414
        %v687 = vunpack.c.l.b16 %v415
        %v688 = vunpack.c.h.b16 %v415
        %v689 = vunpack.c.l.b16 %v416
        %v690 = vunpack.c.h.b16 %v416
        %v691 = vunpack.c.l.b16 %v417
        %v692 = vunpack.c.l.b16 %v418
        %v693 = vunpack.c.h.b16 %v418
        %v694 = vunpack.c.l.b16 %v419
        %v695 = vunpack.c.h.b16 %v419
        %v696 = vunpack.c.l.b16 %v420
        %v697 = vunpack.c.l.b16 %v421
        %v698 = vunpack.c.h.b16 %v421
        %v699 = vunpack.c.l.b16 %v422
        %v700 = vunpack.c.h.b16 %v422
        %v701 = vunpack.c.l.b16 %v423
        %v702 = vunpack.c.l.b16 %v424
        %v703 = vunpack.c.h.b16 %v424
        %v704 = vunpack.c.l.b16 %v425
        %v705 = vunpack.c.h.b16 %v425
        %v706 = vunpack.c.l.b16 %v426
        %v707 = vunpack.c.l.b16 %v427
        %v708 = vunpack.c.h.b16 %v427
        %v709 = vunpack.c.l.b16 %v428
        %v710 = vunpack.c.h.b16 %v428
        %v711 = vunpack.c.l.b16 %v429
        %v712 = vunpack.c.l.b16 %v430
        %v713 = vunpack.c.h.b16 %v430
        %v714 = vunpack.c.l.b16 %v431
        %v715 = vunpack.c.h.b16 %v431
        %v716 = vunpack.c.l.b16 %v432
        %v717 = vunpack.c.l.b16 %v433
        %v718 = vunpack.c.h.b16 %v433
        %v719 = vunpack.c.l.b16 %v434
        %v720 = vunpack.c.h.b16 %v434
        %v721 = vunpack.c.l.b16 %v435
        %v722 = vunpack.c.l.b16 %v436
        %v723 = vunpack.c.h.b16 %v436
        %v724 = vunpack.c.l.b16 %v437
        %v725 = vunpack.c.h.b16 %v437
        %v726 = vunpack.c.l.b16 %v438
        %v727 = vunpack.c.l.b16 %v439
        %v728 = vunpack.c.h.b16 %v439
        %v729 = vunpack.c.l.b16 %v440
        %v730 = vunpack.c.h.b16 %v440
        %v731 = vunpack.c.l.b16 %v441
        %v732 = vunpack.c.l.b16 %v442
        %v733 = vunpack.c.h.b16 %v442
        %v734 = vunpack.c.l.b16 %v443
        %v735 = vunpack.c.h.b16 %v443
        %v736 = vunpack.c.l.b16 %v444
        %v737 = vunpack.c.l.b16 %v445
        %v738 = vunpack.c.h.b16 %v445
        %v739 = vunpack.c.l.b16 %v446
        %v740 = vunpack.c.h.b16 %v446
        %v741 = vunpack.c.l.b16 %v447
        %v742 = vunpack.c.l.b16 %v448
        %v743 = vunpack.c.h.b16 %v448
        %v744 = vunpack.c.l.b16 %v449
        %v745 = vunpack.c.h.b16 %v449
        %v746 = vunpack.c.l.b16 %v450
        %v747 = vunpack.c.l.b16 %v451
        %v748 = vunpack.c.h.b16 %v451
        %v749 = vunpack.c.l.b16 %v452
        %v750 = vunpack.c.h.b16 %v452
        %v751 = vunpack.c.l.b16 %v453
        %v752 = vunpack.c.l.b16 %v454
        %v753 = vunpack.c.h.b16 %v454
        %v754 = vunpack.c.l.b16 %v455
        %v755 = vunpack.c.h.b16 %v455
        %v756 = vunpack.c.l.b16 %v456
        %v757 = vunpack.c.l.b16 %v457
        %v758 = vunpack.c.h.b16 %v457
        %v759 = vunpack.c.l.b16 %v458
        %v760 = vunpack.c.h.b16 %v458
        %v761 = vunpack.c.l.b16 %v459
        %v762 = vunpack.c.l.b16 %v460
        %v763 = vunpack.c.h.b16 %v460
        %v764 = vunpack.c.l.b16 %v461
        %v765 = vunpack.c.h.b16 %v461
        %v766 = vunpack.c.l.b16 %v462
        %v767 = vunpack.c.l.b16 %v463
        %v768 = vunpack.c.h.b16 %v463
        %v769 = vunpack.c.l.b16 %v464
        %v770 = vunpack.c.h.b16 %v464
        %v771 = vunpack.c.l.b16 %v465
        %v772 = vunpack.c.l.b16 %v466
        %v773 = vunpack.c.h.b16 %v466
        %v774 = vunpack.c.l.b16 %v467
        %v775 = vunpack.c.h.b16 %v467
        %v776 = vunpack.c.l.b16 %v468
        %v777 = vunpack.c.l.b16 %v469
        %v778 = vunpack.c.h.b16 %v469
        %v779 = vunpack.c.l.b16 %v470
        %v780 = vunpack.c.h.b16 %v470
        %v781 = vunpack.c.l.b16 %v471
        %v782 = vunpack.c.l.b16 %v472
        %v783 = vunpack.c.h.b16 %v472
        %v784 = vunpack.c.l.b16 %v473
        %v785 = vunpack.c.h.b16 %v473
        %v786 = vunpack.c.l.b16 %v474
        %v787 = vunpack.c.l.b16 %v475
        %v788 = vunpack.c.h.b16 %v475
        %v789 = vunpack.c.l.b16 %v476
        %v790 = vunpack.c.h.b16 %v476
        %v791 = vunpack.c.l.b16 %v477
        %v792 = vunpack.c.l.b16 %v478
        %v793 = vunpack.c.h.b16 %v478
        %v794 = vunpack.c.l.b16 %v479
        %v795 = vunpack.c.h.b16 %v479
        %v796 = vunpack.c.l.b16 %v480
        %v797 = vunpack.c.l.b16 %v481
        %v798 = vunpack.c.h.b16 %v481
        %v799 = vunpack.c.l.b16 %v482
        %v800 = vunpack.c.h.b16 %v482
        %v801 = vunpack.c.l.b16 %v483
        %v802 = vunpack.c.l.b16 %v484
        %v803 = vunpack.c.h.b16 %v484
        %v804 = vunpack.c.l.b16 %v485
        %v805 = vunpack.c.h.b16 %v485
        %v806 = vunpack.c.l.b16 %v486
        %v807 = vunpack.c.l.b16 %v487
        %v808 = vunpack.c.h.b16 %v487
        %v809 = vunpack.c.l.b16 %v488
        %v810 = vunpack.c.h.b16 %v488
        %v811 = vunpack.c.l.b16 %v489
        %v812 = vunpack.c.l.b16 %v490
        %v813 = vunpack.c.h.b16 %v490
        %v814 = vunpack.c.l.b16 %v491
        %v815 = vunpack.c.h.b16 %v491
        %v816 = vunpack.c.l.b16 %v492
        %v817 = vunpack.c.l.b16 %v493
        %v818 = vunpack.c.h.b16 %v493
        %v819 = vunpack.c.l.b16 %v494
        %v820 = vunpack.c.h.b16 %v494
        %v821 = vunpack.c.l.b16 %v495
        %v822 = vunpack.c.l.b16 %v496
        %v823 = vunpack.c.h.b16 %v496
        %v824 = vunpack.c.l.b16 %v497
        %v825 = vunpack.c.h.b16 %v497
        %v826 = vunpack.c.l.b16 %v498
        %v827 = vpack.c.b16 %v672, %v667
        %v828 = vpack.c.b16 %v673, %v668
        %v829 = vpack.c.b16 %v674, %v669
        %v830 = vpack.c.b16 %v675, %v670
        %v831 = vpack.c.b16 %v676, %v671
        %v832 = vpack.c.b16 %v682, %v677
        %v833 = vpack.c.b16 %v683, %v678
        %v834 = vpack.c.b16 %v684, %v679
        %v835 = vpack.c.b16 %v685, %v680
        %v836 = vpack.c.b16 %v686, %v681
        %v837 = vpack.c.b16 %v692, %v687
        %v838 = vpack.c.b16 %v693, %v688
        %v839 = vpack.c.b16 %v694, %v689
        %v840 = vpack.c.b16 %v695, %v690
        %v841 = vpack.c.b16 %v696, %v691
        %v842 = vpack.c.b16 %v702, %v697
        %v843 = vpack.c.b16 %v703, %v698
        %v844 = vpack.c.b16 %v704, %v699
        %v845 = vpack.c.b16 %v705, %v700
        %v846 = vpack.c.b16 %v706, %v701
        %v847 = vpack.c.b16 %v712, %v707
        %v848 = vpack.c.b16 %v713, %v708
        %v849 = vpack.c.b16 %v714, %v709
        %v850 = vpack.c.b16 %v715, %v710
        %v851 = vpack.c.b16 %v716, %v711
        %v852 = vpack.c.b16 %v722, %v717
        %v853 = vpack.c.b16 %v723, %v718
        %v854 = vpack.c.b16 %v724, %v719
        %v855 = vpack.c.b16 %v725, %v720
        %v856 = vpack.c.b16 %v726, %v721
        %v857 = vpack.c.b16 %v732, %v727
        %v858 = vpack.c.b16 %v733, %v728
        %v859 = vpack.c.b16 %v734, %v729
        %v860 = vpack.c.b16 %v735, %v730
        %v861 = vpack.c.b16 %v736, %v731
        %v862 = vpack.c.b16 %v742, %v737
        %v863 = vpack.c.b16 %v743, %v738
        %v864 = vpack.c.b16 %v744, %v739
        %v865 = vpack.c.b16 %v745, %v740
        %v866 = vpack.c.b16 %v746, %v741
        %v867 = vpack.c.b16 %v752, %v747
        %v868 = vpack.c.b16 %v753, %v748
        %v869 = vpack.c.b16 %v754, %v749
        %v870 = vpack.c.b16 %v755, %v750
        %v871 = vpack.c.b16 %v756, %v751
        %v872 = vpack.c.b16 %v762, %v757
        %v873 = vpack.c.b16 %v763, %v758
        %v874 = vpack.c.b16 %v764, %v759
        %v875 = vpack.c.b16 %v765, %v760
        %v876 = vpack.c.b16 %v766, %v761
        %v877 = vpack.c.b16 %v772, %v767
        %v878 = vpack.c.b16 %v773, %v768
        %v879 = vpack.c.b16 %v774, %v769
        %v880 = vpack.c.b16 %v775, %v770
        %v881 = vpack.c.b16 %v776, %v771
        %v882 = vpack.c.b16 %v782, %v777
        %v883 = vpack.c.b16 %v783, %v778
        %v884 = vpack.c.b16 %v784, %v779
        %v885 = vpack.c.b16 %v785, %v780
        %v886 = vpack.c.b16 %v786, %v781
        %v887 = vpack.c.b16 %v792, %v787
        %v888 = vpack.c.b16 %v793, %v788
        %v889 = vpack.c.b16 %v794, %v789
        %v890 = vpack.c.b16 %v795, %v790
        %v891 = vpack.c.b16 %v796, %v791
        %v892 = vpack.c.b16 %v802, %v797
        %v893 = vpack.c.b16 %v803, %v798
        %v894 = vpack.c.b16 %v804, %v799
        %v895 = vpack.c.b16 %v805, %v800
        %v896 = vpack.c.b16 %v806, %v801
        %v897 = vpack.c.b16 %v812, %v807
        %v898 = vpack.c.b16 %v813, %v808
        %v899 = vpack.c.b16 %v814, %v809
        %v900 = vpack.c.b16 %v815, %v810
        %v901 = vpack.c.b16 %v816, %v811
        %v902 = vpack.c.b16 %v822, %v817
        %v903 = vpack.c.b16 %v823, %v818
        %v904 = vpack.c.b16 %v824, %v819
        %v905 = vpack.c.b16 %v825, %v820
        %v906 = vpack.c.b16 %v826, %v821
        %v1043 = vunpack.c.l.b16 %v499
        %v1044 = vunpack.c.l.b16 %v500
        %v1045 = vunpack.c.l.b16 %v501
        %v1046 = vunpack.c.l.b16 %v502
        %v1047 = vunpack.c.l.b16 %v503
        %v1048 = vunpack.c.l.b16 %v504
        %v1049 = vunpack.c.l.b16 %v505
        %v1050 = vunpack.c.l.b16 %v506
        %v1051 = vunpack.c.l.b16 %v507
        %v1052 = vunpack.c.l.b16 %v508
        %v1053 = vunpack.c.l.b16 %v509
        %v1054 = vunpack.c.l.b16 %v510
        %v1055 = vunpack.c.l.b16 %v511
        %v1056 = vunpack.c.l.b16 %v512
        %v1057 = vunpack.c.l.b16 %v513
        %v1058 = vunpack.c.l.b16 %v514
        %v1059 = vunpack.c.l.b16 %v515
        %v1060 = vunpack.c.l.b16 %v516
        %v1061 = vunpack.c.l.b16 %v517
        %v1062 = vunpack.c.l.b16 %v518
        %v1063 = vunpack.c.l.b16 %v519
        %v1064 = vunpack.c.l.b16 %v520
        %v1065 = vunpack.c.l.b16 %v521
        %v1066 = vunpack.c.l.b16 %v522
        %v1067 = vunpack.c.l.b16 %v523
        %v1068 = vunpack.c.l.b16 %v524
        %v1069 = vunpack.c.l.b16 %v525
        %v1070 = vunpack.c.l.b16 %v526
        %v1071 = vunpack.c.l.b16 %v527
        %v1072 = vunpack.c.l.b16 %v528
        %v1073 = vunpack.c.l.b16 %v529
        %v1074 = vunpack.c.l.b16 %v530
        %v1075 = vunpack.c.l.b16 %v531
        %v1076 = vunpack.c.l.b16 %v532
        %v1077 = vunpack.c.l.b16 %v533
        %v1078 = vunpack.c.l.b16 %v534
        %v1079 = vunpack.c.l.b16 %v535
        %v1080 = vunpack.c.l.b16 %v536
        %v1081 = vunpack.c.l.b16 %v537
        %v1082 = vunpack.c.l.b16 %v538
        %v1083 = vunpack.c.l.b16 %v539
        %v1084 = vunpack.c.l.b16 %v540
        %v1085 = vunpack.c.l.b16 %v541
        %v1086 = vunpack.c.l.b16 %v542
        %v1087 = vunpack.c.l.b16 %v543
        %v1088 = vunpack.c.l.b16 %v544
        %v1089 = vunpack.c.l.b16 %v545
        %v1090 = vunpack.c.l.b16 %v546
        %v1091 = vunpack.c.l.b16 %v547
        %v1092 = vunpack.c.l.b16 %v548
        %v1093 = vunpack.c.l.b16 %v549
        %v1094 = vunpack.c.l.b16 %v550
        %v1095 = vunpack.c.l.b16 %v551
        %v1096 = vunpack.c.l.b16 %v552
        %v1097 = vunpack.c.l.b16 %v553
        %v1098 = vunpack.c.l.b16 %v554
        %v1099 = vunpack.c.l.b16 %v555
        %v1100 = vunpack.c.l.b16 %v556
        %v1101 = vunpack.c.l.b16 %v557
        %v1102 = vunpack.c.l.b16 %v558
        %v1103 = vunpack.c.l.b16 %v559
        %v1104 = vunpack.c.l.b16 %v560
        %v1105 = vunpack.c.l.b16 %v561
        %v1106 = vunpack.c.l.b16 %v562
        %v1107 = vunpack.c.l.b16 %v563
        %v1108 = vunpack.c.l.b16 %v564
        %v1109 = vunpack.c.l.b16 %v565
        %v1110 = vunpack.c.l.b16 %v566
        %v1111 = vunpack.c.l.b16 %v567
        %v1112 = vunpack.c.l.b16 %v568
        %v1113 = vunpack.c.l.b16 %v569
        %v1114 = vunpack.c.l.b16 %v570
        %v1115 = vpack.c.b16 %v1044, %v1043
        %v1116 = vpack.c.b16 %v1046, %v1045
        %v1117 = vpack.c.b16 %v1048, %v1047
        %v1118 = vpack.c.b16 %v1050, %v1049
        %v1119 = vpack.c.b16 %v1052, %v1051
        %v1120 = vpack.c.b16 %v1054, %v1053
        %v1121 = vpack.c.b16 %v1056, %v1055
        %v1122 = vpack.c.b16 %v1058, %v1057
        %v1123 = vpack.c.b16 %v1060, %v1059
        %v1124 = vpack.c.b16 %v1062, %v1061
        %v1125 = vpack.c.b16 %v1064, %v1063
        %v1126 = vpack.c.b16 %v1066, %v1065
        %v1127 = vpack.c.b16 %v1068, %v1067
        %v1128 = vpack.c.b16 %v1070, %v1069
        %v1129 = vpack.c.b16 %v1072, %v1071
        %v1130 = vpack.c.b16 %v1074, %v1073
        %v1131 = vpack.c.b16 %v1076, %v1075
        %v1132 = vpack.c.b16 %v1078, %v1077
        %v1133 = vpack.c.b16 %v1080, %v1079
        %v1134 = vpack.c.b16 %v1082, %v1081
        %v1135 = vpack.c.b16 %v1084, %v1083
        %v1136 = vpack.c.b16 %v1086, %v1085
        %v1137 = vpack.c.b16 %v1088, %v1087
        %v1138 = vpack.c.b16 %v1090, %v1089
        %v1139 = vpack.c.b16 %v1092, %v1091
        %v1140 = vpack.c.b16 %v1094, %v1093
        %v1141 = vpack.c.b16 %v1096, %v1095
        %v1142 = vpack.c.b16 %v1098, %v1097
        %v1143 = vpack.c.b16 %v1100, %v1099
        %v1144 = vpack.c.b16 %v1102, %v1101
        %v1145 = vpack.c.b16 %v1104, %v1103
        %v1146 = vpack.c.b16 %v1106, %v1105
        %v1147 = vpack.c.b16 %v1108, %v1107
        %v1148 = vpack.c.b16 %v1110, %v1109
        %v1149 = vpack.c.b16 %v1112, %v1111
        %v1150 = vpack.c.b16 %v1114, %v1113
        %vm1187 = vcmask 523264
        %v1189 = vsel %vm1187, %v831, 0
        %v1192 = vsel %vm1187, %v836, 0
        %v1195 = vsel %vm1187, %v841, 0
        %v1198 = vsel %vm1187, %v846, 0
        %v1201 = vsel %vm1187, %v851, 0
        %v1204 = vsel %vm1187, %v856, 0
        %v1207 = vsel %vm1187, %v861, 0
        %v1210 = vsel %vm1187, %v866, 0
        %v1213 = vsel %vm1187, %v871, 0
        %v1216 = vsel %vm1187, %v876, 0
        %v1219 = vsel %vm1187, %v881, 0
        %v1222 = vsel %vm1187, %v886, 0
        %v1225 = vsel %vm1187, %v891, 0
        %v1228 = vsel %vm1187, %v896, 0
        %v1231 = vsel %vm1187, %v901, 0
        %v1234 = vsel %vm1187, %v906, 0
        %1236 = vmatprep.subr.bf16.mxu0 0
        %1237 = vmatpush1.bf16.msra.mxu0 %v1115
        %1238 = vmatprep.subr.bf16.mxu0 0
        %1239 = vmatpush1.bf16.msra.mxu0 %v1116
        %1240 = vmatprep.subr.bf16.mxu0 0
        %1241 = vmatpush1.bf16.msra.mxu0 %v1117
        %1242 = vmatprep.subr.bf16.mxu0 0
        %1243 = vmatpush1.bf16.msra.mxu0 %v1118
        %1244 = vmatprep.subr.bf16.mxu0 0
        %1245 = vmatpush1.bf16.msra.mxu0 %v1119
        %1246 = vmatprep.subr.bf16.mxu0 0
        %1247 = vmatpush1.bf16.msra.mxu0 %v1120
        %1248 = vmatprep.subr.bf16.mxu0 0
        %1249 = vmatpush1.bf16.msra.mxu0 %v1121
        %1250 = vmatprep.subr.bf16.mxu0 0
        %1251 = vmatpush1.bf16.msra.mxu0 %v1122
        %1252 = vmatprep.subr.bf16.mxu0 0
        %1253 = vmatpush1.bf16.msra.mxu0 %v1123
        %1254 = vmatprep.subr.bf16.mxu0 0
        %1255 = vmatpush1.bf16.msra.mxu0 %v1124
        %1256 = vmatprep.subr.bf16.mxu0 0
        %1257 = vmatpush1.bf16.msra.mxu0 %v1125
        %1258 = vmatprep.subr.bf16.mxu0 0
        %1259 = vmatpush1.bf16.msra.mxu0 %v1126
        %1260 = vmatprep.subr.bf16.mxu0 0
        %1261 = vmatpush1.bf16.msra.mxu0 %v1127
        %1262 = vmatprep.subr.bf16.mxu0 0
        %1263 = vmatpush1.bf16.msra.mxu0 %v1128
        %1264 = vmatprep.subr.bf16.mxu0 0
        %1265 = vmatpush1.bf16.msra.mxu0 %v1129
        %1266 = vmatprep.subr.bf16.mxu0 0
        %1267 = vmatpush1.bf16.msra.mxu0 %v1130
        %1268 = vmatprep.mubr.bf16.mxu0 %v828
        %1269 = vmatmul.mubr.bf16.gmra.mrb[0].mxu0 %v827
        %v1270 = vpop.f32.mrb[0].mxu0
        %v1271 = vadd.f32 0.0, %v1270
        %v1272 = vpop.f32.mrb[0].mxu0
        %v1273 = vpop.f32.mrb[0].mxu0
        %v1274 = vadd.f32 0.0, %v1273
        %v1275 = vpop.f32.mrb[0].mxu0
        %1276 = vmatprep.mubr.bf16.mxu0 %v833
        %1277 = vmatmul.mubr.bf16.gmra.mrb[0].mxu0 %v832
        %v1278 = vpop.f32.mrb[0].mxu0
        %v1279 = vadd.f32 0.0, %v1278
        %v1280 = vpop.f32.mrb[0].mxu0
        %v1281 = vpop.f32.mrb[0].mxu0
        %v1282 = vadd.f32 0.0, %v1281
        %v1283 = vpop.f32.mrb[0].mxu0
        %1284 = vmatprep.mubr.bf16.mxu0 %v838
        %1285 = vmatmul.mubr.bf16.gmra.mrb[0].mxu0 %v837
        %v1286 = vpop.f32.mrb[0].mxu0
        %v1287 = vadd.f32 0.0, %v1286
        %v1288 = vpop.f32.mrb[0].mxu0
        %v1289 = vpop.f32.mrb[0].mxu0
        %v1290 = vadd.f32 0.0, %v1289
        %v1291 = vpop.f32.mrb[0].mxu0
        %1292 = vmatprep.mubr.bf16.mxu0 %v843
        %1293 = vmatmul.mubr.bf16.gmra.mrb[0].mxu0 %v842
        %v1294 = vpop.f32.mrb[0].mxu0
        %v1295 = vadd.f32 0.0, %v1294
        %v1296 = vpop.f32.mrb[0].mxu0
        %v1297 = vpop.f32.mrb[0].mxu0
        %v1298 = vadd.f32 0.0, %v1297
        %v1299 = vpop.f32.mrb[0].mxu0
        %1300 = vmatprep.mubr.bf16.mxu0 %v848
        %1301 = vmatmul.mubr.bf16.gmra.mrb[0].mxu0 %v847
        %v1302 = vpop.f32.mrb[0].mxu0
        %v1303 = vadd.f32 0.0, %v1302
        %v1304 = vpop.f32.mrb[0].mxu0
        %v1305 = vpop.f32.mrb[0].mxu0
        %v1306 = vadd.f32 0.0, %v1305
        %v1307 = vpop.f32.mrb[0].mxu0
        %1308 = vmatprep.mubr.bf16.mxu0 %v853
        %1309 = vmatmul.mubr.bf16.gmra.mrb[0].mxu0 %v852
        %v1310 = vpop.f32.mrb[0].mxu0
        %v1311 = vadd.f32 0.0, %v1310
        %v1312 = vpop.f32.mrb[0].mxu0
        %v1313 = vpop.f32.mrb[0].mxu0
        %v1314 = vadd.f32 0.0, %v1313
        %v1315 = vpop.f32.mrb[0].mxu0
        %1316 = vmatprep.mubr.bf16.mxu0 %v858
        %1317 = vmatmul.mubr.bf16.gmra.mrb[0].mxu0 %v857
        %v1318 = vpop.f32.mrb[0].mxu0
        %v1319 = vadd.f32 0.0, %v1318
        %v1320 = vpop.f32.mrb[0].mxu0
        %v1321 = vpop.f32.mrb[0].mxu0
        %v1322 = vadd.f32 0.0, %v1321
        %v1323 = vpop.f32.mrb[0].mxu0
        %1324 = vmatprep.mubr.bf16.mxu0 %v863
        %1325 = vmatmul.mubr.bf16.gmra.mrb[0].mxu0 %v862
        %v1326 = vpop.f32.mrb[0].mxu0
        %v1327 = vadd.f32 0.0, %v1326
        %v1328 = vpop.f32.mrb[0].mxu0
        %v1329 = vpop.f32.mrb[0].mxu0
        %v1330 = vadd.f32 0.0, %v1329
        %v1331 = vpop.f32.mrb[0].mxu0
        %1332 = vmatprep.mubr.bf16.mxu0 %v868
        %1333 = vmatmul.mubr.bf16.gmra.mrb[0].mxu0 %v867
        %v1334 = vpop.f32.mrb[0].mxu0
        %v1335 = vadd.f32 0.0, %v1334
        %v1336 = vpop.f32.mrb[0].mxu0
        %v1337 = vpop.f32.mrb[0].mxu0
        %v1338 = vadd.f32 0.0, %v1337
        %v1339 = vpop.f32.mrb[0].mxu0
        %1340 = vmatprep.mubr.bf16.mxu0 %v873
        %1341 = vmatmul.mubr.bf16.gmra.mrb[0].mxu0 %v872
        %v1342 = vpop.f32.mrb[0].mxu0
        %v1343 = vadd.f32 0.0, %v1342
        %v1344 = vpop.f32.mrb[0].mxu0
        %v1345 = vpop.f32.mrb[0].mxu0
        %v1346 = vadd.f32 0.0, %v1345
        %v1347 = vpop.f32.mrb[0].mxu0
        %1348 = vmatprep.mubr.bf16.mxu0 %v878
        %1349 = vmatmul.mubr.bf16.gmra.mrb[0].mxu0 %v877
        %v1350 = vpop.f32.mrb[0].mxu0
        %v1351 = vadd.f32 0.0, %v1350
        %v1352 = vpop.f32.mrb[0].mxu0
        %v1353 = vpop.f32.mrb[0].mxu0
        %v1354 = vadd.f32 0.0, %v1353
        %v1355 = vpop.f32.mrb[0].mxu0
        %1356 = vmatprep.mubr.bf16.mxu0 %v883
        %1357 = vmatmul.mubr.bf16.gmra.mrb[0].mxu0 %v882
        %v1358 = vpop.f32.mrb[0].mxu0
        %v1359 = vadd.f32 0.0, %v1358
        %v1360 = vpop.f32.mrb[0].mxu0
        %v1361 = vpop.f32.mrb[0].mxu0
        %v1362 = vadd.f32 0.0, %v1361
        %v1363 = vpop.f32.mrb[0].mxu0
        %1364 = vmatprep.mubr.bf16.mxu0 %v888
        %1365 = vmatmul.mubr.bf16.gmra.mrb[0].mxu0 %v887
        %v1366 = vpop.f32.mrb[0].mxu0
        %v1367 = vadd.f32 0.0, %v1366
        %v1368 = vpop.f32.mrb[0].mxu0
        %v1369 = vpop.f32.mrb[0].mxu0
        %v1370 = vadd.f32 0.0, %v1369
        %v1371 = vpop.f32.mrb[0].mxu0
        %1372 = vmatprep.mubr.bf16.mxu0 %v893
        %1373 = vmatmul.mubr.bf16.gmra.mrb[0].mxu0 %v892
        %v1374 = vpop.f32.mrb[0].mxu0
        %v1375 = vadd.f32 0.0, %v1374
        %v1376 = vpop.f32.mrb[0].mxu0
        %v1377 = vpop.f32.mrb[0].mxu0
        %v1378 = vadd.f32 0.0, %v1377
        %v1379 = vpop.f32.mrb[0].mxu0
        %1380 = vmatprep.mubr.bf16.mxu0 %v898
        %1381 = vmatmul.mubr.bf16.gmra.mrb[0].mxu0 %v897
        %v1382 = vpop.f32.mrb[0].mxu0
        %v1383 = vadd.f32 0.0, %v1382
        %v1384 = vpop.f32.mrb[0].mxu0
        %v1385 = vpop.f32.mrb[0].mxu0
        %v1386 = vadd.f32 0.0, %v1385
        %v1387 = vpop.f32.mrb[0].mxu0
        %1388 = vmatprep.mubr.bf16.mxu0 %v903
        %1389 = vmatmul.mubr.bf16.gmra.mrb[0].mxu0 %v902
        %v1390 = vpop.f32.mrb[0].mxu0
        %v1391 = vadd.f32 0.0, %v1390
        %v1392 = vpop.f32.mrb[0].mxu0
        %v1393 = vpop.f32.mrb[0].mxu0
        %v1394 = vadd.f32 0.0, %v1393
        %v1395 = vpop.f32.mrb[0].mxu0
        %1396 = vdwg.mxu0
        %1397 = vmatprep.subr.bf16.mxu0 0
        %1398 = vmatpush1.bf16.msra.mxu0 %v1131
        %1399 = vmatprep.subr.bf16.mxu0 0
        %1400 = vmatpush1.bf16.msra.mxu0 %v1132
        %1401 = vmatprep.subr.bf16.mxu0 0
        %1402 = vmatpush1.bf16.msra.mxu0 %v1133
        %1403 = vmatprep.subr.bf16.mxu0 0
        %1404 = vmatpush1.bf16.msra.mxu0 %v1134
        %1405 = vmatprep.subr.bf16.mxu0 0
        %1406 = vmatpush1.bf16.msra.mxu0 %v1135
        %1407 = vmatprep.subr.bf16.mxu0 0
        %1408 = vmatpush1.bf16.msra.mxu0 %v1136
        %1409 = vmatprep.subr.bf16.mxu0 0
        %1410 = vmatpush1.bf16.msra.mxu0 %v1137
        %1411 = vmatprep.subr.bf16.mxu0 0
        %1412 = vmatpush1.bf16.msra.mxu0 %v1138
        %1413 = vmatprep.subr.bf16.mxu0 0
        %1414 = vmatpush1.bf16.msra.mxu0 %v1139
        %1415 = vmatprep.subr.bf16.mxu0 0
        %1416 = vmatpush1.bf16.msra.mxu0 %v1140
        %1417 = vmatprep.subr.bf16.mxu0 0
        %1418 = vmatpush1.bf16.msra.mxu0 %v1141
        %1419 = vmatprep.subr.bf16.mxu0 0
        %1420 = vmatpush1.bf16.msra.mxu0 %v1142
        %1421 = vmatprep.subr.bf16.mxu0 0
        %1422 = vmatpush1.bf16.msra.mxu0 %v1143
        %1423 = vmatprep.subr.bf16.mxu0 0
        %1424 = vmatpush1.bf16.msra.mxu0 %v1144
        %1425 = vmatprep.subr.bf16.mxu0 0
        %1426 = vmatpush1.bf16.msra.mxu0 %v1145
        %1427 = vmatprep.subr.bf16.mxu0 0
        %1428 = vmatpush1.bf16.msra.mxu0 %v1146
        %1429 = vmatprep.mubr.bf16.mxu0 %v830
        %1430 = vmatmul.mubr.bf16.gmra.mrb[0].mxu0 %v829
        %v1431 = vpop.f32.mrb[0].mxu0
        %v1432 = vadd.f32 %v1271, %v1431
        %v1433 = vpop.f32.mrb[0].mxu0
        %v1434 = vpop.f32.mrb[0].mxu0
        %v1435 = vadd.f32 %v1274, %v1434
        %v1436 = vpop.f32.mrb[0].mxu0
        %1437 = vmatprep.mubr.bf16.mxu0 %v835
        %1438 = vmatmul.mubr.bf16.gmra.mrb[0].mxu0 %v834
        %v1439 = vpop.f32.mrb[0].mxu0
        %v1440 = vadd.f32 %v1279, %v1439
        %v1441 = vpop.f32.mrb[0].mxu0
        %v1442 = vpop.f32.mrb[0].mxu0
        %v1443 = vadd.f32 %v1282, %v1442
        %v1444 = vpop.f32.mrb[0].mxu0
        %1445 = vmatprep.mubr.bf16.mxu0 %v840
        %1446 = vmatmul.mubr.bf16.gmra.mrb[0].mxu0 %v839
        %v1447 = vpop.f32.mrb[0].mxu0
        %v1448 = vadd.f32 %v1287, %v1447
        %v1449 = vpop.f32.mrb[0].mxu0
        %v1450 = vpop.f32.mrb[0].mxu0
        %v1451 = vadd.f32 %v1290, %v1450
        %v1452 = vpop.f32.mrb[0].mxu0
        %1453 = vmatprep.mubr.bf16.mxu0 %v845
        %1454 = vmatmul.mubr.bf16.gmra.mrb[0].mxu0 %v844
        %v1455 = vpop.f32.mrb[0].mxu0
        %v1456 = vadd.f32 %v1295, %v1455
        %v1457 = vpop.f32.mrb[0].mxu0
        %v1458 = vpop.f32.mrb[0].mxu0
        %v1459 = vadd.f32 %v1298, %v1458
        %v1460 = vpop.f32.mrb[0].mxu0
        %1461 = vmatprep.mubr.bf16.mxu0 %v850
        %1462 = vmatmul.mubr.bf16.gmra.mrb[0].mxu0 %v849
        %v1463 = vpop.f32.mrb[0].mxu0
        %v1464 = vadd.f32 %v1303, %v1463
        %v1465 = vpop.f32.mrb[0].mxu0
        %v1466 = vpop.f32.mrb[0].mxu0
        %v1467 = vadd.f32 %v1306, %v1466
        %v1468 = vpop.f32.mrb[0].mxu0
        %1469 = vmatprep.mubr.bf16.mxu0 %v855
        %1470 = vmatmul.mubr.bf16.gmra.mrb[0].mxu0 %v854
        %v1471 = vpop.f32.mrb[0].mxu0
        %v1472 = vadd.f32 %v1311, %v1471
        %v1473 = vpop.f32.mrb[0].mxu0
        %v1474 = vpop.f32.mrb[0].mxu0
        %v1475 = vadd.f32 %v1314, %v1474
        %v1476 = vpop.f32.mrb[0].mxu0
        %1477 = vmatprep.mubr.bf16.mxu0 %v860
        %1478 = vmatmul.mubr.bf16.gmra.mrb[0].mxu0 %v859
        %v1479 = vpop.f32.mrb[0].mxu0
        %v1480 = vadd.f32 %v1319, %v1479
        %v1481 = vpop.f32.mrb[0].mxu0
        %v1482 = vpop.f32.mrb[0].mxu0
        %v1483 = vadd.f32 %v1322, %v1482
        %v1484 = vpop.f32.mrb[0].mxu0
        %1485 = vmatprep.mubr.bf16.mxu0 %v865
        %1486 = vmatmul.mubr.bf16.gmra.mrb[0].mxu0 %v864
        %v1487 = vpop.f32.mrb[0].mxu0
        %v1488 = vadd.f32 %v1327, %v1487
        %v1489 = vpop.f32.mrb[0].mxu0
        %v1490 = vpop.f32.mrb[0].mxu0
        %v1491 = vadd.f32 %v1330, %v1490
        %v1492 = vpop.f32.mrb[0].mxu0
        %1493 = vmatprep.mubr.bf16.mxu0 %v870
        %1494 = vmatmul.mubr.bf16.gmra.mrb[0].mxu0 %v869
        %v1495 = vpop.f32.mrb[0].mxu0
        %v1496 = vadd.f32 %v1335, %v1495
        %v1497 = vpop.f32.mrb[0].mxu0
        %v1498 = vpop.f32.mrb[0].mxu0
        %v1499 = vadd.f32 %v1338, %v1498
        %v1500 = vpop.f32.mrb[0].mxu0
        %1501 = vmatprep.mubr.bf16.mxu0 %v875
        %1502 = vmatmul.mubr.bf16.gmra.mrb[0].mxu0 %v874
        %v1503 = vpop.f32.mrb[0].mxu0
        %v1504 = vadd.f32 %v1343, %v1503
        %v1505 = vpop.f32.mrb[0].mxu0
        %v1506 = vpop.f32.mrb[0].mxu0
        %v1507 = vadd.f32 %v1346, %v1506
        %v1508 = vpop.f32.mrb[0].mxu0
        %1509 = vmatprep.mubr.bf16.mxu0 %v880
        %1510 = vmatmul.mubr.bf16.gmra.mrb[0].mxu0 %v879
        %v1511 = vpop.f32.mrb[0].mxu0
        %v1512 = vadd.f32 %v1351, %v1511
        %v1513 = vpop.f32.mrb[0].mxu0
        %v1514 = vpop.f32.mrb[0].mxu0
        %v1515 = vadd.f32 %v1354, %v1514
        %v1516 = vpop.f32.mrb[0].mxu0
        %1517 = vmatprep.mubr.bf16.mxu0 %v885
        %1518 = vmatmul.mubr.bf16.gmra.mrb[0].mxu0 %v884
        %v1519 = vpop.f32.mrb[0].mxu0
        %v1520 = vadd.f32 %v1359, %v1519
        %v1521 = vpop.f32.mrb[0].mxu0
        %v1522 = vpop.f32.mrb[0].mxu0
        %v1523 = vadd.f32 %v1362, %v1522
        %v1524 = vpop.f32.mrb[0].mxu0
        %1525 = vmatprep.mubr.bf16.mxu0 %v890
        %1526 = vmatmul.mubr.bf16.gmra.mrb[0].mxu0 %v889
        %v1527 = vpop.f32.mrb[0].mxu0
        %v1528 = vadd.f32 %v1367, %v1527
        %v1529 = vpop.f32.mrb[0].mxu0
        %v1530 = vpop.f32.mrb[0].mxu0
        %v1531 = vadd.f32 %v1370, %v1530
        %v1532 = vpop.f32.mrb[0].mxu0
        %1533 = vmatprep.mubr.bf16.mxu0 %v895
        %1534 = vmatmul.mubr.bf16.gmra.mrb[0].mxu0 %v894
        %v1535 = vpop.f32.mrb[0].mxu0
        %v1536 = vadd.f32 %v1375, %v1535
        %v1537 = vpop.f32.mrb[0].mxu0
        %v1538 = vpop.f32.mrb[0].mxu0
        %v1539 = vadd.f32 %v1378, %v1538
        %v1540 = vpop.f32.mrb[0].mxu0
        %1541 = vmatprep.mubr.bf16.mxu0 %v900
        %1542 = vmatmul.mubr.bf16.gmra.mrb[0].mxu0 %v899
        %v1543 = vpop.f32.mrb[0].mxu0
        %v1544 = vadd.f32 %v1383, %v1543
        %v1545 = vpop.f32.mrb[0].mxu0
        %v1546 = vpop.f32.mrb[0].mxu0
        %v1547 = vadd.f32 %v1386, %v1546
        %v1548 = vpop.f32.mrb[0].mxu0
        %1549 = vmatprep.mubr.bf16.mxu0 %v905
        %1550 = vmatmul.mubr.bf16.gmra.mrb[0].mxu0 %v904
        %v1551 = vpop.f32.mrb[0].mxu0
        %v1552 = vadd.f32 %v1391, %v1551
        %v1553 = vpop.f32.mrb[0].mxu0
        %v1554 = vpop.f32.mrb[0].mxu0
        %v1555 = vadd.f32 %v1394, %v1554
        %v1556 = vpop.f32.mrb[0].mxu0
        %1557 = vdwg.mxu0
        %1558 = vmatprep.subr.bf16.mxu0 0
        %1559 = vmatpush1.bf16.msra.mxu0 %v1147
        %1560 = vmatprep.subr.bf16.mxu0 0
        %1561 = vmatpush1.bf16.msra.mxu0 %v1148
        %1562 = vmatprep.subr.bf16.mxu0 0
        %1563 = vmatpush1.bf16.msra.mxu0 %v1149
        %1564 = vmatprep.subr.bf16.mxu0 0
        %1565 = vmatpush1.bf16.msra.mxu0 %v1150
        %1566 = vmatprep.subr.bf16.mxu0 0
        %1567 = vmatpush1.bf16.msra.mxu0 0
        %1568 = vmatprep.subr.bf16.mxu0 0
        %1569 = vmatpush1.bf16.msra.mxu0 0
        %1570 = vmatprep.subr.bf16.mxu0 0
        %1571 = vmatpush1.bf16.msra.mxu0 0
        %1572 = vmatprep.subr.bf16.mxu0 0
        %1573 = vmatpush1.bf16.msra.mxu0 0
        %1574 = vmatprep.subr.bf16.mxu0 0
        %1575 = vmatpush1.bf16.msra.mxu0 0
        %1576 = vmatprep.subr.bf16.mxu0 0
        %1577 = vmatpush1.bf16.msra.mxu0 0
        %1578 = vmatprep.subr.bf16.mxu0 0
        %1579 = vmatpush1.bf16.msra.mxu0 0
        %1580 = vmatprep.subr.bf16.mxu0 0
        %1581 = vmatpush1.bf16.msra.mxu0 0
        %1582 = vmatprep.subr.bf16.mxu0 0
        %1583 = vmatpush1.bf16.msra.mxu0 0
        %1584 = vmatprep.subr.bf16.mxu0 0
        %1585 = vmatpush1.bf16.msra.mxu0 0
        %1586 = vmatprep.subr.bf16.mxu0 0
        %1587 = vmatpush1.bf16.msra.mxu0 0
        %1588 = vmatprep.subr.bf16.mxu0 0
        %1589 = vmatpush1.bf16.msra.mxu0 0
        %1590 = vmatprep.mubr.bf16.mxu0 0
        %1591 = vmatmul.mubr.bf16.gmra.mrb[0].mxu0 %v1189
        %v1592 = vpop.f32.mrb[0].mxu0
        %v1593 = vadd.f32 %v1432, %v1592
        %v1594 = vpop.f32.mrb[0].mxu0
        %v1595 = vpop.f32.mrb[0].mxu0
        %v1596 = vadd.f32 %v1435, %v1595
        %v1597 = vpop.f32.mrb[0].mxu0
        %1598 = vmatprep.mubr.bf16.mxu0 0
        %1599 = vmatmul.mubr.bf16.gmra.mrb[0].mxu0 %v1192
        %v1600 = vpop.f32.mrb[0].mxu0
        %v1601 = vadd.f32 %v1440, %v1600
        %v1602 = vpop.f32.mrb[0].mxu0
        %v1603 = vpop.f32.mrb[0].mxu0
        %v1604 = vadd.f32 %v1443, %v1603
        %v1605 = vpop.f32.mrb[0].mxu0
        %1606 = vmatprep.mubr.bf16.mxu0 0
        %1607 = vmatmul.mubr.bf16.gmra.mrb[0].mxu0 %v1195
        %v1608 = vpop.f32.mrb[0].mxu0
        %v1609 = vadd.f32 %v1448, %v1608
        %v1610 = vpop.f32.mrb[0].mxu0
        %v1611 = vpop.f32.mrb[0].mxu0
        %v1612 = vadd.f32 %v1451, %v1611
        %v1613 = vpop.f32.mrb[0].mxu0
        %1614 = vmatprep.mubr.bf16.mxu0 0
        %1615 = vmatmul.mubr.bf16.gmra.mrb[0].mxu0 %v1198
        %v1616 = vpop.f32.mrb[0].mxu0
        %v1617 = vadd.f32 %v1456, %v1616
        %v1618 = vpop.f32.mrb[0].mxu0
        %v1619 = vpop.f32.mrb[0].mxu0
        %v1620 = vadd.f32 %v1459, %v1619
        %v1621 = vpop.f32.mrb[0].mxu0
        %1622 = vmatprep.mubr.bf16.mxu0 0
        %1623 = vmatmul.mubr.bf16.gmra.mrb[0].mxu0 %v1201
        %v1624 = vpop.f32.mrb[0].mxu0
        %v1625 = vadd.f32 %v1464, %v1624
        %v1626 = vpop.f32.mrb[0].mxu0
        %v1627 = vpop.f32.mrb[0].mxu0
        %v1628 = vadd.f32 %v1467, %v1627
        %v1629 = vpop.f32.mrb[0].mxu0
        %1630 = vmatprep.mubr.bf16.mxu0 0
        %1631 = vmatmul.mubr.bf16.gmra.mrb[0].mxu0 %v1204
        %v1632 = vpop.f32.mrb[0].mxu0
        %v1633 = vadd.f32 %v1472, %v1632
        %v1634 = vpop.f32.mrb[0].mxu0
        %v1635 = vpop.f32.mrb[0].mxu0
        %v1636 = vadd.f32 %v1475, %v1635
        %v1637 = vpop.f32.mrb[0].mxu0
        %1638 = vmatprep.mubr.bf16.mxu0 0
        %1639 = vmatmul.mubr.bf16.gmra.mrb[0].mxu0 %v1207
        %v1640 = vpop.f32.mrb[0].mxu0
        %v1641 = vadd.f32 %v1480, %v1640
        %v1642 = vpop.f32.mrb[0].mxu0
        %v1643 = vpop.f32.mrb[0].mxu0
        %v1644 = vadd.f32 %v1483, %v1643
        %v1645 = vpop.f32.mrb[0].mxu0
        %1646 = vmatprep.mubr.bf16.mxu0 0
        %1647 = vmatmul.mubr.bf16.gmra.mrb[0].mxu0 %v1210
        %v1648 = vpop.f32.mrb[0].mxu0
        %v1649 = vadd.f32 %v1488, %v1648
        %v1650 = vpop.f32.mrb[0].mxu0
        %v1651 = vpop.f32.mrb[0].mxu0
        %v1652 = vadd.f32 %v1491, %v1651
        %v1653 = vpop.f32.mrb[0].mxu0
        %1654 = vmatprep.mubr.bf16.mxu0 0
        %1655 = vmatmul.mubr.bf16.gmra.mrb[0].mxu0 %v1213
        %v1656 = vpop.f32.mrb[0].mxu0
        %v1657 = vadd.f32 %v1496, %v1656
        %v1658 = vpop.f32.mrb[0].mxu0
        %v1659 = vpop.f32.mrb[0].mxu0
        %v1660 = vadd.f32 %v1499, %v1659
        %v1661 = vpop.f32.mrb[0].mxu0
        %1662 = vmatprep.mubr.bf16.mxu0 0
        %1663 = vmatmul.mubr.bf16.gmra.mrb[0].mxu0 %v1216
        %v1664 = vpop.f32.mrb[0].mxu0
        %v1665 = vadd.f32 %v1504, %v1664
        %v1666 = vpop.f32.mrb[0].mxu0
        %v1667 = vpop.f32.mrb[0].mxu0
        %v1668 = vadd.f32 %v1507, %v1667
        %v1669 = vpop.f32.mrb[0].mxu0
        %1670 = vmatprep.mubr.bf16.mxu0 0
        %1671 = vmatmul.mubr.bf16.gmra.mrb[0].mxu0 %v1219
        %v1672 = vpop.f32.mrb[0].mxu0
        %v1673 = vadd.f32 %v1512, %v1672
        %v1674 = vpop.f32.mrb[0].mxu0
        %v1675 = vpop.f32.mrb[0].mxu0
        %v1676 = vadd.f32 %v1515, %v1675
        %v1677 = vpop.f32.mrb[0].mxu0
        %1678 = vmatprep.mubr.bf16.mxu0 0
        %1679 = vmatmul.mubr.bf16.gmra.mrb[0].mxu0 %v1222
        %v1680 = vpop.f32.mrb[0].mxu0
        %v1681 = vadd.f32 %v1520, %v1680
        %v1682 = vpop.f32.mrb[0].mxu0
        %v1683 = vpop.f32.mrb[0].mxu0
        %v1684 = vadd.f32 %v1523, %v1683
        %v1685 = vpop.f32.mrb[0].mxu0
        %1686 = vmatprep.mubr.bf16.mxu0 0
        %1687 = vmatmul.mubr.bf16.gmra.mrb[0].mxu0 %v1225
        %v1688 = vpop.f32.mrb[0].mxu0
        %v1689 = vadd.f32 %v1528, %v1688
        %v1690 = vpop.f32.mrb[0].mxu0
        %v1691 = vpop.f32.mrb[0].mxu0
        %v1692 = vadd.f32 %v1531, %v1691
        %v1693 = vpop.f32.mrb[0].mxu0
        %1694 = vmatprep.mubr.bf16.mxu0 0
        %1695 = vmatmul.mubr.bf16.gmra.mrb[0].mxu0 %v1228
        %v1696 = vpop.f32.mrb[0].mxu0
        %v1697 = vadd.f32 %v1536, %v1696
        %v1698 = vpop.f32.mrb[0].mxu0
        %v1699 = vpop.f32.mrb[0].mxu0
        %v1700 = vadd.f32 %v1539, %v1699
        %v1701 = vpop.f32.mrb[0].mxu0
        %1702 = vmatprep.mubr.bf16.mxu0 0
        %1703 = vmatmul.mubr.bf16.gmra.mrb[0].mxu0 %v1231
        %v1704 = vpop.f32.mrb[0].mxu0
        %v1705 = vadd.f32 %v1544, %v1704
        %v1706 = vpop.f32.mrb[0].mxu0
        %v1707 = vpop.f32.mrb[0].mxu0
        %v1708 = vadd.f32 %v1547, %v1707
        %v1709 = vpop.f32.mrb[0].mxu0
        %1710 = vmatprep.mubr.bf16.mxu0 0
        %1711 = vmatmul.mubr.bf16.gmra.mrb[0].mxu0 %v1234
        %v1712 = vpop.f32.mrb[0].mxu0
        %v1713 = vadd.f32 %v1552, %v1712
        %v1714 = vpop.f32.mrb[0].mxu0
        %v1715 = vpop.f32.mrb[0].mxu0
        %v1716 = vadd.f32 %v1555, %v1715
        %v1717 = vpop.f32.mrb[0].mxu0
        %1718 = vdwg.mxu0
        %v1719 = vld [vmem:[%s3] sm:$0x1]
        %v1720 = vlaneseq
        %v1721 = vshrl.u32 %v1720, 7
        %v1722 = vsub.s32 0, %v1721
        %v1723 = vrot.slane %v1719, %v1722
        %v1724 = vmul.f32 %v1593, %v1723
        %v1725 = vmul.f32 %v1596, %v1723
        %v1726 = vmul.f32 %v1601, %v1723
        %v1727 = vmul.f32 %v1604, %v1723
        %v1728 = vmul.f32 %v1609, %v1723
        %v1729 = vmul.f32 %v1612, %v1723
        %v1730 = vmul.f32 %v1617, %v1723
        %v1731 = vmul.f32 %v1620, %v1723
        %v1732 = vmul.f32 %v1625, %v1723
        %v1733 = vmul.f32 %v1628, %v1723
        %v1734 = vmul.f32 %v1633, %v1723
        %v1735 = vmul.f32 %v1636, %v1723
        %v1736 = vmul.f32 %v1641, %v1723
        %v1737 = vmul.f32 %v1644, %v1723
        %v1738 = vmul.f32 %v1649, %v1723
        %v1739 = vmul.f32 %v1652, %v1723
        %v1740 = vmul.f32 %v1657, %v1723
        %v1741 = vmul.f32 %v1660, %v1723
        %v1742 = vmul.f32 %v1665, %v1723
        %v1743 = vmul.f32 %v1668, %v1723
        %v1744 = vmul.f32 %v1673, %v1723
        %v1745 = vmul.f32 %v1676, %v1723
        %v1746 = vmul.f32 %v1681, %v1723
        %v1747 = vmul.f32 %v1684, %v1723
        %v1748 = vmul.f32 %v1689, %v1723
        %v1749 = vmul.f32 %v1692, %v1723
        %v1750 = vmul.f32 %v1697, %v1723
        %v1751 = vmul.f32 %v1700, %v1723
        %v1752 = vmul.f32 %v1705, %v1723
        %v1753 = vmul.f32 %v1708, %v1723
        %v1754 = vmul.f32 %v1713, %v1723
        %v1755 = vmul.f32 %v1716, %v1723
        %v1756 = vld [vmem:[%s4] sm:$0x1]
        %v1757 = vlaneseq
        %v1758 = vshrl.u32 %v1757, 7
        %v1759 = vsub.s32 0, %v1758
        %v1760 = vrot.slane %v1756, %v1759
        %v1761 = vadd.f32 %v1724, %v1760
        %v1762 = vadd.f32 %v1725, %v1760
        %v1763 = vadd.f32 %v1726, %v1760
        %v1764 = vadd.f32 %v1727, %v1760
        %v1765 = vadd.f32 %v1728, %v1760
        %v1766 = vadd.f32 %v1729, %v1760
        %v1767 = vadd.f32 %v1730, %v1760
        %v1768 = vadd.f32 %v1731, %v1760
        %v1769 = vadd.f32 %v1732, %v1760
        %v1770 = vadd.f32 %v1733, %v1760
        %v1771 = vadd.f32 %v1734, %v1760
        %v1772 = vadd.f32 %v1735, %v1760
        %v1773 = vadd.f32 %v1736, %v1760
        %v1774 = vadd.f32 %v1737, %v1760
        %v1775 = vadd.f32 %v1738, %v1760
        %v1776 = vadd.f32 %v1739, %v1760
        %v1777 = vadd.f32 %v1740, %v1760
        %v1778 = vadd.f32 %v1741, %v1760
        %v1779 = vadd.f32 %v1742, %v1760
        %v1780 = vadd.f32 %v1743, %v1760
        %v1781 = vadd.f32 %v1744, %v1760
        %v1782 = vadd.f32 %v1745, %v1760
        %v1783 = vadd.f32 %v1746, %v1760
        %v1784 = vadd.f32 %v1747, %v1760
        %v1785 = vadd.f32 %v1748, %v1760
        %v1786 = vadd.f32 %v1749, %v1760
        %v1787 = vadd.f32 %v1750, %v1760
        %v1788 = vadd.f32 %v1751, %v1760
        %v1789 = vadd.f32 %v1752, %v1760
        %v1790 = vadd.f32 %v1753, %v1760
        %v1791 = vadd.f32 %v1754, %v1760
        %v1792 = vadd.f32 %v1755, %v1760
        %v1793 = vmax.f32 %v1761, 0.0
        %v1794 = vmax.f32 %v1762, 0.0
        %v1795 = vmax.f32 %v1763, 0.0
        %v1796 = vmax.f32 %v1764, 0.0
        %v1797 = vmax.f32 %v1765, 0.0
        %v1798 = vmax.f32 %v1766, 0.0
        %v1799 = vmax.f32 %v1767, 0.0
        %v1800 = vmax.f32 %v1768, 0.0
        %v1801 = vmax.f32 %v1769, 0.0
        %v1802 = vmax.f32 %v1770, 0.0
        %v1803 = vmax.f32 %v1771, 0.0
        %v1804 = vmax.f32 %v1772, 0.0
        %v1805 = vmax.f32 %v1773, 0.0
        %v1806 = vmax.f32 %v1774, 0.0
        %v1807 = vmax.f32 %v1775, 0.0
        %v1808 = vmax.f32 %v1776, 0.0
        %v1809 = vmax.f32 %v1777, 0.0
        %v1810 = vmax.f32 %v1778, 0.0
        %v1811 = vmax.f32 %v1779, 0.0
        %v1812 = vmax.f32 %v1780, 0.0
        %v1813 = vmax.f32 %v1781, 0.0
        %v1814 = vmax.f32 %v1782, 0.0
        %v1815 = vmax.f32 %v1783, 0.0
        %v1816 = vmax.f32 %v1784, 0.0
        %v1817 = vmax.f32 %v1785, 0.0
        %v1818 = vmax.f32 %v1786, 0.0
        %v1819 = vmax.f32 %v1787, 0.0
        %v1820 = vmax.f32 %v1788, 0.0
        %v1821 = vmax.f32 %v1789, 0.0
        %v1822 = vmax.f32 %v1790, 0.0
        %v1823 = vmax.f32 %v1791, 0.0
        %v1824 = vmax.f32 %v1792, 0.0
        %v1825 = vpack.c.bf16 %v1794, %v1793
        %v1826 = vpack.c.bf16 %v1796, %v1795
        %v1827 = vpack.c.bf16 %v1798, %v1797
        %v1828 = vpack.c.bf16 %v1800, %v1799
        %v1829 = vpack.c.bf16 %v1802, %v1801
        %v1830 = vpack.c.bf16 %v1804, %v1803
        %v1831 = vpack.c.bf16 %v1806, %v1805
        %v1832 = vpack.c.bf16 %v1808, %v1807
        %v1833 = vpack.c.bf16 %v1810, %v1809
        %v1834 = vpack.c.bf16 %v1812, %v1811
        %v1835 = vpack.c.bf16 %v1814, %v1813
        %v1836 = vpack.c.bf16 %v1816, %v1815
        %v1837 = vpack.c.bf16 %v1818, %v1817
        %v1838 = vpack.c.bf16 %v1820, %v1819
        %v1839 = vpack.c.bf16 %v1822, %v1821
        %v1840 = vpack.c.bf16 %v1824, %v1823
        %v1857 = vunpack.c.l.b16 %v1825
        %v1858 = vunpack.c.h.b16 %v1825
        %v1859 = vunpack.c.l.b16 %v1826
        %v1860 = vunpack.c.h.b16 %v1826
        %v1861 = vunpack.c.l.b16 %v1827
        %v1862 = vunpack.c.h.b16 %v1827
        %v1863 = vunpack.c.l.b16 %v1828
        %v1864 = vunpack.c.h.b16 %v1828
        %v1865 = vunpack.c.l.b16 %v1829
        %v1866 = vunpack.c.h.b16 %v1829
        %v1867 = vunpack.c.l.b16 %v1830
        %v1868 = vunpack.c.h.b16 %v1830
        %v1869 = vunpack.c.l.b16 %v1831
        %v1870 = vunpack.c.h.b16 %v1831
        %v1871 = vunpack.c.l.b16 %v1832
        %v1872 = vunpack.c.h.b16 %v1832
        %v1873 = vunpack.c.l.b16 %v1833
        %v1874 = vunpack.c.h.b16 %v1833
        %v1875 = vunpack.c.l.b16 %v1834
        %v1876 = vunpack.c.h.b16 %v1834
        %v1877 = vunpack.c.l.b16 %v1835
        %v1878 = vunpack.c.h.b16 %v1835
        %v1879 = vunpack.c.l.b16 %v1836
        %v1880 = vunpack.c.h.b16 %v1836
        %v1881 = vunpack.c.l.b16 %v1837
        %v1882 = vunpack.c.h.b16 %v1837
        %v1883 = vunpack.c.l.b16 %v1838
        %v1884 = vunpack.c.h.b16 %v1838
        %v1885 = vunpack.c.l.b16 %v1839
        %v1886 = vunpack.c.h.b16 %v1839
        %v1887 = vunpack.c.l.b16 %v1840
        %v1888 = vunpack.c.h.b16 %v1840
        %v1889 = vpack.c.b16 %v1857, %v1857
        %v1890 = vpack.c.b16 %v1858, %v1858
        %v1891 = vpack.c.b16 %v1859, %v1859
        %v1892 = vpack.c.b16 %v1860, %v1860
        %v1893 = vpack.c.b16 %v1861, %v1861
        %v1894 = vpack.c.b16 %v1862, %v1862
        %v1895 = vpack.c.b16 %v1863, %v1863
        %v1896 = vpack.c.b16 %v1864, %v1864
        %v1897 = vpack.c.b16 %v1865, %v1865
        %v1898 = vpack.c.b16 %v1866, %v1866
        %v1899 = vpack.c.b16 %v1867, %v1867
        %v1900 = vpack.c.b16 %v1868, %v1868
        %v1901 = vpack.c.b16 %v1869, %v1869
        %v1902 = vpack.c.b16 %v1870, %v1870
        %v1903 = vpack.c.b16 %v1871, %v1871
        %v1904 = vpack.c.b16 %v1872, %v1872
        %v1905 = vpack.c.b16 %v1873, %v1873
        %v1906 = vpack.c.b16 %v1874, %v1874
        %v1907 = vpack.c.b16 %v1875, %v1875
        %v1908 = vpack.c.b16 %v1876, %v1876
        %v1909 = vpack.c.b16 %v1877, %v1877
        %v1910 = vpack.c.b16 %v1878, %v1878
        %v1911 = vpack.c.b16 %v1879, %v1879
        %v1912 = vpack.c.b16 %v1880, %v1880
        %v1913 = vpack.c.b16 %v1881, %v1881
        %v1914 = vpack.c.b16 %v1882, %v1882
        %v1915 = vpack.c.b16 %v1883, %v1883
        %v1916 = vpack.c.b16 %v1884, %v1884
        %v1917 = vpack.c.b16 %v1885, %v1885
        %v1918 = vpack.c.b16 %v1886, %v1886
        %v1919 = vpack.c.b16 %v1887, %v1887
        %v1920 = vpack.c.b16 %v1888, %v1888
        %vm1921 = vsmask.f32 4368
        %vm1922 = vmor %vm291, %vm1921
        %v1924 = vshrl.u32 %v1889, 16
        %v1926 = vrot.slane %v1924, 7
        %v1927 = vshll.u32 %v1889, 16
        %v1929 = vor.u32 %v1926, %v1927
        %v1930 = vrot.slane %v1926, 4
        %v1932 = vshrl.u32 %v1890, 16
        %v1934 = vrot.slane %v1932, 7
        %v1935 = vshll.u32 %v1890, 16
        %v1937 = vor.u32 %v1934, %v1935
        %v1938 = vsel %vm1922, %v1930, %v1937
        %v1939 = vrot.slane %v1934, 4
        %v1941 = vshrl.u32 %v1891, 16
        %v1943 = vrot.slane %v1941, 7
        %v1944 = vshll.u32 %v1891, 16
        %v1946 = vor.u32 %v1943, %v1944
        %v1947 = vrot.slane %v1943, 4
        %v1949 = vshrl.u32 %v1892, 16
        %v1951 = vrot.slane %v1949, 7
        %v1952 = vshll.u32 %v1892, 16
        %v1954 = vor.u32 %v1951, %v1952
        %v1955 = vsel %vm1922, %v1947, %v1954
        %v1956 = vrot.slane %v1951, 4
        %v1958 = vshrl.u32 %v1893, 16
        %v1960 = vrot.slane %v1958, 7
        %v1961 = vshll.u32 %v1893, 16
        %v1963 = vor.u32 %v1960, %v1961
        %v1964 = vrot.slane %v1960, 4
        %v1966 = vshrl.u32 %v1894, 16
        %v1968 = vrot.slane %v1966, 7
        %v1969 = vshll.u32 %v1894, 16
        %v1971 = vor.u32 %v1968, %v1969
        %v1972 = vsel %vm1922, %v1964, %v1971
        %v1973 = vrot.slane %v1968, 4
        %v1975 = vshrl.u32 %v1895, 16
        %v1977 = vrot.slane %v1975, 7
        %v1978 = vshll.u32 %v1895, 16
        %v1980 = vor.u32 %v1977, %v1978
        %v1981 = vrot.slane %v1977, 4
        %v1983 = vshrl.u32 %v1896, 16
        %v1985 = vrot.slane %v1983, 7
        %v1986 = vshll.u32 %v1896, 16
        %v1988 = vor.u32 %v1985, %v1986
        %v1989 = vsel %vm1922, %v1981, %v1988
        %v1990 = vrot.slane %v1985, 4
        %v1992 = vshrl.u32 %v1897, 16
        %v1994 = vrot.slane %v1992, 7
        %v1995 = vshll.u32 %v1897, 16
        %v1997 = vor.u32 %v1994, %v1995
        %v1998 = vrot.slane %v1994, 4
        %v2000 = vshrl.u32 %v1898, 16
        %v2002 = vrot.slane %v2000, 7
        %v2003 = vshll.u32 %v1898, 16
        %v2005 = vor.u32 %v2002, %v2003
        %v2006 = vsel %vm1922, %v1998, %v2005
        %v2007 = vrot.slane %v2002, 4
        %v2009 = vshrl.u32 %v1899, 16
        %v2011 = vrot.slane %v2009, 7
        %v2012 = vshll.u32 %v1899, 16
        %v2014 = vor.u32 %v2011, %v2012
        %v2015 = vrot.slane %v2011, 4
        %v2017 = vshrl.u32 %v1900, 16
        %v2019 = vrot.slane %v2017, 7
        %v2020 = vshll.u32 %v1900, 16
        %v2022 = vor.u32 %v2019, %v2020
        %v2023 = vsel %vm1922, %v2015, %v2022
        %v2024 = vrot.slane %v2019, 4
        %v2026 = vshrl.u32 %v1901, 16
        %v2028 = vrot.slane %v2026, 7
        %v2029 = vshll.u32 %v1901, 16
        %v2031 = vor.u32 %v2028, %v2029
        %v2032 = vrot.slane %v2028, 4
        %v2034 = vshrl.u32 %v1902, 16
        %v2036 = vrot.slane %v2034, 7
        %v2037 = vshll.u32 %v1902, 16
        %v2039 = vor.u32 %v2036, %v2037
        %v2040 = vsel %vm1922, %v2032, %v2039
        %v2041 = vrot.slane %v2036, 4
        %v2043 = vshrl.u32 %v1903, 16
        %v2045 = vrot.slane %v2043, 7
        %v2046 = vshll.u32 %v1903, 16
        %v2048 = vor.u32 %v2045, %v2046
        %v2049 = vrot.slane %v2045, 4
        %v2051 = vshrl.u32 %v1904, 16
        %v2053 = vrot.slane %v2051, 7
        %v2054 = vshll.u32 %v1904, 16
        %v2056 = vor.u32 %v2053, %v2054
        %v2057 = vsel %vm1922, %v2049, %v2056
        %v2058 = vrot.slane %v2053, 4
        %v2060 = vshrl.u32 %v1905, 16
        %v2062 = vrot.slane %v2060, 7
        %v2063 = vshll.u32 %v1905, 16
        %v2065 = vor.u32 %v2062, %v2063
        %v2066 = vrot.slane %v2062, 4
        %v2068 = vshrl.u32 %v1906, 16
        %v2070 = vrot.slane %v2068, 7
        %v2071 = vshll.u32 %v1906, 16
        %v2073 = vor.u32 %v2070, %v2071
        %v2074 = vsel %vm1922, %v2066, %v2073
        %v2075 = vrot.slane %v2070, 4
        %v2077 = vshrl.u32 %v1907, 16
        %v2079 = vrot.slane %v2077, 7
        %v2080 = vshll.u32 %v1907, 16
        %v2082 = vor.u32 %v2079, %v2080
        %v2083 = vrot.slane %v2079, 4
        %v2085 = vshrl.u32 %v1908, 16
        %v2087 = vrot.slane %v2085, 7
        %v2088 = vshll.u32 %v1908, 16
        %v2090 = vor.u32 %v2087, %v2088
        %v2091 = vsel %vm1922, %v2083, %v2090
        %v2092 = vrot.slane %v2087, 4
        %v2094 = vshrl.u32 %v1909, 16
        %v2096 = vrot.slane %v2094, 7
        %v2097 = vshll.u32 %v1909, 16
        %v2099 = vor.u32 %v2096, %v2097
        %v2100 = vrot.slane %v2096, 4
        %v2102 = vshrl.u32 %v1910, 16
        %v2104 = vrot.slane %v2102, 7
        %v2105 = vshll.u32 %v1910, 16
        %v2107 = vor.u32 %v2104, %v2105
        %v2108 = vsel %vm1922, %v2100, %v2107
        %v2109 = vrot.slane %v2104, 4
        %v2111 = vshrl.u32 %v1911, 16
        %v2113 = vrot.slane %v2111, 7
        %v2114 = vshll.u32 %v1911, 16
        %v2116 = vor.u32 %v2113, %v2114
        %v2117 = vrot.slane %v2113, 4
        %v2119 = vshrl.u32 %v1912, 16
        %v2121 = vrot.slane %v2119, 7
        %v2122 = vshll.u32 %v1912, 16
        %v2124 = vor.u32 %v2121, %v2122
        %v2125 = vsel %vm1922, %v2117, %v2124
        %v2126 = vrot.slane %v2121, 4
        %v2128 = vshrl.u32 %v1913, 16
        %v2130 = vrot.slane %v2128, 7
        %v2131 = vshll.u32 %v1913, 16
        %v2133 = vor.u32 %v2130, %v2131
        %v2134 = vrot.slane %v2130, 4
        %v2136 = vshrl.u32 %v1914, 16
        %v2138 = vrot.slane %v2136, 7
        %v2139 = vshll.u32 %v1914, 16
        %v2141 = vor.u32 %v2138, %v2139
        %v2142 = vsel %vm1922, %v2134, %v2141
        %v2143 = vrot.slane %v2138, 4
        %v2145 = vshrl.u32 %v1915, 16
        %v2147 = vrot.slane %v2145, 7
        %v2148 = vshll.u32 %v1915, 16
        %v2150 = vor.u32 %v2147, %v2148
        %v2151 = vrot.slane %v2147, 4
        %v2153 = vshrl.u32 %v1916, 16
        %v2155 = vrot.slane %v2153, 7
        %v2156 = vshll.u32 %v1916, 16
        %v2158 = vor.u32 %v2155, %v2156
        %v2159 = vsel %vm1922, %v2151, %v2158
        %v2160 = vrot.slane %v2155, 4
        %v2162 = vshrl.u32 %v1917, 16
        %v2164 = vrot.slane %v2162, 7
        %v2165 = vshll.u32 %v1917, 16
        %v2167 = vor.u32 %v2164, %v2165
        %v2168 = vrot.slane %v2164, 4
        %v2170 = vshrl.u32 %v1918, 16
        %v2172 = vrot.slane %v2170, 7
        %v2173 = vshll.u32 %v1918, 16
        %v2175 = vor.u32 %v2172, %v2173
        %v2176 = vsel %vm1922, %v2168, %v2175
        %v2177 = vrot.slane %v2172, 4
        %v2179 = vshrl.u32 %v1919, 16
        %v2181 = vrot.slane %v2179, 7
        %v2182 = vshll.u32 %v1919, 16
        %v2184 = vor.u32 %v2181, %v2182
        %v2185 = vrot.slane %v2181, 4
        %v2187 = vshrl.u32 %v1920, 16
        %v2189 = vrot.slane %v2187, 7
        %v2190 = vshll.u32 %v1920, 16
        %v2192 = vor.u32 %v2189, %v2190
        %v2193 = vsel %vm1922, %v2185, %v2192
        %v2194 = vrot.slane %v2189, 4
        %s2243 = scalar_lea.vmem [#allocation2], 12
        %vm2244 = vcmask 1043456
        %vm2245 = vmand %vm2244, %vm347
        %v2246 = vld [vmem:[%s2243] sm:$0xf]
        %v2247 = vsel %vm2245, %v1929, %v2246
        %2248 = vst [vmem:[%s2243] sm:$0xf] %v2247
        %2249 = vst [vmem:[%s2243 + $0x4] sm:$0xf] %v1938
        %v2250 = vld [vmem:[%s2243 + $0x8] sm:$0x1]
        %v2251 = vsel %vm292, %v1939, %v2250
        %2252 = vst [vmem:[%s2243 + $0x8] sm:$0x1] %v2251
        %v2253 = vld [vmem:[%s2243 + $0xc] sm:$0xf]
        %v2254 = vsel %vm2245, %v1946, %v2253
        %2255 = vst [vmem:[%s2243 + $0xc] sm:$0xf] %v2254
        %2256 = vst [vmem:[%s2243 + $0x10] sm:$0xf] %v1955
        %v2257 = vld [vmem:[%s2243 + $0x14] sm:$0x1]
        %v2258 = vsel %vm292, %v1956, %v2257
        %2259 = vst [vmem:[%s2243 + $0x14] sm:$0x1] %v2258
        %v2260 = vld [vmem:[%s2243 + $0x18] sm:$0xf]
        %v2261 = vsel %vm2245, %v1963, %v2260
        %2262 = vst [vmem:[%s2243 + $0x18] sm:$0xf] %v2261
        %2263 = vst [vmem:[%s2243 + $0x1c] sm:$0xf] %v1972
        %v2264 = vld [vmem:[%s2243 + $0x20] sm:$0x1]
        %v2265 = vsel %vm292, %v1973, %v2264
        %2266 = vst [vmem:[%s2243 + $0x20] sm:$0x1] %v2265
        %v2267 = vld [vmem:[%s2243 + $0x24] sm:$0xf]
        %v2268 = vsel %vm2245, %v1980, %v2267
        %2269 = vst [vmem:[%s2243 + $0x24] sm:$0xf] %v2268
        %2270 = vst [vmem:[%s2243 + $0x28] sm:$0xf] %v1989
        %v2271 = vld [vmem:[%s2243 + $0x2c] sm:$0x1]
        %v2272 = vsel %vm292, %v1990, %v2271
        %2273 = vst [vmem:[%s2243 + $0x2c] sm:$0x1] %v2272
        %v2274 = vld [vmem:[%s2243 + $0x30] sm:$0xf]
        %v2275 = vsel %vm2245, %v1997, %v2274
        %2276 = vst [vmem:[%s2243 + $0x30] sm:$0xf] %v2275
        %2277 = vst [vmem:[%s2243 + $0x34] sm:$0xf] %v2006
        %v2278 = vld [vmem:[%s2243 + $0x38] sm:$0x1]
        %v2279 = vsel %vm292, %v2007, %v2278
        %2280 = vst [vmem:[%s2243 + $0x38] sm:$0x1] %v2279
        %v2281 = vld [vmem:[%s2243 + $0x3c] sm:$0xf]
        %v2282 = vsel %vm2245, %v2014, %v2281
        %2283 = vst [vmem:[%s2243 + $0x3c] sm:$0xf] %v2282
        %2284 = vst [vmem:[%s2243 + $0x40] sm:$0xf] %v2023
        %v2285 = vld [vmem:[%s2243 + $0x44] sm:$0x1]
        %v2286 = vsel %vm292, %v2024, %v2285
        %2287 = vst [vmem:[%s2243 + $0x44] sm:$0x1] %v2286
        %v2288 = vld [vmem:[%s2243 + $0x48] sm:$0xf]
        %v2289 = vsel %vm2245, %v2031, %v2288
        %2290 = vst [vmem:[%s2243 + $0x48] sm:$0xf] %v2289
        %2291 = vst [vmem:[%s2243 + $0x4c] sm:$0xf] %v2040
        %v2292 = vld [vmem:[%s2243 + $0x50] sm:$0x1]
        %v2293 = vsel %vm292, %v2041, %v2292
        %2294 = vst [vmem:[%s2243 + $0x50] sm:$0x1] %v2293
        %v2295 = vld [vmem:[%s2243 + $0x54] sm:$0xf]
        %v2296 = vsel %vm2245, %v2048, %v2295
        %2297 = vst [vmem:[%s2243 + $0x54] sm:$0xf] %v2296
        %2298 = vst [vmem:[%s2243 + $0x58] sm:$0xf] %v2057
        %v2299 = vld [vmem:[%s2243 + $0x5c] sm:$0x1]
        %v2300 = vsel %vm292, %v2058, %v2299
        %2301 = vst [vmem:[%s2243 + $0x5c] sm:$0x1] %v2300
        %v2302 = vld [vmem:[%s2243 + $0x60] sm:$0xf]
        %v2303 = vsel %vm2245, %v2065, %v2302
        %2304 = vst [vmem:[%s2243 + $0x60] sm:$0xf] %v2303
        %2305 = vst [vmem:[%s2243 + $0x64] sm:$0xf] %v2074
        %v2306 = vld [vmem:[%s2243 + $0x68] sm:$0x1]
        %v2307 = vsel %vm292, %v2075, %v2306
        %2308 = vst [vmem:[%s2243 + $0x68] sm:$0x1] %v2307
        %v2309 = vld [vmem:[%s2243 + $0x6c] sm:$0xf]
        %v2310 = vsel %vm2245, %v2082, %v2309
        %2311 = vst [vmem:[%s2243 + $0x6c] sm:$0xf] %v2310
        %2312 = vst [vmem:[%s2243 + $0x70] sm:$0xf] %v2091
        %v2313 = vld [vmem:[%s2243 + $0x74] sm:$0x1]
        %v2314 = vsel %vm292, %v2092, %v2313
        %2315 = vst [vmem:[%s2243 + $0x74] sm:$0x1] %v2314
        %v2316 = vld [vmem:[%s2243 + $0x78] sm:$0xf]
        %v2317 = vsel %vm2245, %v2099, %v2316
        %2318 = vst [vmem:[%s2243 + $0x78] sm:$0xf] %v2317
        %2319 = vst [vmem:[%s2243 + $0x7c] sm:$0xf] %v2108
        %v2320 = vld [vmem:[%s2243 + $0x80] sm:$0x1]
        %v2321 = vsel %vm292, %v2109, %v2320
        %2322 = vst [vmem:[%s2243 + $0x80] sm:$0x1] %v2321
        %v2323 = vld [vmem:[%s2243 + $0x84] sm:$0xf]
        %v2324 = vsel %vm2245, %v2116, %v2323
        %2325 = vst [vmem:[%s2243 + $0x84] sm:$0xf] %v2324
        %2326 = vst [vmem:[%s2243 + $0x88] sm:$0xf] %v2125
        %v2327 = vld [vmem:[%s2243 + $0x8c] sm:$0x1]
        %v2328 = vsel %vm292, %v2126, %v2327
        %2329 = vst [vmem:[%s2243 + $0x8c] sm:$0x1] %v2328
        %v2330 = vld [vmem:[%s2243 + $0x90] sm:$0xf]
        %v2331 = vsel %vm2245, %v2133, %v2330
        %2332 = vst [vmem:[%s2243 + $0x90] sm:$0xf] %v2331
        %2333 = vst [vmem:[%s2243 + $0x94] sm:$0xf] %v2142
        %v2334 = vld [vmem:[%s2243 + $0x98] sm:$0x1]
        %v2335 = vsel %vm292, %v2143, %v2334
        %2336 = vst [vmem:[%s2243 + $0x98] sm:$0x1] %v2335
        %v2337 = vld [vmem:[%s2243 + $0x9c] sm:$0xf]
        %v2338 = vsel %vm2245, %v2150, %v2337
        %2339 = vst [vmem:[%s2243 + $0x9c] sm:$0xf] %v2338
        %2340 = vst [vmem:[%s2243 + $0xa0] sm:$0xf] %v2159
        %v2341 = vld [vmem:[%s2243 + $0xa4] sm:$0x1]
        %v2342 = vsel %vm292, %v2160, %v2341
        %2343 = vst [vmem:[%s2243 + $0xa4] sm:$0x1] %v2342
        %v2344 = vld [vmem:[%s2243 + $0xa8] sm:$0xf]
        %v2345 = vsel %vm2245, %v2167, %v2344
        %2346 = vst [vmem:[%s2243 + $0xa8] sm:$0xf] %v2345
        %2347 = vst [vmem:[%s2243 + $0xac] sm:$0xf] %v2176
        %v2348 = vld [vmem:[%s2243 + $0xb0] sm:$0x1]
        %v2349 = vsel %vm292, %v2177, %v2348
        %2350 = vst [vmem:[%s2243 + $0xb0] sm:$0x1] %v2349
        %v2351 = vld [vmem:[%s2243 + $0xb4] sm:$0xf]
        %v2352 = vsel %vm2245, %v2184, %v2351
        %2353 = vst [vmem:[%s2243 + $0xb4] sm:$0xf] %v2352
        %2354 = vst [vmem:[%s2243 + $0xb8] sm:$0xf] %v2193
        %v2355 = vld [vmem:[%s2243 + $0xbc] sm:$0x1]
        %v2356 = vsel %vm292, %v2194, %v2355
        %2357 = vst [vmem:[%s2243 + $0xbc] sm:$0x1] %v2356
      $region44: #{point_pillar_forward.5} parent=39 // pred_fallthru
        _
      %p2358 = scmp.gt.s32.totalorder %s21, 0
      // Predicated region
      $region45: #{point_pillar_forward.5} parent=39 // pred_check
        %p2359 = pneg %p2358
      $region46: #{point_pillar_forward.5} parent=39 // pred_check_branch
        %2361 = sbr.rel (%p2359) target = $region48
      $region47: #{point_pillar_forward.5} parent=39 // pred_region
        %v2362 = vld [vmem:[#allocation2] sm:$0xf]
        %v2363 = vld [vmem:[#allocation2 + $0x4] sm:$0xf]
        %v2364 = vld [vmem:[#allocation2 + $0x8] sm:$0x1]
        %v2365 = vld [vmem:[#allocation2 + $0xc] sm:$0xf]
        %v2366 = vld [vmem:[#allocation2 + $0x10] sm:$0xf]
        %v2367 = vld [vmem:[#allocation2 + $0x14] sm:$0x1]
        %v2368 = vld [vmem:[#allocation2 + $0x18] sm:$0xf]
        %v2369 = vld [vmem:[#allocation2 + $0x1c] sm:$0xf]
        %v2370 = vld [vmem:[#allocation2 + $0x20] sm:$0x1]
        %v2371 = vld [vmem:[#allocation2 + $0x24] sm:$0xf]
        %v2372 = vld [vmem:[#allocation2 + $0x28] sm:$0xf]
        %v2373 = vld [vmem:[#allocation2 + $0x2c] sm:$0x1]
        %v2374 = vld [vmem:[#allocation2 + $0x30] sm:$0xf]
        %v2375 = vld [vmem:[#allocation2 + $0x34] sm:$0xf]
        %v2376 = vld [vmem:[#allocation2 + $0x38] sm:$0x1]
        %v2377 = vld [vmem:[#allocation2 + $0x3c] sm:$0xf]
        %v2378 = vld [vmem:[#allocation2 + $0x40] sm:$0xf]
        %v2379 = vld [vmem:[#allocation2 + $0x44] sm:$0x1]
        %v2380 = vld [vmem:[#allocation2 + $0x48] sm:$0xf]
        %v2381 = vld [vmem:[#allocation2 + $0x4c] sm:$0xf]
        %v2382 = vld [vmem:[#allocation2 + $0x50] sm:$0x1]
        %v2383 = vld [vmem:[#allocation2 + $0x54] sm:$0xf]
        %v2384 = vld [vmem:[#allocation2 + $0x58] sm:$0xf]
        %v2385 = vld [vmem:[#allocation2 + $0x5c] sm:$0x1]
        %v2386 = vld [vmem:[#allocation2 + $0x60] sm:$0xf]
        %v2387 = vld [vmem:[#allocation2 + $0x64] sm:$0xf]
        %v2388 = vld [vmem:[#allocation2 + $0x68] sm:$0x1]
        %v2389 = vld [vmem:[#allocation2 + $0x6c] sm:$0xf]
        %v2390 = vld [vmem:[#allocation2 + $0x70] sm:$0xf]
        %v2391 = vld [vmem:[#allocation2 + $0x74] sm:$0x1]
        %v2392 = vld [vmem:[#allocation2 + $0x78] sm:$0xf]
        %v2393 = vld [vmem:[#allocation2 + $0x7c] sm:$0xf]
        %v2394 = vld [vmem:[#allocation2 + $0x80] sm:$0x1]
        %v2395 = vld [vmem:[#allocation2 + $0x84] sm:$0xf]
        %v2396 = vld [vmem:[#allocation2 + $0x88] sm:$0xf]
        %v2397 = vld [vmem:[#allocation2 + $0x8c] sm:$0x1]
        %v2398 = vld [vmem:[#allocation2 + $0x90] sm:$0xf]
        %v2399 = vld [vmem:[#allocation2 + $0x94] sm:$0xf]
        %v2400 = vld [vmem:[#allocation2 + $0x98] sm:$0x1]
        %v2401 = vld [vmem:[#allocation2 + $0x9c] sm:$0xf]
        %v2402 = vld [vmem:[#allocation2 + $0xa0] sm:$0xf]
        %v2403 = vld [vmem:[#allocation2 + $0xa4] sm:$0x1]
        %v2404 = vld [vmem:[#allocation2 + $0xa8] sm:$0xf]
        %v2405 = vld [vmem:[#allocation2 + $0xac] sm:$0xf]
        %v2406 = vld [vmem:[#allocation2 + $0xb0] sm:$0x1]
        %v2407 = vld [vmem:[#allocation2 + $0xb4] sm:$0xf]
        %v2408 = vld [vmem:[#allocation2 + $0xb8] sm:$0xf]
        %v2409 = vld [vmem:[#allocation2 + $0xbc] sm:$0x1]
        %v2410 = vld [vmem:[#allocation2 + $0xc0] sm:$0xf]
        %v2411 = vld [vmem:[#allocation2 + $0xc4] sm:$0xf]
        %v2412 = vld [vmem:[#allocation2 + $0xc8] sm:$0x1]
        %v2413 = vld [vmem:[#allocation2 + $0xcc] sm:$0xf]
        %v2414 = vld [vmem:[#allocation2 + $0xd0] sm:$0xf]
        %v2415 = vld [vmem:[#allocation2 + $0xd4] sm:$0x1]
        %v2448 = vunpack.c.l.b16 %v2362
        %v2449 = vunpack.c.l.b16 %v2363
        %v2450 = vunpack.c.l.b16 %v2365
        %v2451 = vunpack.c.l.b16 %v2366
        %v2452 = vunpack.c.l.b16 %v2368
        %v2453 = vunpack.c.l.b16 %v2369
        %v2454 = vunpack.c.l.b16 %v2371
        %v2455 = vunpack.c.l.b16 %v2372
        %v2456 = vunpack.c.l.b16 %v2374
        %v2457 = vunpack.c.l.b16 %v2375
        %v2458 = vunpack.c.l.b16 %v2377
        %v2459 = vunpack.c.l.b16 %v2378
        %v2460 = vunpack.c.l.b16 %v2380
        %v2461 = vunpack.c.l.b16 %v2381
        %v2462 = vunpack.c.l.b16 %v2383
        %v2463 = vunpack.c.l.b16 %v2384
        %v2464 = vunpack.c.l.b16 %v2386
        %v2465 = vunpack.c.l.b16 %v2387
        %v2466 = vunpack.c.l.b16 %v2389
        %v2467 = vunpack.c.l.b16 %v2390
        %v2468 = vunpack.c.l.b16 %v2392
        %v2469 = vunpack.c.l.b16 %v2393
        %v2470 = vunpack.c.l.b16 %v2395
        %v2471 = vunpack.c.l.b16 %v2396
        %v2472 = vunpack.c.l.b16 %v2398
        %v2473 = vunpack.c.l.b16 %v2399
        %v2474 = vunpack.c.l.b16 %v2401
        %v2475 = vunpack.c.l.b16 %v2402
        %v2476 = vunpack.c.l.b16 %v2404
        %v2477 = vunpack.c.l.b16 %v2405
        %v2478 = vunpack.c.l.b16 %v2407
        %v2479 = vunpack.c.l.b16 %v2408
        %v2480 = vpack.c.b16 %v2449, %v2448
        %v2481 = vpack.c.b16 %v2451, %v2450
        %v2482 = vpack.c.b16 %v2453, %v2452
        %v2483 = vpack.c.b16 %v2455, %v2454
        %v2484 = vpack.c.b16 %v2457, %v2456
        %v2485 = vpack.c.b16 %v2459, %v2458
        %v2486 = vpack.c.b16 %v2461, %v2460
        %v2487 = vpack.c.b16 %v2463, %v2462
        %v2488 = vpack.c.b16 %v2465, %v2464
        %v2489 = vpack.c.b16 %v2467, %v2466
        %v2490 = vpack.c.b16 %v2469, %v2468
        %v2491 = vpack.c.b16 %v2471, %v2470
        %v2492 = vpack.c.b16 %v2473, %v2472
        %v2493 = vpack.c.b16 %v2475, %v2474
        %v2494 = vpack.c.b16 %v2477, %v2476
        %v2495 = vpack.c.b16 %v2479, %v2478
        %v2528 = vunpack.c.l.b16 %v2364
        %v2529 = vunpack.c.l.b16 %v2367
        %v2530 = vunpack.c.l.b16 %v2370
        %v2531 = vunpack.c.l.b16 %v2373
        %v2532 = vunpack.c.l.b16 %v2376
        %v2533 = vunpack.c.l.b16 %v2379
        %v2534 = vunpack.c.l.b16 %v2382
        %v2535 = vunpack.c.l.b16 %v2385
        %v2536 = vunpack.c.l.b16 %v2388
        %v2537 = vunpack.c.l.b16 %v2391
        %v2538 = vunpack.c.l.b16 %v2394
        %v2539 = vunpack.c.l.b16 %v2397
        %v2540 = vunpack.c.l.b16 %v2400
        %v2541 = vunpack.c.l.b16 %v2403
        %v2542 = vunpack.c.l.b16 %v2406
        %v2543 = vunpack.c.l.b16 %v2409
        %v2544 = vpack.c.b16 %v2528, %v2528
        %v2545 = vpack.c.b16 %v2529, %v2529
        %v2546 = vpack.c.b16 %v2530, %v2530
        %v2547 = vpack.c.b16 %v2531, %v2531
        %v2548 = vpack.c.b16 %v2532, %v2532
        %v2549 = vpack.c.b16 %v2533, %v2533
        %v2550 = vpack.c.b16 %v2534, %v2534
        %v2551 = vpack.c.b16 %v2535, %v2535
        %v2552 = vpack.c.b16 %v2536, %v2536
        %v2553 = vpack.c.b16 %v2537, %v2537
        %v2554 = vpack.c.b16 %v2538, %v2538
        %v2555 = vpack.c.b16 %v2539, %v2539
        %v2556 = vpack.c.b16 %v2540, %v2540
        %v2557 = vpack.c.b16 %v2541, %v2541
        %v2558 = vpack.c.b16 %v2542, %v2542
        %v2559 = vpack.c.b16 %v2543, %v2543
        %vm2560 = vsmask.f32 7424
        %v2562 = vshrl.u32 %v2480, 16
        %v2564 = vshll.u32 %v2480, 16
        %v2566 = vrot.slane %v2564, 1
        %v2567 = vor.u32 %v2562, %v2566
        %v2569 = vshll.u32 %v2544, 16
        %v2571 = vrot.slane %v2569, 1
        %v2572 = vsel %vm2560, %v2567, %v2571
        %v2574 = vshrl.u32 %v2481, 16
        %v2576 = vshll.u32 %v2481, 16
        %v2578 = vrot.slane %v2576, 1
        %v2579 = vor.u32 %v2574, %v2578
        %v2581 = vshll.u32 %v2545, 16
        %v2583 = vrot.slane %v2581, 1
        %v2584 = vsel %vm2560, %v2579, %v2583
        %v2586 = vshrl.u32 %v2482, 16
        %v2588 = vshll.u32 %v2482, 16
        %v2590 = vrot.slane %v2588, 1
        %v2591 = vor.u32 %v2586, %v2590
        %v2593 = vshll.u32 %v2546, 16
        %v2595 = vrot.slane %v2593, 1
        %v2596 = vsel %vm2560, %v2591, %v2595
        %v2598 = vshrl.u32 %v2483, 16
        %v2600 = vshll.u32 %v2483, 16
        %v2602 = vrot.slane %v2600, 1
        %v2603 = vor.u32 %v2598, %v2602
        %v2605 = vshll.u32 %v2547, 16
        %v2607 = vrot.slane %v2605, 1
        %v2608 = vsel %vm2560, %v2603, %v2607
        %v2610 = vshrl.u32 %v2484, 16
        %v2612 = vshll.u32 %v2484, 16
        %v2614 = vrot.slane %v2612, 1
        %v2615 = vor.u32 %v2610, %v2614
        %v2617 = vshll.u32 %v2548, 16
        %v2619 = vrot.slane %v2617, 1
        %v2620 = vsel %vm2560, %v2615, %v2619
        %v2622 = vshrl.u32 %v2485, 16
        %v2624 = vshll.u32 %v2485, 16
        %v2626 = vrot.slane %v2624, 1
        %v2627 = vor.u32 %v2622, %v2626
        %v2629 = vshll.u32 %v2549, 16
        %v2631 = vrot.slane %v2629, 1
        %v2632 = vsel %vm2560, %v2627, %v2631
        %v2634 = vshrl.u32 %v2486, 16
        %v2636 = vshll.u32 %v2486, 16
        %v2638 = vrot.slane %v2636, 1
        %v2639 = vor.u32 %v2634, %v2638
        %v2641 = vshll.u32 %v2550, 16
        %v2643 = vrot.slane %v2641, 1
        %v2644 = vsel %vm2560, %v2639, %v2643
        %v2646 = vshrl.u32 %v2487, 16
        %v2648 = vshll.u32 %v2487, 16
        %v2650 = vrot.slane %v2648, 1
        %v2651 = vor.u32 %v2646, %v2650
        %v2653 = vshll.u32 %v2551, 16
        %v2655 = vrot.slane %v2653, 1
        %v2656 = vsel %vm2560, %v2651, %v2655
        %v2658 = vshrl.u32 %v2488, 16
        %v2660 = vshll.u32 %v2488, 16
        %v2662 = vrot.slane %v2660, 1
        %v2663 = vor.u32 %v2658, %v2662
        %v2665 = vshll.u32 %v2552, 16
        %v2667 = vrot.slane %v2665, 1
        %v2668 = vsel %vm2560, %v2663, %v2667
        %v2670 = vshrl.u32 %v2489, 16
        %v2672 = vshll.u32 %v2489, 16
        %v2674 = vrot.slane %v2672, 1
        %v2675 = vor.u32 %v2670, %v2674
        %v2677 = vshll.u32 %v2553, 16
        %v2679 = vrot.slane %v2677, 1
        %v2680 = vsel %vm2560, %v2675, %v2679
        %v2682 = vshrl.u32 %v2490, 16
        %v2684 = vshll.u32 %v2490, 16
        %v2686 = vrot.slane %v2684, 1
        %v2687 = vor.u32 %v2682, %v2686
        %v2689 = vshll.u32 %v2554, 16
        %v2691 = vrot.slane %v2689, 1
        %v2692 = vsel %vm2560, %v2687, %v2691
        %v2694 = vshrl.u32 %v2491, 16
        %v2696 = vshll.u32 %v2491, 16
        %v2698 = vrot.slane %v2696, 1
        %v2699 = vor.u32 %v2694, %v2698
        %v2701 = vshll.u32 %v2555, 16
        %v2703 = vrot.slane %v2701, 1
        %v2704 = vsel %vm2560, %v2699, %v2703
        %v2706 = vshrl.u32 %v2492, 16
        %v2708 = vshll.u32 %v2492, 16
        %v2710 = vrot.slane %v2708, 1
        %v2711 = vor.u32 %v2706, %v2710
        %v2713 = vshll.u32 %v2556, 16
        %v2715 = vrot.slane %v2713, 1
        %v2716 = vsel %vm2560, %v2711, %v2715
        %v2718 = vshrl.u32 %v2493, 16
        %v2720 = vshll.u32 %v2493, 16
        %v2722 = vrot.slane %v2720, 1
        %v2723 = vor.u32 %v2718, %v2722
        %v2725 = vshll.u32 %v2557, 16
        %v2727 = vrot.slane %v2725, 1
        %v2728 = vsel %vm2560, %v2723, %v2727
        %v2730 = vshrl.u32 %v2494, 16
        %v2732 = vshll.u32 %v2494, 16
        %v2734 = vrot.slane %v2732, 1
        %v2735 = vor.u32 %v2730, %v2734
        %v2737 = vshll.u32 %v2558, 16
        %v2739 = vrot.slane %v2737, 1
        %v2740 = vsel %vm2560, %v2735, %v2739
        %v2742 = vshrl.u32 %v2495, 16
        %v2744 = vshll.u32 %v2495, 16
        %v2746 = vrot.slane %v2744, 1
        %v2747 = vor.u32 %v2742, %v2746
        %v2749 = vshll.u32 %v2559, 16
        %v2751 = vrot.slane %v2749, 1
        %v2752 = vsel %vm2560, %v2747, %v2751
        %vm2769 = vcmask 1046528
        %v2770 = vrot.slane %v2480, 1
        %v2771 = vrot.slane %v2544, 1
        %v2772 = vsel %vm2769, %v2770, %v2771
        %v2773 = vrot.slane %v2481, 1
        %v2774 = vrot.slane %v2545, 1
        %v2775 = vsel %vm2769, %v2773, %v2774
        %v2776 = vrot.slane %v2482, 1
        %v2777 = vrot.slane %v2546, 1
        %v2778 = vsel %vm2769, %v2776, %v2777
        %v2779 = vrot.slane %v2483, 1
        %v2780 = vrot.slane %v2547, 1
        %v2781 = vsel %vm2769, %v2779, %v2780
        %v2782 = vrot.slane %v2484, 1
        %v2783 = vrot.slane %v2548, 1
        %v2784 = vsel %vm2769, %v2782, %v2783
        %v2785 = vrot.slane %v2485, 1
        %v2786 = vrot.slane %v2549, 1
        %v2787 = vsel %vm2769, %v2785, %v2786
        %v2788 = vrot.slane %v2486, 1
        %v2789 = vrot.slane %v2550, 1
        %v2790 = vsel %vm2769, %v2788, %v2789
        %v2791 = vrot.slane %v2487, 1
        %v2792 = vrot.slane %v2551, 1
        %v2793 = vsel %vm2769, %v2791, %v2792
        %v2794 = vrot.slane %v2488, 1
        %v2795 = vrot.slane %v2552, 1
        %v2796 = vsel %vm2769, %v2794, %v2795
        %v2797 = vrot.slane %v2489, 1
        %v2798 = vrot.slane %v2553, 1
        %v2799 = vsel %vm2769, %v2797, %v2798
        %v2800 = vrot.slane %v2490, 1
        %v2801 = vrot.slane %v2554, 1
        %v2802 = vsel %vm2769, %v2800, %v2801
        %v2803 = vrot.slane %v2491, 1
        %v2804 = vrot.slane %v2555, 1
        %v2805 = vsel %vm2769, %v2803, %v2804
        %v2806 = vrot.slane %v2492, 1
        %v2807 = vrot.slane %v2556, 1
        %v2808 = vsel %vm2769, %v2806, %v2807
        %v2809 = vrot.slane %v2493, 1
        %v2810 = vrot.slane %v2557, 1
        %v2811 = vsel %vm2769, %v2809, %v2810
        %v2812 = vrot.slane %v2494, 1
        %v2813 = vrot.slane %v2558, 1
        %v2814 = vsel %vm2769, %v2812, %v2813
        %v2815 = vrot.slane %v2495, 1
        %v2816 = vrot.slane %v2559, 1
        %v2817 = vsel %vm2769, %v2815, %v2816
        %v2836 = vunpack.c.l.b16 %v2410
        %v2837 = vunpack.c.l.b16 %v2411
        %v2838 = vpack.c.b16 %v2837, %v2836
        %v2841 = vunpack.c.l.b16 %v2412
        %v2842 = vpack.c.b16 %v2841, %v2841
        %v2844 = vshrl.u32 %v2838, 16
        %v2846 = vshll.u32 %v2838, 16
        %v2848 = vrot.slane %v2846, 1
        %v2849 = vor.u32 %v2844, %v2848
        %v2851 = vshll.u32 %v2842, 16
        %v2853 = vrot.slane %v2851, 1
        %v2854 = vsel %vm2560, %v2849, %v2853
        %v2856 = vrot.slane %v2838, 1
        %v2857 = vrot.slane %v2842, 1
        %v2858 = vsel %vm2769, %v2856, %v2857
        %v2862 = vunpack.c.l.b16 %v2413
        %v2863 = vunpack.c.l.b16 %v2414
        %v2864 = vpack.c.b16 %v2863, %v2862
        %v2867 = vunpack.c.l.b16 %v2415
        %v2868 = vpack.c.b16 %v2867, %v2867
        %v2870 = vshrl.u32 %v2864, 16
        %v2872 = vshll.u32 %v2864, 16
        %v2874 = vrot.slane %v2872, 1
        %v2875 = vor.u32 %v2870, %v2874
        %v2877 = vshll.u32 %v2868, 16
        %v2879 = vrot.slane %v2877, 1
        %v2880 = vsel %vm2560, %v2875, %v2879
        %v2882 = vrot.slane %v2864, 1
        %v2883 = vrot.slane %v2868, 1
        %v2884 = vsel %vm2769, %v2882, %v2883
        %v2886 = vld [vmem:[%s269] sm:$0xf]
        %v2887 = vld [vmem:[%s269 + $0x4] sm:$0xf]
        %v2888 = vld [vmem:[%s269 + $0x8] sm:$0xf]
        %v2889 = vld [vmem:[%s269 + $0xc] sm:$0xf]
        %v2890 = vld [vmem:[%s269 + $0x10] sm:$0xf]
        %v2891 = vld [vmem:[%s269 + $0x14] sm:$0xf]
        %v2892 = vld [vmem:[%s269 + $0x18] sm:$0xf]
        %v2893 = vld [vmem:[%s269 + $0x1c] sm:$0xf]
        %v2894 = vld [vmem:[%s269 + $0x20] sm:$0xf]
        %v2895 = vld [vmem:[%s269 + $0x24] sm:$0xf]
        %v2896 = vld [vmem:[%s269 + $0x28] sm:$0xf]
        %v2897 = vld [vmem:[%s269 + $0x2c] sm:$0xf]
        %v2898 = vld [vmem:[%s269 + $0x30] sm:$0xf]
        %v2899 = vld [vmem:[%s269 + $0x34] sm:$0xf]
        %v2900 = vld [vmem:[%s269 + $0x38] sm:$0xf]
        %v2901 = vld [vmem:[%s269 + $0x3c] sm:$0xf]
        %v2902 = vld [vmem:[%s269 + $0x40] sm:$0xf]
        %v2903 = vld [vmem:[%s269 + $0x44] sm:$0xf]
        %v2904 = vld [vmem:[%s269 + $0x48] sm:$0xf]
        %v2905 = vld [vmem:[%s269 + $0x4c] sm:$0xf]
        %v2906 = vld [vmem:[%s269 + $0x50] sm:$0xf]
        %v2907 = vld [vmem:[%s269 + $0x54] sm:$0xf]
        %v2908 = vld [vmem:[%s269 + $0x58] sm:$0xf]
        %v2909 = vld [vmem:[%s269 + $0x5c] sm:$0xf]
        %v2910 = vld [vmem:[%s269 + $0x60] sm:$0xf]
        %v2911 = vld [vmem:[%s269 + $0x64] sm:$0xf]
        %v2912 = vld [vmem:[%s269 + $0x68] sm:$0xf]
        %v2913 = vld [vmem:[%s269 + $0x6c] sm:$0xf]
        %v2914 = vld [vmem:[%s269 + $0x70] sm:$0xf]
        %v2915 = vld [vmem:[%s269 + $0x74] sm:$0xf]
        %v2916 = vld [vmem:[%s269 + $0x78] sm:$0xf]
        %v2917 = vld [vmem:[%s269 + $0x7c] sm:$0xf]
        %v2918 = vld [vmem:[%s269 + $0x80] sm:$0xf]
        %v2919 = vld [vmem:[%s269 + $0x84] sm:$0xf]
        %v2920 = vld [vmem:[%s269 + $0x88] sm:$0xf]
        %v2921 = vld [vmem:[%s269 + $0x8c] sm:$0xf]
        %v2922 = vld [vmem:[%s269 + $0x90] sm:$0xf]
        %v2923 = vld [vmem:[%s269 + $0x94] sm:$0xf]
        %v2924 = vld [vmem:[%s269 + $0x98] sm:$0xf]
        %v2925 = vld [vmem:[%s269 + $0x9c] sm:$0xf]
        %v2926 = vld [vmem:[%s269 + $0xa0] sm:$0xf]
        %v2927 = vld [vmem:[%s269 + $0xa4] sm:$0xf]
        %v2928 = vld [vmem:[%s269 + $0xa8] sm:$0xf]
        %v2929 = vld [vmem:[%s269 + $0xac] sm:$0xf]
        %v2930 = vld [vmem:[%s269 + $0xb0] sm:$0xf]
        %v2931 = vld [vmem:[%s269 + $0xb4] sm:$0xf]
        %v2932 = vld [vmem:[%s269 + $0xb8] sm:$0xf]
        %v2933 = vld [vmem:[%s269 + $0xbc] sm:$0xf]
        %v2934 = vld [vmem:[%s269 + $0xc0] sm:$0xf]
        %v2935 = vld [vmem:[%s269 + $0xc4] sm:$0xf]
        %v2936 = vld [vmem:[%s269 + $0xc8] sm:$0xf]
        %v2937 = vld [vmem:[%s269 + $0xcc] sm:$0xf]
        %v2938 = vld [vmem:[%s269 + $0xd0] sm:$0xf]
        %v2939 = vld [vmem:[%s269 + $0xd4] sm:$0xf]
        %v2940 = vld [vmem:[%s269 + $0xd8] sm:$0xf]
        %v2941 = vld [vmem:[%s269 + $0xdc] sm:$0xf]
        %v2942 = vld [vmem:[%s269 + $0xe0] sm:$0xf]
        %v2943 = vld [vmem:[%s269 + $0xe4] sm:$0xf]
        %v2944 = vld [vmem:[%s269 + $0xe8] sm:$0xf]
        %v2945 = vld [vmem:[%s269 + $0xec] sm:$0xf]
        %v2946 = vld [vmem:[%s269 + $0xf0] sm:$0xf]
        %v2947 = vld [vmem:[%s269 + $0xf4] sm:$0xf]
        %v2948 = vld [vmem:[%s269 + $0xf8] sm:$0xf]
        %v2949 = vld [vmem:[%s269 + $0xfc] sm:$0xf]
        %v2950 = vld [vmem:[%s269 + $0x100] sm:$0xf]
        %v2951 = vld [vmem:[%s269 + $0x104] sm:$0xf]
        %v2952 = vld [vmem:[%s269 + $0x108] sm:$0xf]
        %v2953 = vld [vmem:[%s269 + $0x10c] sm:$0xf]
        %v2954 = vld [vmem:[%s269 + $0x110] sm:$0xf]
        %v2955 = vld [vmem:[%s269 + $0x114] sm:$0xf]
        %v2956 = vld [vmem:[%s269 + $0x118] sm:$0xf]
        %v2957 = vld [vmem:[%s269 + $0x11c] sm:$0xf]
        %v2958 = vld [vmem:[%s269 + $0x120] sm:$0xf]
        %v2959 = vld [vmem:[%s269 + $0x124] sm:$0xf]
        %v2960 = vld [vmem:[%s269 + $0x128] sm:$0xf]
        %v2961 = vld [vmem:[%s269 + $0x12c] sm:$0xf]
        %v2962 = vld [vmem:[%s269 + $0x130] sm:$0xf]
        %v2963 = vld [vmem:[%s269 + $0x134] sm:$0xf]
        %v2964 = vld [vmem:[%s269 + $0x138] sm:$0xf]
        %v2965 = vld [vmem:[%s269 + $0x13c] sm:$0xf]
        %v2966 = vld [vmem:[%s269 + $0x140] sm:$0xf]
        %v2967 = vld [vmem:[%s269 + $0x144] sm:$0xf]
        %v2968 = vld [vmem:[%s269 + $0x148] sm:$0xf]
        %v2969 = vld [vmem:[%s269 + $0x14c] sm:$0xf]
        %v2970 = vld [vmem:[%s269 + $0x150] sm:$0xf]
        %v2971 = vld [vmem:[%s269 + $0x154] sm:$0xf]
        %v2972 = vld [vmem:[%s269 + $0x158] sm:$0xf]
        %v2973 = vld [vmem:[%s269 + $0x15c] sm:$0xf]
        %v2974 = vld [vmem:[%s269 + $0x160] sm:$0xf]
        %v2975 = vld [vmem:[%s269 + $0x164] sm:$0xf]
        %v2976 = vld [vmem:[%s269 + $0x168] sm:$0xf]
        %v2977 = vld [vmem:[%s269 + $0x16c] sm:$0xf]
        %v2978 = vld [vmem:[%s269 + $0x170] sm:$0xf]
        %v2979 = vld [vmem:[%s269 + $0x174] sm:$0xf]
        %v2980 = vld [vmem:[%s269 + $0x178] sm:$0xf]
        %v2981 = vld [vmem:[%s269 + $0x17c] sm:$0xf]
        %v2982 = vld [vmem:[%s269 + $0x180] sm:$0xf]
        %v2983 = vld [vmem:[%s269 + $0x184] sm:$0xf]
        %v2984 = vld [vmem:[%s269 + $0x188] sm:$0xf]
        %v2985 = vld [vmem:[%s269 + $0x18c] sm:$0xf]
        %v2986 = vld [vmem:[%s269 + $0x190] sm:$0xf]
        %v2987 = vld [vmem:[%s269 + $0x194] sm:$0xf]
        %v2988 = vld [vmem:[%s269 + $0x198] sm:$0xf]
        %v2989 = vld [vmem:[%s269 + $0x19c] sm:$0xf]
        %v2990 = vld [vmem:[%s269 + $0x1a0] sm:$0xf]
        %v2991 = vld [vmem:[%s269 + $0x1a4] sm:$0xf]
        %v2992 = vld [vmem:[%s269 + $0x1a8] sm:$0xf]
        %v2993 = vld [vmem:[%s269 + $0x1ac] sm:$0xf]
        %v2994 = vld [vmem:[%s269 + $0x1b0] sm:$0xf]
        %v2995 = vld [vmem:[%s269 + $0x1b4] sm:$0xf]
        %v2996 = vld [vmem:[%s269 + $0x1b8] sm:$0xf]
        %v2997 = vld [vmem:[%s269 + $0x1bc] sm:$0xf]
        %v2998 = vld [vmem:[%s269 + $0x1c0] sm:$0xf]
        %v2999 = vld [vmem:[%s269 + $0x1c4] sm:$0xf]
        %v3000 = vld [vmem:[%s269 + $0x1c8] sm:$0xf]
        %v3001 = vld [vmem:[%s269 + $0x1cc] sm:$0xf]
        %v3002 = vld [vmem:[%s269 + $0x1d0] sm:$0xf]
        %v3003 = vld [vmem:[%s269 + $0x1d4] sm:$0xf]
        %v3004 = vld [vmem:[%s269 + $0x1d8] sm:$0xf]
        %v3005 = vld [vmem:[%s269 + $0x1dc] sm:$0xf]
        %v3006 = vld [vmem:[%s269 + $0x1e0] sm:$0xf]
        %v3007 = vld [vmem:[%s269 + $0x1e4] sm:$0xf]
        %v3008 = vld [vmem:[%s269 + $0x1e8] sm:$0xf]
        %v3009 = vld [vmem:[%s269 + $0x1ec] sm:$0xf]
        %v3010 = vld [vmem:[%s269 + $0x1f0] sm:$0xf]
        %v3011 = vld [vmem:[%s269 + $0x1f4] sm:$0xf]
        %v3012 = vld [vmem:[%s269 + $0x1f8] sm:$0xf]
        %v3013 = vld [vmem:[%s269 + $0x1fc] sm:$0xf]
        %v3014 = vld [vmem:[%s269 + $0x200] sm:$0xf]
        %v3015 = vld [vmem:[%s269 + $0x204] sm:$0xf]
        %v3016 = vld [vmem:[%s269 + $0x208] sm:$0xf]
        %v3017 = vld [vmem:[%s269 + $0x20c] sm:$0xf]
        %v3018 = vld [vmem:[%s269 + $0x210] sm:$0xf]
        %v3019 = vld [vmem:[%s269 + $0x214] sm:$0xf]
        %v3020 = vld [vmem:[%s269 + $0x218] sm:$0xf]
        %v3021 = vld [vmem:[%s269 + $0x21c] sm:$0xf]
        %v3022 = vld [vmem:[%s269 + $0x220] sm:$0xf]
        %v3023 = vld [vmem:[%s269 + $0x224] sm:$0xf]
        %v3024 = vld [vmem:[%s269 + $0x228] sm:$0xf]
        %v3025 = vld [vmem:[%s269 + $0x22c] sm:$0xf]
        %v3026 = vld [vmem:[%s269 + $0x230] sm:$0xf]
        %v3027 = vld [vmem:[%s269 + $0x234] sm:$0xf]
        %v3028 = vld [vmem:[%s269 + $0x238] sm:$0xf]
        %v3029 = vld [vmem:[%s269 + $0x23c] sm:$0xf]
        %v3174 = vunpack.c.l.b16 %v2886
        %v3175 = vunpack.c.l.b16 %v2887
        %v3176 = vunpack.c.l.b16 %v2888
        %v3177 = vunpack.c.l.b16 %v2889
        %v3178 = vunpack.c.l.b16 %v2890
        %v3179 = vunpack.c.l.b16 %v2891
        %v3180 = vunpack.c.l.b16 %v2892
        %v3181 = vunpack.c.l.b16 %v2893
        %v3182 = vunpack.c.l.b16 %v2894
        %v3183 = vunpack.c.l.b16 %v2895
        %v3184 = vunpack.c.l.b16 %v2896
        %v3185 = vunpack.c.l.b16 %v2897
        %v3186 = vunpack.c.l.b16 %v2898
        %v3187 = vunpack.c.l.b16 %v2899
        %v3188 = vunpack.c.l.b16 %v2900
        %v3189 = vunpack.c.l.b16 %v2901
        %v3190 = vunpack.c.l.b16 %v2902
        %v3191 = vunpack.c.l.b16 %v2903
        %v3192 = vunpack.c.l.b16 %v2904
        %v3193 = vunpack.c.l.b16 %v2905
        %v3194 = vunpack.c.l.b16 %v2906
        %v3195 = vunpack.c.l.b16 %v2907
        %v3196 = vunpack.c.l.b16 %v2908
        %v3197 = vunpack.c.l.b16 %v2909
        %v3198 = vunpack.c.l.b16 %v2910
        %v3199 = vunpack.c.l.b16 %v2911
        %v3200 = vunpack.c.l.b16 %v2912
        %v3201 = vunpack.c.l.b16 %v2913
        %v3202 = vunpack.c.l.b16 %v2914
        %v3203 = vunpack.c.l.b16 %v2915
        %v3204 = vunpack.c.l.b16 %v2916
        %v3205 = vunpack.c.l.b16 %v2917
        %v3206 = vunpack.c.l.b16 %v2918
        %v3207 = vunpack.c.l.b16 %v2919
        %v3208 = vunpack.c.l.b16 %v2920
        %v3209 = vunpack.c.l.b16 %v2921
        %v3210 = vunpack.c.l.b16 %v2922
        %v3211 = vunpack.c.l.b16 %v2923
        %v3212 = vunpack.c.l.b16 %v2924
        %v3213 = vunpack.c.l.b16 %v2925
        %v3214 = vunpack.c.l.b16 %v2926
        %v3215 = vunpack.c.l.b16 %v2927
        %v3216 = vunpack.c.l.b16 %v2928
        %v3217 = vunpack.c.l.b16 %v2929
        %v3218 = vunpack.c.l.b16 %v2930
        %v3219 = vunpack.c.l.b16 %v2931
        %v3220 = vunpack.c.l.b16 %v2932
        %v3221 = vunpack.c.l.b16 %v2933
        %v3222 = vunpack.c.l.b16 %v2934
        %v3223 = vunpack.c.l.b16 %v2935
        %v3224 = vunpack.c.l.b16 %v2936
        %v3225 = vunpack.c.l.b16 %v2937
        %v3226 = vunpack.c.l.b16 %v2938
        %v3227 = vunpack.c.l.b16 %v2939
        %v3228 = vunpack.c.l.b16 %v2940
        %v3229 = vunpack.c.l.b16 %v2941
        %v3230 = vunpack.c.l.b16 %v2942
        %v3231 = vunpack.c.l.b16 %v2943
        %v3232 = vunpack.c.l.b16 %v2944
        %v3233 = vunpack.c.l.b16 %v2945
        %v3234 = vunpack.c.l.b16 %v2946
        %v3235 = vunpack.c.l.b16 %v2947
        %v3236 = vunpack.c.l.b16 %v2948
        %v3237 = vunpack.c.l.b16 %v2949
        %v3238 = vunpack.c.l.b16 %v2950
        %v3239 = vunpack.c.l.b16 %v2951
        %v3240 = vunpack.c.l.b16 %v2952
        %v3241 = vunpack.c.l.b16 %v2953
        %v3242 = vunpack.c.l.b16 %v2954
        %v3243 = vunpack.c.l.b16 %v2955
        %v3244 = vunpack.c.l.b16 %v2956
        %v3245 = vunpack.c.l.b16 %v2957
        %v3246 = vunpack.c.l.b16 %v2958
        %v3247 = vunpack.c.l.b16 %v2959
        %v3248 = vunpack.c.l.b16 %v2960
        %v3249 = vunpack.c.l.b16 %v2961
        %v3250 = vunpack.c.l.b16 %v2962
        %v3251 = vunpack.c.l.b16 %v2963
        %v3252 = vunpack.c.l.b16 %v2964
        %v3253 = vunpack.c.l.b16 %v2965
        %v3254 = vunpack.c.l.b16 %v2966
        %v3255 = vunpack.c.l.b16 %v2967
        %v3256 = vunpack.c.l.b16 %v2968
        %v3257 = vunpack.c.l.b16 %v2969
        %v3258 = vunpack.c.l.b16 %v2970
        %v3259 = vunpack.c.l.b16 %v2971
        %v3260 = vunpack.c.l.b16 %v2972
        %v3261 = vunpack.c.l.b16 %v2973
        %v3262 = vunpack.c.l.b16 %v2974
        %v3263 = vunpack.c.l.b16 %v2975
        %v3264 = vunpack.c.l.b16 %v2976
        %v3265 = vunpack.c.l.b16 %v2977
        %v3266 = vunpack.c.l.b16 %v2978
        %v3267 = vunpack.c.l.b16 %v2979
        %v3268 = vunpack.c.l.b16 %v2980
        %v3269 = vunpack.c.l.b16 %v2981
        %v3270 = vunpack.c.l.b16 %v2982
        %v3271 = vunpack.c.l.b16 %v2983
        %v3272 = vunpack.c.l.b16 %v2984
        %v3273 = vunpack.c.l.b16 %v2985
        %v3274 = vunpack.c.l.b16 %v2986
        %v3275 = vunpack.c.l.b16 %v2987
        %v3276 = vunpack.c.l.b16 %v2988
        %v3277 = vunpack.c.l.b16 %v2989
        %v3278 = vunpack.c.l.b16 %v2990
        %v3279 = vunpack.c.l.b16 %v2991
        %v3280 = vunpack.c.l.b16 %v2992
        %v3281 = vunpack.c.l.b16 %v2993
        %v3282 = vunpack.c.l.b16 %v2994
        %v3283 = vunpack.c.l.b16 %v2995
        %v3284 = vunpack.c.l.b16 %v2996
        %v3285 = vunpack.c.l.b16 %v2997
        %v3286 = vunpack.c.l.b16 %v2998
        %v3287 = vunpack.c.l.b16 %v2999
        %v3288 = vunpack.c.l.b16 %v3000
        %v3289 = vunpack.c.l.b16 %v3001
        %v3290 = vunpack.c.l.b16 %v3002
        %v3291 = vunpack.c.l.b16 %v3003
        %v3292 = vunpack.c.l.b16 %v3004
        %v3293 = vunpack.c.l.b16 %v3005
        %v3294 = vunpack.c.l.b16 %v3006
        %v3295 = vunpack.c.l.b16 %v3007
        %v3296 = vunpack.c.l.b16 %v3008
        %v3297 = vunpack.c.l.b16 %v3009
        %v3298 = vunpack.c.l.b16 %v3010
        %v3299 = vunpack.c.l.b16 %v3011
        %v3300 = vunpack.c.l.b16 %v3012
        %v3301 = vunpack.c.l.b16 %v3013
        %v3302 = vunpack.c.l.b16 %v3014
        %v3303 = vunpack.c.l.b16 %v3015
        %v3304 = vunpack.c.l.b16 %v3016
        %v3305 = vunpack.c.l.b16 %v3017
        %v3306 = vunpack.c.l.b16 %v3018
        %v3307 = vunpack.c.l.b16 %v3019
        %v3308 = vunpack.c.l.b16 %v3020
        %v3309 = vunpack.c.l.b16 %v3021
        %v3310 = vunpack.c.l.b16 %v3022
        %v3311 = vunpack.c.l.b16 %v3023
        %v3312 = vunpack.c.l.b16 %v3024
        %v3313 = vunpack.c.l.b16 %v3025
        %v3314 = vunpack.c.l.b16 %v3026
        %v3315 = vunpack.c.l.b16 %v3027
        %v3316 = vunpack.c.l.b16 %v3028
        %v3317 = vunpack.c.l.b16 %v3029
        %v3318 = vpack.c.b16 %v3175, %v3174
        %v3319 = vpack.c.b16 %v3177, %v3176
        %v3320 = vpack.c.b16 %v3179, %v3178
        %v3321 = vpack.c.b16 %v3181, %v3180
        %v3322 = vpack.c.b16 %v3183, %v3182
        %v3323 = vpack.c.b16 %v3185, %v3184
        %v3324 = vpack.c.b16 %v3187, %v3186
        %v3325 = vpack.c.b16 %v3189, %v3188
        %v3326 = vpack.c.b16 %v3191, %v3190
        %v3327 = vpack.c.b16 %v3193, %v3192
        %v3328 = vpack.c.b16 %v3195, %v3194
        %v3329 = vpack.c.b16 %v3197, %v3196
        %v3330 = vpack.c.b16 %v3199, %v3198
        %v3331 = vpack.c.b16 %v3201, %v3200
        %v3332 = vpack.c.b16 %v3203, %v3202
        %v3333 = vpack.c.b16 %v3205, %v3204
        %v3334 = vpack.c.b16 %v3207, %v3206
        %v3335 = vpack.c.b16 %v3209, %v3208
        %v3336 = vpack.c.b16 %v3211, %v3210
        %v3337 = vpack.c.b16 %v3213, %v3212
        %v3338 = vpack.c.b16 %v3215, %v3214
        %v3339 = vpack.c.b16 %v3217, %v3216
        %v3340 = vpack.c.b16 %v3219, %v3218
        %v3341 = vpack.c.b16 %v3221, %v3220
        %v3342 = vpack.c.b16 %v3223, %v3222
        %v3343 = vpack.c.b16 %v3225, %v3224
        %v3344 = vpack.c.b16 %v3227, %v3226
        %v3345 = vpack.c.b16 %v3229, %v3228
        %v3346 = vpack.c.b16 %v3231, %v3230
        %v3347 = vpack.c.b16 %v3233, %v3232
        %v3348 = vpack.c.b16 %v3235, %v3234
        %v3349 = vpack.c.b16 %v3237, %v3236
        %v3350 = vpack.c.b16 %v3239, %v3238
        %v3351 = vpack.c.b16 %v3241, %v3240
        %v3352 = vpack.c.b16 %v3243, %v3242
        %v3353 = vpack.c.b16 %v3245, %v3244
        %v3354 = vpack.c.b16 %v3247, %v3246
        %v3355 = vpack.c.b16 %v3249, %v3248
        %v3356 = vpack.c.b16 %v3251, %v3250
        %v3357 = vpack.c.b16 %v3253, %v3252
        %v3358 = vpack.c.b16 %v3255, %v3254
        %v3359 = vpack.c.b16 %v3257, %v3256
        %v3360 = vpack.c.b16 %v3259, %v3258
        %v3361 = vpack.c.b16 %v3261, %v3260
        %v3362 = vpack.c.b16 %v3263, %v3262
        %v3363 = vpack.c.b16 %v3265, %v3264
        %v3364 = vpack.c.b16 %v3267, %v3266
        %v3365 = vpack.c.b16 %v3269, %v3268
        %v3366 = vpack.c.b16 %v3271, %v3270
        %v3367 = vpack.c.b16 %v3273, %v3272
        %v3368 = vpack.c.b16 %v3275, %v3274
        %v3369 = vpack.c.b16 %v3277, %v3276
        %v3370 = vpack.c.b16 %v3279, %v3278
        %v3371 = vpack.c.b16 %v3281, %v3280
        %v3372 = vpack.c.b16 %v3283, %v3282
        %v3373 = vpack.c.b16 %v3285, %v3284
        %v3374 = vpack.c.b16 %v3287, %v3286
        %v3375 = vpack.c.b16 %v3289, %v3288
        %v3376 = vpack.c.b16 %v3291, %v3290
        %v3377 = vpack.c.b16 %v3293, %v3292
        %v3378 = vpack.c.b16 %v3295, %v3294
        %v3379 = vpack.c.b16 %v3297, %v3296
        %v3380 = vpack.c.b16 %v3299, %v3298
        %v3381 = vpack.c.b16 %v3301, %v3300
        %v3382 = vpack.c.b16 %v3303, %v3302
        %v3383 = vpack.c.b16 %v3305, %v3304
        %v3384 = vpack.c.b16 %v3307, %v3306
        %v3385 = vpack.c.b16 %v3309, %v3308
        %v3386 = vpack.c.b16 %v3311, %v3310
        %v3387 = vpack.c.b16 %v3313, %v3312
        %v3388 = vpack.c.b16 %v3315, %v3314
        %v3389 = vpack.c.b16 %v3317, %v3316
        %3462 = vmatprep.subr.bf16.mxu0 0
        %3463 = vmatpush1.bf16.msra.mxu0 %v3318
        %3464 = vmatprep.subr.bf16.mxu0 0
        %3465 = vmatpush1.bf16.msra.mxu0 %v3319
        %3466 = vmatprep.subr.bf16.mxu0 0
        %3467 = vmatpush1.bf16.msra.mxu0 %v3320
        %3468 = vmatprep.subr.bf16.mxu0 0
        %3469 = vmatpush1.bf16.msra.mxu0 %v3321
        %3470 = vmatprep.subr.bf16.mxu0 0
        %3471 = vmatpush1.bf16.msra.mxu0 %v3322
        %3472 = vmatprep.subr.bf16.mxu0 0
        %3473 = vmatpush1.bf16.msra.mxu0 %v3323
        %3474 = vmatprep.subr.bf16.mxu0 0
        %3475 = vmatpush1.bf16.msra.mxu0 %v3324
        %3476 = vmatprep.subr.bf16.mxu0 0
        %3477 = vmatpush1.bf16.msra.mxu0 %v3325
        %3478 = vmatprep.subr.bf16.mxu0 0
        %3479 = vmatpush1.bf16.msra.mxu0 %v3326
        %3480 = vmatprep.subr.bf16.mxu0 0
        %3481 = vmatpush1.bf16.msra.mxu0 %v3327
        %3482 = vmatprep.subr.bf16.mxu0 0
        %3483 = vmatpush1.bf16.msra.mxu0 %v3328
        %3484 = vmatprep.subr.bf16.mxu0 0
        %3485 = vmatpush1.bf16.msra.mxu0 %v3329
        %3486 = vmatprep.subr.bf16.mxu0 0
        %3487 = vmatpush1.bf16.msra.mxu0 %v3330
        %3488 = vmatprep.subr.bf16.mxu0 0
        %3489 = vmatpush1.bf16.msra.mxu0 %v3331
        %3490 = vmatprep.subr.bf16.mxu0 0
        %3491 = vmatpush1.bf16.msra.mxu0 %v3332
        %3492 = vmatprep.subr.bf16.mxu0 0
        %3493 = vmatpush1.bf16.msra.mxu0 %v3333
        %3494 = vmatprep.mubr.bf16.mxu0 %v2572
        %3495 = vmatmul.mubr.bf16.gmra.mrb[0].mxu0 %v2480
        %v3496 = vpop.f32.mrb[0].mxu0
        %v3497 = vadd.f32 0.0, %v3496
        %v3498 = vpop.f32.mrb[0].mxu0
        %v3499 = vpop.f32.mrb[0].mxu0
        %v3500 = vadd.f32 0.0, %v3499
        %v3501 = vpop.f32.mrb[0].mxu0
        %3502 = vmatprep.mubr.bf16.mxu0 %v2584
        %3503 = vmatmul.mubr.bf16.gmra.mrb[0].mxu0 %v2481
        %v3504 = vpop.f32.mrb[0].mxu0
        %v3505 = vadd.f32 0.0, %v3504
        %v3506 = vpop.f32.mrb[0].mxu0
        %v3507 = vpop.f32.mrb[0].mxu0
        %v3508 = vadd.f32 0.0, %v3507
        %v3509 = vpop.f32.mrb[0].mxu0
        %3510 = vmatprep.mubr.bf16.mxu0 %v2596
        %3511 = vmatmul.mubr.bf16.gmra.mrb[0].mxu0 %v2482
        %v3512 = vpop.f32.mrb[0].mxu0
        %v3513 = vadd.f32 0.0, %v3512
        %v3514 = vpop.f32.mrb[0].mxu0
        %v3515 = vpop.f32.mrb[0].mxu0
        %v3516 = vadd.f32 0.0, %v3515
        %v3517 = vpop.f32.mrb[0].mxu0
        %3518 = vmatprep.mubr.bf16.mxu0 %v2608
        %3519 = vmatmul.mubr.bf16.gmra.mrb[0].mxu0 %v2483
        %v3520 = vpop.f32.mrb[0].mxu0
        %v3521 = vadd.f32 0.0, %v3520
        %v3522 = vpop.f32.mrb[0].mxu0
        %v3523 = vpop.f32.mrb[0].mxu0
        %v3524 = vadd.f32 0.0, %v3523
        %v3525 = vpop.f32.mrb[0].mxu0
        %3526 = vmatprep.mubr.bf16.mxu0 %v2620
        %3527 = vmatmul.mubr.bf16.gmra.mrb[0].mxu0 %v2484
        %v3528 = vpop.f32.mrb[0].mxu0
        %v3529 = vadd.f32 0.0, %v3528
        %v3530 = vpop.f32.mrb[0].mxu0
        %v3531 = vpop.f32.mrb[0].mxu0
        %v3532 = vadd.f32 0.0, %v3531
        %v3533 = vpop.f32.mrb[0].mxu0
        %3534 = vmatprep.mubr.bf16.mxu0 %v2632
        %3535 = vmatmul.mubr.bf16.gmra.mrb[0].mxu0 %v2485
        %v3536 = vpop.f32.mrb[0].mxu0
        %v3537 = vadd.f32 0.0, %v3536
        %v3538 = vpop.f32.mrb[0].mxu0
        %v3539 = vpop.f32.mrb[0].mxu0
        %v3540 = vadd.f32 0.0, %v3539
        %v3541 = vpop.f32.mrb[0].mxu0
        %3542 = vmatprep.mubr.bf16.mxu0 %v2644
        %3543 = vmatmul.mubr.bf16.gmra.mrb[0].mxu0 %v2486
        %v3544 = vpop.f32.mrb[0].mxu0
        %v3545 = vadd.f32 0.0, %v3544
        %v3546 = vpop.f32.mrb[0].mxu0
        %v3547 = vpop.f32.mrb[0].mxu0
        %v3548 = vadd.f32 0.0, %v3547
        %v3549 = vpop.f32.mrb[0].mxu0
        %3550 = vmatprep.mubr.bf16.mxu0 %v2656
        %3551 = vmatmul.mubr.bf16.gmra.mrb[0].mxu0 %v2487
        %v3552 = vpop.f32.mrb[0].mxu0
        %v3553 = vadd.f32 0.0, %v3552
        %v3554 = vpop.f32.mrb[0].mxu0
        %v3555 = vpop.f32.mrb[0].mxu0
        %v3556 = vadd.f32 0.0, %v3555
        %v3557 = vpop.f32.mrb[0].mxu0
        %3558 = vmatprep.mubr.bf16.mxu0 %v2668
        %3559 = vmatmul.mubr.bf16.gmra.mrb[0].mxu0 %v2488
        %v3560 = vpop.f32.mrb[0].mxu0
        %v3561 = vadd.f32 0.0, %v3560
        %v3562 = vpop.f32.mrb[0].mxu0
        %v3563 = vpop.f32.mrb[0].mxu0
        %v3564 = vadd.f32 0.0, %v3563
        %v3565 = vpop.f32.mrb[0].mxu0
        %3566 = vmatprep.mubr.bf16.mxu0 %v2680
        %3567 = vmatmul.mubr.bf16.gmra.mrb[0].mxu0 %v2489
        %v3568 = vpop.f32.mrb[0].mxu0
        %v3569 = vadd.f32 0.0, %v3568
        %v3570 = vpop.f32.mrb[0].mxu0
        %v3571 = vpop.f32.mrb[0].mxu0
        %v3572 = vadd.f32 0.0, %v3571
        %v3573 = vpop.f32.mrb[0].mxu0
        %3574 = vmatprep.mubr.bf16.mxu0 %v2692
        %3575 = vmatmul.mubr.bf16.gmra.mrb[0].mxu0 %v2490
        %v3576 = vpop.f32.mrb[0].mxu0
        %v3577 = vadd.f32 0.0, %v3576
        %v3578 = vpop.f32.mrb[0].mxu0
        %v3579 = vpop.f32.mrb[0].mxu0
        %v3580 = vadd.f32 0.0, %v3579
        %v3581 = vpop.f32.mrb[0].mxu0
        %3582 = vmatprep.mubr.bf16.mxu0 %v2704
        %3583 = vmatmul.mubr.bf16.gmra.mrb[0].mxu0 %v2491
        %v3584 = vpop.f32.mrb[0].mxu0
        %v3585 = vadd.f32 0.0, %v3584
        %v3586 = vpop.f32.mrb[0].mxu0
        %v3587 = vpop.f32.mrb[0].mxu0
        %v3588 = vadd.f32 0.0, %v3587
        %v3589 = vpop.f32.mrb[0].mxu0
        %3590 = vmatprep.mubr.bf16.mxu0 %v2716
        %3591 = vmatmul.mubr.bf16.gmra.mrb[0].mxu0 %v2492
        %v3592 = vpop.f32.mrb[0].mxu0
        %v3593 = vadd.f32 0.0, %v3592
        %v3594 = vpop.f32.mrb[0].mxu0
        %v3595 = vpop.f32.mrb[0].mxu0
        %v3596 = vadd.f32 0.0, %v3595
        %v3597 = vpop.f32.mrb[0].mxu0
        %3598 = vmatprep.mubr.bf16.mxu0 %v2728
        %3599 = vmatmul.mubr.bf16.gmra.mrb[0].mxu0 %v2493
        %v3600 = vpop.f32.mrb[0].mxu0
        %v3601 = vadd.f32 0.0, %v3600
        %v3602 = vpop.f32.mrb[0].mxu0
        %v3603 = vpop.f32.mrb[0].mxu0
        %v3604 = vadd.f32 0.0, %v3603
        %v3605 = vpop.f32.mrb[0].mxu0
        %3606 = vmatprep.mubr.bf16.mxu0 %v2740
        %3607 = vmatmul.mubr.bf16.gmra.mrb[0].mxu0 %v2494
        %v3608 = vpop.f32.mrb[0].mxu0
        %v3609 = vadd.f32 0.0, %v3608
        %v3610 = vpop.f32.mrb[0].mxu0
        %v3611 = vpop.f32.mrb[0].mxu0
        %v3612 = vadd.f32 0.0, %v3611
        %v3613 = vpop.f32.mrb[0].mxu0
        %3614 = vmatprep.mubr.bf16.mxu0 %v2752
        %3615 = vmatmul.mubr.bf16.gmra.mrb[0].mxu0 %v2495
        %v3616 = vpop.f32.mrb[0].mxu0
        %v3617 = vadd.f32 0.0, %v3616
        %v3618 = vpop.f32.mrb[0].mxu0
        %v3619 = vpop.f32.mrb[0].mxu0
        %v3620 = vadd.f32 0.0, %v3619
        %v3621 = vpop.f32.mrb[0].mxu0
        %3622 = vdwg.mxu0
        %3623 = vmatprep.subr.bf16.mxu0 0
        %3624 = vmatpush1.bf16.msra.mxu0 %v3334
        %3625 = vmatprep.subr.bf16.mxu0 0
        %3626 = vmatpush1.bf16.msra.mxu0 %v3335
        %3627 = vmatprep.subr.bf16.mxu0 0
        %3628 = vmatpush1.bf16.msra.mxu0 %v3336
        %3629 = vmatprep.subr.bf16.mxu0 0
        %3630 = vmatpush1.bf16.msra.mxu0 %v3337
        %3631 = vmatprep.subr.bf16.mxu0 0
        %3632 = vmatpush1.bf16.msra.mxu0 %v3338
        %3633 = vmatprep.subr.bf16.mxu0 0
        %3634 = vmatpush1.bf16.msra.mxu0 %v3339
        %3635 = vmatprep.subr.bf16.mxu0 0
        %3636 = vmatpush1.bf16.msra.mxu0 %v3340
        %3637 = vmatprep.subr.bf16.mxu0 0
        %3638 = vmatpush1.bf16.msra.mxu0 %v3341
        %3639 = vmatprep.subr.bf16.mxu0 0
        %3640 = vmatpush1.bf16.msra.mxu0 %v3342
        %3641 = vmatprep.subr.bf16.mxu0 0
        %3642 = vmatpush1.bf16.msra.mxu0 %v3343
        %3643 = vmatprep.subr.bf16.mxu0 0
        %3644 = vmatpush1.bf16.msra.mxu0 %v3344
        %3645 = vmatprep.subr.bf16.mxu0 0
        %3646 = vmatpush1.bf16.msra.mxu0 %v3345
        %3647 = vmatprep.subr.bf16.mxu0 0
        %3648 = vmatpush1.bf16.msra.mxu0 %v3346
        %3649 = vmatprep.subr.bf16.mxu0 0
        %3650 = vmatpush1.bf16.msra.mxu0 %v3347
        %3651 = vmatprep.subr.bf16.mxu0 0
        %3652 = vmatpush1.bf16.msra.mxu0 %v3348
        %3653 = vmatprep.subr.bf16.mxu0 0
        %3654 = vmatpush1.bf16.msra.mxu0 %v3349
        %3655 = vmatprep.mubr.bf16.mxu0 %v2481
        %3656 = vmatmul.mubr.bf16.gmra.mrb[0].mxu0 %v2772
        %v3657 = vpop.f32.mrb[0].mxu0
        %v3658 = vadd.f32 %v3497, %v3657
        %v3659 = vpop.f32.mrb[0].mxu0
        %v3660 = vpop.f32.mrb[0].mxu0
        %v3661 = vadd.f32 %v3500, %v3660
        %v3662 = vpop.f32.mrb[0].mxu0
        %3663 = vmatprep.mubr.bf16.mxu0 %v2482
        %3664 = vmatmul.mubr.bf16.gmra.mrb[0].mxu0 %v2775
        %v3665 = vpop.f32.mrb[0].mxu0
        %v3666 = vadd.f32 %v3505, %v3665
        %v3667 = vpop.f32.mrb[0].mxu0
        %v3668 = vpop.f32.mrb[0].mxu0
        %v3669 = vadd.f32 %v3508, %v3668
        %v3670 = vpop.f32.mrb[0].mxu0
        %3671 = vmatprep.mubr.bf16.mxu0 %v2483
        %3672 = vmatmul.mubr.bf16.gmra.mrb[0].mxu0 %v2778
        %v3673 = vpop.f32.mrb[0].mxu0
        %v3674 = vadd.f32 %v3513, %v3673
        %v3675 = vpop.f32.mrb[0].mxu0
        %v3676 = vpop.f32.mrb[0].mxu0
        %v3677 = vadd.f32 %v3516, %v3676
        %v3678 = vpop.f32.mrb[0].mxu0
        %3679 = vmatprep.mubr.bf16.mxu0 %v2484
        %3680 = vmatmul.mubr.bf16.gmra.mrb[0].mxu0 %v2781
        %v3681 = vpop.f32.mrb[0].mxu0
        %v3682 = vadd.f32 %v3521, %v3681
        %v3683 = vpop.f32.mrb[0].mxu0
        %v3684 = vpop.f32.mrb[0].mxu0
        %v3685 = vadd.f32 %v3524, %v3684
        %v3686 = vpop.f32.mrb[0].mxu0
        %3687 = vmatprep.mubr.bf16.mxu0 %v2485
        %3688 = vmatmul.mubr.bf16.gmra.mrb[0].mxu0 %v2784
        %v3689 = vpop.f32.mrb[0].mxu0
        %v3690 = vadd.f32 %v3529, %v3689
        %v3691 = vpop.f32.mrb[0].mxu0
        %v3692 = vpop.f32.mrb[0].mxu0
        %v3693 = vadd.f32 %v3532, %v3692
        %v3694 = vpop.f32.mrb[0].mxu0
        %3695 = vmatprep.mubr.bf16.mxu0 %v2486
        %3696 = vmatmul.mubr.bf16.gmra.mrb[0].mxu0 %v2787
        %v3697 = vpop.f32.mrb[0].mxu0
        %v3698 = vadd.f32 %v3537, %v3697
        %v3699 = vpop.f32.mrb[0].mxu0
        %v3700 = vpop.f32.mrb[0].mxu0
        %v3701 = vadd.f32 %v3540, %v3700
        %v3702 = vpop.f32.mrb[0].mxu0
        %3703 = vmatprep.mubr.bf16.mxu0 %v2487
        %3704 = vmatmul.mubr.bf16.gmra.mrb[0].mxu0 %v2790
        %v3705 = vpop.f32.mrb[0].mxu0
        %v3706 = vadd.f32 %v3545, %v3705
        %v3707 = vpop.f32.mrb[0].mxu0
        %v3708 = vpop.f32.mrb[0].mxu0
        %v3709 = vadd.f32 %v3548, %v3708
        %v3710 = vpop.f32.mrb[0].mxu0
        %3711 = vmatprep.mubr.bf16.mxu0 %v2488
        %3712 = vmatmul.mubr.bf16.gmra.mrb[0].mxu0 %v2793
        %v3713 = vpop.f32.mrb[0].mxu0
        %v3714 = vadd.f32 %v3553, %v3713
        %v3715 = vpop.f32.mrb[0].mxu0
        %v3716 = vpop.f32.mrb[0].mxu0
        %v3717 = vadd.f32 %v3556, %v3716
        %v3718 = vpop.f32.mrb[0].mxu0
        %3719 = vmatprep.mubr.bf16.mxu0 %v2489
        %3720 = vmatmul.mubr.bf16.gmra.mrb[0].mxu0 %v2796
        %v3721 = vpop.f32.mrb[0].mxu0
        %v3722 = vadd.f32 %v3561, %v3721
        %v3723 = vpop.f32.mrb[0].mxu0
        %v3724 = vpop.f32.mrb[0].mxu0
        %v3725 = vadd.f32 %v3564, %v3724
        %v3726 = vpop.f32.mrb[0].mxu0
        %3727 = vmatprep.mubr.bf16.mxu0 %v2490
        %3728 = vmatmul.mubr.bf16.gmra.mrb[0].mxu0 %v2799
        %v3729 = vpop.f32.mrb[0].mxu0
        %v3730 = vadd.f32 %v3569, %v3729
        %v3731 = vpop.f32.mrb[0].mxu0
        %v3732 = vpop.f32.mrb[0].mxu0
        %v3733 = vadd.f32 %v3572, %v3732
        %v3734 = vpop.f32.mrb[0].mxu0
        %3735 = vmatprep.mubr.bf16.mxu0 %v2491
        %3736 = vmatmul.mubr.bf16.gmra.mrb[0].mxu0 %v2802
        %v3737 = vpop.f32.mrb[0].mxu0
        %v3738 = vadd.f32 %v3577, %v3737
        %v3739 = vpop.f32.mrb[0].mxu0
        %v3740 = vpop.f32.mrb[0].mxu0
        %v3741 = vadd.f32 %v3580, %v3740
        %v3742 = vpop.f32.mrb[0].mxu0
        %3743 = vmatprep.mubr.bf16.mxu0 %v2492
        %3744 = vmatmul.mubr.bf16.gmra.mrb[0].mxu0 %v2805
        %v3745 = vpop.f32.mrb[0].mxu0
        %v3746 = vadd.f32 %v3585, %v3745
        %v3747 = vpop.f32.mrb[0].mxu0
        %v3748 = vpop.f32.mrb[0].mxu0
        %v3749 = vadd.f32 %v3588, %v3748
        %v3750 = vpop.f32.mrb[0].mxu0
        %3751 = vmatprep.mubr.bf16.mxu0 %v2493
        %3752 = vmatmul.mubr.bf16.gmra.mrb[0].mxu0 %v2808
        %v3753 = vpop.f32.mrb[0].mxu0
        %v3754 = vadd.f32 %v3593, %v3753
        %v3755 = vpop.f32.mrb[0].mxu0
        %v3756 = vpop.f32.mrb[0].mxu0
        %v3757 = vadd.f32 %v3596, %v3756
        %v3758 = vpop.f32.mrb[0].mxu0
        %3759 = vmatprep.mubr.bf16.mxu0 %v2494
        %3760 = vmatmul.mubr.bf16.gmra.mrb[0].mxu0 %v2811
        %v3761 = vpop.f32.mrb[0].mxu0
        %v3762 = vadd.f32 %v3601, %v3761
        %v3763 = vpop.f32.mrb[0].mxu0
        %v3764 = vpop.f32.mrb[0].mxu0
        %v3765 = vadd.f32 %v3604, %v3764
        %v3766 = vpop.f32.mrb[0].mxu0
        %3767 = vmatprep.mubr.bf16.mxu0 %v2495
        %3768 = vmatmul.mubr.bf16.gmra.mrb[0].mxu0 %v2814
        %v3769 = vpop.f32.mrb[0].mxu0
        %v3770 = vadd.f32 %v3609, %v3769
        %v3771 = vpop.f32.mrb[0].mxu0
        %v3772 = vpop.f32.mrb[0].mxu0
        %v3773 = vadd.f32 %v3612, %v3772
        %v3774 = vpop.f32.mrb[0].mxu0
        %3775 = vmatprep.mubr.bf16.mxu0 %v2838
        %3776 = vmatmul.mubr.bf16.gmra.mrb[0].mxu0 %v2817
        %v3777 = vpop.f32.mrb[0].mxu0
        %v3778 = vadd.f32 %v3617, %v3777
        %v3779 = vpop.f32.mrb[0].mxu0
        %v3780 = vpop.f32.mrb[0].mxu0
        %v3781 = vadd.f32 %v3620, %v3780
        %v3782 = vpop.f32.mrb[0].mxu0
        %3783 = vdwg.mxu0
        %3784 = vmatprep.subr.bf16.mxu0 0
        %3785 = vmatpush1.bf16.msra.mxu0 %v3350
        %3786 = vmatprep.subr.bf16.mxu0 0
        %3787 = vmatpush1.bf16.msra.mxu0 %v3351
        %3788 = vmatprep.subr.bf16.mxu0 0
        %3789 = vmatpush1.bf16.msra.mxu0 %v3352
        %3790 = vmatprep.subr.bf16.mxu0 0
        %3791 = vmatpush1.bf16.msra.mxu0 %v3353
        %3792 = vmatprep.subr.bf16.mxu0 0
        %3793 = vmatpush1.bf16.msra.mxu0 %v3354
        %3794 = vmatprep.subr.bf16.mxu0 0
        %3795 = vmatpush1.bf16.msra.mxu0 %v3355
        %3796 = vmatprep.subr.bf16.mxu0 0
        %3797 = vmatpush1.bf16.msra.mxu0 %v3356
        %3798 = vmatprep.subr.bf16.mxu0 0
        %3799 = vmatpush1.bf16.msra.mxu0 %v3357
        %3800 = vmatprep.subr.bf16.mxu0 0
        %3801 = vmatpush1.bf16.msra.mxu0 %v3358
        %3802 = vmatprep.subr.bf16.mxu0 0
        %3803 = vmatpush1.bf16.msra.mxu0 %v3359
        %3804 = vmatprep.subr.bf16.mxu0 0
        %3805 = vmatpush1.bf16.msra.mxu0 %v3360
        %3806 = vmatprep.subr.bf16.mxu0 0
        %3807 = vmatpush1.bf16.msra.mxu0 %v3361
        %3808 = vmatprep.subr.bf16.mxu0 0
        %3809 = vmatpush1.bf16.msra.mxu0 %v3362
        %3810 = vmatprep.subr.bf16.mxu0 0
        %3811 = vmatpush1.bf16.msra.mxu0 %v3363
        %3812 = vmatprep.subr.bf16.mxu0 0
        %3813 = vmatpush1.bf16.msra.mxu0 %v3364
        %3814 = vmatprep.subr.bf16.mxu0 0
        %3815 = vmatpush1.bf16.msra.mxu0 %v3365
        %3816 = vmatprep.mubr.bf16.mxu0 %v2775
        %3817 = vmatmul.mubr.bf16.gmra.mrb[0].mxu0 %v2584
        %v3818 = vpop.f32.mrb[0].mxu0
        %v3819 = vadd.f32 %v3658, %v3818
        %v3820 = vpop.f32.mrb[0].mxu0
        %v3821 = vpop.f32.mrb[0].mxu0
        %v3822 = vadd.f32 %v3661, %v3821
        %v3823 = vpop.f32.mrb[0].mxu0
        %3824 = vmatprep.mubr.bf16.mxu0 %v2778
        %3825 = vmatmul.mubr.bf16.gmra.mrb[0].mxu0 %v2596
        %v3826 = vpop.f32.mrb[0].mxu0
        %v3827 = vadd.f32 %v3666, %v3826
        %v3828 = vpop.f32.mrb[0].mxu0
        %v3829 = vpop.f32.mrb[0].mxu0
        %v3830 = vadd.f32 %v3669, %v3829
        %v3831 = vpop.f32.mrb[0].mxu0
        %3832 = vmatprep.mubr.bf16.mxu0 %v2781
        %3833 = vmatmul.mubr.bf16.gmra.mrb[0].mxu0 %v2608
        %v3834 = vpop.f32.mrb[0].mxu0
        %v3835 = vadd.f32 %v3674, %v3834
        %v3836 = vpop.f32.mrb[0].mxu0
        %v3837 = vpop.f32.mrb[0].mxu0
        %v3838 = vadd.f32 %v3677, %v3837
        %v3839 = vpop.f32.mrb[0].mxu0
        %3840 = vmatprep.mubr.bf16.mxu0 %v2784
        %3841 = vmatmul.mubr.bf16.gmra.mrb[0].mxu0 %v2620
        %v3842 = vpop.f32.mrb[0].mxu0
        %v3843 = vadd.f32 %v3682, %v3842
        %v3844 = vpop.f32.mrb[0].mxu0
        %v3845 = vpop.f32.mrb[0].mxu0
        %v3846 = vadd.f32 %v3685, %v3845
        %v3847 = vpop.f32.mrb[0].mxu0
        %3848 = vmatprep.mubr.bf16.mxu0 %v2787
        %3849 = vmatmul.mubr.bf16.gmra.mrb[0].mxu0 %v2632
        %v3850 = vpop.f32.mrb[0].mxu0
        %v3851 = vadd.f32 %v3690, %v3850
        %v3852 = vpop.f32.mrb[0].mxu0
        %v3853 = vpop.f32.mrb[0].mxu0
        %v3854 = vadd.f32 %v3693, %v3853
        %v3855 = vpop.f32.mrb[0].mxu0
        %3856 = vmatprep.mubr.bf16.mxu0 %v2790
        %3857 = vmatmul.mubr.bf16.gmra.mrb[0].mxu0 %v2644
        %v3858 = vpop.f32.mrb[0].mxu0
        %v3859 = vadd.f32 %v3698, %v3858
        %v3860 = vpop.f32.mrb[0].mxu0
        %v3861 = vpop.f32.mrb[0].mxu0
        %v3862 = vadd.f32 %v3701, %v3861
        %v3863 = vpop.f32.mrb[0].mxu0
        %3864 = vmatprep.mubr.bf16.mxu0 %v2793
        %3865 = vmatmul.mubr.bf16.gmra.mrb[0].mxu0 %v2656
        %v3866 = vpop.f32.mrb[0].mxu0
        %v3867 = vadd.f32 %v3706, %v3866
        %v3868 = vpop.f32.mrb[0].mxu0
        %v3869 = vpop.f32.mrb[0].mxu0
        %v3870 = vadd.f32 %v3709, %v3869
        %v3871 = vpop.f32.mrb[0].mxu0
        %3872 = vmatprep.mubr.bf16.mxu0 %v2796
        %3873 = vmatmul.mubr.bf16.gmra.mrb[0].mxu0 %v2668
        %v3874 = vpop.f32.mrb[0].mxu0
        %v3875 = vadd.f32 %v3714, %v3874
        %v3876 = vpop.f32.mrb[0].mxu0
        %v3877 = vpop.f32.mrb[0].mxu0
        %v3878 = vadd.f32 %v3717, %v3877
        %v3879 = vpop.f32.mrb[0].mxu0
        %3880 = vmatprep.mubr.bf16.mxu0 %v2799
        %3881 = vmatmul.mubr.bf16.gmra.mrb[0].mxu0 %v2680
        %v3882 = vpop.f32.mrb[0].mxu0
        %v3883 = vadd.f32 %v3722, %v3882
        %v3884 = vpop.f32.mrb[0].mxu0
        %v3885 = vpop.f32.mrb[0].mxu0
        %v3886 = vadd.f32 %v3725, %v3885
        %v3887 = vpop.f32.mrb[0].mxu0
        %3888 = vmatprep.mubr.bf16.mxu0 %v2802
        %3889 = vmatmul.mubr.bf16.gmra.mrb[0].mxu0 %v2692
        %v3890 = vpop.f32.mrb[0].mxu0
        %v3891 = vadd.f32 %v3730, %v3890
        %v3892 = vpop.f32.mrb[0].mxu0
        %v3893 = vpop.f32.mrb[0].mxu0
        %v3894 = vadd.f32 %v3733, %v3893
        %v3895 = vpop.f32.mrb[0].mxu0
        %3896 = vmatprep.mubr.bf16.mxu0 %v2805
        %3897 = vmatmul.mubr.bf16.gmra.mrb[0].mxu0 %v2704
        %v3898 = vpop.f32.mrb[0].mxu0
        %v3899 = vadd.f32 %v3738, %v3898
        %v3900 = vpop.f32.mrb[0].mxu0
        %v3901 = vpop.f32.mrb[0].mxu0
        %v3902 = vadd.f32 %v3741, %v3901
        %v3903 = vpop.f32.mrb[0].mxu0
        %3904 = vmatprep.mubr.bf16.mxu0 %v2808
        %3905 = vmatmul.mubr.bf16.gmra.mrb[0].mxu0 %v2716
        %v3906 = vpop.f32.mrb[0].mxu0
        %v3907 = vadd.f32 %v3746, %v3906
        %v3908 = vpop.f32.mrb[0].mxu0
        %v3909 = vpop.f32.mrb[0].mxu0
        %v3910 = vadd.f32 %v3749, %v3909
        %v3911 = vpop.f32.mrb[0].mxu0
        %3912 = vmatprep.mubr.bf16.mxu0 %v2811
        %3913 = vmatmul.mubr.bf16.gmra.mrb[0].mxu0 %v2728
        %v3914 = vpop.f32.mrb[0].mxu0
        %v3915 = vadd.f32 %v3754, %v3914
        %v3916 = vpop.f32.mrb[0].mxu0
        %v3917 = vpop.f32.mrb[0].mxu0
        %v3918 = vadd.f32 %v3757, %v3917
        %v3919 = vpop.f32.mrb[0].mxu0
        %3920 = vmatprep.mubr.bf16.mxu0 %v2814
        %3921 = vmatmul.mubr.bf16.gmra.mrb[0].mxu0 %v2740
        %v3922 = vpop.f32.mrb[0].mxu0
        %v3923 = vadd.f32 %v3762, %v3922
        %v3924 = vpop.f32.mrb[0].mxu0
        %v3925 = vpop.f32.mrb[0].mxu0
        %v3926 = vadd.f32 %v3765, %v3925
        %v3927 = vpop.f32.mrb[0].mxu0
        %3928 = vmatprep.mubr.bf16.mxu0 %v2817
        %3929 = vmatmul.mubr.bf16.gmra.mrb[0].mxu0 %v2752
        %v3930 = vpop.f32.mrb[0].mxu0
        %v3931 = vadd.f32 %v3770, %v3930
        %v3932 = vpop.f32.mrb[0].mxu0
        %v3933 = vpop.f32.mrb[0].mxu0
        %v3934 = vadd.f32 %v3773, %v3933
        %v3935 = vpop.f32.mrb[0].mxu0
        %3936 = vmatprep.mubr.bf16.mxu0 %v2858
        %3937 = vmatmul.mubr.bf16.gmra.mrb[0].mxu0 %v2854
        %v3938 = vpop.f32.mrb[0].mxu0
        %v3939 = vadd.f32 %v3778, %v3938
        %v3940 = vpop.f32.mrb[0].mxu0
        %v3941 = vpop.f32.mrb[0].mxu0
        %v3942 = vadd.f32 %v3781, %v3941
        %v3943 = vpop.f32.mrb[0].mxu0
        %3944 = vdwg.mxu0
        %3945 = vmatprep.subr.bf16.mxu0 0
        %3946 = vmatpush1.bf16.msra.mxu0 %v3366
        %3947 = vmatprep.subr.bf16.mxu0 0
        %3948 = vmatpush1.bf16.msra.mxu0 %v3367
        %3949 = vmatprep.subr.bf16.mxu0 0
        %3950 = vmatpush1.bf16.msra.mxu0 %v3368
        %3951 = vmatprep.subr.bf16.mxu0 0
        %3952 = vmatpush1.bf16.msra.mxu0 %v3369
        %3953 = vmatprep.subr.bf16.mxu0 0
        %3954 = vmatpush1.bf16.msra.mxu0 %v3370
        %3955 = vmatprep.subr.bf16.mxu0 0
        %3956 = vmatpush1.bf16.msra.mxu0 %v3371
        %3957 = vmatprep.subr.bf16.mxu0 0
        %3958 = vmatpush1.bf16.msra.mxu0 %v3372
        %3959 = vmatprep.subr.bf16.mxu0 0
        %3960 = vmatpush1.bf16.msra.mxu0 %v3373
        %3961 = vmatprep.subr.bf16.mxu0 0
        %3962 = vmatpush1.bf16.msra.mxu0 %v3374
        %3963 = vmatprep.subr.bf16.mxu0 0
        %3964 = vmatpush1.bf16.msra.mxu0 %v3375
        %3965 = vmatprep.subr.bf16.mxu0 0
        %3966 = vmatpush1.bf16.msra.mxu0 %v3376
        %3967 = vmatprep.subr.bf16.mxu0 0
        %3968 = vmatpush1.bf16.msra.mxu0 %v3377
        %3969 = vmatprep.subr.bf16.mxu0 0
        %3970 = vmatpush1.bf16.msra.mxu0 %v3378
        %3971 = vmatprep.subr.bf16.mxu0 0
        %3972 = vmatpush1.bf16.msra.mxu0 %v3379
        %3973 = vmatprep.subr.bf16.mxu0 0
        %3974 = vmatpush1.bf16.msra.mxu0 %v3380
        %3975 = vmatprep.subr.bf16.mxu0 0
        %3976 = vmatpush1.bf16.msra.mxu0 %v3381
        %3977 = vmatprep.mubr.bf16.mxu0 %v2596
        %3978 = vmatmul.mubr.bf16.gmra.mrb[0].mxu0 %v2482
        %v3979 = vpop.f32.mrb[0].mxu0
        %v3980 = vadd.f32 %v3819, %v3979
        %v3981 = vpop.f32.mrb[0].mxu0
        %v3982 = vpop.f32.mrb[0].mxu0
        %v3983 = vadd.f32 %v3822, %v3982
        %v3984 = vpop.f32.mrb[0].mxu0
        %3985 = vmatprep.mubr.bf16.mxu0 %v2608
        %3986 = vmatmul.mubr.bf16.gmra.mrb[0].mxu0 %v2483
        %v3987 = vpop.f32.mrb[0].mxu0
        %v3988 = vadd.f32 %v3827, %v3987
        %v3989 = vpop.f32.mrb[0].mxu0
        %v3990 = vpop.f32.mrb[0].mxu0
        %v3991 = vadd.f32 %v3830, %v3990
        %v3992 = vpop.f32.mrb[0].mxu0
        %3993 = vmatprep.mubr.bf16.mxu0 %v2620
        %3994 = vmatmul.mubr.bf16.gmra.mrb[0].mxu0 %v2484
        %v3995 = vpop.f32.mrb[0].mxu0
        %v3996 = vadd.f32 %v3835, %v3995
        %v3997 = vpop.f32.mrb[0].mxu0
        %v3998 = vpop.f32.mrb[0].mxu0
        %v3999 = vadd.f32 %v3838, %v3998
        %v4000 = vpop.f32.mrb[0].mxu0
        %4001 = vmatprep.mubr.bf16.mxu0 %v2632
        %4002 = vmatmul.mubr.bf16.gmra.mrb[0].mxu0 %v2485
        %v4003 = vpop.f32.mrb[0].mxu0
        %v4004 = vadd.f32 %v3843, %v4003
        %v4005 = vpop.f32.mrb[0].mxu0
        %v4006 = vpop.f32.mrb[0].mxu0
        %v4007 = vadd.f32 %v3846, %v4006
        %v4008 = vpop.f32.mrb[0].mxu0
        %4009 = vmatprep.mubr.bf16.mxu0 %v2644
        %4010 = vmatmul.mubr.bf16.gmra.mrb[0].mxu0 %v2486
        %v4011 = vpop.f32.mrb[0].mxu0
        %v4012 = vadd.f32 %v3851, %v4011
        %v4013 = vpop.f32.mrb[0].mxu0
        %v4014 = vpop.f32.mrb[0].mxu0
        %v4015 = vadd.f32 %v3854, %v4014
        %v4016 = vpop.f32.mrb[0].mxu0
        %4017 = vmatprep.mubr.bf16.mxu0 %v2656
        %4018 = vmatmul.mubr.bf16.gmra.mrb[0].mxu0 %v2487
        %v4019 = vpop.f32.mrb[0].mxu0
        %v4020 = vadd.f32 %v3859, %v4019
        %v4021 = vpop.f32.mrb[0].mxu0
        %v4022 = vpop.f32.mrb[0].mxu0
        %v4023 = vadd.f32 %v3862, %v4022
        %v4024 = vpop.f32.mrb[0].mxu0
        %4025 = vmatprep.mubr.bf16.mxu0 %v2668
        %4026 = vmatmul.mubr.bf16.gmra.mrb[0].mxu0 %v2488
        %v4027 = vpop.f32.mrb[0].mxu0
        %v4028 = vadd.f32 %v3867, %v4027
        %v4029 = vpop.f32.mrb[0].mxu0
        %v4030 = vpop.f32.mrb[0].mxu0
        %v4031 = vadd.f32 %v3870, %v4030
        %v4032 = vpop.f32.mrb[0].mxu0
        %4033 = vmatprep.mubr.bf16.mxu0 %v2680
        %4034 = vmatmul.mubr.bf16.gmra.mrb[0].mxu0 %v2489
        %v4035 = vpop.f32.mrb[0].mxu0
        %v4036 = vadd.f32 %v3875, %v4035
        %v4037 = vpop.f32.mrb[0].mxu0
        %v4038 = vpop.f32.mrb[0].mxu0
        %v4039 = vadd.f32 %v3878, %v4038
        %v4040 = vpop.f32.mrb[0].mxu0
        %4041 = vmatprep.mubr.bf16.mxu0 %v2692
        %4042 = vmatmul.mubr.bf16.gmra.mrb[0].mxu0 %v2490
        %v4043 = vpop.f32.mrb[0].mxu0
        %v4044 = vadd.f32 %v3883, %v4043
        %v4045 = vpop.f32.mrb[0].mxu0
        %v4046 = vpop.f32.mrb[0].mxu0
        %v4047 = vadd.f32 %v3886, %v4046
        %v4048 = vpop.f32.mrb[0].mxu0
        %4049 = vmatprep.mubr.bf16.mxu0 %v2704
        %4050 = vmatmul.mubr.bf16.gmra.mrb[0].mxu0 %v2491
        %v4051 = vpop.f32.mrb[0].mxu0
        %v4052 = vadd.f32 %v3891, %v4051
        %v4053 = vpop.f32.mrb[0].mxu0
        %v4054 = vpop.f32.mrb[0].mxu0
        %v4055 = vadd.f32 %v3894, %v4054
        %v4056 = vpop.f32.mrb[0].mxu0
        %4057 = vmatprep.mubr.bf16.mxu0 %v2716
        %4058 = vmatmul.mubr.bf16.gmra.mrb[0].mxu0 %v2492
        %v4059 = vpop.f32.mrb[0].mxu0
        %v4060 = vadd.f32 %v3899, %v4059
        %v4061 = vpop.f32.mrb[0].mxu0
        %v4062 = vpop.f32.mrb[0].mxu0
        %v4063 = vadd.f32 %v3902, %v4062
        %v4064 = vpop.f32.mrb[0].mxu0
        %4065 = vmatprep.mubr.bf16.mxu0 %v2728
        %4066 = vmatmul.mubr.bf16.gmra.mrb[0].mxu0 %v2493
        %v4067 = vpop.f32.mrb[0].mxu0
        %v4068 = vadd.f32 %v3907, %v4067
        %v4069 = vpop.f32.mrb[0].mxu0
        %v4070 = vpop.f32.mrb[0].mxu0
        %v4071 = vadd.f32 %v3910, %v4070
        %v4072 = vpop.f32.mrb[0].mxu0
        %4073 = vmatprep.mubr.bf16.mxu0 %v2740
        %4074 = vmatmul.mubr.bf16.gmra.mrb[0].mxu0 %v2494
        %v4075 = vpop.f32.mrb[0].mxu0
        %v4076 = vadd.f32 %v3915, %v4075
        %v4077 = vpop.f32.mrb[0].mxu0
        %v4078 = vpop.f32.mrb[0].mxu0
        %v4079 = vadd.f32 %v3918, %v4078
        %v4080 = vpop.f32.mrb[0].mxu0
        %4081 = vmatprep.mubr.bf16.mxu0 %v2752
        %4082 = vmatmul.mubr.bf16.gmra.mrb[0].mxu0 %v2495
        %v4083 = vpop.f32.mrb[0].mxu0
        %v4084 = vadd.f32 %v3923, %v4083
        %v4085 = vpop.f32.mrb[0].mxu0
        %v4086 = vpop.f32.mrb[0].mxu0
        %v4087 = vadd.f32 %v3926, %v4086
        %v4088 = vpop.f32.mrb[0].mxu0
        %4089 = vmatprep.mubr.bf16.mxu0 %v2854
        %4090 = vmatmul.mubr.bf16.gmra.mrb[0].mxu0 %v2838
        %v4091 = vpop.f32.mrb[0].mxu0
        %v4092 = vadd.f32 %v3931, %v4091
        %v4093 = vpop.f32.mrb[0].mxu0
        %v4094 = vpop.f32.mrb[0].mxu0
        %v4095 = vadd.f32 %v3934, %v4094
        %v4096 = vpop.f32.mrb[0].mxu0
        %4097 = vmatprep.mubr.bf16.mxu0 %v2880
        %4098 = vmatmul.mubr.bf16.gmra.mrb[0].mxu0 %v2864
        %v4099 = vpop.f32.mrb[0].mxu0
        %v4100 = vadd.f32 %v3939, %v4099
        %v4101 = vpop.f32.mrb[0].mxu0
        %v4102 = vpop.f32.mrb[0].mxu0
        %v4103 = vadd.f32 %v3942, %v4102
        %v4104 = vpop.f32.mrb[0].mxu0
        %4105 = vdwg.mxu0
        %4106 = vmatprep.subr.bf16.mxu0 0
        %4107 = vmatpush1.bf16.msra.mxu0 %v3382
        %4108 = vmatprep.subr.bf16.mxu0 0
        %4109 = vmatpush1.bf16.msra.mxu0 %v3383
        %4110 = vmatprep.subr.bf16.mxu0 0
        %4111 = vmatpush1.bf16.msra.mxu0 %v3384
        %4112 = vmatprep.subr.bf16.mxu0 0
        %4113 = vmatpush1.bf16.msra.mxu0 %v3385
        %4114 = vmatprep.subr.bf16.mxu0 0
        %4115 = vmatpush1.bf16.msra.mxu0 %v3386
        %4116 = vmatprep.subr.bf16.mxu0 0
        %4117 = vmatpush1.bf16.msra.mxu0 %v3387
        %4118 = vmatprep.subr.bf16.mxu0 0
        %4119 = vmatpush1.bf16.msra.mxu0 %v3388
        %4120 = vmatprep.subr.bf16.mxu0 0
        %4121 = vmatpush1.bf16.msra.mxu0 %v3389
        %4122 = vmatprep.subr.bf16.mxu0 0
        %4123 = vmatpush1.bf16.msra.mxu0 0
        %4124 = vmatprep.subr.bf16.mxu0 0
        %4125 = vmatpush1.bf16.msra.mxu0 0
        %4126 = vmatprep.subr.bf16.mxu0 0
        %4127 = vmatpush1.bf16.msra.mxu0 0
        %4128 = vmatprep.subr.bf16.mxu0 0
        %4129 = vmatpush1.bf16.msra.mxu0 0
        %4130 = vmatprep.subr.bf16.mxu0 0
        %4131 = vmatpush1.bf16.msra.mxu0 0
        %4132 = vmatprep.subr.bf16.mxu0 0
        %4133 = vmatpush1.bf16.msra.mxu0 0
        %4134 = vmatprep.subr.bf16.mxu0 0
        %4135 = vmatpush1.bf16.msra.mxu0 0
        %4136 = vmatprep.subr.bf16.mxu0 0
        %4137 = vmatpush1.bf16.msra.mxu0 0
        %4138 = vmatprep.mubr.bf16.mxu0 0
        %4139 = vmatmul.mubr.bf16.gmra.mrb[0].mxu0 %v2778
        %v4140 = vpop.f32.mrb[0].mxu0
        %v4141 = vadd.f32 %v3980, %v4140
        %v4142 = vpop.f32.mrb[0].mxu0
        %v4143 = vpop.f32.mrb[0].mxu0
        %v4144 = vadd.f32 %v3983, %v4143
        %v4145 = vpop.f32.mrb[0].mxu0
        %4146 = vmatprep.mubr.bf16.mxu0 0
        %4147 = vmatmul.mubr.bf16.gmra.mrb[0].mxu0 %v2781
        %v4148 = vpop.f32.mrb[0].mxu0
        %v4149 = vadd.f32 %v3988, %v4148
        %v4150 = vpop.f32.mrb[0].mxu0
        %v4151 = vpop.f32.mrb[0].mxu0
        %v4152 = vadd.f32 %v3991, %v4151
        %v4153 = vpop.f32.mrb[0].mxu0
        %4154 = vmatprep.mubr.bf16.mxu0 0
        %4155 = vmatmul.mubr.bf16.gmra.mrb[0].mxu0 %v2784
        %v4156 = vpop.f32.mrb[0].mxu0
        %v4157 = vadd.f32 %v3996, %v4156
        %v4158 = vpop.f32.mrb[0].mxu0
        %v4159 = vpop.f32.mrb[0].mxu0
        %v4160 = vadd.f32 %v3999, %v4159
        %v4161 = vpop.f32.mrb[0].mxu0
        %4162 = vmatprep.mubr.bf16.mxu0 0
        %4163 = vmatmul.mubr.bf16.gmra.mrb[0].mxu0 %v2787
        %v4164 = vpop.f32.mrb[0].mxu0
        %v4165 = vadd.f32 %v4004, %v4164
        %v4166 = vpop.f32.mrb[0].mxu0
        %v4167 = vpop.f32.mrb[0].mxu0
        %v4168 = vadd.f32 %v4007, %v4167
        %v4169 = vpop.f32.mrb[0].mxu0
        %4170 = vmatprep.mubr.bf16.mxu0 0
        %4171 = vmatmul.mubr.bf16.gmra.mrb[0].mxu0 %v2790
        %v4172 = vpop.f32.mrb[0].mxu0
        %v4173 = vadd.f32 %v4012, %v4172
        %v4174 = vpop.f32.mrb[0].mxu0
        %v4175 = vpop.f32.mrb[0].mxu0
        %v4176 = vadd.f32 %v4015, %v4175
        %v4177 = vpop.f32.mrb[0].mxu0
        %4178 = vmatprep.mubr.bf16.mxu0 0
        %4179 = vmatmul.mubr.bf16.gmra.mrb[0].mxu0 %v2793
        %v4180 = vpop.f32.mrb[0].mxu0
        %v4181 = vadd.f32 %v4020, %v4180
        %v4182 = vpop.f32.mrb[0].mxu0
        %v4183 = vpop.f32.mrb[0].mxu0
        %v4184 = vadd.f32 %v4023, %v4183
        %v4185 = vpop.f32.mrb[0].mxu0
        %4186 = vmatprep.mubr.bf16.mxu0 0
        %4187 = vmatmul.mubr.bf16.gmra.mrb[0].mxu0 %v2796
        %v4188 = vpop.f32.mrb[0].mxu0
        %v4189 = vadd.f32 %v4028, %v4188
        %v4190 = vpop.f32.mrb[0].mxu0
        %v4191 = vpop.f32.mrb[0].mxu0
        %v4192 = vadd.f32 %v4031, %v4191
        %v4193 = vpop.f32.mrb[0].mxu0
        %4194 = vmatprep.mubr.bf16.mxu0 0
        %4195 = vmatmul.mubr.bf16.gmra.mrb[0].mxu0 %v2799
        %v4196 = vpop.f32.mrb[0].mxu0
        %v4197 = vadd.f32 %v4036, %v4196
        %v4198 = vpop.f32.mrb[0].mxu0
        %v4199 = vpop.f32.mrb[0].mxu0
        %v4200 = vadd.f32 %v4039, %v4199
        %v4201 = vpop.f32.mrb[0].mxu0
        %4202 = vmatprep.mubr.bf16.mxu0 0
        %4203 = vmatmul.mubr.bf16.gmra.mrb[0].mxu0 %v2802
        %v4204 = vpop.f32.mrb[0].mxu0
        %v4205 = vadd.f32 %v4044, %v4204
        %v4206 = vpop.f32.mrb[0].mxu0
        %v4207 = vpop.f32.mrb[0].mxu0
        %v4208 = vadd.f32 %v4047, %v4207
        %v4209 = vpop.f32.mrb[0].mxu0
        %4210 = vmatprep.mubr.bf16.mxu0 0
        %4211 = vmatmul.mubr.bf16.gmra.mrb[0].mxu0 %v2805
        %v4212 = vpop.f32.mrb[0].mxu0
        %v4213 = vadd.f32 %v4052, %v4212
        %v4214 = vpop.f32.mrb[0].mxu0
        %v4215 = vpop.f32.mrb[0].mxu0
        %v4216 = vadd.f32 %v4055, %v4215
        %v4217 = vpop.f32.mrb[0].mxu0
        %4218 = vmatprep.mubr.bf16.mxu0 0
        %4219 = vmatmul.mubr.bf16.gmra.mrb[0].mxu0 %v2808
        %v4220 = vpop.f32.mrb[0].mxu0
        %v4221 = vadd.f32 %v4060, %v4220
        %v4222 = vpop.f32.mrb[0].mxu0
        %v4223 = vpop.f32.mrb[0].mxu0
        %v4224 = vadd.f32 %v4063, %v4223
        %v4225 = vpop.f32.mrb[0].mxu0
        %4226 = vmatprep.mubr.bf16.mxu0 0
        %4227 = vmatmul.mubr.bf16.gmra.mrb[0].mxu0 %v2811
        %v4228 = vpop.f32.mrb[0].mxu0
        %v4229 = vadd.f32 %v4068, %v4228
        %v4230 = vpop.f32.mrb[0].mxu0
        %v4231 = vpop.f32.mrb[0].mxu0
        %v4232 = vadd.f32 %v4071, %v4231
        %v4233 = vpop.f32.mrb[0].mxu0
        %4234 = vmatprep.mubr.bf16.mxu0 0
        %4235 = vmatmul.mubr.bf16.gmra.mrb[0].mxu0 %v2814
        %v4236 = vpop.f32.mrb[0].mxu0
        %v4237 = vadd.f32 %v4076, %v4236
        %v4238 = vpop.f32.mrb[0].mxu0
        %v4239 = vpop.f32.mrb[0].mxu0
        %v4240 = vadd.f32 %v4079, %v4239
        %v4241 = vpop.f32.mrb[0].mxu0
        %4242 = vmatprep.mubr.bf16.mxu0 0
        %4243 = vmatmul.mubr.bf16.gmra.mrb[0].mxu0 %v2817
        %v4244 = vpop.f32.mrb[0].mxu0
        %v4245 = vadd.f32 %v4084, %v4244
        %v4246 = vpop.f32.mrb[0].mxu0
        %v4247 = vpop.f32.mrb[0].mxu0
        %v4248 = vadd.f32 %v4087, %v4247
        %v4249 = vpop.f32.mrb[0].mxu0
        %4250 = vmatprep.mubr.bf16.mxu0 0
        %4251 = vmatmul.mubr.bf16.gmra.mrb[0].mxu0 %v2858
        %v4252 = vpop.f32.mrb[0].mxu0
        %v4253 = vadd.f32 %v4092, %v4252
        %v4254 = vpop.f32.mrb[0].mxu0
        %v4255 = vpop.f32.mrb[0].mxu0
        %v4256 = vadd.f32 %v4095, %v4255
        %v4257 = vpop.f32.mrb[0].mxu0
        %4258 = vmatprep.mubr.bf16.mxu0 0
        %4259 = vmatmul.mubr.bf16.gmra.mrb[0].mxu0 %v2884
        %v4260 = vpop.f32.mrb[0].mxu0
        %v4261 = vadd.f32 %v4100, %v4260
        %v4262 = vpop.f32.mrb[0].mxu0
        %v4263 = vpop.f32.mrb[0].mxu0
        %v4264 = vadd.f32 %v4103, %v4263
        %v4265 = vpop.f32.mrb[0].mxu0
        %4266 = vdwg.mxu0
        %s4267 = scalar_lea.vmem %s3, %s21
        %v4268 = vld [vmem:[%s4267] sm:$0x1]
        %v4269 = vlaneseq
        %v4270 = vshrl.u32 %v4269, 7
        %v4271 = vsub.s32 0, %v4270
        %v4272 = vrot.slane %v4268, %v4271
        %v4273 = vmul.f32 %v4141, %v4272
        %v4274 = vmul.f32 %v4144, %v4272
        %v4275 = vmul.f32 %v4149, %v4272
        %v4276 = vmul.f32 %v4152, %v4272
        %v4277 = vmul.f32 %v4157, %v4272
        %v4278 = vmul.f32 %v4160, %v4272
        %v4279 = vmul.f32 %v4165, %v4272
        %v4280 = vmul.f32 %v4168, %v4272
        %v4281 = vmul.f32 %v4173, %v4272
        %v4282 = vmul.f32 %v4176, %v4272
        %v4283 = vmul.f32 %v4181, %v4272
        %v4284 = vmul.f32 %v4184, %v4272
        %v4285 = vmul.f32 %v4189, %v4272
        %v4286 = vmul.f32 %v4192, %v4272
        %v4287 = vmul.f32 %v4197, %v4272
        %v4288 = vmul.f32 %v4200, %v4272
        %v4289 = vmul.f32 %v4205, %v4272
        %v4290 = vmul.f32 %v4208, %v4272
        %v4291 = vmul.f32 %v4213, %v4272
        %v4292 = vmul.f32 %v4216, %v4272
        %v4293 = vmul.f32 %v4221, %v4272
        %v4294 = vmul.f32 %v4224, %v4272
        %v4295 = vmul.f32 %v4229, %v4272
        %v4296 = vmul.f32 %v4232, %v4272
        %v4297 = vmul.f32 %v4237, %v4272
        %v4298 = vmul.f32 %v4240, %v4272
        %v4299 = vmul.f32 %v4245, %v4272
        %v4300 = vmul.f32 %v4248, %v4272
        %v4301 = vmul.f32 %v4253, %v4272
        %v4302 = vmul.f32 %v4256, %v4272
        %v4303 = vmul.f32 %v4261, %v4272
        %v4304 = vmul.f32 %v4264, %v4272
        %s4305 = scalar_lea.vmem %s4, %s21
        %v4306 = vld [vmem:[%s4305] sm:$0x1]
        %v4307 = vlaneseq
        %v4308 = vshrl.u32 %v4307, 7
        %v4309 = vsub.s32 0, %v4308
        %v4310 = vrot.slane %v4306, %v4309
        %v4311 = vadd.f32 %v4273, %v4310
        %v4312 = vadd.f32 %v4274, %v4310
        %v4313 = vadd.f32 %v4275, %v4310
        %v4314 = vadd.f32 %v4276, %v4310
        %v4315 = vadd.f32 %v4277, %v4310
        %v4316 = vadd.f32 %v4278, %v4310
        %v4317 = vadd.f32 %v4279, %v4310
        %v4318 = vadd.f32 %v4280, %v4310
        %v4319 = vadd.f32 %v4281, %v4310
        %v4320 = vadd.f32 %v4282, %v4310
        %v4321 = vadd.f32 %v4283, %v4310
        %v4322 = vadd.f32 %v4284, %v4310
        %v4323 = vadd.f32 %v4285, %v4310
        %v4324 = vadd.f32 %v4286, %v4310
        %v4325 = vadd.f32 %v4287, %v4310
        %v4326 = vadd.f32 %v4288, %v4310
        %v4327 = vadd.f32 %v4289, %v4310
        %v4328 = vadd.f32 %v4290, %v4310
        %v4329 = vadd.f32 %v4291, %v4310
        %v4330 = vadd.f32 %v4292, %v4310
        %v4331 = vadd.f32 %v4293, %v4310
        %v4332 = vadd.f32 %v4294, %v4310
        %v4333 = vadd.f32 %v4295, %v4310
        %v4334 = vadd.f32 %v4296, %v4310
        %v4335 = vadd.f32 %v4297, %v4310
        %v4336 = vadd.f32 %v4298, %v4310
        %v4337 = vadd.f32 %v4299, %v4310
        %v4338 = vadd.f32 %v4300, %v4310
        %v4339 = vadd.f32 %v4301, %v4310
        %v4340 = vadd.f32 %v4302, %v4310
        %v4341 = vadd.f32 %v4303, %v4310
        %v4342 = vadd.f32 %v4304, %v4310
        %v4343 = vmax.f32 %v4311, 0.0
        %v4344 = vmax.f32 %v4312, 0.0
        %v4345 = vmax.f32 %v4313, 0.0
        %v4346 = vmax.f32 %v4314, 0.0
        %v4347 = vmax.f32 %v4315, 0.0
        %v4348 = vmax.f32 %v4316, 0.0
        %v4349 = vmax.f32 %v4317, 0.0
        %v4350 = vmax.f32 %v4318, 0.0
        %v4351 = vmax.f32 %v4319, 0.0
        %v4352 = vmax.f32 %v4320, 0.0
        %v4353 = vmax.f32 %v4321, 0.0
        %v4354 = vmax.f32 %v4322, 0.0
        %v4355 = vmax.f32 %v4323, 0.0
        %v4356 = vmax.f32 %v4324, 0.0
        %v4357 = vmax.f32 %v4325, 0.0
        %v4358 = vmax.f32 %v4326, 0.0
        %v4359 = vmax.f32 %v4327, 0.0
        %v4360 = vmax.f32 %v4328, 0.0
        %v4361 = vmax.f32 %v4329, 0.0
        %v4362 = vmax.f32 %v4330, 0.0
        %v4363 = vmax.f32 %v4331, 0.0
        %v4364 = vmax.f32 %v4332, 0.0
        %v4365 = vmax.f32 %v4333, 0.0
        %v4366 = vmax.f32 %v4334, 0.0
        %v4367 = vmax.f32 %v4335, 0.0
        %v4368 = vmax.f32 %v4336, 0.0
        %v4369 = vmax.f32 %v4337, 0.0
        %v4370 = vmax.f32 %v4338, 0.0
        %v4371 = vmax.f32 %v4339, 0.0
        %v4372 = vmax.f32 %v4340, 0.0
        %v4373 = vmax.f32 %v4341, 0.0
        %v4374 = vmax.f32 %v4342, 0.0
        %v4375 = vpack.c.bf16 %v4344, %v4343
        %v4376 = vpack.c.bf16 %v4346, %v4345
        %v4377 = vpack.c.bf16 %v4348, %v4347
        %v4378 = vpack.c.bf16 %v4350, %v4349
        %v4379 = vpack.c.bf16 %v4352, %v4351
        %v4380 = vpack.c.bf16 %v4354, %v4353
        %v4381 = vpack.c.bf16 %v4356, %v4355
        %v4382 = vpack.c.bf16 %v4358, %v4357
        %v4383 = vpack.c.bf16 %v4360, %v4359
        %v4384 = vpack.c.bf16 %v4362, %v4361
        %v4385 = vpack.c.bf16 %v4364, %v4363
        %v4386 = vpack.c.bf16 %v4366, %v4365
        %v4387 = vpack.c.bf16 %v4368, %v4367
        %v4388 = vpack.c.bf16 %v4370, %v4369
        %v4389 = vpack.c.bf16 %v4372, %v4371
        %v4390 = vpack.c.bf16 %v4374, %v4373
        %v4407 = vunpack.c.l.b16 %v4375
        %v4408 = vunpack.c.h.b16 %v4375
        %v4409 = vunpack.c.l.b16 %v4376
        %v4410 = vunpack.c.h.b16 %v4376
        %v4411 = vunpack.c.l.b16 %v4377
        %v4412 = vunpack.c.h.b16 %v4377
        %v4413 = vunpack.c.l.b16 %v4378
        %v4414 = vunpack.c.h.b16 %v4378
        %v4415 = vunpack.c.l.b16 %v4379
        %v4416 = vunpack.c.h.b16 %v4379
        %v4417 = vunpack.c.l.b16 %v4380
        %v4418 = vunpack.c.h.b16 %v4380
        %v4419 = vunpack.c.l.b16 %v4381
        %v4420 = vunpack.c.h.b16 %v4381
        %v4421 = vunpack.c.l.b16 %v4382
        %v4422 = vunpack.c.h.b16 %v4382
        %v4423 = vunpack.c.l.b16 %v4383
        %v4424 = vunpack.c.h.b16 %v4383
        %v4425 = vunpack.c.l.b16 %v4384
        %v4426 = vunpack.c.h.b16 %v4384
        %v4427 = vunpack.c.l.b16 %v4385
        %v4428 = vunpack.c.h.b16 %v4385
        %v4429 = vunpack.c.l.b16 %v4386
        %v4430 = vunpack.c.h.b16 %v4386
        %v4431 = vunpack.c.l.b16 %v4387
        %v4432 = vunpack.c.h.b16 %v4387
        %v4433 = vunpack.c.l.b16 %v4388
        %v4434 = vunpack.c.h.b16 %v4388
        %v4435 = vunpack.c.l.b16 %v4389
        %v4436 = vunpack.c.h.b16 %v4389
        %v4437 = vunpack.c.l.b16 %v4390
        %v4438 = vunpack.c.h.b16 %v4390
        %v4439 = vpack.c.b16 %v4407, %v4407
        %v4440 = vpack.c.b16 %v4408, %v4408
        %v4441 = vpack.c.b16 %v4409, %v4409
        %v4442 = vpack.c.b16 %v4410, %v4410
        %v4443 = vpack.c.b16 %v4411, %v4411
        %v4444 = vpack.c.b16 %v4412, %v4412
        %v4445 = vpack.c.b16 %v4413, %v4413
        %v4446 = vpack.c.b16 %v4414, %v4414
        %v4447 = vpack.c.b16 %v4415, %v4415
        %v4448 = vpack.c.b16 %v4416, %v4416
        %v4449 = vpack.c.b16 %v4417, %v4417
        %v4450 = vpack.c.b16 %v4418, %v4418
        %v4451 = vpack.c.b16 %v4419, %v4419
        %v4452 = vpack.c.b16 %v4420, %v4420
        %v4453 = vpack.c.b16 %v4421, %v4421
        %v4454 = vpack.c.b16 %v4422, %v4422
        %v4455 = vpack.c.b16 %v4423, %v4423
        %v4456 = vpack.c.b16 %v4424, %v4424
        %v4457 = vpack.c.b16 %v4425, %v4425
        %v4458 = vpack.c.b16 %v4426, %v4426
        %v4459 = vpack.c.b16 %v4427, %v4427
        %v4460 = vpack.c.b16 %v4428, %v4428
        %v4461 = vpack.c.b16 %v4429, %v4429
        %v4462 = vpack.c.b16 %v4430, %v4430
        %v4463 = vpack.c.b16 %v4431, %v4431
        %v4464 = vpack.c.b16 %v4432, %v4432
        %v4465 = vpack.c.b16 %v4433, %v4433
        %v4466 = vpack.c.b16 %v4434, %v4434
        %v4467 = vpack.c.b16 %v4435, %v4435
        %v4468 = vpack.c.b16 %v4436, %v4436
        %v4469 = vpack.c.b16 %v4437, %v4437
        %v4470 = vpack.c.b16 %v4438, %v4438
        %vm4471 = vsmask.f32 256
        %vm4472 = vsmask.f32 4368
        %vm4473 = vmor %vm4471, %vm4472
        %v4475 = vshrl.u32 %v4439, 16
        %v4477 = vrot.slane %v4475, 7
        %v4478 = vshll.u32 %v4439, 16
        %v4480 = vor.u32 %v4477, %v4478
        %v4481 = vrot.slane %v4477, 4
        %v4483 = vshrl.u32 %v4440, 16
        %v4485 = vrot.slane %v4483, 7
        %v4486 = vshll.u32 %v4440, 16
        %v4488 = vor.u32 %v4485, %v4486
        %v4489 = vsel %vm4473, %v4481, %v4488
        %v4490 = vrot.slane %v4485, 4
        %v4492 = vshrl.u32 %v4441, 16
        %v4494 = vrot.slane %v4492, 7
        %v4495 = vshll.u32 %v4441, 16
        %v4497 = vor.u32 %v4494, %v4495
        %v4498 = vrot.slane %v4494, 4
        %v4500 = vshrl.u32 %v4442, 16
        %v4502 = vrot.slane %v4500, 7
        %v4503 = vshll.u32 %v4442, 16
        %v4505 = vor.u32 %v4502, %v4503
        %v4506 = vsel %vm4473, %v4498, %v4505
        %v4507 = vrot.slane %v4502, 4
        %v4509 = vshrl.u32 %v4443, 16
        %v4511 = vrot.slane %v4509, 7
        %v4512 = vshll.u32 %v4443, 16
        %v4514 = vor.u32 %v4511, %v4512
        %v4515 = vrot.slane %v4511, 4
        %v4517 = vshrl.u32 %v4444, 16
        %v4519 = vrot.slane %v4517, 7
        %v4520 = vshll.u32 %v4444, 16
        %v4522 = vor.u32 %v4519, %v4520
        %v4523 = vsel %vm4473, %v4515, %v4522
        %v4524 = vrot.slane %v4519, 4
        %v4526 = vshrl.u32 %v4445, 16
        %v4528 = vrot.slane %v4526, 7
        %v4529 = vshll.u32 %v4445, 16
        %v4531 = vor.u32 %v4528, %v4529
        %v4532 = vrot.slane %v4528, 4
        %v4534 = vshrl.u32 %v4446, 16
        %v4536 = vrot.slane %v4534, 7
        %v4537 = vshll.u32 %v4446, 16
        %v4539 = vor.u32 %v4536, %v4537
        %v4540 = vsel %vm4473, %v4532, %v4539
        %v4541 = vrot.slane %v4536, 4
        %v4543 = vshrl.u32 %v4447, 16
        %v4545 = vrot.slane %v4543, 7
        %v4546 = vshll.u32 %v4447, 16
        %v4548 = vor.u32 %v4545, %v4546
        %v4549 = vrot.slane %v4545, 4
        %v4551 = vshrl.u32 %v4448, 16
        %v4553 = vrot.slane %v4551, 7
        %v4554 = vshll.u32 %v4448, 16
        %v4556 = vor.u32 %v4553, %v4554
        %v4557 = vsel %vm4473, %v4549, %v4556
        %v4558 = vrot.slane %v4553, 4
        %v4560 = vshrl.u32 %v4449, 16
        %v4562 = vrot.slane %v4560, 7
        %v4563 = vshll.u32 %v4449, 16
        %v4565 = vor.u32 %v4562, %v4563
        %v4566 = vrot.slane %v4562, 4
        %v4568 = vshrl.u32 %v4450, 16
        %v4570 = vrot.slane %v4568, 7
        %v4571 = vshll.u32 %v4450, 16
        %v4573 = vor.u32 %v4570, %v4571
        %v4574 = vsel %vm4473, %v4566, %v4573
        %v4575 = vrot.slane %v4570, 4
        %v4577 = vshrl.u32 %v4451, 16
        %v4579 = vrot.slane %v4577, 7
        %v4580 = vshll.u32 %v4451, 16
        %v4582 = vor.u32 %v4579, %v4580
        %v4583 = vrot.slane %v4579, 4
        %v4585 = vshrl.u32 %v4452, 16
        %v4587 = vrot.slane %v4585, 7
        %v4588 = vshll.u32 %v4452, 16
        %v4590 = vor.u32 %v4587, %v4588
        %v4591 = vsel %vm4473, %v4583, %v4590
        %v4592 = vrot.slane %v4587, 4
        %v4594 = vshrl.u32 %v4453, 16
        %v4596 = vrot.slane %v4594, 7
        %v4597 = vshll.u32 %v4453, 16
        %v4599 = vor.u32 %v4596, %v4597
        %v4600 = vrot.slane %v4596, 4
        %v4602 = vshrl.u32 %v4454, 16
        %v4604 = vrot.slane %v4602, 7
        %v4605 = vshll.u32 %v4454, 16
        %v4607 = vor.u32 %v4604, %v4605
        %v4608 = vsel %vm4473, %v4600, %v4607
        %v4609 = vrot.slane %v4604, 4
        %v4611 = vshrl.u32 %v4455, 16
        %v4613 = vrot.slane %v4611, 7
        %v4614 = vshll.u32 %v4455, 16
        %v4616 = vor.u32 %v4613, %v4614
        %v4617 = vrot.slane %v4613, 4
        %v4619 = vshrl.u32 %v4456, 16
        %v4621 = vrot.slane %v4619, 7
        %v4622 = vshll.u32 %v4456, 16
        %v4624 = vor.u32 %v4621, %v4622
        %v4625 = vsel %vm4473, %v4617, %v4624
        %v4626 = vrot.slane %v4621, 4
        %v4628 = vshrl.u32 %v4457, 16
        %v4630 = vrot.slane %v4628, 7
        %v4631 = vshll.u32 %v4457, 16
        %v4633 = vor.u32 %v4630, %v4631
        %v4634 = vrot.slane %v4630, 4
        %v4636 = vshrl.u32 %v4458, 16
        %v4638 = vrot.slane %v4636, 7
        %v4639 = vshll.u32 %v4458, 16
        %v4641 = vor.u32 %v4638, %v4639
        %v4642 = vsel %vm4473, %v4634, %v4641
        %v4643 = vrot.slane %v4638, 4
        %v4645 = vshrl.u32 %v4459, 16
        %v4647 = vrot.slane %v4645, 7
        %v4648 = vshll.u32 %v4459, 16
        %v4650 = vor.u32 %v4647, %v4648
        %v4651 = vrot.slane %v4647, 4
        %v4653 = vshrl.u32 %v4460, 16
        %v4655 = vrot.slane %v4653, 7
        %v4656 = vshll.u32 %v4460, 16
        %v4658 = vor.u32 %v4655, %v4656
        %v4659 = vsel %vm4473, %v4651, %v4658
        %v4660 = vrot.slane %v4655, 4
        %v4662 = vshrl.u32 %v4461, 16
        %v4664 = vrot.slane %v4662, 7
        %v4665 = vshll.u32 %v4461, 16
        %v4667 = vor.u32 %v4664, %v4665
        %v4668 = vrot.slane %v4664, 4
        %v4670 = vshrl.u32 %v4462, 16
        %v4672 = vrot.slane %v4670, 7
        %v4673 = vshll.u32 %v4462, 16
        %v4675 = vor.u32 %v4672, %v4673
        %v4676 = vsel %vm4473, %v4668, %v4675
        %v4677 = vrot.slane %v4672, 4
        %v4679 = vshrl.u32 %v4463, 16
        %v4681 = vrot.slane %v4679, 7
        %v4682 = vshll.u32 %v4463, 16
        %v4684 = vor.u32 %v4681, %v4682
        %v4685 = vrot.slane %v4681, 4
        %v4687 = vshrl.u32 %v4464, 16
        %v4689 = vrot.slane %v4687, 7
        %v4690 = vshll.u32 %v4464, 16
        %v4692 = vor.u32 %v4689, %v4690
        %v4693 = vsel %vm4473, %v4685, %v4692
        %v4694 = vrot.slane %v4689, 4
        %v4696 = vshrl.u32 %v4465, 16
        %v4698 = vrot.slane %v4696, 7
        %v4699 = vshll.u32 %v4465, 16
        %v4701 = vor.u32 %v4698, %v4699
        %v4702 = vrot.slane %v4698, 4
        %v4704 = vshrl.u32 %v4466, 16
        %v4706 = vrot.slane %v4704, 7
        %v4707 = vshll.u32 %v4466, 16
        %v4709 = vor.u32 %v4706, %v4707
        %v4710 = vsel %vm4473, %v4702, %v4709
        %v4711 = vrot.slane %v4706, 4
        %v4713 = vshrl.u32 %v4467, 16
        %v4715 = vrot.slane %v4713, 7
        %v4716 = vshll.u32 %v4467, 16
        %v4718 = vor.u32 %v4715, %v4716
        %v4719 = vrot.slane %v4715, 4
        %v4721 = vshrl.u32 %v4468, 16
        %v4723 = vrot.slane %v4721, 7
        %v4724 = vshll.u32 %v4468, 16
        %v4726 = vor.u32 %v4723, %v4724
        %v4727 = vsel %vm4473, %v4719, %v4726
        %v4728 = vrot.slane %v4723, 4
        %v4730 = vshrl.u32 %v4469, 16
        %v4732 = vrot.slane %v4730, 7
        %v4733 = vshll.u32 %v4469, 16
        %v4735 = vor.u32 %v4732, %v4733
        %v4736 = vrot.slane %v4732, 4
        %v4738 = vshrl.u32 %v4470, 16
        %v4740 = vrot.slane %v4738, 7
        %v4741 = vshll.u32 %v4470, 16
        %v4743 = vor.u32 %v4740, %v4741
        %v4744 = vsel %vm4473, %v4736, %v4743
        %v4745 = vrot.slane %v4740, 4
        %s4794 = scalar_lea.vmem [#allocation2], 12
        %vm4795 = vcmask 1043456
        %vm4796 = vsmask.f32 7938
        %vm4797 = vmand %vm4795, %vm4796
        %v4798 = vld [vmem:[%s4794] sm:$0xf]
        %v4799 = vsel %vm4797, %v4480, %v4798
        %4800 = vst [vmem:[%s4794] sm:$0xf] %v4799
        %4801 = vst [vmem:[%s4794 + $0x4] sm:$0xf] %v4489
        %vm4802 = vcmask 1040384
        %vm4803 = vmand %vm4802, %vm4471
        %v4804 = vld [vmem:[%s4794 + $0x8] sm:$0x1]
        %v4805 = vsel %vm4803, %v4490, %v4804
        %4806 = vst [vmem:[%s4794 + $0x8] sm:$0x1] %v4805
        %v4807 = vld [vmem:[%s4794 + $0xc] sm:$0xf]
        %v4808 = vsel %vm4797, %v4497, %v4807
        %4809 = vst [vmem:[%s4794 + $0xc] sm:$0xf] %v4808
        %4810 = vst [vmem:[%s4794 + $0x10] sm:$0xf] %v4506
        %v4811 = vld [vmem:[%s4794 + $0x14] sm:$0x1]
        %v4812 = vsel %vm4803, %v4507, %v4811
        %4813 = vst [vmem:[%s4794 + $0x14] sm:$0x1] %v4812
        %v4814 = vld [vmem:[%s4794 + $0x18] sm:$0xf]
        %v4815 = vsel %vm4797, %v4514, %v4814
        %4816 = vst [vmem:[%s4794 + $0x18] sm:$0xf] %v4815
        %4817 = vst [vmem:[%s4794 + $0x1c] sm:$0xf] %v4523
        %v4818 = vld [vmem:[%s4794 + $0x20] sm:$0x1]
        %v4819 = vsel %vm4803, %v4524, %v4818
        %4820 = vst [vmem:[%s4794 + $0x20] sm:$0x1] %v4819
        %v4821 = vld [vmem:[%s4794 + $0x24] sm:$0xf]
        %v4822 = vsel %vm4797, %v4531, %v4821
        %4823 = vst [vmem:[%s4794 + $0x24] sm:$0xf] %v4822
        %4824 = vst [vmem:[%s4794 + $0x28] sm:$0xf] %v4540
        %v4825 = vld [vmem:[%s4794 + $0x2c] sm:$0x1]
        %v4826 = vsel %vm4803, %v4541, %v4825
        %4827 = vst [vmem:[%s4794 + $0x2c] sm:$0x1] %v4826
        %v4828 = vld [vmem:[%s4794 + $0x30] sm:$0xf]
        %v4829 = vsel %vm4797, %v4548, %v4828
        %4830 = vst [vmem:[%s4794 + $0x30] sm:$0xf] %v4829
        %4831 = vst [vmem:[%s4794 + $0x34] sm:$0xf] %v4557
        %v4832 = vld [vmem:[%s4794 + $0x38] sm:$0x1]
        %v4833 = vsel %vm4803, %v4558, %v4832
        %4834 = vst [vmem:[%s4794 + $0x38] sm:$0x1] %v4833
        %v4835 = vld [vmem:[%s4794 + $0x3c] sm:$0xf]
        %v4836 = vsel %vm4797, %v4565, %v4835
        %4837 = vst [vmem:[%s4794 + $0x3c] sm:$0xf] %v4836
        %4838 = vst [vmem:[%s4794 + $0x40] sm:$0xf] %v4574
        %v4839 = vld [vmem:[%s4794 + $0x44] sm:$0x1]
        %v4840 = vsel %vm4803, %v4575, %v4839
        %4841 = vst [vmem:[%s4794 + $0x44] sm:$0x1] %v4840
        %v4842 = vld [vmem:[%s4794 + $0x48] sm:$0xf]
        %v4843 = vsel %vm4797, %v4582, %v4842
        %4844 = vst [vmem:[%s4794 + $0x48] sm:$0xf] %v4843
        %4845 = vst [vmem:[%s4794 + $0x4c] sm:$0xf] %v4591
        %v4846 = vld [vmem:[%s4794 + $0x50] sm:$0x1]
        %v4847 = vsel %vm4803, %v4592, %v4846
        %4848 = vst [vmem:[%s4794 + $0x50] sm:$0x1] %v4847
        %v4849 = vld [vmem:[%s4794 + $0x54] sm:$0xf]
        %v4850 = vsel %vm4797, %v4599, %v4849
        %4851 = vst [vmem:[%s4794 + $0x54] sm:$0xf] %v4850
        %4852 = vst [vmem:[%s4794 + $0x58] sm:$0xf] %v4608
        %v4853 = vld [vmem:[%s4794 + $0x5c] sm:$0x1]
        %v4854 = vsel %vm4803, %v4609, %v4853
        %4855 = vst [vmem:[%s4794 + $0x5c] sm:$0x1] %v4854
        %v4856 = vld [vmem:[%s4794 + $0x60] sm:$0xf]
        %v4857 = vsel %vm4797, %v4616, %v4856
        %4858 = vst [vmem:[%s4794 + $0x60] sm:$0xf] %v4857
        %4859 = vst [vmem:[%s4794 + $0x64] sm:$0xf] %v4625
        %v4860 = vld [vmem:[%s4794 + $0x68] sm:$0x1]
        %v4861 = vsel %vm4803, %v4626, %v4860
        %4862 = vst [vmem:[%s4794 + $0x68] sm:$0x1] %v4861
        %v4863 = vld [vmem:[%s4794 + $0x6c] sm:$0xf]
        %v4864 = vsel %vm4797, %v4633, %v4863
        %4865 = vst [vmem:[%s4794 + $0x6c] sm:$0xf] %v4864
        %4866 = vst [vmem:[%s4794 + $0x70] sm:$0xf] %v4642
        %v4867 = vld [vmem:[%s4794 + $0x74] sm:$0x1]
        %v4868 = vsel %vm4803, %v4643, %v4867
        %4869 = vst [vmem:[%s4794 + $0x74] sm:$0x1] %v4868
        %v4870 = vld [vmem:[%s4794 + $0x78] sm:$0xf]
        %v4871 = vsel %vm4797, %v4650, %v4870
        %4872 = vst [vmem:[%s4794 + $0x78] sm:$0xf] %v4871
        %4873 = vst [vmem:[%s4794 + $0x7c] sm:$0xf] %v4659
        %v4874 = vld [vmem:[%s4794 + $0x80] sm:$0x1]
        %v4875 = vsel %vm4803, %v4660, %v4874
        %4876 = vst [vmem:[%s4794 + $0x80] sm:$0x1] %v4875
        %v4877 = vld [vmem:[%s4794 + $0x84] sm:$0xf]
        %v4878 = vsel %vm4797, %v4667, %v4877
        %4879 = vst [vmem:[%s4794 + $0x84] sm:$0xf] %v4878
        %4880 = vst [vmem:[%s4794 + $0x88] sm:$0xf] %v4676
        %v4881 = vld [vmem:[%s4794 + $0x8c] sm:$0x1]
        %v4882 = vsel %vm4803, %v4677, %v4881
        %4883 = vst [vmem:[%s4794 + $0x8c] sm:$0x1] %v4882
        %v4884 = vld [vmem:[%s4794 + $0x90] sm:$0xf]
        %v4885 = vsel %vm4797, %v4684, %v4884
        %4886 = vst [vmem:[%s4794 + $0x90] sm:$0xf] %v4885
        %4887 = vst [vmem:[%s4794 + $0x94] sm:$0xf] %v4693
        %v4888 = vld [vmem:[%s4794 + $0x98] sm:$0x1]
        %v4889 = vsel %vm4803, %v4694, %v4888
        %4890 = vst [vmem:[%s4794 + $0x98] sm:$0x1] %v4889
        %v4891 = vld [vmem:[%s4794 + $0x9c] sm:$0xf]
        %v4892 = vsel %vm4797, %v4701, %v4891
        %4893 = vst [vmem:[%s4794 + $0x9c] sm:$0xf] %v4892
        %4894 = vst [vmem:[%s4794 + $0xa0] sm:$0xf] %v4710
        %v4895 = vld [vmem:[%s4794 + $0xa4] sm:$0x1]
        %v4896 = vsel %vm4803, %v4711, %v4895
        %4897 = vst [vmem:[%s4794 + $0xa4] sm:$0x1] %v4896
        %v4898 = vld [vmem:[%s4794 + $0xa8] sm:$0xf]
        %v4899 = vsel %vm4797, %v4718, %v4898
        %4900 = vst [vmem:[%s4794 + $0xa8] sm:$0xf] %v4899
        %4901 = vst [vmem:[%s4794 + $0xac] sm:$0xf] %v4727
        %v4902 = vld [vmem:[%s4794 + $0xb0] sm:$0x1]
        %v4903 = vsel %vm4803, %v4728, %v4902
        %4904 = vst [vmem:[%s4794 + $0xb0] sm:$0x1] %v4903
        %v4905 = vld [vmem:[%s4794 + $0xb4] sm:$0xf]
        %v4906 = vsel %vm4797, %v4735, %v4905
        %4907 = vst [vmem:[%s4794 + $0xb4] sm:$0xf] %v4906
        %4908 = vst [vmem:[%s4794 + $0xb8] sm:$0xf] %v4744
        %v4909 = vld [vmem:[%s4794 + $0xbc] sm:$0x1]
        %v4910 = vsel %vm4803, %v4745, %v4909
        %4911 = vst [vmem:[%s4794 + $0xbc] sm:$0x1] %v4910
        %4944 = vst [vmem:[%s277] sm:$0xf] %v4439
        %4945 = vst [vmem:[%s277 + $0x4] sm:$0xf] %v4440
        %4946 = vst [vmem:[%s277 + $0x8] sm:$0xf] %v4441
        %4947 = vst [vmem:[%s277 + $0xc] sm:$0xf] %v4442
        %4948 = vst [vmem:[%s277 + $0x10] sm:$0xf] %v4443
        %4949 = vst [vmem:[%s277 + $0x14] sm:$0xf] %v4444
        %4950 = vst [vmem:[%s277 + $0x18] sm:$0xf] %v4445
        %4951 = vst [vmem:[%s277 + $0x1c] sm:$0xf] %v4446
        %4952 = vst [vmem:[%s277 + $0x20] sm:$0xf] %v4447
        %4953 = vst [vmem:[%s277 + $0x24] sm:$0xf] %v4448
        %4954 = vst [vmem:[%s277 + $0x28] sm:$0xf] %v4449
        %4955 = vst [vmem:[%s277 + $0x2c] sm:$0xf] %v4450
        %4956 = vst [vmem:[%s277 + $0x30] sm:$0xf] %v4451
        %4957 = vst [vmem:[%s277 + $0x34] sm:$0xf] %v4452
        %4958 = vst [vmem:[%s277 + $0x38] sm:$0xf] %v4453
        %4959 = vst [vmem:[%s277 + $0x3c] sm:$0xf] %v4454
        %4960 = vst [vmem:[%s277 + $0x40] sm:$0xf] %v4455
        %4961 = vst [vmem:[%s277 + $0x44] sm:$0xf] %v4456
        %4962 = vst [vmem:[%s277 + $0x48] sm:$0xf] %v4457
        %4963 = vst [vmem:[%s277 + $0x4c] sm:$0xf] %v4458
        %4964 = vst [vmem:[%s277 + $0x50] sm:$0xf] %v4459
        %4965 = vst [vmem:[%s277 + $0x54] sm:$0xf] %v4460
        %4966 = vst [vmem:[%s277 + $0x58] sm:$0xf] %v4461
        %4967 = vst [vmem:[%s277 + $0x5c] sm:$0xf] %v4462
        %4968 = vst [vmem:[%s277 + $0x60] sm:$0xf] %v4463
        %4969 = vst [vmem:[%s277 + $0x64] sm:$0xf] %v4464
        %4970 = vst [vmem:[%s277 + $0x68] sm:$0xf] %v4465
        %4971 = vst [vmem:[%s277 + $0x6c] sm:$0xf] %v4466
        %4972 = vst [vmem:[%s277 + $0x70] sm:$0xf] %v4467
        %4973 = vst [vmem:[%s277 + $0x74] sm:$0xf] %v4468
        %4974 = vst [vmem:[%s277 + $0x78] sm:$0xf] %v4469
        %4975 = vst [vmem:[%s277 + $0x7c] sm:$0xf] %v4470
      $region48: #{point_pillar_forward.5} parent=39 // pred_fallthru
        _
      %p4976 = scmp.lt.s32.totalorder %s20, 1
      %s4977 = scalar_select %p4976, %s20, 1
      %s4978 = smul.addr %s4977, 32
      %s4979 = smul.addr %s4978, 4
      %s4980 = scalar_lea.vmem %s5, %s4979
      // Predicated region
      $region49: #{point_pillar_forward.5} parent=39 // pred_check
        %p4981 = pneg %p167
      $region50: #{point_pillar_forward.5} parent=39 // pred_check_branch
        %4983 = sbr.rel (%p4981) target = $region52
      $region51: #{point_pillar_forward.5} parent=39 // pred_region
        _
      $region52: #{point_pillar_forward.5} parent=39 // pred_fallthru
        _
    $region40: #{point_pillar_forward.5} parent=5 // pred_fallthru
      _
    %p4984 = scmp.le.s32.totalorder 2, %s11
    // Predicated region
    $region53: #{point_pillar_forward.5} parent=5 // pred_check
      %p4985 = pneg %p4984
    $region54: #{point_pillar_forward.5} parent=5 // pred_check_branch
      %4987 = sbr.rel (%p4985) target = $region56
    $region55: #{point_pillar_forward.5} parent=5 // pred_region
      %s4988 = ssub.s32 %s11, 2
      // Predicated region
      $region57: #{point_pillar_forward.5} parent=55 // pred_check
        %p4989 = pneg %p173
      $region58: #{point_pillar_forward.5} parent=55 // pred_check_branch
        %4991 = sbr.rel (%p4989) target = $region60
      $region59: #{point_pillar_forward.5} parent=55 // pred_region
        %p4992 = scmp.lt.s32.totalorder %s22, 1
        %s4993 = scalar_select %p4992, %s22, 1
        %s4994 = smul.addr %s4993, 32
        %s4995 = smul.addr %s4994, 4
        %s4996 = scalar_lea.vmem %s5, %s4995
      $region60: #{point_pillar_forward.5} parent=55 // pred_fallthru
        _
    $region56: #{point_pillar_forward.5} parent=5 // pred_fallthru
      _
  $region6: #{point_pillar_forward.5} parent=0 // loop_footer
    %s15 = sadd.s32 1, %s11
  $region7: #{point_pillar_forward.5} parent=0 // loop_footer_branch
    %10 = sbr.rel target = $region3
  $region8: #{point_pillar_forward.5} parent=0 // loop_exit
    _

// kernel: point_pillar_forward.6
$region0: #{point_pillar_forward.6}
  #allocation0 [shape = 'u32[]', space=smem, size = 0x4, offset = 0x4, fixed_abs, tag = 'smem constant byte address 0x4 - core index']
  #allocation1 [shape = 'u32[144,128]{1,0:T(1,128)}', space=vmem, size = 0x12000, scoped, tag = 'internal scratch']
  #allocation2 [shape = 'bf16[10,10,128]{2,1,0:T(8,128)(2,1)}', space=vmem, size = 0xa000, scoped, tag = 'scratch operand']
  %s0 = inlined_call_operand.vmem [shape: bf16[2,64,576], index: 0, kind: input, shape index: {}]
  %s1 = inlined_call_operand.vmem [shape: bf16[576,128], index: 1, kind: input, shape index: {}]
  %s2 = inlined_call_operand.vmem [shape: bf16[5,1152,128], index: 2, kind: input, shape index: {}]
  %s3 = inlined_call_operand.vmem [shape: f32[6,128], index: 3, kind: input, shape index: {}]
  %s4 = inlined_call_operand.vmem [shape: f32[6,128], index: 4, kind: input, shape index: {}]
  %s5 = inlined_call_operand.vmem [shape: bf16[2,64,128], index: 5, kind: output, shape index: {}]
  %s6 = sld [smem:[#allocation0]]
  $region61: #{point_pillar_forward.6} parent=0
    _
  %s8 = ssub.s32 1, %s6
  %s9 = scalar_select 0, %s8, %s6
  loop: start=0, step=1, limit=14
  $region2: #{point_pillar_forward.6} parent=0 // loop_pre_header
    _
  $region3: #{point_pillar_forward.6} parent=0 // loop_header
    %s11 = sphi 0, %s15
    %p12 = scmp.ge.s32.totalorder %s11, 14
    %s18 = sphi 0, %s30
    %s19 = sphi 0, %s26
    %s20 = sphi 0, %s18
    %s21 = sphi 0, %s19
    %s22 = sphi 0, %s20
    %s23 = sphi 0, %s21
    %s33 = sphi 0, %s35
    %s36 = sphi 0, %s33
    %s37 = sphi 0, %s36
    %s53 = sphi 0, %s37
    %s57 = sphi 0, %s57
    %s59 = sphi 0, %s57
    %s60 = sphi 0, %s59
    %s74 = sphi 0, %s60
    %s86 = sphi 0, %s88
    %s89 = sphi 0, %s86
    %s90 = sphi 0, %s89
    %s106 = sphi 0, %s90
    %s110 = sphi 0, %s110
    %s112 = sphi 0, %s110
    %s113 = sphi 0, %s112
    %s127 = sphi 0, %s113
    %s131 = sphi 0, %s131
    %s133 = sphi 0, %s131
    %s134 = sphi 0, %s133
    %s148 = sphi 0, %s134
    %s154 = sphi 0, %s156
    %s157 = sphi 0, %s154
    %s158 = sphi 0, %s157
    %s174 = sphi 0, %s158
  $region4: #{point_pillar_forward.6} parent=0 // loop_header_branch
    %14 = sbr.rel (%p12) target = $region8
  $region5: #{point_pillar_forward.6} parent=0 // loop_body
    %s16 = ssub.s32 %s11, 1
    %s17 = ssub.s32 %s11, 2
    %s24 = sadd.s32 1, %s19
    %p25 = scmp.ge.s32.totalorder %s24, 6
    %s26 = scalar_select %p25, 0, %s24
    %s27 = sadd.s32 1, %s18
    %s28 = scalar_select %p25, %s27, %s18
    %p29 = scmp.ge.s32.totalorder %s28, 2
    %s30 = scalar_select %p29, 0, %s28
    %s31 = ssub.s32 %s18, %s30
    %p32 = scmp.eq.s32.totalorder %s31, 0
    %s34 = sadd.s32 %s33, 1
    %s35 = scalar_select %p32, %s33, %s34
    %p38 = pneg %p32
    %p39 = scmp.eq.s32.totalorder %s11, 11
    %p40 = por %p38, %p39
    %p41 = scmp.ne.s32.totalorder %s33, %s36
    %p42 = scmp.eq.s32.totalorder %s11, 0
    %p43 = por %p41, %p42
    %p44 = scmp.ne.s32.totalorder %s33, %s36
    %p45 = scmp.eq.s32.totalorder %s16, 11
    %p46 = por %p44, %p45
    %p47 = scmp.ne.s32.totalorder %s36, %s37
    %p48 = scmp.eq.s32.totalorder %s16, 0
    %p49 = por %p47, %p48
    %p50 = scmp.ne.s32.totalorder %s36, %s37
    %p51 = scmp.eq.s32.totalorder %s17, 11
    %p52 = por %p50, %p51
    %p54 = scmp.ne.s32.totalorder %s37, %s53
    %p55 = scmp.eq.s32.totalorder %s17, 0
    %p56 = por %p54, %p55
    %s58 = sadd.s32 %s57, 1
    %p61 = scmp.eq.s32.totalorder %s11, 11
    %p62 = scmp.ne.s32.totalorder %s57, %s59
    %p63 = scmp.eq.s32.totalorder %s11, 0
    %p64 = por %p62, %p63
    %p65 = scmp.ne.s32.totalorder %s57, %s59
    %p66 = scmp.eq.s32.totalorder %s16, 11
    %p67 = por %p65, %p66
    %p68 = scmp.ne.s32.totalorder %s59, %s60
    %p69 = scmp.eq.s32.totalorder %s16, 0
    %p70 = por %p68, %p69
    %p71 = scmp.ne.s32.totalorder %s59, %s60
    %p72 = scmp.eq.s32.totalorder %s17, 11
    %p73 = por %p71, %p72
    %p75 = scmp.ne.s32.totalorder %s60, %s74
    %p76 = scmp.eq.s32.totalorder %s17, 0
    %p77 = por %p75, %p76
    %s78 = ssub.s32 %s19, 1
    %p79 = scmp.gt.s32.totalorder %s78, 0
    %s80 = scalar_select %p79, %s78, 0
    %s81 = ssub.s32 %s26, 1
    %p82 = scmp.gt.s32.totalorder %s81, 0
    %s83 = scalar_select %p82, %s81, 0
    %s84 = ssub.s32 %s80, %s83
    %p85 = scmp.eq.s32.totalorder %s84, 0
    %s87 = sadd.s32 %s86, 1
    %s88 = scalar_select %p85, %s86, %s87
    %p91 = pneg %p85
    %p92 = scmp.eq.s32.totalorder %s11, 11
    %p93 = por %p91, %p92
    %p94 = scmp.ne.s32.totalorder %s86, %s89
    %p95 = scmp.eq.s32.totalorder %s11, 0
    %p96 = por %p94, %p95
    %p97 = scmp.ne.s32.totalorder %s86, %s89
    %p98 = scmp.eq.s32.totalorder %s16, 11
    %p99 = por %p97, %p98
    %p100 = scmp.ne.s32.totalorder %s89, %s90
    %p101 = scmp.eq.s32.totalorder %s16, 0
    %p102 = por %p100, %p101
    %p103 = scmp.ne.s32.totalorder %s89, %s90
    %p104 = scmp.eq.s32.totalorder %s17, 11
    %p105 = por %p103, %p104
    %p107 = scmp.ne.s32.totalorder %s90, %s106
    %p108 = scmp.eq.s32.totalorder %s17, 0
    %p109 = por %p107, %p108
    %s111 = sadd.s32 %s110, 1
    %p114 = scmp.eq.s32.totalorder %s11, 11
    %p115 = scmp.ne.s32.totalorder %s110, %s112
    %p116 = scmp.eq.s32.totalorder %s11, 0
    %p117 = por %p115, %p116
    %p118 = scmp.ne.s32.totalorder %s110, %s112
    %p119 = scmp.eq.s32.totalorder %s16, 11
    %p120 = por %p118, %p119
    %p121 = scmp.ne.s32.totalorder %s112, %s113
    %p122 = scmp.eq.s32.totalorder %s16, 0
    %p123 = por %p121, %p122
    %p124 = scmp.ne.s32.totalorder %s112, %s113
    %p125 = scmp.eq.s32.totalorder %s17, 11
    %p126 = por %p124, %p125
    %p128 = scmp.ne.s32.totalorder %s113, %s127
    %p129 = scmp.eq.s32.totalorder %s17, 0
    %p130 = por %p128, %p129
    %s132 = sadd.s32 %s131, 1
    %p135 = scmp.eq.s32.totalorder %s11, 11
    %p136 = scmp.ne.s32.totalorder %s131, %s133
    %p137 = scmp.eq.s32.totalorder %s11, 0
    %p138 = por %p136, %p137
    %p139 = scmp.ne.s32.totalorder %s131, %s133
    %p140 = scmp.eq.s32.totalorder %s16, 11
    %p141 = por %p139, %p140
    %p142 = scmp.ne.s32.totalorder %s133, %s134
    %p143 = scmp.eq.s32.totalorder %s16, 0
    %p144 = por %p142, %p143
    %p145 = scmp.ne.s32.totalorder %s133, %s134
    %p146 = scmp.eq.s32.totalorder %s17, 11
    %p147 = por %p145, %p146
    %p149 = scmp.ne.s32.totalorder %s134, %s148
    %p150 = scmp.eq.s32.totalorder %s17, 0
    %p151 = por %p149, %p150
    %s152 = ssub.s32 %s18, %s30
    %p153 = scmp.eq.s32.totalorder %s152, 0
    %s155 = sadd.s32 %s154, 1
    %s156 = scalar_select %p153, %s154, %s155
    %p159 = pneg %p153
    %p160 = scmp.eq.s32.totalorder %s11, 11
    %p161 = por %p159, %p160
    %p162 = scmp.ne.s32.totalorder %s154, %s157
    %p163 = scmp.eq.s32.totalorder %s11, 0
    %p164 = por %p162, %p163
    %p165 = scmp.ne.s32.totalorder %s154, %s157
    %p166 = scmp.eq.s32.totalorder %s16, 11
    %p167 = por %p165, %p166
    %p168 = scmp.ne.s32.totalorder %s157, %s158
    %p169 = scmp.eq.s32.totalorder %s16, 0
    %p170 = por %p168, %p169
    %p171 = scmp.ne.s32.totalorder %s157, %s158
    %p172 = scmp.eq.s32.totalorder %s17, 11
    %p173 = por %p171, %p172
    %p175 = scmp.ne.s32.totalorder %s158, %s174
    %p176 = scmp.eq.s32.totalorder %s17, 0
    %p177 = por %p175, %p176
    %p178 = scmp.le.s32.totalorder 1, %s11
    %p179 = scmp.lt.s32.totalorder %s11, 13
    %p180 = pnand %p178, %p179
    %p181 = pneg %p180
    // Predicated region
    $region9: #{point_pillar_forward.6} parent=5 // pred_check
      _
    $region10: #{point_pillar_forward.6} parent=5 // pred_check_branch
      %183 = sbr.rel (%p180) target = $region12
    $region11: #{point_pillar_forward.6} parent=5 // pred_region
      %s184 = ssub.s32 %s11, 1
      // Predicated region
      $region13: #{point_pillar_forward.6} parent=11 // pred_check
        %p185 = pneg %p70
      $region14: #{point_pillar_forward.6} parent=11 // pred_check_branch
        %187 = sbr.rel (%p185) target = $region16
      $region15: #{point_pillar_forward.6} parent=11 // pred_region
        _
      $region16: #{point_pillar_forward.6} parent=11 // pred_fallthru
        _
      // Predicated region
      $region17: #{point_pillar_forward.6} parent=11 // pred_check
        %p188 = pneg %p123
      $region18: #{point_pillar_forward.6} parent=11 // pred_check_branch
        %190 = sbr.rel (%p188) target = $region20
      $region19: #{point_pillar_forward.6} parent=11 // pred_region
        _
      $region20: #{point_pillar_forward.6} parent=11 // pred_fallthru
        _
      // Predicated region
      $region21: #{point_pillar_forward.6} parent=11 // pred_check
        %p191 = pneg %p144
      $region22: #{point_pillar_forward.6} parent=11 // pred_check_branch
        %193 = sbr.rel (%p191) target = $region24
      $region23: #{point_pillar_forward.6} parent=11 // pred_region
        _
      $region24: #{point_pillar_forward.6} parent=11 // pred_fallthru
        _
    $region12: #{point_pillar_forward.6} parent=5 // pred_fallthru
      _
    %p194 = scmp.lt.s32.totalorder %s11, 12
    // Predicated region
    $region25: #{point_pillar_forward.6} parent=5 // pred_check
      %p195 = pneg %p194
    $region26: #{point_pillar_forward.6} parent=5 // pred_check_branch
      %197 = sbr.rel (%p195) target = $region28
    $region27: #{point_pillar_forward.6} parent=5 // pred_region
      // Predicated region
      $region29: #{point_pillar_forward.6} parent=27 // pred_check
        %p198 = pneg %p43
      $region30: #{point_pillar_forward.6} parent=27 // pred_check_branch
        %200 = sbr.rel (%p198) target = $region32
      $region31: #{point_pillar_forward.6} parent=27 // pred_region
        %p201 = scmp.lt.s32.totalorder %s18, 1
        %s202 = scalar_select %p201, %s18, 1
        %s203 = smul.addr %s202, 40
        %s204 = smul.addr %s203, 4
        %s205 = scalar_lea.vmem %s0, %s204
      $region32: #{point_pillar_forward.6} parent=27 // pred_fallthru
        _
      // Predicated region
      $region33: #{point_pillar_forward.6} parent=27 // pred_check
        %p206 = pneg %p96
      $region34: #{point_pillar_forward.6} parent=27 // pred_check_branch
        %208 = sbr.rel (%p206) target = $region36
      $region35: #{point_pillar_forward.6} parent=27 // pred_region
        %s209 = ssub.s32 %s19, 1
        %p210 = scmp.gt.s32.totalorder %s209, 0
        %s211 = scalar_select %p210, %s209, 0
        %p212 = scmp.lt.s32.totalorder %s211, 4
        %s213 = scalar_select %p212, %s211, 4
        %s214 = smul.addr %s213, 144
        %s215 = smul.addr %s214, 4
        %s216 = scalar_lea.vmem %s2, %s215
        %s217 = ssub.s32 %s19, 1
        %p218 = scmp.gt.s32.totalorder %s217, 0
        %s219 = scalar_select %p218, %s217, 0
      $region36: #{point_pillar_forward.6} parent=27 // pred_fallthru
        _
    $region28: #{point_pillar_forward.6} parent=5 // pred_fallthru
      _
    %p220 = scmp.le.s32.totalorder 1, %s11
    %p221 = scmp.lt.s32.totalorder %s11, 13
    %p222 = pnand %p220, %p221
    %p223 = pneg %p222
    // Predicated region
    $region37: #{point_pillar_forward.6} parent=5 // pred_check
      _
    $region38: #{point_pillar_forward.6} parent=5 // pred_check_branch
      %225 = sbr.rel (%p222) target = $region40
    $region39: #{point_pillar_forward.6} parent=5 // pred_region
      %s226 = ssub.s32 %s11, 1
      %p227 = scmp.lt.s32.totalorder %s20, 1
      %s228 = scalar_select %p227, %s20, 1
      %s229 = smul.addr %s228, 40
      %s230 = smul.addr %s229, 4
      %s231 = scalar_lea.vmem %s0, %s230
      %p232 = pneg %p49
      %p233 = pneg %p46
      %p234 = pneg %p70
      %p235 = pneg %p67
      %s236 = ssub.s32 %s21, 1
      %p237 = scmp.gt.s32.totalorder %s236, 0
      %s238 = scalar_select %p237, %s236, 0
      %p239 = scmp.lt.s32.totalorder %s238, 4
      %s240 = scalar_select %p239, %s238, 4
      %s241 = smul.addr %s240, 144
      %s242 = smul.addr %s241, 4
      %s243 = scalar_lea.vmem %s2, %s242
      %p244 = pneg %p102
      %p245 = pneg %p99
      %p246 = pneg %p123
      %p247 = pneg %p120
      %p248 = pneg %p144
      %p249 = pneg %p141
      %p250 = pneg %p170
      %p251 = pneg %p167
      %p252 = scmp.lt.s32.totalorder %s20, 1
      %s253 = scalar_select %p252, %s20, 1
      %s254 = smul.addr %s253, 8
      %s255 = smul.addr %s254, 4
      %s256 = scalar_lea.vmem %s5, %s255
      %p257 = scmp.lt.s32.totalorder %s20, 1
      %s258 = scalar_select %p257, %s20, 1
      %s259 = smul.addr %s258, 40
      %s260 = smul.addr %s259, 4
      %s261 = scalar_lea.vmem %s0, %s260
      %s262 = ssub.s32 %s21, 1
      %p263 = scmp.gt.s32.totalorder %s262, 0
      %s264 = scalar_select %p263, %s262, 0
      %p265 = scmp.lt.s32.totalorder %s264, 4
      %s266 = scalar_select %p265, %s264, 4
      %s267 = smul.addr %s266, 144
      %s268 = smul.addr %s267, 4
      %s269 = scalar_lea.vmem %s2, %s268
      %s270 = ssub.s32 %s21, 1
      %p271 = scmp.gt.s32.totalorder %s270, 0
      %s272 = scalar_select %p271, %s270, 0
      %p273 = scmp.lt.s32.totalorder %s20, 1
      %s274 = scalar_select %p273, %s20, 1
      %s275 = smul.addr %s274, 8
      %s276 = smul.addr %s275, 4
      %s277 = scalar_lea.vmem %s5, %s276
      %p279 = scmp.eq.s32.totalorder %s21, 0
      // Predicated region
      $region41: #{point_pillar_forward.6} parent=39 // pred_check
        %p280 = pneg %p279
      $region42: #{point_pillar_forward.6} parent=39 // pred_check_branch
        %282 = sbr.rel (%p280) target = $region44
      $region43: #{point_pillar_forward.6} parent=39 // pred_region
        %283 = vst [vmem:[#allocation2] sm:$0xf] 0
        %284 = vst [vmem:[#allocation2 + $0x4] sm:$0x1] 0
        %s285 = scalar_lea.vmem [#allocation2], 72
        %286 = vst [vmem:[%s285] sm:$0xf] 0
        %287 = vst [vmem:[%s285 + $0x4] sm:$0x1] 0
        %vm288 = vcmask 1040384
        %vm289 = vsmask.f32 256
        %vm290 = vmand %vm288, %vm289
        %v291 = vld [vmem:[#allocation2] sm:$0x1]
        %v292 = vsel %vm290, 0, %v291
        %293 = vst [vmem:[#allocation2] sm:$0x1] %v292
        %v294 = vld [vmem:[#allocation2 + $0x8] sm:$0x1]
        %v295 = vsel %vm290, 0, %v294
        %296 = vst [vmem:[#allocation2 + $0x8] sm:$0x1] %v295
        %v297 = vld [vmem:[#allocation2 + $0x10] sm:$0x1]
        %v298 = vsel %vm290, 0, %v297
        %299 = vst [vmem:[#allocation2 + $0x10] sm:$0x1] %v298
        %v300 = vld [vmem:[#allocation2 + $0x18] sm:$0x1]
        %v301 = vsel %vm290, 0, %v300
        %302 = vst [vmem:[#allocation2 + $0x18] sm:$0x1] %v301
        %v303 = vld [vmem:[#allocation2 + $0x20] sm:$0x1]
        %v304 = vsel %vm290, 0, %v303
        %305 = vst [vmem:[#allocation2 + $0x20] sm:$0x1] %v304
        %v306 = vld [vmem:[#allocation2 + $0x28] sm:$0x1]
        %v307 = vsel %vm290, 0, %v306
        %308 = vst [vmem:[#allocation2 + $0x28] sm:$0x1] %v307
        %v309 = vld [vmem:[#allocation2 + $0x30] sm:$0x1]
        %v310 = vsel %vm290, 0, %v309
        %311 = vst [vmem:[#allocation2 + $0x30] sm:$0x1] %v310
        %v312 = vld [vmem:[#allocation2 + $0x38] sm:$0x1]
        %v313 = vsel %vm290, 0, %v312
        %314 = vst [vmem:[#allocation2 + $0x38] sm:$0x1] %v313
        %v315 = vld [vmem:[#allocation2 + $0x40] sm:$0x1]
        %v316 = vsel %vm290, 0, %v315
        %317 = vst [vmem:[#allocation2 + $0x40] sm:$0x1] %v316
        %v318 = vld [vmem:[#allocation2 + $0x48] sm:$0x1]
        %v319 = vsel %vm290, 0, %v318
        %320 = vst [vmem:[#allocation2 + $0x48] sm:$0x1] %v319
        %vm321 = vsmask.f32 7938
        %vm322 = vmand %vm288, %vm321
        %v323 = vld [vmem:[#allocation2 + $0x4] sm:$0x1]
        %v324 = vsel %vm322, 0, %v323
        %325 = vst [vmem:[#allocation2 + $0x4] sm:$0x1] %v324
        %v326 = vld [vmem:[#allocation2 + $0xc] sm:$0x1]
        %v327 = vsel %vm322, 0, %v326
        %328 = vst [vmem:[#allocation2 + $0xc] sm:$0x1] %v327
        %v329 = vld [vmem:[#allocation2 + $0x14] sm:$0x1]
        %v330 = vsel %vm322, 0, %v329
        %331 = vst [vmem:[#allocation2 + $0x14] sm:$0x1] %v330
        %v332 = vld [vmem:[#allocation2 + $0x1c] sm:$0x1]
        %v333 = vsel %vm322, 0, %v332
        %334 = vst [vmem:[#allocation2 + $0x1c] sm:$0x1] %v333
        %v335 = vld [vmem:[#allocation2 + $0x24] sm:$0x1]
        %v336 = vsel %vm322, 0, %v335
        %337 = vst [vmem:[#allocation2 + $0x24] sm:$0x1] %v336
        %v338 = vld [vmem:[#allocation2 + $0x2c] sm:$0x1]
        %v339 = vsel %vm322, 0, %v338
        %340 = vst [vmem:[#allocation2 + $0x2c] sm:$0x1] %v339
        %v341 = vld [vmem:[#allocation2 + $0x34] sm:$0x1]
        %v342 = vsel %vm322, 0, %v341
        %343 = vst [vmem:[#allocation2 + $0x34] sm:$0x1] %v342
        %v344 = vld [vmem:[#allocation2 + $0x3c] sm:$0x1]
        %v345 = vsel %vm322, 0, %v344
        %346 = vst [vmem:[#allocation2 + $0x3c] sm:$0x1] %v345
        %v347 = vld [vmem:[#allocation2 + $0x44] sm:$0x1]
        %v348 = vsel %vm322, 0, %v347
        %349 = vst [vmem:[#allocation2 + $0x44] sm:$0x1] %v348
        %v350 = vld [vmem:[#allocation2 + $0x4c] sm:$0x1]
        %v351 = vsel %vm322, 0, %v350
        %352 = vst [vmem:[#allocation2 + $0x4c] sm:$0x1] %v351
        %v353 = vld [vmem:[%s261] sm:$0xff]
        %v354 = vld [vmem:[%s261 + $0x8] sm:$0xff]
        %v355 = vld [vmem:[%s261 + $0x10] sm:$0xf]
        %v356 = vld [vmem:[%s261 + $0x14] sm:$0xff]
        %v357 = vld [vmem:[%s261 + $0x1c] sm:$0xff]
        %v358 = vld [vmem:[%s261 + $0x24] sm:$0xf]
        %v359 = vld [vmem:[%s261 + $0x28] sm:$0xff]
        %v360 = vld [vmem:[%s261 + $0x30] sm:$0xff]
        %v361 = vld [vmem:[%s261 + $0x38] sm:$0xf]
        %v362 = vld [vmem:[%s261 + $0x3c] sm:$0xff]
        %v363 = vld [vmem:[%s261 + $0x44] sm:$0xff]
        %v364 = vld [vmem:[%s261 + $0x4c] sm:$0xf]
        %v365 = vld [vmem:[%s261 + $0x50] sm:$0xff]
        %v366 = vld [vmem:[%s261 + $0x58] sm:$0xff]
        %v367 = vld [vmem:[%s261 + $0x60] sm:$0xf]
        %v368 = vld [vmem:[%s261 + $0x64] sm:$0xff]
        %v369 = vld [vmem:[%s261 + $0x6c] sm:$0xff]
        %v370 = vld [vmem:[%s261 + $0x74] sm:$0xf]
        %v371 = vld [vmem:[%s261 + $0x78] sm:$0xff]
        %v372 = vld [vmem:[%s261 + $0x80] sm:$0xff]
        %v373 = vld [vmem:[%s261 + $0x88] sm:$0xf]
        %v374 = vld [vmem:[%s261 + $0x8c] sm:$0xff]
        %v375 = vld [vmem:[%s261 + $0x94] sm:$0xff]
        %v376 = vld [vmem:[%s261 + $0x9c] sm:$0xf]
        %v377 = vld [vmem:[%s1] sm:$0xf]
        %v378 = vld [vmem:[%s1 + $0x4] sm:$0xf]
        %v379 = vld [vmem:[%s1 + $0x8] sm:$0xf]
        %v380 = vld [vmem:[%s1 + $0xc] sm:$0xf]
        %v381 = vld [vmem:[%s1 + $0x10] sm:$0xf]
        %v382 = vld [vmem:[%s1 + $0x14] sm:$0xf]
        %v383 = vld [vmem:[%s1 + $0x18] sm:$0xf]
        %v384 = vld [vmem:[%s1 + $0x1c] sm:$0xf]
        %v385 = vld [vmem:[%s1 + $0x20] sm:$0xf]
        %v386 = vld [vmem:[%s1 + $0x24] sm:$0xf]
        %v387 = vld [vmem:[%s1 + $0x28] sm:$0xf]
        %v388 = vld [vmem:[%s1 + $0x2c] sm:$0xf]
        %v389 = vld [vmem:[%s1 + $0x30] sm:$0xf]
        %v390 = vld [vmem:[%s1 + $0x34] sm:$0xf]
        %v391 = vld [vmem:[%s1 + $0x38] sm:$0xf]
        %v392 = vld [vmem:[%s1 + $0x3c] sm:$0xf]
        %v393 = vld [vmem:[%s1 + $0x40] sm:$0xf]
        %v394 = vld [vmem:[%s1 + $0x44] sm:$0xf]
        %v395 = vld [vmem:[%s1 + $0x48] sm:$0xf]
        %v396 = vld [vmem:[%s1 + $0x4c] sm:$0xf]
        %v397 = vld [vmem:[%s1 + $0x50] sm:$0xf]
        %v398 = vld [vmem:[%s1 + $0x54] sm:$0xf]
        %v399 = vld [vmem:[%s1 + $0x58] sm:$0xf]
        %v400 = vld [vmem:[%s1 + $0x5c] sm:$0xf]
        %v401 = vld [vmem:[%s1 + $0x60] sm:$0xf]
        %v402 = vld [vmem:[%s1 + $0x64] sm:$0xf]
        %v403 = vld [vmem:[%s1 + $0x68] sm:$0xf]
        %v404 = vld [vmem:[%s1 + $0x6c] sm:$0xf]
        %v405 = vld [vmem:[%s1 + $0x70] sm:$0xf]
        %v406 = vld [vmem:[%s1 + $0x74] sm:$0xf]
        %v407 = vld [vmem:[%s1 + $0x78] sm:$0xf]
        %v408 = vld [vmem:[%s1 + $0x7c] sm:$0xf]
        %v409 = vld [vmem:[%s1 + $0x80] sm:$0xf]
        %v410 = vld [vmem:[%s1 + $0x84] sm:$0xf]
        %v411 = vld [vmem:[%s1 + $0x88] sm:$0xf]
        %v412 = vld [vmem:[%s1 + $0x8c] sm:$0xf]
        %v413 = vld [vmem:[%s1 + $0x90] sm:$0xf]
        %v414 = vld [vmem:[%s1 + $0x94] sm:$0xf]
        %v415 = vld [vmem:[%s1 + $0x98] sm:$0xf]
        %v416 = vld [vmem:[%s1 + $0x9c] sm:$0xf]
        %v417 = vld [vmem:[%s1 + $0xa0] sm:$0xf]
        %v418 = vld [vmem:[%s1 + $0xa4] sm:$0xf]
        %v419 = vld [vmem:[%s1 + $0xa8] sm:$0xf]
        %v420 = vld [vmem:[%s1 + $0xac] sm:$0xf]
        %v421 = vld [vmem:[%s1 + $0xb0] sm:$0xf]
        %v422 = vld [vmem:[%s1 + $0xb4] sm:$0xf]
        %v423 = vld [vmem:[%s1 + $0xb8] sm:$0xf]
        %v424 = vld [vmem:[%s1 + $0xbc] sm:$0xf]
        %v425 = vld [vmem:[%s1 + $0xc0] sm:$0xf]
        %v426 = vld [vmem:[%s1 + $0xc4] sm:$0xf]
        %v427 = vld [vmem:[%s1 + $0xc8] sm:$0xf]
        %v428 = vld [vmem:[%s1 + $0xcc] sm:$0xf]
        %v429 = vld [vmem:[%s1 + $0xd0] sm:$0xf]
        %v430 = vld [vmem:[%s1 + $0xd4] sm:$0xf]
        %v431 = vld [vmem:[%s1 + $0xd8] sm:$0xf]
        %v432 = vld [vmem:[%s1 + $0xdc] sm:$0xf]
        %v433 = vld [vmem:[%s1 + $0xe0] sm:$0xf]
        %v434 = vld [vmem:[%s1 + $0xe4] sm:$0xf]
        %v435 = vld [vmem:[%s1 + $0xe8] sm:$0xf]
        %v436 = vld [vmem:[%s1 + $0xec] sm:$0xf]
        %v437 = vld [vmem:[%s1 + $0xf0] sm:$0xf]
        %v438 = vld [vmem:[%s1 + $0xf4] sm:$0xf]
        %v439 = vld [vmem:[%s1 + $0xf8] sm:$0xf]
        %v440 = vld [vmem:[%s1 + $0xfc] sm:$0xf]
        %v441 = vld [vmem:[%s1 + $0x100] sm:$0xf]
        %v442 = vld [vmem:[%s1 + $0x104] sm:$0xf]
        %v443 = vld [vmem:[%s1 + $0x108] sm:$0xf]
        %v444 = vld [vmem:[%s1 + $0x10c] sm:$0xf]
        %v445 = vld [vmem:[%s1 + $0x110] sm:$0xf]
        %v446 = vld [vmem:[%s1 + $0x114] sm:$0xf]
        %v447 = vld [vmem:[%s1 + $0x118] sm:$0xf]
        %v448 = vld [vmem:[%s1 + $0x11c] sm:$0xf]
        %v473 = vunpack.c.l.b16 %v353
        %v474 = vunpack.c.h.b16 %v353
        %v475 = vunpack.c.l.b16 %v354
        %v476 = vunpack.c.h.b16 %v354
        %v477 = vunpack.c.l.b16 %v355
        %v478 = vunpack.c.l.b16 %v356
        %v479 = vunpack.c.h.b16 %v356
        %v480 = vunpack.c.l.b16 %v357
        %v481 = vunpack.c.h.b16 %v357
        %v482 = vunpack.c.l.b16 %v358
        %v483 = vunpack.c.l.b16 %v359
        %v484 = vunpack.c.h.b16 %v359
        %v485 = vunpack.c.l.b16 %v360
        %v486 = vunpack.c.h.b16 %v360
        %v487 = vunpack.c.l.b16 %v361
        %v488 = vunpack.c.l.b16 %v362
        %v489 = vunpack.c.h.b16 %v362
        %v490 = vunpack.c.l.b16 %v363
        %v491 = vunpack.c.h.b16 %v363
        %v492 = vunpack.c.l.b16 %v364
        %v493 = vunpack.c.l.b16 %v365
        %v494 = vunpack.c.h.b16 %v365
        %v495 = vunpack.c.l.b16 %v366
        %v496 = vunpack.c.h.b16 %v366
        %v497 = vunpack.c.l.b16 %v367
        %v498 = vunpack.c.l.b16 %v368
        %v499 = vunpack.c.h.b16 %v368
        %v500 = vunpack.c.l.b16 %v369
        %v501 = vunpack.c.h.b16 %v369
        %v502 = vunpack.c.l.b16 %v370
        %v503 = vunpack.c.l.b16 %v371
        %v504 = vunpack.c.h.b16 %v371
        %v505 = vunpack.c.l.b16 %v372
        %v506 = vunpack.c.h.b16 %v372
        %v507 = vunpack.c.l.b16 %v373
        %v508 = vunpack.c.l.b16 %v374
        %v509 = vunpack.c.h.b16 %v374
        %v510 = vunpack.c.l.b16 %v375
        %v511 = vunpack.c.h.b16 %v375
        %v512 = vunpack.c.l.b16 %v376
        %v513 = vpack.c.b16 %v478, %v473
        %v514 = vpack.c.b16 %v479, %v474
        %v515 = vpack.c.b16 %v480, %v475
        %v516 = vpack.c.b16 %v481, %v476
        %v517 = vpack.c.b16 %v482, %v477
        %v518 = vpack.c.b16 %v488, %v483
        %v519 = vpack.c.b16 %v489, %v484
        %v520 = vpack.c.b16 %v490, %v485
        %v521 = vpack.c.b16 %v491, %v486
        %v522 = vpack.c.b16 %v492, %v487
        %v523 = vpack.c.b16 %v498, %v493
        %v524 = vpack.c.b16 %v499, %v494
        %v525 = vpack.c.b16 %v500, %v495
        %v526 = vpack.c.b16 %v501, %v496
        %v527 = vpack.c.b16 %v502, %v497
        %v528 = vpack.c.b16 %v508, %v503
        %v529 = vpack.c.b16 %v509, %v504
        %v530 = vpack.c.b16 %v510, %v505
        %v531 = vpack.c.b16 %v511, %v506
        %v532 = vpack.c.b16 %v512, %v507
        %v621 = vunpack.c.l.b16 %v377
        %v622 = vunpack.c.l.b16 %v378
        %v623 = vunpack.c.l.b16 %v379
        %v624 = vunpack.c.l.b16 %v380
        %v625 = vunpack.c.l.b16 %v381
        %v626 = vunpack.c.l.b16 %v382
        %v627 = vunpack.c.l.b16 %v383
        %v628 = vunpack.c.l.b16 %v384
        %v629 = vunpack.c.l.b16 %v385
        %v630 = vunpack.c.l.b16 %v386
        %v631 = vunpack.c.l.b16 %v387
        %v632 = vunpack.c.l.b16 %v388
        %v633 = vunpack.c.l.b16 %v389
        %v634 = vunpack.c.l.b16 %v390
        %v635 = vunpack.c.l.b16 %v391
        %v636 = vunpack.c.l.b16 %v392
        %v637 = vunpack.c.l.b16 %v393
        %v638 = vunpack.c.l.b16 %v394
        %v639 = vunpack.c.l.b16 %v395
        %v640 = vunpack.c.l.b16 %v396
        %v641 = vunpack.c.l.b16 %v397
        %v642 = vunpack.c.l.b16 %v398
        %v643 = vunpack.c.l.b16 %v399
        %v644 = vunpack.c.l.b16 %v400
        %v645 = vunpack.c.l.b16 %v401
        %v646 = vunpack.c.l.b16 %v402
        %v647 = vunpack.c.l.b16 %v403
        %v648 = vunpack.c.l.b16 %v404
        %v649 = vunpack.c.l.b16 %v405
        %v650 = vunpack.c.l.b16 %v406
        %v651 = vunpack.c.l.b16 %v407
        %v652 = vunpack.c.l.b16 %v408
        %v653 = vunpack.c.l.b16 %v409
        %v654 = vunpack.c.l.b16 %v410
        %v655 = vunpack.c.l.b16 %v411
        %v656 = vunpack.c.l.b16 %v412
        %v657 = vunpack.c.l.b16 %v413
        %v658 = vunpack.c.l.b16 %v414
        %v659 = vunpack.c.l.b16 %v415
        %v660 = vunpack.c.l.b16 %v416
        %v661 = vunpack.c.l.b16 %v417
        %v662 = vunpack.c.l.b16 %v418
        %v663 = vunpack.c.l.b16 %v419
        %v664 = vunpack.c.l.b16 %v420
        %v665 = vunpack.c.l.b16 %v421
        %v666 = vunpack.c.l.b16 %v422
        %v667 = vunpack.c.l.b16 %v423
        %v668 = vunpack.c.l.b16 %v424
        %v669 = vunpack.c.l.b16 %v425
        %v670 = vunpack.c.l.b16 %v426
        %v671 = vunpack.c.l.b16 %v427
        %v672 = vunpack.c.l.b16 %v428
        %v673 = vunpack.c.l.b16 %v429
        %v674 = vunpack.c.l.b16 %v430
        %v675 = vunpack.c.l.b16 %v431
        %v676 = vunpack.c.l.b16 %v432
        %v677 = vunpack.c.l.b16 %v433
        %v678 = vunpack.c.l.b16 %v434
        %v679 = vunpack.c.l.b16 %v435
        %v680 = vunpack.c.l.b16 %v436
        %v681 = vunpack.c.l.b16 %v437
        %v682 = vunpack.c.l.b16 %v438
        %v683 = vunpack.c.l.b16 %v439
        %v684 = vunpack.c.l.b16 %v440
        %v685 = vunpack.c.l.b16 %v441
        %v686 = vunpack.c.l.b16 %v442
        %v687 = vunpack.c.l.b16 %v443
        %v688 = vunpack.c.l.b16 %v444
        %v689 = vunpack.c.l.b16 %v445
        %v690 = vunpack.c.l.b16 %v446
        %v691 = vunpack.c.l.b16 %v447
        %v692 = vunpack.c.l.b16 %v448
        %v693 = vpack.c.b16 %v622, %v621
        %v694 = vpack.c.b16 %v624, %v623
        %v695 = vpack.c.b16 %v626, %v625
        %v696 = vpack.c.b16 %v628, %v627
        %v697 = vpack.c.b16 %v630, %v629
        %v698 = vpack.c.b16 %v632, %v631
        %v699 = vpack.c.b16 %v634, %v633
        %v700 = vpack.c.b16 %v636, %v635
        %v701 = vpack.c.b16 %v638, %v637
        %v702 = vpack.c.b16 %v640, %v639
        %v703 = vpack.c.b16 %v642, %v641
        %v704 = vpack.c.b16 %v644, %v643
        %v705 = vpack.c.b16 %v646, %v645
        %v706 = vpack.c.b16 %v648, %v647
        %v707 = vpack.c.b16 %v650, %v649
        %v708 = vpack.c.b16 %v652, %v651
        %v709 = vpack.c.b16 %v654, %v653
        %v710 = vpack.c.b16 %v656, %v655
        %v711 = vpack.c.b16 %v658, %v657
        %v712 = vpack.c.b16 %v660, %v659
        %v713 = vpack.c.b16 %v662, %v661
        %v714 = vpack.c.b16 %v664, %v663
        %v715 = vpack.c.b16 %v666, %v665
        %v716 = vpack.c.b16 %v668, %v667
        %v717 = vpack.c.b16 %v670, %v669
        %v718 = vpack.c.b16 %v672, %v671
        %v719 = vpack.c.b16 %v674, %v673
        %v720 = vpack.c.b16 %v676, %v675
        %v721 = vpack.c.b16 %v678, %v677
        %v722 = vpack.c.b16 %v680, %v679
        %v723 = vpack.c.b16 %v682, %v681
        %v724 = vpack.c.b16 %v684, %v683
        %v725 = vpack.c.b16 %v686, %v685
        %v726 = vpack.c.b16 %v688, %v687
        %v727 = vpack.c.b16 %v690, %v689
        %v728 = vpack.c.b16 %v692, %v691
        %vm765 = vcmask 523264
        %v767 = vsel %vm765, %v517, 0
        %v770 = vsel %vm765, %v522, 0
        %v773 = vsel %vm765, %v527, 0
        %v776 = vsel %vm765, %v532, 0
        %778 = vmatprep.subr.bf16.mxu0 0
        %779 = vmatpush1.bf16.msra.mxu0 %v693
        %780 = vmatprep.subr.bf16.mxu0 0
        %781 = vmatpush1.bf16.msra.mxu0 %v694
        %782 = vmatprep.subr.bf16.mxu0 0
        %783 = vmatpush1.bf16.msra.mxu0 %v695
        %784 = vmatprep.subr.bf16.mxu0 0
        %785 = vmatpush1.bf16.msra.mxu0 %v696
        %786 = vmatprep.subr.bf16.mxu0 0
        %787 = vmatpush1.bf16.msra.mxu0 %v697
        %788 = vmatprep.subr.bf16.mxu0 0
        %789 = vmatpush1.bf16.msra.mxu0 %v698
        %790 = vmatprep.subr.bf16.mxu0 0
        %791 = vmatpush1.bf16.msra.mxu0 %v699
        %792 = vmatprep.subr.bf16.mxu0 0
        %793 = vmatpush1.bf16.msra.mxu0 %v700
        %794 = vmatprep.subr.bf16.mxu0 0
        %795 = vmatpush1.bf16.msra.mxu0 %v701
        %796 = vmatprep.subr.bf16.mxu0 0
        %797 = vmatpush1.bf16.msra.mxu0 %v702
        %798 = vmatprep.subr.bf16.mxu0 0
        %799 = vmatpush1.bf16.msra.mxu0 %v703
        %800 = vmatprep.subr.bf16.mxu0 0
        %801 = vmatpush1.bf16.msra.mxu0 %v704
        %802 = vmatprep.subr.bf16.mxu0 0
        %803 = vmatpush1.bf16.msra.mxu0 %v705
        %804 = vmatprep.subr.bf16.mxu0 0
        %805 = vmatpush1.bf16.msra.mxu0 %v706
        %806 = vmatprep.subr.bf16.mxu0 0
        %807 = vmatpush1.bf16.msra.mxu0 %v707
        %808 = vmatprep.subr.bf16.mxu0 0
        %809 = vmatpush1.bf16.msra.mxu0 %v708
        %810 = vmatprep.mubr.bf16.mxu0 %v514
        %811 = vmatmul.mubr.bf16.gmra.mrb[0].mxu0 %v513
        %v812 = vpop.f32.mrb[0].mxu0
        %v813 = vadd.f32 0.0, %v812
        %v814 = vpop.f32.mrb[0].mxu0
        %v815 = vpop.f32.mrb[0].mxu0
        %v816 = vadd.f32 0.0, %v815
        %v817 = vpop.f32.mrb[0].mxu0
        %818 = vmatprep.mubr.bf16.mxu0 %v519
        %819 = vmatmul.mubr.bf16.gmra.mrb[0].mxu0 %v518
        %v820 = vpop.f32.mrb[0].mxu0
        %v821 = vadd.f32 0.0, %v820
        %v822 = vpop.f32.mrb[0].mxu0
        %v823 = vpop.f32.mrb[0].mxu0
        %v824 = vadd.f32 0.0, %v823
        %v825 = vpop.f32.mrb[0].mxu0
        %826 = vmatprep.mubr.bf16.mxu0 %v524
        %827 = vmatmul.mubr.bf16.gmra.mrb[0].mxu0 %v523
        %v828 = vpop.f32.mrb[0].mxu0
        %v829 = vadd.f32 0.0, %v828
        %v830 = vpop.f32.mrb[0].mxu0
        %v831 = vpop.f32.mrb[0].mxu0
        %v832 = vadd.f32 0.0, %v831
        %v833 = vpop.f32.mrb[0].mxu0
        %834 = vmatprep.mubr.bf16.mxu0 %v529
        %835 = vmatmul.mubr.bf16.gmra.mrb[0].mxu0 %v528
        %v836 = vpop.f32.mrb[0].mxu0
        %v837 = vadd.f32 0.0, %v836
        %v838 = vpop.f32.mrb[0].mxu0
        %v839 = vpop.f32.mrb[0].mxu0
        %v840 = vadd.f32 0.0, %v839
        %v841 = vpop.f32.mrb[0].mxu0
        %842 = vdwg.mxu0
        %843 = vmatprep.subr.bf16.mxu0 0
        %844 = vmatpush1.bf16.msra.mxu0 %v709
        %845 = vmatprep.subr.bf16.mxu0 0
        %846 = vmatpush1.bf16.msra.mxu0 %v710
        %847 = vmatprep.subr.bf16.mxu0 0
        %848 = vmatpush1.bf16.msra.mxu0 %v711
        %849 = vmatprep.subr.bf16.mxu0 0
        %850 = vmatpush1.bf16.msra.mxu0 %v712
        %851 = vmatprep.subr.bf16.mxu0 0
        %852 = vmatpush1.bf16.msra.mxu0 %v713
        %853 = vmatprep.subr.bf16.mxu0 0
        %854 = vmatpush1.bf16.msra.mxu0 %v714
        %855 = vmatprep.subr.bf16.mxu0 0
        %856 = vmatpush1.bf16.msra.mxu0 %v715
        %857 = vmatprep.subr.bf16.mxu0 0
        %858 = vmatpush1.bf16.msra.mxu0 %v716
        %859 = vmatprep.subr.bf16.mxu0 0
        %860 = vmatpush1.bf16.msra.mxu0 %v717
        %861 = vmatprep.subr.bf16.mxu0 0
        %862 = vmatpush1.bf16.msra.mxu0 %v718
        %863 = vmatprep.subr.bf16.mxu0 0
        %864 = vmatpush1.bf16.msra.mxu0 %v719
        %865 = vmatprep.subr.bf16.mxu0 0
        %866 = vmatpush1.bf16.msra.mxu0 %v720
        %867 = vmatprep.subr.bf16.mxu0 0
        %868 = vmatpush1.bf16.msra.mxu0 %v721
        %869 = vmatprep.subr.bf16.mxu0 0
        %870 = vmatpush1.bf16.msra.mxu0 %v722
        %871 = vmatprep.subr.bf16.mxu0 0
        %872 = vmatpush1.bf16.msra.mxu0 %v723
        %873 = vmatprep.subr.bf16.mxu0 0
        %874 = vmatpush1.bf16.msra.mxu0 %v724
        %875 = vmatprep.mubr.bf16.mxu0 %v516
        %876 = vmatmul.mubr.bf16.gmra.mrb[0].mxu0 %v515
        %v877 = vpop.f32.mrb[0].mxu0
        %v878 = vadd.f32 %v813, %v877
        %v879 = vpop.f32.mrb[0].mxu0
        %v880 = vpop.f32.mrb[0].mxu0
        %v881 = vadd.f32 %v816, %v880
        %v882 = vpop.f32.mrb[0].mxu0
        %883 = vmatprep.mubr.bf16.mxu0 %v521
        %884 = vmatmul.mubr.bf16.gmra.mrb[0].mxu0 %v520
        %v885 = vpop.f32.mrb[0].mxu0
        %v886 = vadd.f32 %v821, %v885
        %v887 = vpop.f32.mrb[0].mxu0
        %v888 = vpop.f32.mrb[0].mxu0
        %v889 = vadd.f32 %v824, %v888
        %v890 = vpop.f32.mrb[0].mxu0
        %891 = vmatprep.mubr.bf16.mxu0 %v526
        %892 = vmatmul.mubr.bf16.gmra.mrb[0].mxu0 %v525
        %v893 = vpop.f32.mrb[0].mxu0
        %v894 = vadd.f32 %v829, %v893
        %v895 = vpop.f32.mrb[0].mxu0
        %v896 = vpop.f32.mrb[0].mxu0
        %v897 = vadd.f32 %v832, %v896
        %v898 = vpop.f32.mrb[0].mxu0
        %899 = vmatprep.mubr.bf16.mxu0 %v531
        %900 = vmatmul.mubr.bf16.gmra.mrb[0].mxu0 %v530
        %v901 = vpop.f32.mrb[0].mxu0
        %v902 = vadd.f32 %v837, %v901
        %v903 = vpop.f32.mrb[0].mxu0
        %v904 = vpop.f32.mrb[0].mxu0
        %v905 = vadd.f32 %v840, %v904
        %v906 = vpop.f32.mrb[0].mxu0
        %907 = vdwg.mxu0
        %908 = vmatprep.subr.bf16.mxu0 0
        %909 = vmatpush1.bf16.msra.mxu0 %v725
        %910 = vmatprep.subr.bf16.mxu0 0
        %911 = vmatpush1.bf16.msra.mxu0 %v726
        %912 = vmatprep.subr.bf16.mxu0 0
        %913 = vmatpush1.bf16.msra.mxu0 %v727
        %914 = vmatprep.subr.bf16.mxu0 0
        %915 = vmatpush1.bf16.msra.mxu0 %v728
        %916 = vmatprep.subr.bf16.mxu0 0
        %917 = vmatpush1.bf16.msra.mxu0 0
        %918 = vmatprep.subr.bf16.mxu0 0
        %919 = vmatpush1.bf16.msra.mxu0 0
        %920 = vmatprep.subr.bf16.mxu0 0
        %921 = vmatpush1.bf16.msra.mxu0 0
        %922 = vmatprep.subr.bf16.mxu0 0
        %923 = vmatpush1.bf16.msra.mxu0 0
        %924 = vmatprep.subr.bf16.mxu0 0
        %925 = vmatpush1.bf16.msra.mxu0 0
        %926 = vmatprep.subr.bf16.mxu0 0
        %927 = vmatpush1.bf16.msra.mxu0 0
        %928 = vmatprep.subr.bf16.mxu0 0
        %929 = vmatpush1.bf16.msra.mxu0 0
        %930 = vmatprep.subr.bf16.mxu0 0
        %931 = vmatpush1.bf16.msra.mxu0 0
        %932 = vmatprep.subr.bf16.mxu0 0
        %933 = vmatpush1.bf16.msra.mxu0 0
        %934 = vmatprep.subr.bf16.mxu0 0
        %935 = vmatpush1.bf16.msra.mxu0 0
        %936 = vmatprep.subr.bf16.mxu0 0
        %937 = vmatpush1.bf16.msra.mxu0 0
        %938 = vmatprep.subr.bf16.mxu0 0
        %939 = vmatpush1.bf16.msra.mxu0 0
        %940 = vmatprep.mubr.bf16.mxu0 0
        %941 = vmatmul.mubr.bf16.gmra.mrb[0].mxu0 %v767
        %v942 = vpop.f32.mrb[0].mxu0
        %v943 = vadd.f32 %v878, %v942
        %v944 = vpop.f32.mrb[0].mxu0
        %v945 = vpop.f32.mrb[0].mxu0
        %v946 = vadd.f32 %v881, %v945
        %v947 = vpop.f32.mrb[0].mxu0
        %948 = vmatprep.mubr.bf16.mxu0 0
        %949 = vmatmul.mubr.bf16.gmra.mrb[0].mxu0 %v770
        %v950 = vpop.f32.mrb[0].mxu0
        %v951 = vadd.f32 %v886, %v950
        %v952 = vpop.f32.mrb[0].mxu0
        %v953 = vpop.f32.mrb[0].mxu0
        %v954 = vadd.f32 %v889, %v953
        %v955 = vpop.f32.mrb[0].mxu0
        %956 = vmatprep.mubr.bf16.mxu0 0
        %957 = vmatmul.mubr.bf16.gmra.mrb[0].mxu0 %v773
        %v958 = vpop.f32.mrb[0].mxu0
        %v959 = vadd.f32 %v894, %v958
        %v960 = vpop.f32.mrb[0].mxu0
        %v961 = vpop.f32.mrb[0].mxu0
        %v962 = vadd.f32 %v897, %v961
        %v963 = vpop.f32.mrb[0].mxu0
        %964 = vmatprep.mubr.bf16.mxu0 0
        %965 = vmatmul.mubr.bf16.gmra.mrb[0].mxu0 %v776
        %v966 = vpop.f32.mrb[0].mxu0
        %v967 = vadd.f32 %v902, %v966
        %v968 = vpop.f32.mrb[0].mxu0
        %v969 = vpop.f32.mrb[0].mxu0
        %v970 = vadd.f32 %v905, %v969
        %v971 = vpop.f32.mrb[0].mxu0
        %972 = vdwg.mxu0
        %v973 = vld [vmem:[%s3] sm:$0x1]
        %v974 = vlaneseq
        %v975 = vshrl.u32 %v974, 7
        %v976 = vsub.s32 0, %v975
        %v977 = vrot.slane %v973, %v976
        %v978 = vmul.f32 %v943, %v977
        %v979 = vmul.f32 %v946, %v977
        %v980 = vmul.f32 %v951, %v977
        %v981 = vmul.f32 %v954, %v977
        %v982 = vmul.f32 %v959, %v977
        %v983 = vmul.f32 %v962, %v977
        %v984 = vmul.f32 %v967, %v977
        %v985 = vmul.f32 %v970, %v977
        %v986 = vld [vmem:[%s4] sm:$0x1]
        %v987 = vlaneseq
        %v988 = vshrl.u32 %v987, 7
        %v989 = vsub.s32 0, %v988
        %v990 = vrot.slane %v986, %v989
        %v991 = vadd.f32 %v978, %v990
        %v992 = vadd.f32 %v979, %v990
        %v993 = vadd.f32 %v980, %v990
        %v994 = vadd.f32 %v981, %v990
        %v995 = vadd.f32 %v982, %v990
        %v996 = vadd.f32 %v983, %v990
        %v997 = vadd.f32 %v984, %v990
        %v998 = vadd.f32 %v985, %v990
        %v999 = vmax.f32 %v991, 0.0
        %v1000 = vmax.f32 %v992, 0.0
        %v1001 = vmax.f32 %v993, 0.0
        %v1002 = vmax.f32 %v994, 0.0
        %v1003 = vmax.f32 %v995, 0.0
        %v1004 = vmax.f32 %v996, 0.0
        %v1005 = vmax.f32 %v997, 0.0
        %v1006 = vmax.f32 %v998, 0.0
        %v1007 = vpack.c.bf16 %v999, %v999
        %v1008 = vpack.c.bf16 %v1000, %v1000
        %v1009 = vpack.c.bf16 %v1001, %v1001
        %v1010 = vpack.c.bf16 %v1002, %v1002
        %v1011 = vpack.c.bf16 %v1003, %v1003
        %v1012 = vpack.c.bf16 %v1004, %v1004
        %v1013 = vpack.c.bf16 %v1005, %v1005
        %v1014 = vpack.c.bf16 %v1006, %v1006
        %v1023 = vunpack.c.l.b16 %v1007
        %v1024 = vunpack.c.l.b16 %v1008
        %v1025 = vunpack.c.l.b16 %v1009
        %v1026 = vunpack.c.l.b16 %v1010
        %v1027 = vunpack.c.l.b16 %v1011
        %v1028 = vunpack.c.l.b16 %v1012
        %v1029 = vunpack.c.l.b16 %v1013
        %v1030 = vunpack.c.l.b16 %v1014
        %v1031 = vpack.c.b16 %v1023, %v1023
        %v1032 = vpack.c.b16 %v1024, %v1024
        %v1033 = vpack.c.b16 %v1025, %v1025
        %v1034 = vpack.c.b16 %v1026, %v1026
        %v1035 = vpack.c.b16 %v1027, %v1027
        %v1036 = vpack.c.b16 %v1028, %v1028
        %v1037 = vpack.c.b16 %v1029, %v1029
        %v1038 = vpack.c.b16 %v1030, %v1030
        %v1040 = vshrl.u32 %v1031, 16
        %v1042 = vrot.slane %v1040, 7
        %v1043 = vshll.u32 %v1031, 16
        %v1045 = vor.u32 %v1042, %v1043
        %v1046 = vrot.slane %v1042, 4
        %v1048 = vshrl.u32 %v1032, 16
        %v1050 = vrot.slane %v1048, 7
        %v1051 = vshll.u32 %v1032, 16
        %v1053 = vor.u32 %v1050, %v1051
        %v1054 = vrot.slane %v1050, 4
        %v1056 = vshrl.u32 %v1033, 16
        %v1058 = vrot.slane %v1056, 7
        %v1059 = vshll.u32 %v1033, 16
        %v1061 = vor.u32 %v1058, %v1059
        %v1062 = vrot.slane %v1058, 4
        %v1064 = vshrl.u32 %v1034, 16
        %v1066 = vrot.slane %v1064, 7
        %v1067 = vshll.u32 %v1034, 16
        %v1069 = vor.u32 %v1066, %v1067
        %v1070 = vrot.slane %v1066, 4
        %v1072 = vshrl.u32 %v1035, 16
        %v1074 = vrot.slane %v1072, 7
        %v1075 = vshll.u32 %v1035, 16
        %v1077 = vor.u32 %v1074, %v1075
        %v1078 = vrot.slane %v1074, 4
        %v1080 = vshrl.u32 %v1036, 16
        %v1082 = vrot.slane %v1080, 7
        %v1083 = vshll.u32 %v1036, 16
        %v1085 = vor.u32 %v1082, %v1083
        %v1086 = vrot.slane %v1082, 4
        %v1088 = vshrl.u32 %v1037, 16
        %v1090 = vrot.slane %v1088, 7
        %v1091 = vshll.u32 %v1037, 16
        %v1093 = vor.u32 %v1090, %v1091
        %v1094 = vrot.slane %v1090, 4
        %v1096 = vshrl.u32 %v1038, 16
        %v1098 = vrot.slane %v1096, 7
        %v1099 = vshll.u32 %v1038, 16
        %v1101 = vor.u32 %v1098, %v1099
        %v1102 = vrot.slane %v1098, 4
        %s1119 = scalar_lea.vmem [#allocation2], 8
        %vm1120 = vcmask 1043456
        %vm1121 = vmand %vm1120, %vm321
        %v1122 = vld [vmem:[%s1119] sm:$0xf]
        %v1123 = vsel %vm1121, %v1045, %v1122
        %1124 = vst [vmem:[%s1119] sm:$0xf] %v1123
        %v1125 = vld [vmem:[%s1119 + $0x4] sm:$0x1]
        %v1126 = vsel %vm290, %v1046, %v1125
        %1127 = vst [vmem:[%s1119 + $0x4] sm:$0x1] %v1126
        %v1128 = vld [vmem:[%s1119 + $0x8] sm:$0xf]
        %v1129 = vsel %vm1121, %v1053, %v1128
        %1130 = vst [vmem:[%s1119 + $0x8] sm:$0xf] %v1129
        %v1131 = vld [vmem:[%s1119 + $0xc] sm:$0x1]
        %v1132 = vsel %vm290, %v1054, %v1131
        %1133 = vst [vmem:[%s1119 + $0xc] sm:$0x1] %v1132
        %v1134 = vld [vmem:[%s1119 + $0x10] sm:$0xf]
        %v1135 = vsel %vm1121, %v1061, %v1134
        %1136 = vst [vmem:[%s1119 + $0x10] sm:$0xf] %v1135
        %v1137 = vld [vmem:[%s1119 + $0x14] sm:$0x1]
        %v1138 = vsel %vm290, %v1062, %v1137
        %1139 = vst [vmem:[%s1119 + $0x14] sm:$0x1] %v1138
        %v1140 = vld [vmem:[%s1119 + $0x18] sm:$0xf]
        %v1141 = vsel %vm1121, %v1069, %v1140
        %1142 = vst [vmem:[%s1119 + $0x18] sm:$0xf] %v1141
        %v1143 = vld [vmem:[%s1119 + $0x1c] sm:$0x1]
        %v1144 = vsel %vm290, %v1070, %v1143
        %1145 = vst [vmem:[%s1119 + $0x1c] sm:$0x1] %v1144
        %v1146 = vld [vmem:[%s1119 + $0x20] sm:$0xf]
        %v1147 = vsel %vm1121, %v1077, %v1146
        %1148 = vst [vmem:[%s1119 + $0x20] sm:$0xf] %v1147
        %v1149 = vld [vmem:[%s1119 + $0x24] sm:$0x1]
        %v1150 = vsel %vm290, %v1078, %v1149
        %1151 = vst [vmem:[%s1119 + $0x24] sm:$0x1] %v1150
        %v1152 = vld [vmem:[%s1119 + $0x28] sm:$0xf]
        %v1153 = vsel %vm1121, %v1085, %v1152
        %1154 = vst [vmem:[%s1119 + $0x28] sm:$0xf] %v1153
        %v1155 = vld [vmem:[%s1119 + $0x2c] sm:$0x1]
        %v1156 = vsel %vm290, %v1086, %v1155
        %1157 = vst [vmem:[%s1119 + $0x2c] sm:$0x1] %v1156
        %v1158 = vld [vmem:[%s1119 + $0x30] sm:$0xf]
        %v1159 = vsel %vm1121, %v1093, %v1158
        %1160 = vst [vmem:[%s1119 + $0x30] sm:$0xf] %v1159
        %v1161 = vld [vmem:[%s1119 + $0x34] sm:$0x1]
        %v1162 = vsel %vm290, %v1094, %v1161
        %1163 = vst [vmem:[%s1119 + $0x34] sm:$0x1] %v1162
        %v1164 = vld [vmem:[%s1119 + $0x38] sm:$0xf]
        %v1165 = vsel %vm1121, %v1101, %v1164
        %1166 = vst [vmem:[%s1119 + $0x38] sm:$0xf] %v1165
        %v1167 = vld [vmem:[%s1119 + $0x3c] sm:$0x1]
        %v1168 = vsel %vm290, %v1102, %v1167
        %1169 = vst [vmem:[%s1119 + $0x3c] sm:$0x1] %v1168
      $region44: #{point_pillar_forward.6} parent=39 // pred_fallthru
        _
      %p1170 = scmp.gt.s32.totalorder %s21, 0
      // Predicated region
      $region45: #{point_pillar_forward.6} parent=39 // pred_check
        %p1171 = pneg %p1170
      $region46: #{point_pillar_forward.6} parent=39 // pred_check_branch
        %1173 = sbr.rel (%p1171) target = $region48
      $region47: #{point_pillar_forward.6} parent=39 // pred_region
        %v1174 = vld [vmem:[#allocation2] sm:$0xf]
        %v1175 = vld [vmem:[#allocation2 + $0x4] sm:$0x1]
        %v1176 = vld [vmem:[#allocation2 + $0x8] sm:$0xf]
        %v1177 = vld [vmem:[#allocation2 + $0xc] sm:$0x1]
        %v1178 = vld [vmem:[#allocation2 + $0x10] sm:$0xf]
        %v1179 = vld [vmem:[#allocation2 + $0x14] sm:$0x1]
        %v1180 = vld [vmem:[#allocation2 + $0x18] sm:$0xf]
        %v1181 = vld [vmem:[#allocation2 + $0x1c] sm:$0x1]
        %v1182 = vld [vmem:[#allocation2 + $0x20] sm:$0xf]
        %v1183 = vld [vmem:[#allocation2 + $0x24] sm:$0x1]
        %v1184 = vld [vmem:[#allocation2 + $0x28] sm:$0xf]
        %v1185 = vld [vmem:[#allocation2 + $0x2c] sm:$0x1]
        %v1186 = vld [vmem:[#allocation2 + $0x30] sm:$0xf]
        %v1187 = vld [vmem:[#allocation2 + $0x34] sm:$0x1]
        %v1188 = vld [vmem:[#allocation2 + $0x38] sm:$0xf]
        %v1189 = vld [vmem:[#allocation2 + $0x3c] sm:$0x1]
        %v1190 = vld [vmem:[#allocation2 + $0x40] sm:$0xf]
        %v1191 = vld [vmem:[#allocation2 + $0x44] sm:$0x1]
        %v1192 = vld [vmem:[#allocation2 + $0x48] sm:$0xf]
        %v1193 = vld [vmem:[#allocation2 + $0x4c] sm:$0x1]
        %v1210 = vunpack.c.l.b16 %v1174
        %v1211 = vunpack.c.l.b16 %v1175
        %v1212 = vunpack.c.l.b16 %v1176
        %v1213 = vunpack.c.l.b16 %v1177
        %v1214 = vunpack.c.l.b16 %v1178
        %v1215 = vunpack.c.l.b16 %v1179
        %v1216 = vunpack.c.l.b16 %v1180
        %v1217 = vunpack.c.l.b16 %v1181
        %v1218 = vunpack.c.l.b16 %v1182
        %v1219 = vunpack.c.l.b16 %v1183
        %v1220 = vunpack.c.l.b16 %v1184
        %v1221 = vunpack.c.l.b16 %v1185
        %v1222 = vunpack.c.l.b16 %v1186
        %v1223 = vunpack.c.l.b16 %v1187
        %v1224 = vunpack.c.l.b16 %v1188
        %v1225 = vunpack.c.l.b16 %v1189
        %v1226 = vpack.c.b16 %v1211, %v1210
        %v1227 = vpack.c.b16 %v1213, %v1212
        %v1228 = vpack.c.b16 %v1215, %v1214
        %v1229 = vpack.c.b16 %v1217, %v1216
        %v1230 = vpack.c.b16 %v1219, %v1218
        %v1231 = vpack.c.b16 %v1221, %v1220
        %v1232 = vpack.c.b16 %v1223, %v1222
        %v1233 = vpack.c.b16 %v1225, %v1224
        %v1235 = vshrl.u32 %v1226, 16
        %v1237 = vshll.u32 %v1226, 16
        %v1239 = vrot.slane %v1237, 1
        %v1240 = vor.u32 %v1235, %v1239
        %v1242 = vshrl.u32 %v1227, 16
        %v1244 = vshll.u32 %v1227, 16
        %v1246 = vrot.slane %v1244, 1
        %v1247 = vor.u32 %v1242, %v1246
        %v1249 = vshrl.u32 %v1228, 16
        %v1251 = vshll.u32 %v1228, 16
        %v1253 = vrot.slane %v1251, 1
        %v1254 = vor.u32 %v1249, %v1253
        %v1256 = vshrl.u32 %v1229, 16
        %v1258 = vshll.u32 %v1229, 16
        %v1260 = vrot.slane %v1258, 1
        %v1261 = vor.u32 %v1256, %v1260
        %v1263 = vshrl.u32 %v1230, 16
        %v1265 = vshll.u32 %v1230, 16
        %v1267 = vrot.slane %v1265, 1
        %v1268 = vor.u32 %v1263, %v1267
        %v1270 = vshrl.u32 %v1231, 16
        %v1272 = vshll.u32 %v1231, 16
        %v1274 = vrot.slane %v1272, 1
        %v1275 = vor.u32 %v1270, %v1274
        %v1277 = vshrl.u32 %v1232, 16
        %v1279 = vshll.u32 %v1232, 16
        %v1281 = vrot.slane %v1279, 1
        %v1282 = vor.u32 %v1277, %v1281
        %v1284 = vshrl.u32 %v1233, 16
        %v1286 = vshll.u32 %v1233, 16
        %v1288 = vrot.slane %v1286, 1
        %v1289 = vor.u32 %v1284, %v1288
        %v1290 = vrot.slane %v1226, 1
        %v1291 = vrot.slane %v1227, 1
        %v1292 = vrot.slane %v1228, 1
        %v1293 = vrot.slane %v1229, 1
        %v1294 = vrot.slane %v1230, 1
        %v1295 = vrot.slane %v1231, 1
        %v1296 = vrot.slane %v1232, 1
        %v1297 = vrot.slane %v1233, 1
        %v1300 = vunpack.c.l.b16 %v1190
        %v1301 = vunpack.c.l.b16 %v1191
        %v1302 = vpack.c.b16 %v1301, %v1300
        %v1304 = vshrl.u32 %v1302, 16
        %v1306 = vshll.u32 %v1302, 16
        %v1308 = vrot.slane %v1306, 1
        %v1309 = vor.u32 %v1304, %v1308
        %v1310 = vrot.slane %v1302, 1
        %v1313 = vunpack.c.l.b16 %v1192
        %v1314 = vunpack.c.l.b16 %v1193
        %v1315 = vpack.c.b16 %v1314, %v1313
        %v1317 = vshrl.u32 %v1315, 16
        %v1319 = vshll.u32 %v1315, 16
        %v1321 = vrot.slane %v1319, 1
        %v1322 = vor.u32 %v1317, %v1321
        %v1323 = vrot.slane %v1315, 1
        %v1324 = vunpack.c.l.b16 %v1240
        %v1325 = vunpack.c.l.b16 %v1290
        %v1326 = vunpack.c.l.b16 %v1247
        %v1327 = vunpack.c.l.b16 %v1291
        %v1328 = vunpack.c.l.b16 %v1254
        %v1329 = vunpack.c.l.b16 %v1292
        %v1330 = vunpack.c.l.b16 %v1261
        %v1331 = vunpack.c.l.b16 %v1293
        %v1332 = vunpack.c.l.b16 %v1268
        %v1333 = vunpack.c.l.b16 %v1294
        %v1334 = vunpack.c.l.b16 %v1275
        %v1335 = vunpack.c.l.b16 %v1295
        %v1336 = vunpack.c.l.b16 %v1282
        %v1337 = vunpack.c.l.b16 %v1296
        %v1338 = vunpack.c.l.b16 %v1289
        %v1339 = vunpack.c.l.b16 %v1297
        %v1340 = vunpack.c.l.b16 %v1309
        %v1341 = vunpack.c.l.b16 %v1310
        %v1342 = vunpack.c.l.b16 %v1322
        %v1343 = vunpack.c.l.b16 %v1323
        %v1344 = vld [vmem:[%s269] sm:$0xf]
        %v1345 = vld [vmem:[%s269 + $0x4] sm:$0xf]
        %v1346 = vld [vmem:[%s269 + $0x8] sm:$0xf]
        %v1347 = vld [vmem:[%s269 + $0xc] sm:$0xf]
        %v1348 = vld [vmem:[%s269 + $0x10] sm:$0xf]
        %v1349 = vld [vmem:[%s269 + $0x14] sm:$0xf]
        %v1350 = vld [vmem:[%s269 + $0x18] sm:$0xf]
        %v1351 = vld [vmem:[%s269 + $0x1c] sm:$0xf]
        %v1352 = vld [vmem:[%s269 + $0x20] sm:$0xf]
        %v1353 = vld [vmem:[%s269 + $0x24] sm:$0xf]
        %v1354 = vld [vmem:[%s269 + $0x28] sm:$0xf]
        %v1355 = vld [vmem:[%s269 + $0x2c] sm:$0xf]
        %v1356 = vld [vmem:[%s269 + $0x30] sm:$0xf]
        %v1357 = vld [vmem:[%s269 + $0x34] sm:$0xf]
        %v1358 = vld [vmem:[%s269 + $0x38] sm:$0xf]
        %v1359 = vld [vmem:[%s269 + $0x3c] sm:$0xf]
        %v1360 = vld [vmem:[%s269 + $0x40] sm:$0xf]
        %v1361 = vld [vmem:[%s269 + $0x44] sm:$0xf]
        %v1362 = vld [vmem:[%s269 + $0x48] sm:$0xf]
        %v1363 = vld [vmem:[%s269 + $0x4c] sm:$0xf]
        %v1364 = vld [vmem:[%s269 + $0x50] sm:$0xf]
        %v1365 = vld [vmem:[%s269 + $0x54] sm:$0xf]
        %v1366 = vld [vmem:[%s269 + $0x58] sm:$0xf]
        %v1367 = vld [vmem:[%s269 + $0x5c] sm:$0xf]
        %v1368 = vld [vmem:[%s269 + $0x60] sm:$0xf]
        %v1369 = vld [vmem:[%s269 + $0x64] sm:$0xf]
        %v1370 = vld [vmem:[%s269 + $0x68] sm:$0xf]
        %v1371 = vld [vmem:[%s269 + $0x6c] sm:$0xf]
        %v1372 = vld [vmem:[%s269 + $0x70] sm:$0xf]
        %v1373 = vld [vmem:[%s269 + $0x74] sm:$0xf]
        %v1374 = vld [vmem:[%s269 + $0x78] sm:$0xf]
        %v1375 = vld [vmem:[%s269 + $0x7c] sm:$0xf]
        %v1376 = vld [vmem:[%s269 + $0x80] sm:$0xf]
        %v1377 = vld [vmem:[%s269 + $0x84] sm:$0xf]
        %v1378 = vld [vmem:[%s269 + $0x88] sm:$0xf]
        %v1379 = vld [vmem:[%s269 + $0x8c] sm:$0xf]
        %v1380 = vld [vmem:[%s269 + $0x90] sm:$0xf]
        %v1381 = vld [vmem:[%s269 + $0x94] sm:$0xf]
        %v1382 = vld [vmem:[%s269 + $0x98] sm:$0xf]
        %v1383 = vld [vmem:[%s269 + $0x9c] sm:$0xf]
        %v1384 = vld [vmem:[%s269 + $0xa0] sm:$0xf]
        %v1385 = vld [vmem:[%s269 + $0xa4] sm:$0xf]
        %v1386 = vld [vmem:[%s269 + $0xa8] sm:$0xf]
        %v1387 = vld [vmem:[%s269 + $0xac] sm:$0xf]
        %v1388 = vld [vmem:[%s269 + $0xb0] sm:$0xf]
        %v1389 = vld [vmem:[%s269 + $0xb4] sm:$0xf]
        %v1390 = vld [vmem:[%s269 + $0xb8] sm:$0xf]
        %v1391 = vld [vmem:[%s269 + $0xbc] sm:$0xf]
        %v1392 = vld [vmem:[%s269 + $0xc0] sm:$0xf]
        %v1393 = vld [vmem:[%s269 + $0xc4] sm:$0xf]
        %v1394 = vld [vmem:[%s269 + $0xc8] sm:$0xf]
        %v1395 = vld [vmem:[%s269 + $0xcc] sm:$0xf]
        %v1396 = vld [vmem:[%s269 + $0xd0] sm:$0xf]
        %v1397 = vld [vmem:[%s269 + $0xd4] sm:$0xf]
        %v1398 = vld [vmem:[%s269 + $0xd8] sm:$0xf]
        %v1399 = vld [vmem:[%s269 + $0xdc] sm:$0xf]
        %v1400 = vld [vmem:[%s269 + $0xe0] sm:$0xf]
        %v1401 = vld [vmem:[%s269 + $0xe4] sm:$0xf]
        %v1402 = vld [vmem:[%s269 + $0xe8] sm:$0xf]
        %v1403 = vld [vmem:[%s269 + $0xec] sm:$0xf]
        %v1404 = vld [vmem:[%s269 + $0xf0] sm:$0xf]
        %v1405 = vld [vmem:[%s269 + $0xf4] sm:$0xf]
        %v1406 = vld [vmem:[%s269 + $0xf8] sm:$0xf]
        %v1407 = vld [vmem:[%s269 + $0xfc] sm:$0xf]
        %v1408 = vld [vmem:[%s269 + $0x100] sm:$0xf]
        %v1409 = vld [vmem:[%s269 + $0x104] sm:$0xf]
        %v1410 = vld [vmem:[%s269 + $0x108] sm:$0xf]
        %v1411 = vld [vmem:[%s269 + $0x10c] sm:$0xf]
        %v1412 = vld [vmem:[%s269 + $0x110] sm:$0xf]
        %v1413 = vld [vmem:[%s269 + $0x114] sm:$0xf]
        %v1414 = vld [vmem:[%s269 + $0x118] sm:$0xf]
        %v1415 = vld [vmem:[%s269 + $0x11c] sm:$0xf]
        %v1416 = vld [vmem:[%s269 + $0x120] sm:$0xf]
        %v1417 = vld [vmem:[%s269 + $0x124] sm:$0xf]
        %v1418 = vld [vmem:[%s269 + $0x128] sm:$0xf]
        %v1419 = vld [vmem:[%s269 + $0x12c] sm:$0xf]
        %v1420 = vld [vmem:[%s269 + $0x130] sm:$0xf]
        %v1421 = vld [vmem:[%s269 + $0x134] sm:$0xf]
        %v1422 = vld [vmem:[%s269 + $0x138] sm:$0xf]
        %v1423 = vld [vmem:[%s269 + $0x13c] sm:$0xf]
        %v1424 = vld [vmem:[%s269 + $0x140] sm:$0xf]
        %v1425 = vld [vmem:[%s269 + $0x144] sm:$0xf]
        %v1426 = vld [vmem:[%s269 + $0x148] sm:$0xf]
        %v1427 = vld [vmem:[%s269 + $0x14c] sm:$0xf]
        %v1428 = vld [vmem:[%s269 + $0x150] sm:$0xf]
        %v1429 = vld [vmem:[%s269 + $0x154] sm:$0xf]
        %v1430 = vld [vmem:[%s269 + $0x158] sm:$0xf]
        %v1431 = vld [vmem:[%s269 + $0x15c] sm:$0xf]
        %v1432 = vld [vmem:[%s269 + $0x160] sm:$0xf]
        %v1433 = vld [vmem:[%s269 + $0x164] sm:$0xf]
        %v1434 = vld [vmem:[%s269 + $0x168] sm:$0xf]
        %v1435 = vld [vmem:[%s269 + $0x16c] sm:$0xf]
        %v1436 = vld [vmem:[%s269 + $0x170] sm:$0xf]
        %v1437 = vld [vmem:[%s269 + $0x174] sm:$0xf]
        %v1438 = vld [vmem:[%s269 + $0x178] sm:$0xf]
        %v1439 = vld [vmem:[%s269 + $0x17c] sm:$0xf]
        %v1440 = vld [vmem:[%s269 + $0x180] sm:$0xf]
        %v1441 = vld [vmem:[%s269 + $0x184] sm:$0xf]
        %v1442 = vld [vmem:[%s269 + $0x188] sm:$0xf]
        %v1443 = vld [vmem:[%s269 + $0x18c] sm:$0xf]
        %v1444 = vld [vmem:[%s269 + $0x190] sm:$0xf]
        %v1445 = vld [vmem:[%s269 + $0x194] sm:$0xf]
        %v1446 = vld [vmem:[%s269 + $0x198] sm:$0xf]
        %v1447 = vld [vmem:[%s269 + $0x19c] sm:$0xf]
        %v1448 = vld [vmem:[%s269 + $0x1a0] sm:$0xf]
        %v1449 = vld [vmem:[%s269 + $0x1a4] sm:$0xf]
        %v1450 = vld [vmem:[%s269 + $0x1a8] sm:$0xf]
        %v1451 = vld [vmem:[%s269 + $0x1ac] sm:$0xf]
        %v1452 = vld [vmem:[%s269 + $0x1b0] sm:$0xf]
        %v1453 = vld [vmem:[%s269 + $0x1b4] sm:$0xf]
        %v1454 = vld [vmem:[%s269 + $0x1b8] sm:$0xf]
        %v1455 = vld [vmem:[%s269 + $0x1bc] sm:$0xf]
        %v1456 = vld [vmem:[%s269 + $0x1c0] sm:$0xf]
        %v1457 = vld [vmem:[%s269 + $0x1c4] sm:$0xf]
        %v1458 = vld [vmem:[%s269 + $0x1c8] sm:$0xf]
        %v1459 = vld [vmem:[%s269 + $0x1cc] sm:$0xf]
        %v1460 = vld [vmem:[%s269 + $0x1d0] sm:$0xf]
        %v1461 = vld [vmem:[%s269 + $0x1d4] sm:$0xf]
        %v1462 = vld [vmem:[%s269 + $0x1d8] sm:$0xf]
        %v1463 = vld [vmem:[%s269 + $0x1dc] sm:$0xf]
        %v1464 = vld [vmem:[%s269 + $0x1e0] sm:$0xf]
        %v1465 = vld [vmem:[%s269 + $0x1e4] sm:$0xf]
        %v1466 = vld [vmem:[%s269 + $0x1e8] sm:$0xf]
        %v1467 = vld [vmem:[%s269 + $0x1ec] sm:$0xf]
        %v1468 = vld [vmem:[%s269 + $0x1f0] sm:$0xf]
        %v1469 = vld [vmem:[%s269 + $0x1f4] sm:$0xf]
        %v1470 = vld [vmem:[%s269 + $0x1f8] sm:$0xf]
        %v1471 = vld [vmem:[%s269 + $0x1fc] sm:$0xf]
        %v1472 = vld [vmem:[%s269 + $0x200] sm:$0xf]
        %v1473 = vld [vmem:[%s269 + $0x204] sm:$0xf]
        %v1474 = vld [vmem:[%s269 + $0x208] sm:$0xf]
        %v1475 = vld [vmem:[%s269 + $0x20c] sm:$0xf]
        %v1476 = vld [vmem:[%s269 + $0x210] sm:$0xf]
        %v1477 = vld [vmem:[%s269 + $0x214] sm:$0xf]
        %v1478 = vld [vmem:[%s269 + $0x218] sm:$0xf]
        %v1479 = vld [vmem:[%s269 + $0x21c] sm:$0xf]
        %v1480 = vld [vmem:[%s269 + $0x220] sm:$0xf]
        %v1481 = vld [vmem:[%s269 + $0x224] sm:$0xf]
        %v1482 = vld [vmem:[%s269 + $0x228] sm:$0xf]
        %v1483 = vld [vmem:[%s269 + $0x22c] sm:$0xf]
        %v1484 = vld [vmem:[%s269 + $0x230] sm:$0xf]
        %v1485 = vld [vmem:[%s269 + $0x234] sm:$0xf]
        %v1486 = vld [vmem:[%s269 + $0x238] sm:$0xf]
        %v1487 = vld [vmem:[%s269 + $0x23c] sm:$0xf]
        %v1488 = vpack.c.b16 %v1212, %v1210
        %v1489 = vpack.c.b16 %v1326, %v1324
        %v1490 = vpack.c.b16 %v1327, %v1325
        %v1491 = vpack.c.b16 %v1214, %v1212
        %v1492 = vpack.c.b16 %v1328, %v1326
        %v1493 = vpack.c.b16 %v1329, %v1327
        %v1494 = vpack.c.b16 %v1216, %v1214
        %v1495 = vpack.c.b16 %v1330, %v1328
        %v1496 = vpack.c.b16 %v1331, %v1329
        %v1497 = vpack.c.b16 %v1218, %v1216
        %v1498 = vpack.c.b16 %v1332, %v1330
        %v1499 = vpack.c.b16 %v1333, %v1331
        %v1500 = vpack.c.b16 %v1220, %v1218
        %v1501 = vpack.c.b16 %v1334, %v1332
        %v1502 = vpack.c.b16 %v1335, %v1333
        %v1503 = vpack.c.b16 %v1222, %v1220
        %v1504 = vpack.c.b16 %v1336, %v1334
        %v1505 = vpack.c.b16 %v1337, %v1335
        %v1506 = vpack.c.b16 %v1224, %v1222
        %v1507 = vpack.c.b16 %v1338, %v1336
        %v1508 = vpack.c.b16 %v1339, %v1337
        %v1509 = vpack.c.b16 %v1300, %v1224
        %v1510 = vpack.c.b16 %v1340, %v1338
        %v1511 = vpack.c.b16 %v1341, %v1339
        %v1512 = vpack.c.b16 %v1313, %v1300
        %v1513 = vpack.c.b16 %v1342, %v1340
        %v1514 = vpack.c.b16 %v1343, %v1341
        %v1686 = vunpack.c.l.b16 %v1344
        %v1687 = vunpack.c.l.b16 %v1345
        %v1688 = vunpack.c.l.b16 %v1346
        %v1689 = vunpack.c.l.b16 %v1347
        %v1690 = vunpack.c.l.b16 %v1348
        %v1691 = vunpack.c.l.b16 %v1349
        %v1692 = vunpack.c.l.b16 %v1350
        %v1693 = vunpack.c.l.b16 %v1351
        %v1694 = vunpack.c.l.b16 %v1352
        %v1695 = vunpack.c.l.b16 %v1353
        %v1696 = vunpack.c.l.b16 %v1354
        %v1697 = vunpack.c.l.b16 %v1355
        %v1698 = vunpack.c.l.b16 %v1356
        %v1699 = vunpack.c.l.b16 %v1357
        %v1700 = vunpack.c.l.b16 %v1358
        %v1701 = vunpack.c.l.b16 %v1359
        %v1702 = vunpack.c.l.b16 %v1360
        %v1703 = vunpack.c.l.b16 %v1361
        %v1704 = vunpack.c.l.b16 %v1362
        %v1705 = vunpack.c.l.b16 %v1363
        %v1706 = vunpack.c.l.b16 %v1364
        %v1707 = vunpack.c.l.b16 %v1365
        %v1708 = vunpack.c.l.b16 %v1366
        %v1709 = vunpack.c.l.b16 %v1367
        %v1710 = vunpack.c.l.b16 %v1368
        %v1711 = vunpack.c.l.b16 %v1369
        %v1712 = vunpack.c.l.b16 %v1370
        %v1713 = vunpack.c.l.b16 %v1371
        %v1714 = vunpack.c.l.b16 %v1372
        %v1715 = vunpack.c.l.b16 %v1373
        %v1716 = vunpack.c.l.b16 %v1374
        %v1717 = vunpack.c.l.b16 %v1375
        %v1718 = vunpack.c.l.b16 %v1376
        %v1719 = vunpack.c.l.b16 %v1377
        %v1720 = vunpack.c.l.b16 %v1378
        %v1721 = vunpack.c.l.b16 %v1379
        %v1722 = vunpack.c.l.b16 %v1380
        %v1723 = vunpack.c.l.b16 %v1381
        %v1724 = vunpack.c.l.b16 %v1382
        %v1725 = vunpack.c.l.b16 %v1383
        %v1726 = vunpack.c.l.b16 %v1384
        %v1727 = vunpack.c.l.b16 %v1385
        %v1728 = vunpack.c.l.b16 %v1386
        %v1729 = vunpack.c.l.b16 %v1387
        %v1730 = vunpack.c.l.b16 %v1388
        %v1731 = vunpack.c.l.b16 %v1389
        %v1732 = vunpack.c.l.b16 %v1390
        %v1733 = vunpack.c.l.b16 %v1391
        %v1734 = vunpack.c.l.b16 %v1392
        %v1735 = vunpack.c.l.b16 %v1393
        %v1736 = vunpack.c.l.b16 %v1394
        %v1737 = vunpack.c.l.b16 %v1395
        %v1738 = vunpack.c.l.b16 %v1396
        %v1739 = vunpack.c.l.b16 %v1397
        %v1740 = vunpack.c.l.b16 %v1398
        %v1741 = vunpack.c.l.b16 %v1399
        %v1742 = vunpack.c.l.b16 %v1400
        %v1743 = vunpack.c.l.b16 %v1401
        %v1744 = vunpack.c.l.b16 %v1402
        %v1745 = vunpack.c.l.b16 %v1403
        %v1746 = vunpack.c.l.b16 %v1404
        %v1747 = vunpack.c.l.b16 %v1405
        %v1748 = vunpack.c.l.b16 %v1406
        %v1749 = vunpack.c.l.b16 %v1407
        %v1750 = vunpack.c.l.b16 %v1408
        %v1751 = vunpack.c.l.b16 %v1409
        %v1752 = vunpack.c.l.b16 %v1410
        %v1753 = vunpack.c.l.b16 %v1411
        %v1754 = vunpack.c.l.b16 %v1412
        %v1755 = vunpack.c.l.b16 %v1413
        %v1756 = vunpack.c.l.b16 %v1414
        %v1757 = vunpack.c.l.b16 %v1415
        %v1758 = vunpack.c.l.b16 %v1416
        %v1759 = vunpack.c.l.b16 %v1417
        %v1760 = vunpack.c.l.b16 %v1418
        %v1761 = vunpack.c.l.b16 %v1419
        %v1762 = vunpack.c.l.b16 %v1420
        %v1763 = vunpack.c.l.b16 %v1421
        %v1764 = vunpack.c.l.b16 %v1422
        %v1765 = vunpack.c.l.b16 %v1423
        %v1766 = vunpack.c.l.b16 %v1424
        %v1767 = vunpack.c.l.b16 %v1425
        %v1768 = vunpack.c.l.b16 %v1426
        %v1769 = vunpack.c.l.b16 %v1427
        %v1770 = vunpack.c.l.b16 %v1428
        %v1771 = vunpack.c.l.b16 %v1429
        %v1772 = vunpack.c.l.b16 %v1430
        %v1773 = vunpack.c.l.b16 %v1431
        %v1774 = vunpack.c.l.b16 %v1432
        %v1775 = vunpack.c.l.b16 %v1433
        %v1776 = vunpack.c.l.b16 %v1434
        %v1777 = vunpack.c.l.b16 %v1435
        %v1778 = vunpack.c.l.b16 %v1436
        %v1779 = vunpack.c.l.b16 %v1437
        %v1780 = vunpack.c.l.b16 %v1438
        %v1781 = vunpack.c.l.b16 %v1439
        %v1782 = vunpack.c.l.b16 %v1440
        %v1783 = vunpack.c.l.b16 %v1441
        %v1784 = vunpack.c.l.b16 %v1442
        %v1785 = vunpack.c.l.b16 %v1443
        %v1786 = vunpack.c.l.b16 %v1444
        %v1787 = vunpack.c.l.b16 %v1445
        %v1788 = vunpack.c.l.b16 %v1446
        %v1789 = vunpack.c.l.b16 %v1447
        %v1790 = vunpack.c.l.b16 %v1448
        %v1791 = vunpack.c.l.b16 %v1449
        %v1792 = vunpack.c.l.b16 %v1450
        %v1793 = vunpack.c.l.b16 %v1451
        %v1794 = vunpack.c.l.b16 %v1452
        %v1795 = vunpack.c.l.b16 %v1453
        %v1796 = vunpack.c.l.b16 %v1454
        %v1797 = vunpack.c.l.b16 %v1455
        %v1798 = vunpack.c.l.b16 %v1456
        %v1799 = vunpack.c.l.b16 %v1457
        %v1800 = vunpack.c.l.b16 %v1458
        %v1801 = vunpack.c.l.b16 %v1459
        %v1802 = vunpack.c.l.b16 %v1460
        %v1803 = vunpack.c.l.b16 %v1461
        %v1804 = vunpack.c.l.b16 %v1462
        %v1805 = vunpack.c.l.b16 %v1463
        %v1806 = vunpack.c.l.b16 %v1464
        %v1807 = vunpack.c.l.b16 %v1465
        %v1808 = vunpack.c.l.b16 %v1466
        %v1809 = vunpack.c.l.b16 %v1467
        %v1810 = vunpack.c.l.b16 %v1468
        %v1811 = vunpack.c.l.b16 %v1469
        %v1812 = vunpack.c.l.b16 %v1470
        %v1813 = vunpack.c.l.b16 %v1471
        %v1814 = vunpack.c.l.b16 %v1472
        %v1815 = vunpack.c.l.b16 %v1473
        %v1816 = vunpack.c.l.b16 %v1474
        %v1817 = vunpack.c.l.b16 %v1475
        %v1818 = vunpack.c.l.b16 %v1476
        %v1819 = vunpack.c.l.b16 %v1477
        %v1820 = vunpack.c.l.b16 %v1478
        %v1821 = vunpack.c.l.b16 %v1479
        %v1822 = vunpack.c.l.b16 %v1480
        %v1823 = vunpack.c.l.b16 %v1481
        %v1824 = vunpack.c.l.b16 %v1482
        %v1825 = vunpack.c.l.b16 %v1483
        %v1826 = vunpack.c.l.b16 %v1484
        %v1827 = vunpack.c.l.b16 %v1485
        %v1828 = vunpack.c.l.b16 %v1486
        %v1829 = vunpack.c.l.b16 %v1487
        %v1830 = vpack.c.b16 %v1687, %v1686
        %v1831 = vpack.c.b16 %v1689, %v1688
        %v1832 = vpack.c.b16 %v1691, %v1690
        %v1833 = vpack.c.b16 %v1693, %v1692
        %v1834 = vpack.c.b16 %v1695, %v1694
        %v1835 = vpack.c.b16 %v1697, %v1696
        %v1836 = vpack.c.b16 %v1699, %v1698
        %v1837 = vpack.c.b16 %v1701, %v1700
        %v1838 = vpack.c.b16 %v1703, %v1702
        %v1839 = vpack.c.b16 %v1705, %v1704
        %v1840 = vpack.c.b16 %v1707, %v1706
        %v1841 = vpack.c.b16 %v1709, %v1708
        %v1842 = vpack.c.b16 %v1711, %v1710
        %v1843 = vpack.c.b16 %v1713, %v1712
        %v1844 = vpack.c.b16 %v1715, %v1714
        %v1845 = vpack.c.b16 %v1717, %v1716
        %v1846 = vpack.c.b16 %v1719, %v1718
        %v1847 = vpack.c.b16 %v1721, %v1720
        %v1848 = vpack.c.b16 %v1723, %v1722
        %v1849 = vpack.c.b16 %v1725, %v1724
        %v1850 = vpack.c.b16 %v1727, %v1726
        %v1851 = vpack.c.b16 %v1729, %v1728
        %v1852 = vpack.c.b16 %v1731, %v1730
        %v1853 = vpack.c.b16 %v1733, %v1732
        %v1854 = vpack.c.b16 %v1735, %v1734
        %v1855 = vpack.c.b16 %v1737, %v1736
        %v1856 = vpack.c.b16 %v1739, %v1738
        %v1857 = vpack.c.b16 %v1741, %v1740
        %v1858 = vpack.c.b16 %v1743, %v1742
        %v1859 = vpack.c.b16 %v1745, %v1744
        %v1860 = vpack.c.b16 %v1747, %v1746
        %v1861 = vpack.c.b16 %v1749, %v1748
        %v1862 = vpack.c.b16 %v1751, %v1750
        %v1863 = vpack.c.b16 %v1753, %v1752
        %v1864 = vpack.c.b16 %v1755, %v1754
        %v1865 = vpack.c.b16 %v1757, %v1756
        %v1866 = vpack.c.b16 %v1759, %v1758
        %v1867 = vpack.c.b16 %v1761, %v1760
        %v1868 = vpack.c.b16 %v1763, %v1762
        %v1869 = vpack.c.b16 %v1765, %v1764
        %v1870 = vpack.c.b16 %v1767, %v1766
        %v1871 = vpack.c.b16 %v1769, %v1768
        %v1872 = vpack.c.b16 %v1771, %v1770
        %v1873 = vpack.c.b16 %v1773, %v1772
        %v1874 = vpack.c.b16 %v1775, %v1774
        %v1875 = vpack.c.b16 %v1777, %v1776
        %v1876 = vpack.c.b16 %v1779, %v1778
        %v1877 = vpack.c.b16 %v1781, %v1780
        %v1878 = vpack.c.b16 %v1783, %v1782
        %v1879 = vpack.c.b16 %v1785, %v1784
        %v1880 = vpack.c.b16 %v1787, %v1786
        %v1881 = vpack.c.b16 %v1789, %v1788
        %v1882 = vpack.c.b16 %v1791, %v1790
        %v1883 = vpack.c.b16 %v1793, %v1792
        %v1884 = vpack.c.b16 %v1795, %v1794
        %v1885 = vpack.c.b16 %v1797, %v1796
        %v1886 = vpack.c.b16 %v1799, %v1798
        %v1887 = vpack.c.b16 %v1801, %v1800
        %v1888 = vpack.c.b16 %v1803, %v1802
        %v1889 = vpack.c.b16 %v1805, %v1804
        %v1890 = vpack.c.b16 %v1807, %v1806
        %v1891 = vpack.c.b16 %v1809, %v1808
        %v1892 = vpack.c.b16 %v1811, %v1810
        %v1893 = vpack.c.b16 %v1813, %v1812
        %v1894 = vpack.c.b16 %v1815, %v1814
        %v1895 = vpack.c.b16 %v1817, %v1816
        %v1896 = vpack.c.b16 %v1819, %v1818
        %v1897 = vpack.c.b16 %v1821, %v1820
        %v1898 = vpack.c.b16 %v1823, %v1822
        %v1899 = vpack.c.b16 %v1825, %v1824
        %v1900 = vpack.c.b16 %v1827, %v1826
        %v1901 = vpack.c.b16 %v1829, %v1828
        %1974 = vmatprep.subr.bf16.mxu0 0
        %1975 = vmatpush1.bf16.msra.mxu0 %v1830
        %1976 = vmatprep.subr.bf16.mxu0 0
        %1977 = vmatpush1.bf16.msra.mxu0 %v1831
        %1978 = vmatprep.subr.bf16.mxu0 0
        %1979 = vmatpush1.bf16.msra.mxu0 %v1832
        %1980 = vmatprep.subr.bf16.mxu0 0
        %1981 = vmatpush1.bf16.msra.mxu0 %v1833
        %1982 = vmatprep.subr.bf16.mxu0 0
        %1983 = vmatpush1.bf16.msra.mxu0 %v1834
        %1984 = vmatprep.subr.bf16.mxu0 0
        %1985 = vmatpush1.bf16.msra.mxu0 %v1835
        %1986 = vmatprep.subr.bf16.mxu0 0
        %1987 = vmatpush1.bf16.msra.mxu0 %v1836
        %1988 = vmatprep.subr.bf16.mxu0 0
        %1989 = vmatpush1.bf16.msra.mxu0 %v1837
        %1990 = vmatprep.subr.bf16.mxu0 0
        %1991 = vmatpush1.bf16.msra.mxu0 %v1838
        %1992 = vmatprep.subr.bf16.mxu0 0
        %1993 = vmatpush1.bf16.msra.mxu0 %v1839
        %1994 = vmatprep.subr.bf16.mxu0 0
        %1995 = vmatpush1.bf16.msra.mxu0 %v1840
        %1996 = vmatprep.subr.bf16.mxu0 0
        %1997 = vmatpush1.bf16.msra.mxu0 %v1841
        %1998 = vmatprep.subr.bf16.mxu0 0
        %1999 = vmatpush1.bf16.msra.mxu0 %v1842
        %2000 = vmatprep.subr.bf16.mxu0 0
        %2001 = vmatpush1.bf16.msra.mxu0 %v1843
        %2002 = vmatprep.subr.bf16.mxu0 0
        %2003 = vmatpush1.bf16.msra.mxu0 %v1844
        %2004 = vmatprep.subr.bf16.mxu0 0
        %2005 = vmatpush1.bf16.msra.mxu0 %v1845
        %2006 = vmatprep.mubr.bf16.mxu0 %v1489
        %2007 = vmatmul.mubr.bf16.gmra.mrb[0].mxu0 %v1488
        %v2008 = vpop.f32.mrb[0].mxu0
        %v2009 = vadd.f32 0.0, %v2008
        %v2010 = vpop.f32.mrb[0].mxu0
        %v2011 = vpop.f32.mrb[0].mxu0
        %v2012 = vadd.f32 0.0, %v2011
        %v2013 = vpop.f32.mrb[0].mxu0
        %2014 = vmatprep.mubr.bf16.mxu0 %v1495
        %2015 = vmatmul.mubr.bf16.gmra.mrb[0].mxu0 %v1494
        %v2016 = vpop.f32.mrb[0].mxu0
        %v2017 = vadd.f32 0.0, %v2016
        %v2018 = vpop.f32.mrb[0].mxu0
        %v2019 = vpop.f32.mrb[0].mxu0
        %v2020 = vadd.f32 0.0, %v2019
        %v2021 = vpop.f32.mrb[0].mxu0
        %2022 = vmatprep.mubr.bf16.mxu0 %v1501
        %2023 = vmatmul.mubr.bf16.gmra.mrb[0].mxu0 %v1500
        %v2024 = vpop.f32.mrb[0].mxu0
        %v2025 = vadd.f32 0.0, %v2024
        %v2026 = vpop.f32.mrb[0].mxu0
        %v2027 = vpop.f32.mrb[0].mxu0
        %v2028 = vadd.f32 0.0, %v2027
        %v2029 = vpop.f32.mrb[0].mxu0
        %2030 = vmatprep.mubr.bf16.mxu0 %v1507
        %2031 = vmatmul.mubr.bf16.gmra.mrb[0].mxu0 %v1506
        %v2032 = vpop.f32.mrb[0].mxu0
        %v2033 = vadd.f32 0.0, %v2032
        %v2034 = vpop.f32.mrb[0].mxu0
        %v2035 = vpop.f32.mrb[0].mxu0
        %v2036 = vadd.f32 0.0, %v2035
        %v2037 = vpop.f32.mrb[0].mxu0
        %2038 = vdwg.mxu0
        %2039 = vmatprep.subr.bf16.mxu0 0
        %2040 = vmatpush1.bf16.msra.mxu0 %v1846
        %2041 = vmatprep.subr.bf16.mxu0 0
        %2042 = vmatpush1.bf16.msra.mxu0 %v1847
        %2043 = vmatprep.subr.bf16.mxu0 0
        %2044 = vmatpush1.bf16.msra.mxu0 %v1848
        %2045 = vmatprep.subr.bf16.mxu0 0
        %2046 = vmatpush1.bf16.msra.mxu0 %v1849
        %2047 = vmatprep.subr.bf16.mxu0 0
        %2048 = vmatpush1.bf16.msra.mxu0 %v1850
        %2049 = vmatprep.subr.bf16.mxu0 0
        %2050 = vmatpush1.bf16.msra.mxu0 %v1851
        %2051 = vmatprep.subr.bf16.mxu0 0
        %2052 = vmatpush1.bf16.msra.mxu0 %v1852
        %2053 = vmatprep.subr.bf16.mxu0 0
        %2054 = vmatpush1.bf16.msra.mxu0 %v1853
        %2055 = vmatprep.subr.bf16.mxu0 0
        %2056 = vmatpush1.bf16.msra.mxu0 %v1854
        %2057 = vmatprep.subr.bf16.mxu0 0
        %2058 = vmatpush1.bf16.msra.mxu0 %v1855
        %2059 = vmatprep.subr.bf16.mxu0 0
        %2060 = vmatpush1.bf16.msra.mxu0 %v1856
        %2061 = vmatprep.subr.bf16.mxu0 0
        %2062 = vmatpush1.bf16.msra.mxu0 %v1857
        %2063 = vmatprep.subr.bf16.mxu0 0
        %2064 = vmatpush1.bf16.msra.mxu0 %v1858
        %2065 = vmatprep.subr.bf16.mxu0 0
        %2066 = vmatpush1.bf16.msra.mxu0 %v1859
        %2067 = vmatprep.subr.bf16.mxu0 0
        %2068 = vmatpush1.bf16.msra.mxu0 %v1860
        %2069 = vmatprep.subr.bf16.mxu0 0
        %2070 = vmatpush1.bf16.msra.mxu0 %v1861
        %2071 = vmatprep.mubr.bf16.mxu0 %v1491
        %2072 = vmatmul.mubr.bf16.gmra.mrb[0].mxu0 %v1490
        %v2073 = vpop.f32.mrb[0].mxu0
        %v2074 = vadd.f32 %v2009, %v2073
        %v2075 = vpop.f32.mrb[0].mxu0
        %v2076 = vpop.f32.mrb[0].mxu0
        %v2077 = vadd.f32 %v2012, %v2076
        %v2078 = vpop.f32.mrb[0].mxu0
        %2079 = vmatprep.mubr.bf16.mxu0 %v1497
        %2080 = vmatmul.mubr.bf16.gmra.mrb[0].mxu0 %v1496
        %v2081 = vpop.f32.mrb[0].mxu0
        %v2082 = vadd.f32 %v2017, %v2081
        %v2083 = vpop.f32.mrb[0].mxu0
        %v2084 = vpop.f32.mrb[0].mxu0
        %v2085 = vadd.f32 %v2020, %v2084
        %v2086 = vpop.f32.mrb[0].mxu0
        %2087 = vmatprep.mubr.bf16.mxu0 %v1503
        %2088 = vmatmul.mubr.bf16.gmra.mrb[0].mxu0 %v1502
        %v2089 = vpop.f32.mrb[0].mxu0
        %v2090 = vadd.f32 %v2025, %v2089
        %v2091 = vpop.f32.mrb[0].mxu0
        %v2092 = vpop.f32.mrb[0].mxu0
        %v2093 = vadd.f32 %v2028, %v2092
        %v2094 = vpop.f32.mrb[0].mxu0
        %2095 = vmatprep.mubr.bf16.mxu0 %v1509
        %2096 = vmatmul.mubr.bf16.gmra.mrb[0].mxu0 %v1508
        %v2097 = vpop.f32.mrb[0].mxu0
        %v2098 = vadd.f32 %v2033, %v2097
        %v2099 = vpop.f32.mrb[0].mxu0
        %v2100 = vpop.f32.mrb[0].mxu0
        %v2101 = vadd.f32 %v2036, %v2100
        %v2102 = vpop.f32.mrb[0].mxu0
        %2103 = vdwg.mxu0
        %2104 = vmatprep.subr.bf16.mxu0 0
        %2105 = vmatpush1.bf16.msra.mxu0 %v1862
        %2106 = vmatprep.subr.bf16.mxu0 0
        %2107 = vmatpush1.bf16.msra.mxu0 %v1863
        %2108 = vmatprep.subr.bf16.mxu0 0
        %2109 = vmatpush1.bf16.msra.mxu0 %v1864
        %2110 = vmatprep.subr.bf16.mxu0 0
        %2111 = vmatpush1.bf16.msra.mxu0 %v1865
        %2112 = vmatprep.subr.bf16.mxu0 0
        %2113 = vmatpush1.bf16.msra.mxu0 %v1866
        %2114 = vmatprep.subr.bf16.mxu0 0
        %2115 = vmatpush1.bf16.msra.mxu0 %v1867
        %2116 = vmatprep.subr.bf16.mxu0 0
        %2117 = vmatpush1.bf16.msra.mxu0 %v1868
        %2118 = vmatprep.subr.bf16.mxu0 0
        %2119 = vmatpush1.bf16.msra.mxu0 %v1869
        %2120 = vmatprep.subr.bf16.mxu0 0
        %2121 = vmatpush1.bf16.msra.mxu0 %v1870
        %2122 = vmatprep.subr.bf16.mxu0 0
        %2123 = vmatpush1.bf16.msra.mxu0 %v1871
        %2124 = vmatprep.subr.bf16.mxu0 0
        %2125 = vmatpush1.bf16.msra.mxu0 %v1872
        %2126 = vmatprep.subr.bf16.mxu0 0
        %2127 = vmatpush1.bf16.msra.mxu0 %v1873
        %2128 = vmatprep.subr.bf16.mxu0 0
        %2129 = vmatpush1.bf16.msra.mxu0 %v1874
        %2130 = vmatprep.subr.bf16.mxu0 0
        %2131 = vmatpush1.bf16.msra.mxu0 %v1875
        %2132 = vmatprep.subr.bf16.mxu0 0
        %2133 = vmatpush1.bf16.msra.mxu0 %v1876
        %2134 = vmatprep.subr.bf16.mxu0 0
        %2135 = vmatpush1.bf16.msra.mxu0 %v1877
        %2136 = vmatprep.mubr.bf16.mxu0 %v1493
        %2137 = vmatmul.mubr.bf16.gmra.mrb[0].mxu0 %v1492
        %v2138 = vpop.f32.mrb[0].mxu0
        %v2139 = vadd.f32 %v2074, %v2138
        %v2140 = vpop.f32.mrb[0].mxu0
        %v2141 = vpop.f32.mrb[0].mxu0
        %v2142 = vadd.f32 %v2077, %v2141
        %v2143 = vpop.f32.mrb[0].mxu0
        %2144 = vmatprep.mubr.bf16.mxu0 %v1499
        %2145 = vmatmul.mubr.bf16.gmra.mrb[0].mxu0 %v1498
        %v2146 = vpop.f32.mrb[0].mxu0
        %v2147 = vadd.f32 %v2082, %v2146
        %v2148 = vpop.f32.mrb[0].mxu0
        %v2149 = vpop.f32.mrb[0].mxu0
        %v2150 = vadd.f32 %v2085, %v2149
        %v2151 = vpop.f32.mrb[0].mxu0
        %2152 = vmatprep.mubr.bf16.mxu0 %v1505
        %2153 = vmatmul.mubr.bf16.gmra.mrb[0].mxu0 %v1504
        %v2154 = vpop.f32.mrb[0].mxu0
        %v2155 = vadd.f32 %v2090, %v2154
        %v2156 = vpop.f32.mrb[0].mxu0
        %v2157 = vpop.f32.mrb[0].mxu0
        %v2158 = vadd.f32 %v2093, %v2157
        %v2159 = vpop.f32.mrb[0].mxu0
        %2160 = vmatprep.mubr.bf16.mxu0 %v1511
        %2161 = vmatmul.mubr.bf16.gmra.mrb[0].mxu0 %v1510
        %v2162 = vpop.f32.mrb[0].mxu0
        %v2163 = vadd.f32 %v2098, %v2162
        %v2164 = vpop.f32.mrb[0].mxu0
        %v2165 = vpop.f32.mrb[0].mxu0
        %v2166 = vadd.f32 %v2101, %v2165
        %v2167 = vpop.f32.mrb[0].mxu0
        %2168 = vdwg.mxu0
        %2169 = vmatprep.subr.bf16.mxu0 0
        %2170 = vmatpush1.bf16.msra.mxu0 %v1878
        %2171 = vmatprep.subr.bf16.mxu0 0
        %2172 = vmatpush1.bf16.msra.mxu0 %v1879
        %2173 = vmatprep.subr.bf16.mxu0 0
        %2174 = vmatpush1.bf16.msra.mxu0 %v1880
        %2175 = vmatprep.subr.bf16.mxu0 0
        %2176 = vmatpush1.bf16.msra.mxu0 %v1881
        %2177 = vmatprep.subr.bf16.mxu0 0
        %2178 = vmatpush1.bf16.msra.mxu0 %v1882
        %2179 = vmatprep.subr.bf16.mxu0 0
        %2180 = vmatpush1.bf16.msra.mxu0 %v1883
        %2181 = vmatprep.subr.bf16.mxu0 0
        %2182 = vmatpush1.bf16.msra.mxu0 %v1884
        %2183 = vmatprep.subr.bf16.mxu0 0
        %2184 = vmatpush1.bf16.msra.mxu0 %v1885
        %2185 = vmatprep.subr.bf16.mxu0 0
        %2186 = vmatpush1.bf16.msra.mxu0 %v1886
        %2187 = vmatprep.subr.bf16.mxu0 0
        %2188 = vmatpush1.bf16.msra.mxu0 %v1887
        %2189 = vmatprep.subr.bf16.mxu0 0
        %2190 = vmatpush1.bf16.msra.mxu0 %v1888
        %2191 = vmatprep.subr.bf16.mxu0 0
        %2192 = vmatpush1.bf16.msra.mxu0 %v1889
        %2193 = vmatprep.subr.bf16.mxu0 0
        %2194 = vmatpush1.bf16.msra.mxu0 %v1890
        %2195 = vmatprep.subr.bf16.mxu0 0
        %2196 = vmatpush1.bf16.msra.mxu0 %v1891
        %2197 = vmatprep.subr.bf16.mxu0 0
        %2198 = vmatpush1.bf16.msra.mxu0 %v1892
        %2199 = vmatprep.subr.bf16.mxu0 0
        %2200 = vmatpush1.bf16.msra.mxu0 %v1893
        %2201 = vmatprep.mubr.bf16.mxu0 %v1495
        %2202 = vmatmul.mubr.bf16.gmra.mrb[0].mxu0 %v1494
        %v2203 = vpop.f32.mrb[0].mxu0
        %v2204 = vadd.f32 %v2139, %v2203
        %v2205 = vpop.f32.mrb[0].mxu0
        %v2206 = vpop.f32.mrb[0].mxu0
        %v2207 = vadd.f32 %v2142, %v2206
        %v2208 = vpop.f32.mrb[0].mxu0
        %2209 = vmatprep.mubr.bf16.mxu0 %v1501
        %2210 = vmatmul.mubr.bf16.gmra.mrb[0].mxu0 %v1500
        %v2211 = vpop.f32.mrb[0].mxu0
        %v2212 = vadd.f32 %v2147, %v2211
        %v2213 = vpop.f32.mrb[0].mxu0
        %v2214 = vpop.f32.mrb[0].mxu0
        %v2215 = vadd.f32 %v2150, %v2214
        %v2216 = vpop.f32.mrb[0].mxu0
        %2217 = vmatprep.mubr.bf16.mxu0 %v1507
        %2218 = vmatmul.mubr.bf16.gmra.mrb[0].mxu0 %v1506
        %v2219 = vpop.f32.mrb[0].mxu0
        %v2220 = vadd.f32 %v2155, %v2219
        %v2221 = vpop.f32.mrb[0].mxu0
        %v2222 = vpop.f32.mrb[0].mxu0
        %v2223 = vadd.f32 %v2158, %v2222
        %v2224 = vpop.f32.mrb[0].mxu0
        %2225 = vmatprep.mubr.bf16.mxu0 %v1513
        %2226 = vmatmul.mubr.bf16.gmra.mrb[0].mxu0 %v1512
        %v2227 = vpop.f32.mrb[0].mxu0
        %v2228 = vadd.f32 %v2163, %v2227
        %v2229 = vpop.f32.mrb[0].mxu0
        %v2230 = vpop.f32.mrb[0].mxu0
        %v2231 = vadd.f32 %v2166, %v2230
        %v2232 = vpop.f32.mrb[0].mxu0
        %2233 = vdwg.mxu0
        %2234 = vmatprep.subr.bf16.mxu0 0
        %2235 = vmatpush1.bf16.msra.mxu0 %v1894
        %2236 = vmatprep.subr.bf16.mxu0 0
        %2237 = vmatpush1.bf16.msra.mxu0 %v1895
        %2238 = vmatprep.subr.bf16.mxu0 0
        %2239 = vmatpush1.bf16.msra.mxu0 %v1896
        %2240 = vmatprep.subr.bf16.mxu0 0
        %2241 = vmatpush1.bf16.msra.mxu0 %v1897
        %2242 = vmatprep.subr.bf16.mxu0 0
        %2243 = vmatpush1.bf16.msra.mxu0 %v1898
        %2244 = vmatprep.subr.bf16.mxu0 0
        %2245 = vmatpush1.bf16.msra.mxu0 %v1899
        %2246 = vmatprep.subr.bf16.mxu0 0
        %2247 = vmatpush1.bf16.msra.mxu0 %v1900
        %2248 = vmatprep.subr.bf16.mxu0 0
        %2249 = vmatpush1.bf16.msra.mxu0 %v1901
        %2250 = vmatprep.subr.bf16.mxu0 0
        %2251 = vmatpush1.bf16.msra.mxu0 0
        %2252 = vmatprep.subr.bf16.mxu0 0
        %2253 = vmatpush1.bf16.msra.mxu0 0
        %2254 = vmatprep.subr.bf16.mxu0 0
        %2255 = vmatpush1.bf16.msra.mxu0 0
        %2256 = vmatprep.subr.bf16.mxu0 0
        %2257 = vmatpush1.bf16.msra.mxu0 0
        %2258 = vmatprep.subr.bf16.mxu0 0
        %2259 = vmatpush1.bf16.msra.mxu0 0
        %2260 = vmatprep.subr.bf16.mxu0 0
        %2261 = vmatpush1.bf16.msra.mxu0 0
        %2262 = vmatprep.subr.bf16.mxu0 0
        %2263 = vmatpush1.bf16.msra.mxu0 0
        %2264 = vmatprep.subr.bf16.mxu0 0
        %2265 = vmatpush1.bf16.msra.mxu0 0
        %2266 = vmatprep.mubr.bf16.mxu0 0
        %2267 = vmatmul.mubr.bf16.gmra.mrb[0].mxu0 %v1496
        %v2268 = vpop.f32.mrb[0].mxu0
        %v2269 = vadd.f32 %v2204, %v2268
        %v2270 = vpop.f32.mrb[0].mxu0
        %v2271 = vpop.f32.mrb[0].mxu0
        %v2272 = vadd.f32 %v2207, %v2271
        %v2273 = vpop.f32.mrb[0].mxu0
        %2274 = vmatprep.mubr.bf16.mxu0 0
        %2275 = vmatmul.mubr.bf16.gmra.mrb[0].mxu0 %v1502
        %v2276 = vpop.f32.mrb[0].mxu0
        %v2277 = vadd.f32 %v2212, %v2276
        %v2278 = vpop.f32.mrb[0].mxu0
        %v2279 = vpop.f32.mrb[0].mxu0
        %v2280 = vadd.f32 %v2215, %v2279
        %v2281 = vpop.f32.mrb[0].mxu0
        %2282 = vmatprep.mubr.bf16.mxu0 0
        %2283 = vmatmul.mubr.bf16.gmra.mrb[0].mxu0 %v1508
        %v2284 = vpop.f32.mrb[0].mxu0
        %v2285 = vadd.f32 %v2220, %v2284
        %v2286 = vpop.f32.mrb[0].mxu0
        %v2287 = vpop.f32.mrb[0].mxu0
        %v2288 = vadd.f32 %v2223, %v2287
        %v2289 = vpop.f32.mrb[0].mxu0
        %2290 = vmatprep.mubr.bf16.mxu0 0
        %2291 = vmatmul.mubr.bf16.gmra.mrb[0].mxu0 %v1514
        %v2292 = vpop.f32.mrb[0].mxu0
        %v2293 = vadd.f32 %v2228, %v2292
        %v2294 = vpop.f32.mrb[0].mxu0
        %v2295 = vpop.f32.mrb[0].mxu0
        %v2296 = vadd.f32 %v2231, %v2295
        %v2297 = vpop.f32.mrb[0].mxu0
        %2298 = vdwg.mxu0
        %s2299 = scalar_lea.vmem %s3, %s21
        %v2300 = vld [vmem:[%s2299] sm:$0x1]
        %v2301 = vlaneseq
        %v2302 = vshrl.u32 %v2301, 7
        %v2303 = vsub.s32 0, %v2302
        %v2304 = vrot.slane %v2300, %v2303
        %v2305 = vmul.f32 %v2269, %v2304
        %v2306 = vmul.f32 %v2272, %v2304
        %v2307 = vmul.f32 %v2277, %v2304
        %v2308 = vmul.f32 %v2280, %v2304
        %v2309 = vmul.f32 %v2285, %v2304
        %v2310 = vmul.f32 %v2288, %v2304
        %v2311 = vmul.f32 %v2293, %v2304
        %v2312 = vmul.f32 %v2296, %v2304
        %s2313 = scalar_lea.vmem %s4, %s21
        %v2314 = vld [vmem:[%s2313] sm:$0x1]
        %v2315 = vlaneseq
        %v2316 = vshrl.u32 %v2315, 7
        %v2317 = vsub.s32 0, %v2316
        %v2318 = vrot.slane %v2314, %v2317
        %v2319 = vadd.f32 %v2305, %v2318
        %v2320 = vadd.f32 %v2306, %v2318
        %v2321 = vadd.f32 %v2307, %v2318
        %v2322 = vadd.f32 %v2308, %v2318
        %v2323 = vadd.f32 %v2309, %v2318
        %v2324 = vadd.f32 %v2310, %v2318
        %v2325 = vadd.f32 %v2311, %v2318
        %v2326 = vadd.f32 %v2312, %v2318
        %v2327 = vmax.f32 %v2319, 0.0
        %v2328 = vmax.f32 %v2320, 0.0
        %v2329 = vmax.f32 %v2321, 0.0
        %v2330 = vmax.f32 %v2322, 0.0
        %v2331 = vmax.f32 %v2323, 0.0
        %v2332 = vmax.f32 %v2324, 0.0
        %v2333 = vmax.f32 %v2325, 0.0
        %v2334 = vmax.f32 %v2326, 0.0
        %v2335 = vpack.c.bf16 %v2327, %v2327
        %v2336 = vpack.c.bf16 %v2328, %v2328
        %v2337 = vpack.c.bf16 %v2329, %v2329
        %v2338 = vpack.c.bf16 %v2330, %v2330
        %v2339 = vpack.c.bf16 %v2331, %v2331
        %v2340 = vpack.c.bf16 %v2332, %v2332
        %v2341 = vpack.c.bf16 %v2333, %v2333
        %v2342 = vpack.c.bf16 %v2334, %v2334
        %v2351 = vunpack.c.l.b16 %v2335
        %v2352 = vunpack.c.l.b16 %v2336
        %v2353 = vunpack.c.l.b16 %v2337
        %v2354 = vunpack.c.l.b16 %v2338
        %v2355 = vunpack.c.l.b16 %v2339
        %v2356 = vunpack.c.l.b16 %v2340
        %v2357 = vunpack.c.l.b16 %v2341
        %v2358 = vunpack.c.l.b16 %v2342
        %v2359 = vpack.c.b16 %v2351, %v2351
        %v2360 = vpack.c.b16 %v2352, %v2352
        %v2361 = vpack.c.b16 %v2353, %v2353
        %v2362 = vpack.c.b16 %v2354, %v2354
        %v2363 = vpack.c.b16 %v2355, %v2355
        %v2364 = vpack.c.b16 %v2356, %v2356
        %v2365 = vpack.c.b16 %v2357, %v2357
        %v2366 = vpack.c.b16 %v2358, %v2358
        %v2368 = vshrl.u32 %v2359, 16
        %v2370 = vrot.slane %v2368, 7
        %v2371 = vshll.u32 %v2359, 16
        %v2373 = vor.u32 %v2370, %v2371
        %v2374 = vrot.slane %v2370, 4
        %v2376 = vshrl.u32 %v2360, 16
        %v2378 = vrot.slane %v2376, 7
        %v2379 = vshll.u32 %v2360, 16
        %v2381 = vor.u32 %v2378, %v2379
        %v2382 = vrot.slane %v2378, 4
        %v2384 = vshrl.u32 %v2361, 16
        %v2386 = vrot.slane %v2384, 7
        %v2387 = vshll.u32 %v2361, 16
        %v2389 = vor.u32 %v2386, %v2387
        %v2390 = vrot.slane %v2386, 4
        %v2392 = vshrl.u32 %v2362, 16
        %v2394 = vrot.slane %v2392, 7
        %v2395 = vshll.u32 %v2362, 16
        %v2397 = vor.u32 %v2394, %v2395
        %v2398 = vrot.slane %v2394, 4
        %v2400 = vshrl.u32 %v2363, 16
        %v2402 = vrot.slane %v2400, 7
        %v2403 = vshll.u32 %v2363, 16
        %v2405 = vor.u32 %v2402, %v2403
        %v2406 = vrot.slane %v2402, 4
        %v2408 = vshrl.u32 %v2364, 16
        %v2410 = vrot.slane %v2408, 7
        %v2411 = vshll.u32 %v2364, 16
        %v2413 = vor.u32 %v2410, %v2411
        %v2414 = vrot.slane %v2410, 4
        %v2416 = vshrl.u32 %v2365, 16
        %v2418 = vrot.slane %v2416, 7
        %v2419 = vshll.u32 %v2365, 16
        %v2421 = vor.u32 %v2418, %v2419
        %v2422 = vrot.slane %v2418, 4
        %v2424 = vshrl.u32 %v2366, 16
        %v2426 = vrot.slane %v2424, 7
        %v2427 = vshll.u32 %v2366, 16
        %v2429 = vor.u32 %v2426, %v2427
        %v2430 = vrot.slane %v2426, 4
        %s2447 = scalar_lea.vmem [#allocation2], 8
        %vm2448 = vcmask 1043456
        %vm2449 = vsmask.f32 7938
        %vm2450 = vmand %vm2448, %vm2449
        %v2451 = vld [vmem:[%s2447] sm:$0xf]
        %v2452 = vsel %vm2450, %v2373, %v2451
        %2453 = vst [vmem:[%s2447] sm:$0xf] %v2452
        %vm2454 = vcmask 1040384
        %vm2455 = vsmask.f32 256
        %vm2456 = vmand %vm2454, %vm2455
        %v2457 = vld [vmem:[%s2447 + $0x4] sm:$0x1]
        %v2458 = vsel %vm2456, %v2374, %v2457
        %2459 = vst [vmem:[%s2447 + $0x4] sm:$0x1] %v2458
        %v2460 = vld [vmem:[%s2447 + $0x8] sm:$0xf]
        %v2461 = vsel %vm2450, %v2381, %v2460
        %2462 = vst [vmem:[%s2447 + $0x8] sm:$0xf] %v2461
        %v2463 = vld [vmem:[%s2447 + $0xc] sm:$0x1]
        %v2464 = vsel %vm2456, %v2382, %v2463
        %2465 = vst [vmem:[%s2447 + $0xc] sm:$0x1] %v2464
        %v2466 = vld [vmem:[%s2447 + $0x10] sm:$0xf]
        %v2467 = vsel %vm2450, %v2389, %v2466
        %2468 = vst [vmem:[%s2447 + $0x10] sm:$0xf] %v2467
        %v2469 = vld [vmem:[%s2447 + $0x14] sm:$0x1]
        %v2470 = vsel %vm2456, %v2390, %v2469
        %2471 = vst [vmem:[%s2447 + $0x14] sm:$0x1] %v2470
        %v2472 = vld [vmem:[%s2447 + $0x18] sm:$0xf]
        %v2473 = vsel %vm2450, %v2397, %v2472
        %2474 = vst [vmem:[%s2447 + $0x18] sm:$0xf] %v2473
        %v2475 = vld [vmem:[%s2447 + $0x1c] sm:$0x1]
        %v2476 = vsel %vm2456, %v2398, %v2475
        %2477 = vst [vmem:[%s2447 + $0x1c] sm:$0x1] %v2476
        %v2478 = vld [vmem:[%s2447 + $0x20] sm:$0xf]
        %v2479 = vsel %vm2450, %v2405, %v2478
        %2480 = vst [vmem:[%s2447 + $0x20] sm:$0xf] %v2479
        %v2481 = vld [vmem:[%s2447 + $0x24] sm:$0x1]
        %v2482 = vsel %vm2456, %v2406, %v2481
        %2483 = vst [vmem:[%s2447 + $0x24] sm:$0x1] %v2482
        %v2484 = vld [vmem:[%s2447 + $0x28] sm:$0xf]
        %v2485 = vsel %vm2450, %v2413, %v2484
        %2486 = vst [vmem:[%s2447 + $0x28] sm:$0xf] %v2485
        %v2487 = vld [vmem:[%s2447 + $0x2c] sm:$0x1]
        %v2488 = vsel %vm2456, %v2414, %v2487
        %2489 = vst [vmem:[%s2447 + $0x2c] sm:$0x1] %v2488
        %v2490 = vld [vmem:[%s2447 + $0x30] sm:$0xf]
        %v2491 = vsel %vm2450, %v2421, %v2490
        %2492 = vst [vmem:[%s2447 + $0x30] sm:$0xf] %v2491
        %v2493 = vld [vmem:[%s2447 + $0x34] sm:$0x1]
        %v2494 = vsel %vm2456, %v2422, %v2493
        %2495 = vst [vmem:[%s2447 + $0x34] sm:$0x1] %v2494
        %v2496 = vld [vmem:[%s2447 + $0x38] sm:$0xf]
        %v2497 = vsel %vm2450, %v2429, %v2496
        %2498 = vst [vmem:[%s2447 + $0x38] sm:$0xf] %v2497
        %v2499 = vld [vmem:[%s2447 + $0x3c] sm:$0x1]
        %v2500 = vsel %vm2456, %v2430, %v2499
        %2501 = vst [vmem:[%s2447 + $0x3c] sm:$0x1] %v2500
        %v2502 = vpack.c.bf16 %v2328, %v2327
        %v2503 = vpack.c.bf16 %v2330, %v2329
        %v2504 = vpack.c.bf16 %v2332, %v2331
        %v2505 = vpack.c.bf16 %v2334, %v2333
        %v2510 = vunpack.c.l.b16 %v2502
        %v2511 = vunpack.c.h.b16 %v2502
        %v2512 = vunpack.c.l.b16 %v2503
        %v2513 = vunpack.c.h.b16 %v2503
        %v2514 = vunpack.c.l.b16 %v2504
        %v2515 = vunpack.c.h.b16 %v2504
        %v2516 = vunpack.c.l.b16 %v2505
        %v2517 = vunpack.c.h.b16 %v2505
        %v2518 = vpack.c.b16 %v2510, %v2510
        %v2519 = vpack.c.b16 %v2511, %v2511
        %v2520 = vpack.c.b16 %v2512, %v2512
        %v2521 = vpack.c.b16 %v2513, %v2513
        %v2522 = vpack.c.b16 %v2514, %v2514
        %v2523 = vpack.c.b16 %v2515, %v2515
        %v2524 = vpack.c.b16 %v2516, %v2516
        %v2525 = vpack.c.b16 %v2517, %v2517
        %2534 = vst [vmem:[%s277] sm:$0xf] %v2518
        %2535 = vst [vmem:[%s277 + $0x4] sm:$0xf] %v2519
        %2536 = vst [vmem:[%s277 + $0x8] sm:$0xf] %v2520
        %2537 = vst [vmem:[%s277 + $0xc] sm:$0xf] %v2521
        %2538 = vst [vmem:[%s277 + $0x10] sm:$0xf] %v2522
        %2539 = vst [vmem:[%s277 + $0x14] sm:$0xf] %v2523
        %2540 = vst [vmem:[%s277 + $0x18] sm:$0xf] %v2524
        %2541 = vst [vmem:[%s277 + $0x1c] sm:$0xf] %v2525
      $region48: #{point_pillar_forward.6} parent=39 // pred_fallthru
        _
      %p2542 = scmp.lt.s32.totalorder %s20, 1
      %s2543 = scalar_select %p2542, %s20, 1
      %s2544 = smul.addr %s2543, 8
      %s2545 = smul.addr %s2544, 4
      %s2546 = scalar_lea.vmem %s5, %s2545
      // Predicated region
      $region49: #{point_pillar_forward.6} parent=39 // pred_check
        %p2547 = pneg %p167
      $region50: #{point_pillar_forward.6} parent=39 // pred_check_branch
        %2549 = sbr.rel (%p2547) target = $region52
      $region51: #{point_pillar_forward.6} parent=39 // pred_region
        _
      $region52: #{point_pillar_forward.6} parent=39 // pred_fallthru
        _
    $region40: #{point_pillar_forward.6} parent=5 // pred_fallthru
      _
    %p2550 = scmp.le.s32.totalorder 2, %s11
    // Predicated region
    $region53: #{point_pillar_forward.6} parent=5 // pred_check
      %p2551 = pneg %p2550
    $region54: #{point_pillar_forward.6} parent=5 // pred_check_branch
      %2553 = sbr.rel (%p2551) target = $region56
    $region55: #{point_pillar_forward.6} parent=5 // pred_region
      %s2554 = ssub.s32 %s11, 2
      // Predicated region
      $region57: #{point_pillar_forward.6} parent=55 // pred_check
        %p2555 = pneg %p173
      $region58: #{point_pillar_forward.6} parent=55 // pred_check_branch
        %2557 = sbr.rel (%p2555) target = $region60
      $region59: #{point_pillar_forward.6} parent=55 // pred_region
        %p2558 = scmp.lt.s32.totalorder %s22, 1
        %s2559 = scalar_select %p2558, %s22, 1
        %s2560 = smul.addr %s2559, 8
        %s2561 = smul.addr %s2560, 4
        %s2562 = scalar_lea.vmem %s5, %s2561
      $region60: #{point_pillar_forward.6} parent=55 // pred_fallthru
        _
    $region56: #{point_pillar_forward.6} parent=5 // pred_fallthru
      _
  $region6: #{point_pillar_forward.6} parent=0 // loop_footer
    %s15 = sadd.s32 1, %s11
  $region7: #{point_pillar_forward.6} parent=0 // loop_footer_branch
    %10 = sbr.rel target = $region3
  $region8: #{point_pillar_forward.6} parent=0 // loop_exit
    _

// kernel: point_pillar_forward.7
$region0: #{point_pillar_forward.7}
  #allocation0 [shape = 'u32[]', space=smem, size = 0x4, offset = 0x4, fixed_abs, tag = 'smem constant byte address 0x4 - core index']
  #allocation1 [shape = 'u32[144,128]{1,0:T(1,128)}', space=vmem, size = 0x12000, scoped, tag = 'internal scratch']
  %s0 = inlined_call_operand.vmem [shape: bf16[2,64,512], index: 0, kind: input, shape index: {}]
  %s1 = inlined_call_operand.vmem [shape: bf16[2,64,128], index: 1, kind: input, shape index: {}]
  %s2 = inlined_call_operand.vmem [shape: bf16[512,512], index: 2, kind: input, shape index: {}]
  %s3 = inlined_call_operand.vmem [shape: f32[1,512], index: 3, kind: input, shape index: {}]
  %s4 = inlined_call_operand.vmem [shape: f32[1,512], index: 4, kind: input, shape index: {}]
  %s5 = inlined_call_operand.vmem [shape: bf16[128,512], index: 5, kind: input, shape index: {}]
  %s6 = inlined_call_operand.vmem [shape: f32[1,512], index: 6, kind: input, shape index: {}]
  %s7 = inlined_call_operand.vmem [shape: f32[1,512], index: 7, kind: input, shape index: {}]
  %s8 = inlined_call_operand.vmem [shape: bf16[512,64], index: 8, kind: input, shape index: {}]
  %s9 = inlined_call_operand.vmem [shape: bf16[512,64], index: 9, kind: input, shape index: {}]
  %s10 = inlined_call_operand.vmem [shape: f32[1,64], index: 10, kind: input, shape index: {}]
  %s11 = inlined_call_operand.vmem [shape: f32[2,64,64], index: 11, kind: output, shape index: {}]
  %s12 = sld [smem:[#allocation0]]
  $region77: #{point_pillar_forward.7} parent=0
    _
  %s14 = ssub.s32 1, %s12
  %s15 = scalar_select 0, %s14, %s12
  loop: start=0, step=1, limit=4
  $region2: #{point_pillar_forward.7} parent=0 // loop_pre_header
    _
  $region3: #{point_pillar_forward.7} parent=0 // loop_header
    %s17 = sphi 0, %s21
    %p18 = scmp.ge.s32.totalorder %s17, 4
    %s27 = sphi 0, %s29
    %s30 = sphi 0, %s27
    %s31 = sphi 0, %s30
    %s47 = sphi 0, %s31
    %s53 = sphi 0, %s55
    %s56 = sphi 0, %s53
    %s57 = sphi 0, %s56
    %s73 = sphi 0, %s57
    %s77 = sphi 0, %s77
    %s79 = sphi 0, %s77
    %s80 = sphi 0, %s79
    %s94 = sphi 0, %s80
    %s98 = sphi 0, %s98
    %s100 = sphi 0, %s98
    %s101 = sphi 0, %s100
    %s115 = sphi 0, %s101
    %s119 = sphi 0, %s119
    %s121 = sphi 0, %s119
    %s122 = sphi 0, %s121
    %s136 = sphi 0, %s122
    %s140 = sphi 0, %s140
    %s142 = sphi 0, %s140
    %s143 = sphi 0, %s142
    %s157 = sphi 0, %s143
    %s161 = sphi 0, %s161
    %s163 = sphi 0, %s161
    %s164 = sphi 0, %s163
    %s178 = sphi 0, %s164
    %s182 = sphi 0, %s182
    %s184 = sphi 0, %s182
    %s185 = sphi 0, %s184
    %s199 = sphi 0, %s185
    %s203 = sphi 0, %s203
    %s205 = sphi 0, %s203
    %s206 = sphi 0, %s205
    %s220 = sphi 0, %s206
    %s224 = sphi 0, %s224
    %s226 = sphi 0, %s224
    %s227 = sphi 0, %s226
    %s241 = sphi 0, %s227
    %s245 = sphi 0, %s245
    %s247 = sphi 0, %s245
    %s248 = sphi 0, %s247
    %s262 = sphi 0, %s248
    %s268 = sphi 0, %s270
    %s271 = sphi 0, %s268
    %s272 = sphi 0, %s271
    %s288 = sphi 0, %s272
  $region4: #{point_pillar_forward.7} parent=0 // loop_header_branch
    %20 = sbr.rel (%p18) target = $region8
  $region5: #{point_pillar_forward.7} parent=0 // loop_body
    %s22 = ssub.s32 %s17, 1
    %s23 = ssub.s32 %s17, 2
    %s24 = sadd.s32 %s17, 1
    %s25 = ssub.s32 %s17, %s24
    %p26 = scmp.eq.s32.totalorder %s25, 0
    %s28 = sadd.s32 %s27, 1
    %s29 = scalar_select %p26, %s27, %s28
    %p32 = pneg %p26
    %p33 = scmp.eq.s32.totalorder %s17, 1
    %p34 = por %p32, %p33
    %p35 = scmp.ne.s32.totalorder %s27, %s30
    %p36 = scmp.eq.s32.totalorder %s17, 0
    %p37 = por %p35, %p36
    %p38 = scmp.ne.s32.totalorder %s27, %s30
    %p39 = scmp.eq.s32.totalorder %s22, 1
    %p40 = por %p38, %p39
    %p41 = scmp.ne.s32.totalorder %s30, %s31
    %p42 = scmp.eq.s32.totalorder %s22, 0
    %p43 = por %p41, %p42
    %p44 = scmp.ne.s32.totalorder %s30, %s31
    %p45 = scmp.eq.s32.totalorder %s23, 1
    %p46 = por %p44, %p45
    %p48 = scmp.ne.s32.totalorder %s31, %s47
    %p49 = scmp.eq.s32.totalorder %s23, 0
    %p50 = por %p48, %p49
    %s51 = ssub.s32 %s17, %s24
    %p52 = scmp.eq.s32.totalorder %s51, 0
    %s54 = sadd.s32 %s53, 1
    %s55 = scalar_select %p52, %s53, %s54
    %p58 = pneg %p52
    %p59 = scmp.eq.s32.totalorder %s17, 1
    %p60 = por %p58, %p59
    %p61 = scmp.ne.s32.totalorder %s53, %s56
    %p62 = scmp.eq.s32.totalorder %s17, 0
    %p63 = por %p61, %p62
    %p64 = scmp.ne.s32.totalorder %s53, %s56
    %p65 = scmp.eq.s32.totalorder %s22, 1
    %p66 = por %p64, %p65
    %p67 = scmp.ne.s32.totalorder %s56, %s57
    %p68 = scmp.eq.s32.totalorder %s22, 0
    %p69 = por %p67, %p68
    %p70 = scmp.ne.s32.totalorder %s56, %s57
    %p71 = scmp.eq.s32.totalorder %s23, 1
    %p72 = por %p70, %p71
    %p74 = scmp.ne.s32.totalorder %s57, %s73
    %p75 = scmp.eq.s32.totalorder %s23, 0
    %p76 = por %p74, %p75
    %s78 = sadd.s32 %s77, 1
    %p81 = scmp.eq.s32.totalorder %s17, 1
    %p82 = scmp.ne.s32.totalorder %s77, %s79
    %p83 = scmp.eq.s32.totalorder %s17, 0
    %p84 = por %p82, %p83
    %p85 = scmp.ne.s32.totalorder %s77, %s79
    %p86 = scmp.eq.s32.totalorder %s22, 1
    %p87 = por %p85, %p86
    %p88 = scmp.ne.s32.totalorder %s79, %s80
    %p89 = scmp.eq.s32.totalorder %s22, 0
    %p90 = por %p88, %p89
    %p91 = scmp.ne.s32.totalorder %s79, %s80
    %p92 = scmp.eq.s32.totalorder %s23, 1
    %p93 = por %p91, %p92
    %p95 = scmp.ne.s32.totalorder %s80, %s94
    %p96 = scmp.eq.s32.totalorder %s23, 0
    %p97 = por %p95, %p96
    %s99 = sadd.s32 %s98, 1
    %p102 = scmp.eq.s32.totalorder %s17, 1
    %p103 = scmp.ne.s32.totalorder %s98, %s100
    %p104 = scmp.eq.s32.totalorder %s17, 0
    %p105 = por %p103, %p104
    %p106 = scmp.ne.s32.totalorder %s98, %s100
    %p107 = scmp.eq.s32.totalorder %s22, 1
    %p108 = por %p106, %p107
    %p109 = scmp.ne.s32.totalorder %s100, %s101
    %p110 = scmp.eq.s32.totalorder %s22, 0
    %p111 = por %p109, %p110
    %p112 = scmp.ne.s32.totalorder %s100, %s101
    %p113 = scmp.eq.s32.totalorder %s23, 1
    %p114 = por %p112, %p113
    %p116 = scmp.ne.s32.totalorder %s101, %s115
    %p117 = scmp.eq.s32.totalorder %s23, 0
    %p118 = por %p116, %p117
    %s120 = sadd.s32 %s119, 1
    %p123 = scmp.eq.s32.totalorder %s17, 1
    %p124 = scmp.ne.s32.totalorder %s119, %s121
    %p125 = scmp.eq.s32.totalorder %s17, 0
    %p126 = por %p124, %p125
    %p127 = scmp.ne.s32.totalorder %s119, %s121
    %p128 = scmp.eq.s32.totalorder %s22, 1
    %p129 = por %p127, %p128
    %p130 = scmp.ne.s32.totalorder %s121, %s122
    %p131 = scmp.eq.s32.totalorder %s22, 0
    %p132 = por %p130, %p131
    %p133 = scmp.ne.s32.totalorder %s121, %s122
    %p134 = scmp.eq.s32.totalorder %s23, 1
    %p135 = por %p133, %p134
    %p137 = scmp.ne.s32.totalorder %s122, %s136
    %p138 = scmp.eq.s32.totalorder %s23, 0
    %p139 = por %p137, %p138
    %s141 = sadd.s32 %s140, 1
    %p144 = scmp.eq.s32.totalorder %s17, 1
    %p145 = scmp.ne.s32.totalorder %s140, %s142
    %p146 = scmp.eq.s32.totalorder %s17, 0
    %p147 = por %p145, %p146
    %p148 = scmp.ne.s32.totalorder %s140, %s142
    %p149 = scmp.eq.s32.totalorder %s22, 1
    %p150 = por %p148, %p149
    %p151 = scmp.ne.s32.totalorder %s142, %s143
    %p152 = scmp.eq.s32.totalorder %s22, 0
    %p153 = por %p151, %p152
    %p154 = scmp.ne.s32.totalorder %s142, %s143
    %p155 = scmp.eq.s32.totalorder %s23, 1
    %p156 = por %p154, %p155
    %p158 = scmp.ne.s32.totalorder %s143, %s157
    %p159 = scmp.eq.s32.totalorder %s23, 0
    %p160 = por %p158, %p159
    %s162 = sadd.s32 %s161, 1
    %p165 = scmp.eq.s32.totalorder %s17, 1
    %p166 = scmp.ne.s32.totalorder %s161, %s163
    %p167 = scmp.eq.s32.totalorder %s17, 0
    %p168 = por %p166, %p167
    %p169 = scmp.ne.s32.totalorder %s161, %s163
    %p170 = scmp.eq.s32.totalorder %s22, 1
    %p171 = por %p169, %p170
    %p172 = scmp.ne.s32.totalorder %s163, %s164
    %p173 = scmp.eq.s32.totalorder %s22, 0
    %p174 = por %p172, %p173
    %p175 = scmp.ne.s32.totalorder %s163, %s164
    %p176 = scmp.eq.s32.totalorder %s23, 1
    %p177 = por %p175, %p176
    %p179 = scmp.ne.s32.totalorder %s164, %s178
    %p180 = scmp.eq.s32.totalorder %s23, 0
    %p181 = por %p179, %p180
    %s183 = sadd.s32 %s182, 1
    %p186 = scmp.eq.s32.totalorder %s17, 1
    %p187 = scmp.ne.s32.totalorder %s182, %s184
    %p188 = scmp.eq.s32.totalorder %s17, 0
    %p189 = por %p187, %p188
    %p190 = scmp.ne.s32.totalorder %s182, %s184
    %p191 = scmp.eq.s32.totalorder %s22, 1
    %p192 = por %p190, %p191
    %p193 = scmp.ne.s32.totalorder %s184, %s185
    %p194 = scmp.eq.s32.totalorder %s22, 0
    %p195 = por %p193, %p194
    %p196 = scmp.ne.s32.totalorder %s184, %s185
    %p197 = scmp.eq.s32.totalorder %s23, 1
    %p198 = por %p196, %p197
    %p200 = scmp.ne.s32.totalorder %s185, %s199
    %p201 = scmp.eq.s32.totalorder %s23, 0
    %p202 = por %p200, %p201
    %s204 = sadd.s32 %s203, 1
    %p207 = scmp.eq.s32.totalorder %s17, 1
    %p208 = scmp.ne.s32.totalorder %s203, %s205
    %p209 = scmp.eq.s32.totalorder %s17, 0
    %p210 = por %p208, %p209
    %p211 = scmp.ne.s32.totalorder %s203, %s205
    %p212 = scmp.eq.s32.totalorder %s22, 1
    %p213 = por %p211, %p212
    %p214 = scmp.ne.s32.totalorder %s205, %s206
    %p215 = scmp.eq.s32.totalorder %s22, 0
    %p216 = por %p214, %p215
    %p217 = scmp.ne.s32.totalorder %s205, %s206
    %p218 = scmp.eq.s32.totalorder %s23, 1
    %p219 = por %p217, %p218
    %p221 = scmp.ne.s32.totalorder %s206, %s220
    %p222 = scmp.eq.s32.totalorder %s23, 0
    %p223 = por %p221, %p222
    %s225 = sadd.s32 %s224, 1
    %p228 = scmp.eq.s32.totalorder %s17, 1
    %p229 = scmp.ne.s32.totalorder %s224, %s226
    %p230 = scmp.eq.s32.totalorder %s17, 0
    %p231 = por %p229, %p230
    %p232 = scmp.ne.s32.totalorder %s224, %s226
    %p233 = scmp.eq.s32.totalorder %s22, 1
    %p234 = por %p232, %p233
    %p235 = scmp.ne.s32.totalorder %s226, %s227
    %p236 = scmp.eq.s32.totalorder %s22, 0
    %p237 = por %p235, %p236
    %p238 = scmp.ne.s32.totalorder %s226, %s227
    %p239 = scmp.eq.s32.totalorder %s23, 1
    %p240 = por %p238, %p239
    %p242 = scmp.ne.s32.totalorder %s227, %s241
    %p243 = scmp.eq.s32.totalorder %s23, 0
    %p244 = por %p242, %p243
    %s246 = sadd.s32 %s245, 1
    %p249 = scmp.eq.s32.totalorder %s17, 1
    %p250 = scmp.ne.s32.totalorder %s245, %s247
    %p251 = scmp.eq.s32.totalorder %s17, 0
    %p252 = por %p250, %p251
    %p253 = scmp.ne.s32.totalorder %s245, %s247
    %p254 = scmp.eq.s32.totalorder %s22, 1
    %p255 = por %p253, %p254
    %p256 = scmp.ne.s32.totalorder %s247, %s248
    %p257 = scmp.eq.s32.totalorder %s22, 0
    %p258 = por %p256, %p257
    %p259 = scmp.ne.s32.totalorder %s247, %s248
    %p260 = scmp.eq.s32.totalorder %s23, 1
    %p261 = por %p259, %p260
    %p263 = scmp.ne.s32.totalorder %s248, %s262
    %p264 = scmp.eq.s32.totalorder %s23, 0
    %p265 = por %p263, %p264
    %s266 = ssub.s32 %s17, %s24
    %p267 = scmp.eq.s32.totalorder %s266, 0
    %s269 = sadd.s32 %s268, 1
    %s270 = scalar_select %p267, %s268, %s269
    %p273 = pneg %p267
    %p274 = scmp.eq.s32.totalorder %s17, 1
    %p275 = por %p273, %p274
    %p276 = scmp.ne.s32.totalorder %s268, %s271
    %p277 = scmp.eq.s32.totalorder %s17, 0
    %p278 = por %p276, %p277
    %p279 = scmp.ne.s32.totalorder %s268, %s271
    %p280 = scmp.eq.s32.totalorder %s22, 1
    %p281 = por %p279, %p280
    %p282 = scmp.ne.s32.totalorder %s271, %s272
    %p283 = scmp.eq.s32.totalorder %s22, 0
    %p284 = por %p282, %p283
    %p285 = scmp.ne.s32.totalorder %s271, %s272
    %p286 = scmp.eq.s32.totalorder %s23, 1
    %p287 = por %p285, %p286
    %p289 = scmp.ne.s32.totalorder %s272, %s288
    %p290 = scmp.eq.s32.totalorder %s23, 0
    %p291 = por %p289, %p290
    %p292 = scmp.le.s32.totalorder 1, %s17
    %p293 = scmp.lt.s32.totalorder %s17, 3
    %p294 = pnand %p292, %p293
    %p295 = pneg %p294
    // Predicated region
    $region9: #{point_pillar_forward.7} parent=5 // pred_check
      _
    $region10: #{point_pillar_forward.7} parent=5 // pred_check_branch
      %297 = sbr.rel (%p294) target = $region12
    $region11: #{point_pillar_forward.7} parent=5 // pred_region
      %s298 = ssub.s32 %s17, 1
      // Predicated region
      $region13: #{point_pillar_forward.7} parent=11 // pred_check
        %p299 = pneg %p90
      $region14: #{point_pillar_forward.7} parent=11 // pred_check_branch
        %301 = sbr.rel (%p299) target = $region16
      $region15: #{point_pillar_forward.7} parent=11 // pred_region
        _
      $region16: #{point_pillar_forward.7} parent=11 // pred_fallthru
        _
      // Predicated region
      $region17: #{point_pillar_forward.7} parent=11 // pred_check
        %p302 = pneg %p111
      $region18: #{point_pillar_forward.7} parent=11 // pred_check_branch
        %304 = sbr.rel (%p302) target = $region20
      $region19: #{point_pillar_forward.7} parent=11 // pred_region
        _
      $region20: #{point_pillar_forward.7} parent=11 // pred_fallthru
        _
      // Predicated region
      $region21: #{point_pillar_forward.7} parent=11 // pred_check
        %p305 = pneg %p132
      $region22: #{point_pillar_forward.7} parent=11 // pred_check_branch
        %307 = sbr.rel (%p305) target = $region24
      $region23: #{point_pillar_forward.7} parent=11 // pred_region
        _
      $region24: #{point_pillar_forward.7} parent=11 // pred_fallthru
        _
      // Predicated region
      $region25: #{point_pillar_forward.7} parent=11 // pred_check
        %p308 = pneg %p153
      $region26: #{point_pillar_forward.7} parent=11 // pred_check_branch
        %310 = sbr.rel (%p308) target = $region28
      $region27: #{point_pillar_forward.7} parent=11 // pred_region
        _
      $region28: #{point_pillar_forward.7} parent=11 // pred_fallthru
        _
      // Predicated region
      $region29: #{point_pillar_forward.7} parent=11 // pred_check
        %p311 = pneg %p174
      $region30: #{point_pillar_forward.7} parent=11 // pred_check_branch
        %313 = sbr.rel (%p311) target = $region32
      $region31: #{point_pillar_forward.7} parent=11 // pred_region
        _
      $region32: #{point_pillar_forward.7} parent=11 // pred_fallthru
        _
      // Predicated region
      $region33: #{point_pillar_forward.7} parent=11 // pred_check
        %p314 = pneg %p195
      $region34: #{point_pillar_forward.7} parent=11 // pred_check_branch
        %316 = sbr.rel (%p314) target = $region36
      $region35: #{point_pillar_forward.7} parent=11 // pred_region
        _
      $region36: #{point_pillar_forward.7} parent=11 // pred_fallthru
        _
      // Predicated region
      $region37: #{point_pillar_forward.7} parent=11 // pred_check
        %p317 = pneg %p216
      $region38: #{point_pillar_forward.7} parent=11 // pred_check_branch
        %319 = sbr.rel (%p317) target = $region40
      $region39: #{point_pillar_forward.7} parent=11 // pred_region
        _
      $region40: #{point_pillar_forward.7} parent=11 // pred_fallthru
        _
      // Predicated region
      $region41: #{point_pillar_forward.7} parent=11 // pred_check
        %p320 = pneg %p237
      $region42: #{point_pillar_forward.7} parent=11 // pred_check_branch
        %322 = sbr.rel (%p320) target = $region44
      $region43: #{point_pillar_forward.7} parent=11 // pred_region
        _
      $region44: #{point_pillar_forward.7} parent=11 // pred_fallthru
        _
      // Predicated region
      $region45: #{point_pillar_forward.7} parent=11 // pred_check
        %p323 = pneg %p258
      $region46: #{point_pillar_forward.7} parent=11 // pred_check_branch
        %325 = sbr.rel (%p323) target = $region48
      $region47: #{point_pillar_forward.7} parent=11 // pred_region
        _
      $region48: #{point_pillar_forward.7} parent=11 // pred_fallthru
        _
    $region12: #{point_pillar_forward.7} parent=5 // pred_fallthru
      _
    %p326 = scmp.lt.s32.totalorder %s17, 2
    // Predicated region
    $region49: #{point_pillar_forward.7} parent=5 // pred_check
      %p327 = pneg %p326
    $region50: #{point_pillar_forward.7} parent=5 // pred_check_branch
      %329 = sbr.rel (%p327) target = $region52
    $region51: #{point_pillar_forward.7} parent=5 // pred_region
      // Predicated region
      $region53: #{point_pillar_forward.7} parent=51 // pred_check
        %p330 = pneg %p37
      $region54: #{point_pillar_forward.7} parent=51 // pred_check_branch
        %332 = sbr.rel (%p330) target = $region56
      $region55: #{point_pillar_forward.7} parent=51 // pred_region
        %p333 = scmp.lt.s32.totalorder %s17, 1
        %s334 = scalar_select %p333, %s17, 1
        %s335 = smul.addr %s334, 32
        %s336 = smul.addr %s335, 4
        %s337 = scalar_lea.vmem %s0, %s336
      $region56: #{point_pillar_forward.7} parent=51 // pred_fallthru
        _
      // Predicated region
      $region57: #{point_pillar_forward.7} parent=51 // pred_check
        %p338 = pneg %p63
      $region58: #{point_pillar_forward.7} parent=51 // pred_check_branch
        %340 = sbr.rel (%p338) target = $region60
      $region59: #{point_pillar_forward.7} parent=51 // pred_region
        %p341 = scmp.lt.s32.totalorder %s17, 1
        %s342 = scalar_select %p341, %s17, 1
        %s343 = smul.addr %s342, 8
        %s344 = smul.addr %s343, 4
        %s345 = scalar_lea.vmem %s1, %s344
      $region60: #{point_pillar_forward.7} parent=51 // pred_fallthru
        _
    $region52: #{point_pillar_forward.7} parent=5 // pred_fallthru
      _
    %p346 = scmp.le.s32.totalorder 1, %s17
    %p347 = scmp.lt.s32.totalorder %s17, 3
    %p348 = pnand %p346, %p347
    %p349 = pneg %p348
    // Predicated region
    $region61: #{point_pillar_forward.7} parent=5 // pred_check
      _
    $region62: #{point_pillar_forward.7} parent=5 // pred_check_branch
      %351 = sbr.rel (%p348) target = $region64
    $region63: #{point_pillar_forward.7} parent=5 // pred_region
      %s352 = ssub.s32 %s17, 1
      %p353 = scmp.lt.s32.totalorder %s22, 1
      %s354 = scalar_select %p353, %s22, 1
      %s355 = smul.addr %s354, 32
      %s356 = smul.addr %s355, 4
      %s357 = scalar_lea.vmem %s0, %s356
      %p358 = pneg %p43
      %p359 = pneg %p40
      %p360 = scmp.lt.s32.totalorder %s22, 1
      %s361 = scalar_select %p360, %s22, 1
      %s362 = smul.addr %s361, 8
      %s363 = smul.addr %s362, 4
      %s364 = scalar_lea.vmem %s1, %s363
      %p365 = pneg %p69
      %p366 = pneg %p66
      %p367 = pneg %p90
      %p368 = pneg %p87
      %p369 = pneg %p111
      %p370 = pneg %p108
      %p371 = pneg %p132
      %p372 = pneg %p129
      %p373 = pneg %p153
      %p374 = pneg %p150
      %p375 = pneg %p174
      %p376 = pneg %p171
      %p377 = pneg %p195
      %p378 = pneg %p192
      %p379 = pneg %p216
      %p380 = pneg %p213
      %p381 = pneg %p237
      %p382 = pneg %p234
      %p383 = pneg %p258
      %p384 = pneg %p255
      %p385 = pneg %p284
      %p386 = pneg %p281
      %p387 = scmp.lt.s32.totalorder %s22, 1
      %s388 = scalar_select %p387, %s22, 1
      %s389 = smul.addr %s388, 8
      %s390 = smul.addr %s389, 8
      %s391 = scalar_lea.vmem %s11, %s390
      %p392 = scmp.lt.s32.totalorder %s22, 1
      %s393 = scalar_select %p392, %s22, 1
      %s394 = smul.addr %s393, 32
      %s395 = smul.addr %s394, 4
      %s396 = scalar_lea.vmem %s0, %s395
      %p397 = scmp.lt.s32.totalorder %s22, 1
      %s398 = scalar_select %p397, %s22, 1
      %s399 = smul.addr %s398, 8
      %s400 = smul.addr %s399, 4
      %s401 = scalar_lea.vmem %s1, %s400
      %p402 = scmp.lt.s32.totalorder %s22, 1
      %s403 = scalar_select %p402, %s22, 1
      %s404 = smul.addr %s403, 8
      %s405 = smul.addr %s404, 8
      %s406 = scalar_lea.vmem %s11, %s405
      %v408 = vld [vmem:[%s396] sm:$0xff]
      %v409 = vld [vmem:[%s396 + $0x8] sm:$0xff]
      %v410 = vld [vmem:[%s396 + $0x10] sm:$0xff]
      %v411 = vld [vmem:[%s396 + $0x18] sm:$0xff]
      %v412 = vld [vmem:[%s396 + $0x20] sm:$0xff]
      %v413 = vld [vmem:[%s396 + $0x28] sm:$0xff]
      %v414 = vld [vmem:[%s396 + $0x30] sm:$0xff]
      %v415 = vld [vmem:[%s396 + $0x38] sm:$0xff]
      %v416 = vld [vmem:[%s396 + $0x40] sm:$0xff]
      %v417 = vld [vmem:[%s396 + $0x48] sm:$0xff]
      %v418 = vld [vmem:[%s396 + $0x50] sm:$0xff]
      %v419 = vld [vmem:[%s396 + $0x58] sm:$0xff]
      %v420 = vld [vmem:[%s396 + $0x60] sm:$0xff]
      %v421 = vld [vmem:[%s396 + $0x68] sm:$0xff]
      %v422 = vld [vmem:[%s396 + $0x70] sm:$0xff]
      %v423 = vld [vmem:[%s396 + $0x78] sm:$0xff]
      %v424 = vld [vmem:[%s2] sm:$0xff]
      %v425 = vld [vmem:[%s2 + $0x8] sm:$0xff]
      %v426 = vld [vmem:[%s2 + $0x10] sm:$0xff]
      %v427 = vld [vmem:[%s2 + $0x18] sm:$0xff]
      %v428 = vld [vmem:[%s2 + $0x20] sm:$0xff]
      %v429 = vld [vmem:[%s2 + $0x28] sm:$0xff]
      %v430 = vld [vmem:[%s2 + $0x30] sm:$0xff]
      %v431 = vld [vmem:[%s2 + $0x38] sm:$0xff]
      %v432 = vld [vmem:[%s2 + $0x40] sm:$0xff]
      %v433 = vld [vmem:[%s2 + $0x48] sm:$0xff]
      %v434 = vld [vmem:[%s2 + $0x50] sm:$0xff]
      %v435 = vld [vmem:[%s2 + $0x58] sm:$0xff]
      %v436 = vld [vmem:[%s2 + $0x60] sm:$0xff]
      %v437 = vld [vmem:[%s2 + $0x68] sm:$0xff]
      %v438 = vld [vmem:[%s2 + $0x70] sm:$0xff]
      %v439 = vld [vmem:[%s2 + $0x78] sm:$0xff]
      %v440 = vld [vmem:[%s2 + $0x80] sm:$0xff]
      %v441 = vld [vmem:[%s2 + $0x88] sm:$0xff]
      %v442 = vld [vmem:[%s2 + $0x90] sm:$0xff]
      %v443 = vld [vmem:[%s2 + $0x98] sm:$0xff]
      %v444 = vld [vmem:[%s2 + $0xa0] sm:$0xff]
      %v445 = vld [vmem:[%s2 + $0xa8] sm:$0xff]
      %v446 = vld [vmem:[%s2 + $0xb0] sm:$0xff]
      %v447 = vld [vmem:[%s2 + $0xb8] sm:$0xff]
      %v448 = vld [vmem:[%s2 + $0xc0] sm:$0xff]
      %v449 = vld [vmem:[%s2 + $0xc8] sm:$0xff]
      %v450 = vld [vmem:[%s2 + $0xd0] sm:$0xff]
      %v451 = vld [vmem:[%s2 + $0xd8] sm:$0xff]
      %v452 = vld [vmem:[%s2 + $0xe0] sm:$0xff]
      %v453 = vld [vmem:[%s2 + $0xe8] sm:$0xff]
      %v454 = vld [vmem:[%s2 + $0xf0] sm:$0xff]
      %v455 = vld [vmem:[%s2 + $0xf8] sm:$0xff]
      %v456 = vld [vmem:[%s2 + $0x100] sm:$0xff]
      %v457 = vld [vmem:[%s2 + $0x108] sm:$0xff]
      %v458 = vld [vmem:[%s2 + $0x110] sm:$0xff]
      %v459 = vld [vmem:[%s2 + $0x118] sm:$0xff]
      %v460 = vld [vmem:[%s2 + $0x120] sm:$0xff]
      %v461 = vld [vmem:[%s2 + $0x128] sm:$0xff]
      %v462 = vld [vmem:[%s2 + $0x130] sm:$0xff]
      %v463 = vld [vmem:[%s2 + $0x138] sm:$0xff]
      %v464 = vld [vmem:[%s2 + $0x140] sm:$0xff]
      %v465 = vld [vmem:[%s2 + $0x148] sm:$0xff]
      %v466 = vld [vmem:[%s2 + $0x150] sm:$0xff]
      %v467 = vld [vmem:[%s2 + $0x158] sm:$0xff]
      %v468 = vld [vmem:[%s2 + $0x160] sm:$0xff]
      %v469 = vld [vmem:[%s2 + $0x168] sm:$0xff]
      %v470 = vld [vmem:[%s2 + $0x170] sm:$0xff]
      %v471 = vld [vmem:[%s2 + $0x178] sm:$0xff]
      %v472 = vld [vmem:[%s2 + $0x180] sm:$0xff]
      %v473 = vld [vmem:[%s2 + $0x188] sm:$0xff]
      %v474 = vld [vmem:[%s2 + $0x190] sm:$0xff]
      %v475 = vld [vmem:[%s2 + $0x198] sm:$0xff]
      %v476 = vld [vmem:[%s2 + $0x1a0] sm:$0xff]
      %v477 = vld [vmem:[%s2 + $0x1a8] sm:$0xff]
      %v478 = vld [vmem:[%s2 + $0x1b0] sm:$0xff]
      %v479 = vld [vmem:[%s2 + $0x1b8] sm:$0xff]
      %v480 = vld [vmem:[%s2 + $0x1c0] sm:$0xff]
      %v481 = vld [vmem:[%s2 + $0x1c8] sm:$0xff]
      %v482 = vld [vmem:[%s2 + $0x1d0] sm:$0xff]
      %v483 = vld [vmem:[%s2 + $0x1d8] sm:$0xff]
      %v484 = vld [vmem:[%s2 + $0x1e0] sm:$0xff]
      %v485 = vld [vmem:[%s2 + $0x1e8] sm:$0xff]
      %v486 = vld [vmem:[%s2 + $0x1f0] sm:$0xff]
      %v487 = vld [vmem:[%s2 + $0x1f8] sm:$0xff]
      %v488 = vld [vmem:[%s2 + $0x200] sm:$0xff]
      %v489 = vld [vmem:[%s2 + $0x208] sm:$0xff]
      %v490 = vld [vmem:[%s2 + $0x210] sm:$0xff]
      %v491 = vld [vmem:[%s2 + $0x218] sm:$0xff]
      %v492 = vld [vmem:[%s2 + $0x220] sm:$0xff]
      %v493 = vld [vmem:[%s2 + $0x228] sm:$0xff]
      %v494 = vld [vmem:[%s2 + $0x230] sm:$0xff]
      %v495 = vld [vmem:[%s2 + $0x238] sm:$0xff]
      %v496 = vld [vmem:[%s2 + $0x240] sm:$0xff]
      %v497 = vld [vmem:[%s2 + $0x248] sm:$0xff]
      %v498 = vld [vmem:[%s2 + $0x250] sm:$0xff]
      %v499 = vld [vmem:[%s2 + $0x258] sm:$0xff]
      %v500 = vld [vmem:[%s2 + $0x260] sm:$0xff]
      %v501 = vld [vmem:[%s2 + $0x268] sm:$0xff]
      %v502 = vld [vmem:[%s2 + $0x270] sm:$0xff]
      %v503 = vld [vmem:[%s2 + $0x278] sm:$0xff]
      %v504 = vld [vmem:[%s2 + $0x280] sm:$0xff]
      %v505 = vld [vmem:[%s2 + $0x288] sm:$0xff]
      %v506 = vld [vmem:[%s2 + $0x290] sm:$0xff]
      %v507 = vld [vmem:[%s2 + $0x298] sm:$0xff]
      %v508 = vld [vmem:[%s2 + $0x2a0] sm:$0xff]
      %v509 = vld [vmem:[%s2 + $0x2a8] sm:$0xff]
      %v510 = vld [vmem:[%s2 + $0x2b0] sm:$0xff]
      %v511 = vld [vmem:[%s2 + $0x2b8] sm:$0xff]
      %v512 = vld [vmem:[%s2 + $0x2c0] sm:$0xff]
      %v513 = vld [vmem:[%s2 + $0x2c8] sm:$0xff]
      %v514 = vld [vmem:[%s2 + $0x2d0] sm:$0xff]
      %v515 = vld [vmem:[%s2 + $0x2d8] sm:$0xff]
      %v516 = vld [vmem:[%s2 + $0x2e0] sm:$0xff]
      %v517 = vld [vmem:[%s2 + $0x2e8] sm:$0xff]
      %v518 = vld [vmem:[%s2 + $0x2f0] sm:$0xff]
      %v519 = vld [vmem:[%s2 + $0x2f8] sm:$0xff]
      %v520 = vld [vmem:[%s2 + $0x300] sm:$0xff]
      %v521 = vld [vmem:[%s2 + $0x308] sm:$0xff]
      %v522 = vld [vmem:[%s2 + $0x310] sm:$0xff]
      %v523 = vld [vmem:[%s2 + $0x318] sm:$0xff]
      %v524 = vld [vmem:[%s2 + $0x320] sm:$0xff]
      %v525 = vld [vmem:[%s2 + $0x328] sm:$0xff]
      %v526 = vld [vmem:[%s2 + $0x330] sm:$0xff]
      %v527 = vld [vmem:[%s2 + $0x338] sm:$0xff]
      %v528 = vld [vmem:[%s2 + $0x340] sm:$0xff]
      %v529 = vld [vmem:[%s2 + $0x348] sm:$0xff]
      %v530 = vld [vmem:[%s2 + $0x350] sm:$0xff]
      %v531 = vld [vmem:[%s2 + $0x358] sm:$0xff]
      %v532 = vld [vmem:[%s2 + $0x360] sm:$0xff]
      %v533 = vld [vmem:[%s2 + $0x368] sm:$0xff]
      %v534 = vld [vmem:[%s2 + $0x370] sm:$0xff]
      %v535 = vld [vmem:[%s2 + $0x378] sm:$0xff]
      %v536 = vld [vmem:[%s2 + $0x380] sm:$0xff]
      %v537 = vld [vmem:[%s2 + $0x388] sm:$0xff]
      %v538 = vld [vmem:[%s2 + $0x390] sm:$0xff]
      %v539 = vld [vmem:[%s2 + $0x398] sm:$0xff]
      %v540 = vld [vmem:[%s2 + $0x3a0] sm:$0xff]
      %v541 = vld [vmem:[%s2 + $0x3a8] sm:$0xff]
      %v542 = vld [vmem:[%s2 + $0x3b0] sm:$0xff]
      %v543 = vld [vmem:[%s2 + $0x3b8] sm:$0xff]
      %v544 = vld [vmem:[%s2 + $0x3c0] sm:$0xff]
      %v545 = vld [vmem:[%s2 + $0x3c8] sm:$0xff]
      %v546 = vld [vmem:[%s2 + $0x3d0] sm:$0xff]
      %v547 = vld [vmem:[%s2 + $0x3d8] sm:$0xff]
      %v548 = vld [vmem:[%s2 + $0x3e0] sm:$0xff]
      %v549 = vld [vmem:[%s2 + $0x3e8] sm:$0xff]
      %v550 = vld [vmem:[%s2 + $0x3f0] sm:$0xff]
      %v551 = vld [vmem:[%s2 + $0x3f8] sm:$0xff]
      %v568 = vunpack.c.l.b16 %v408
      %v569 = vunpack.c.h.b16 %v408
      %v570 = vunpack.c.l.b16 %v409
      %v571 = vunpack.c.h.b16 %v409
      %v572 = vunpack.c.l.b16 %v410
      %v573 = vunpack.c.h.b16 %v410
      %v574 = vunpack.c.l.b16 %v411
      %v575 = vunpack.c.h.b16 %v411
      %v576 = vunpack.c.l.b16 %v412
      %v577 = vunpack.c.h.b16 %v412
      %v578 = vunpack.c.l.b16 %v413
      %v579 = vunpack.c.h.b16 %v413
      %v580 = vunpack.c.l.b16 %v414
      %v581 = vunpack.c.h.b16 %v414
      %v582 = vunpack.c.l.b16 %v415
      %v583 = vunpack.c.h.b16 %v415
      %v584 = vunpack.c.l.b16 %v416
      %v585 = vunpack.c.h.b16 %v416
      %v586 = vunpack.c.l.b16 %v417
      %v587 = vunpack.c.h.b16 %v417
      %v588 = vunpack.c.l.b16 %v418
      %v589 = vunpack.c.h.b16 %v418
      %v590 = vunpack.c.l.b16 %v419
      %v591 = vunpack.c.h.b16 %v419
      %v592 = vunpack.c.l.b16 %v420
      %v593 = vunpack.c.h.b16 %v420
      %v594 = vunpack.c.l.b16 %v421
      %v595 = vunpack.c.h.b16 %v421
      %v596 = vunpack.c.l.b16 %v422
      %v597 = vunpack.c.h.b16 %v422
      %v598 = vunpack.c.l.b16 %v423
      %v599 = vunpack.c.h.b16 %v423
      %v600 = vpack.c.b16 %v572, %v568
      %v601 = vpack.c.b16 %v573, %v569
      %v602 = vpack.c.b16 %v574, %v570
      %v603 = vpack.c.b16 %v575, %v571
      %v604 = vpack.c.b16 %v580, %v576
      %v605 = vpack.c.b16 %v581, %v577
      %v606 = vpack.c.b16 %v582, %v578
      %v607 = vpack.c.b16 %v583, %v579
      %v608 = vpack.c.b16 %v588, %v584
      %v609 = vpack.c.b16 %v589, %v585
      %v610 = vpack.c.b16 %v590, %v586
      %v611 = vpack.c.b16 %v591, %v587
      %v612 = vpack.c.b16 %v596, %v592
      %v613 = vpack.c.b16 %v597, %v593
      %v614 = vpack.c.b16 %v598, %v594
      %v615 = vpack.c.b16 %v599, %v595
      %v760 = vunpack.c.l.b16 %v424
      %v761 = vunpack.c.h.b16 %v424
      %v762 = vunpack.c.l.b16 %v425
      %v763 = vunpack.c.h.b16 %v425
      %v764 = vunpack.c.l.b16 %v426
      %v765 = vunpack.c.h.b16 %v426
      %v766 = vunpack.c.l.b16 %v427
      %v767 = vunpack.c.h.b16 %v427
      %v768 = vunpack.c.l.b16 %v428
      %v769 = vunpack.c.h.b16 %v428
      %v770 = vunpack.c.l.b16 %v429
      %v771 = vunpack.c.h.b16 %v429
      %v772 = vunpack.c.l.b16 %v430
      %v773 = vunpack.c.h.b16 %v430
      %v774 = vunpack.c.l.b16 %v431
      %v775 = vunpack.c.h.b16 %v431
      %v776 = vunpack.c.l.b16 %v432
      %v777 = vunpack.c.h.b16 %v432
      %v778 = vunpack.c.l.b16 %v433
      %v779 = vunpack.c.h.b16 %v433
      %v780 = vunpack.c.l.b16 %v434
      %v781 = vunpack.c.h.b16 %v434
      %v782 = vunpack.c.l.b16 %v435
      %v783 = vunpack.c.h.b16 %v435
      %v784 = vunpack.c.l.b16 %v436
      %v785 = vunpack.c.h.b16 %v436
      %v786 = vunpack.c.l.b16 %v437
      %v787 = vunpack.c.h.b16 %v437
      %v788 = vunpack.c.l.b16 %v438
      %v789 = vunpack.c.h.b16 %v438
      %v790 = vunpack.c.l.b16 %v439
      %v791 = vunpack.c.h.b16 %v439
      %v792 = vunpack.c.l.b16 %v440
      %v793 = vunpack.c.h.b16 %v440
      %v794 = vunpack.c.l.b16 %v441
      %v795 = vunpack.c.h.b16 %v441
      %v796 = vunpack.c.l.b16 %v442
      %v797 = vunpack.c.h.b16 %v442
      %v798 = vunpack.c.l.b16 %v443
      %v799 = vunpack.c.h.b16 %v443
      %v800 = vunpack.c.l.b16 %v444
      %v801 = vunpack.c.h.b16 %v444
      %v802 = vunpack.c.l.b16 %v445
      %v803 = vunpack.c.h.b16 %v445
      %v804 = vunpack.c.l.b16 %v446
      %v805 = vunpack.c.h.b16 %v446
      %v806 = vunpack.c.l.b16 %v447
      %v807 = vunpack.c.h.b16 %v447
      %v808 = vunpack.c.l.b16 %v448
      %v809 = vunpack.c.h.b16 %v448
      %v810 = vunpack.c.l.b16 %v449
      %v811 = vunpack.c.h.b16 %v449
      %v812 = vunpack.c.l.b16 %v450
      %v813 = vunpack.c.h.b16 %v450
      %v814 = vunpack.c.l.b16 %v451
      %v815 = vunpack.c.h.b16 %v451
      %v816 = vunpack.c.l.b16 %v452
      %v817 = vunpack.c.h.b16 %v452
      %v818 = vunpack.c.l.b16 %v453
      %v819 = vunpack.c.h.b16 %v453
      %v820 = vunpack.c.l.b16 %v454
      %v821 = vunpack.c.h.b16 %v454
      %v822 = vunpack.c.l.b16 %v455
      %v823 = vunpack.c.h.b16 %v455
      %v824 = vunpack.c.l.b16 %v456
      %v825 = vunpack.c.h.b16 %v456
      %v826 = vunpack.c.l.b16 %v457
      %v827 = vunpack.c.h.b16 %v457
      %v828 = vunpack.c.l.b16 %v458
      %v829 = vunpack.c.h.b16 %v458
      %v830 = vunpack.c.l.b16 %v459
      %v831 = vunpack.c.h.b16 %v459
      %v832 = vunpack.c.l.b16 %v460
      %v833 = vunpack.c.h.b16 %v460
      %v834 = vunpack.c.l.b16 %v461
      %v835 = vunpack.c.h.b16 %v461
      %v836 = vunpack.c.l.b16 %v462
      %v837 = vunpack.c.h.b16 %v462
      %v838 = vunpack.c.l.b16 %v463
      %v839 = vunpack.c.h.b16 %v463
      %v840 = vunpack.c.l.b16 %v464
      %v841 = vunpack.c.h.b16 %v464
      %v842 = vunpack.c.l.b16 %v465
      %v843 = vunpack.c.h.b16 %v465
      %v844 = vunpack.c.l.b16 %v466
      %v845 = vunpack.c.h.b16 %v466
      %v846 = vunpack.c.l.b16 %v467
      %v847 = vunpack.c.h.b16 %v467
      %v848 = vunpack.c.l.b16 %v468
      %v849 = vunpack.c.h.b16 %v468
      %v850 = vunpack.c.l.b16 %v469
      %v851 = vunpack.c.h.b16 %v469
      %v852 = vunpack.c.l.b16 %v470
      %v853 = vunpack.c.h.b16 %v470
      %v854 = vunpack.c.l.b16 %v471
      %v855 = vunpack.c.h.b16 %v471
      %v856 = vunpack.c.l.b16 %v472
      %v857 = vunpack.c.h.b16 %v472
      %v858 = vunpack.c.l.b16 %v473
      %v859 = vunpack.c.h.b16 %v473
      %v860 = vunpack.c.l.b16 %v474
      %v861 = vunpack.c.h.b16 %v474
      %v862 = vunpack.c.l.b16 %v475
      %v863 = vunpack.c.h.b16 %v475
      %v864 = vunpack.c.l.b16 %v476
      %v865 = vunpack.c.h.b16 %v476
      %v866 = vunpack.c.l.b16 %v477
      %v867 = vunpack.c.h.b16 %v477
      %v868 = vunpack.c.l.b16 %v478
      %v869 = vunpack.c.h.b16 %v478
      %v870 = vunpack.c.l.b16 %v479
      %v871 = vunpack.c.h.b16 %v479
      %v872 = vunpack.c.l.b16 %v480
      %v873 = vunpack.c.h.b16 %v480
      %v874 = vunpack.c.l.b16 %v481
      %v875 = vunpack.c.h.b16 %v481
      %v876 = vunpack.c.l.b16 %v482
      %v877 = vunpack.c.h.b16 %v482
      %v878 = vunpack.c.l.b16 %v483
      %v879 = vunpack.c.h.b16 %v483
      %v880 = vunpack.c.l.b16 %v484
      %v881 = vunpack.c.h.b16 %v484
      %v882 = vunpack.c.l.b16 %v485
      %v883 = vunpack.c.h.b16 %v485
      %v884 = vunpack.c.l.b16 %v486
      %v885 = vunpack.c.h.b16 %v486
      %v886 = vunpack.c.l.b16 %v487
      %v887 = vunpack.c.h.b16 %v487
      %v888 = vunpack.c.l.b16 %v488
      %v889 = vunpack.c.h.b16 %v488
      %v890 = vunpack.c.l.b16 %v489
      %v891 = vunpack.c.h.b16 %v489
      %v892 = vunpack.c.l.b16 %v490
      %v893 = vunpack.c.h.b16 %v490
      %v894 = vunpack.c.l.b16 %v491
      %v895 = vunpack.c.h.b16 %v491
      %v896 = vunpack.c.l.b16 %v492
      %v897 = vunpack.c.h.b16 %v492
      %v898 = vunpack.c.l.b16 %v493
      %v899 = vunpack.c.h.b16 %v493
      %v900 = vunpack.c.l.b16 %v494
      %v901 = vunpack.c.h.b16 %v494
      %v902 = vunpack.c.l.b16 %v495
      %v903 = vunpack.c.h.b16 %v495
      %v904 = vunpack.c.l.b16 %v496
      %v905 = vunpack.c.h.b16 %v496
      %v906 = vunpack.c.l.b16 %v497
      %v907 = vunpack.c.h.b16 %v497
      %v908 = vunpack.c.l.b16 %v498
      %v909 = vunpack.c.h.b16 %v498
      %v910 = vunpack.c.l.b16 %v499
      %v911 = vunpack.c.h.b16 %v499
      %v912 = vunpack.c.l.b16 %v500
      %v913 = vunpack.c.h.b16 %v500
      %v914 = vunpack.c.l.b16 %v501
      %v915 = vunpack.c.h.b16 %v501
      %v916 = vunpack.c.l.b16 %v502
      %v917 = vunpack.c.h.b16 %v502
      %v918 = vunpack.c.l.b16 %v503
      %v919 = vunpack.c.h.b16 %v503
      %v920 = vunpack.c.l.b16 %v504
      %v921 = vunpack.c.h.b16 %v504
      %v922 = vunpack.c.l.b16 %v505
      %v923 = vunpack.c.h.b16 %v505
      %v924 = vunpack.c.l.b16 %v506
      %v925 = vunpack.c.h.b16 %v506
      %v926 = vunpack.c.l.b16 %v507
      %v927 = vunpack.c.h.b16 %v507
      %v928 = vunpack.c.l.b16 %v508
      %v929 = vunpack.c.h.b16 %v508
      %v930 = vunpack.c.l.b16 %v509
      %v931 = vunpack.c.h.b16 %v509
      %v932 = vunpack.c.l.b16 %v510
      %v933 = vunpack.c.h.b16 %v510
      %v934 = vunpack.c.l.b16 %v511
      %v935 = vunpack.c.h.b16 %v511
      %v936 = vunpack.c.l.b16 %v512
      %v937 = vunpack.c.h.b16 %v512
      %v938 = vunpack.c.l.b16 %v513
      %v939 = vunpack.c.h.b16 %v513
      %v940 = vunpack.c.l.b16 %v514
      %v941 = vunpack.c.h.b16 %v514
      %v942 = vunpack.c.l.b16 %v515
      %v943 = vunpack.c.h.b16 %v515
      %v944 = vunpack.c.l.b16 %v516
      %v945 = vunpack.c.h.b16 %v516
      %v946 = vunpack.c.l.b16 %v517
      %v947 = vunpack.c.h.b16 %v517
      %v948 = vunpack.c.l.b16 %v518
      %v949 = vunpack.c.h.b16 %v518
      %v950 = vunpack.c.l.b16 %v519
      %v951 = vunpack.c.h.b16 %v519
      %v952 = vunpack.c.l.b16 %v520
      %v953 = vunpack.c.h.b16 %v520
      %v954 = vunpack.c.l.b16 %v521
      %v955 = vunpack.c.h.b16 %v521
      %v956 = vunpack.c.l.b16 %v522
      %v957 = vunpack.c.h.b16 %v522
      %v958 = vunpack.c.l.b16 %v523
      %v959 = vunpack.c.h.b16 %v523
      %v960 = vunpack.c.l.b16 %v524
      %v961 = vunpack.c.h.b16 %v524
      %v962 = vunpack.c.l.b16 %v525
      %v963 = vunpack.c.h.b16 %v525
      %v964 = vunpack.c.l.b16 %v526
      %v965 = vunpack.c.h.b16 %v526
      %v966 = vunpack.c.l.b16 %v527
      %v967 = vunpack.c.h.b16 %v527
      %v968 = vunpack.c.l.b16 %v528
      %v969 = vunpack.c.h.b16 %v528
      %v970 = vunpack.c.l.b16 %v529
      %v971 = vunpack.c.h.b16 %v529
      %v972 = vunpack.c.l.b16 %v530
      %v973 = vunpack.c.h.b16 %v530
      %v974 = vunpack.c.l.b16 %v531
      %v975 = vunpack.c.h.b16 %v531
      %v976 = vunpack.c.l.b16 %v532
      %v977 = vunpack.c.h.b16 %v532
      %v978 = vunpack.c.l.b16 %v533
      %v979 = vunpack.c.h.b16 %v533
      %v980 = vunpack.c.l.b16 %v534
      %v981 = vunpack.c.h.b16 %v534
      %v982 = vunpack.c.l.b16 %v535
      %v983 = vunpack.c.h.b16 %v535
      %v984 = vunpack.c.l.b16 %v536
      %v985 = vunpack.c.h.b16 %v536
      %v986 = vunpack.c.l.b16 %v537
      %v987 = vunpack.c.h.b16 %v537
      %v988 = vunpack.c.l.b16 %v538
      %v989 = vunpack.c.h.b16 %v538
      %v990 = vunpack.c.l.b16 %v539
      %v991 = vunpack.c.h.b16 %v539
      %v992 = vunpack.c.l.b16 %v540
      %v993 = vunpack.c.h.b16 %v540
      %v994 = vunpack.c.l.b16 %v541
      %v995 = vunpack.c.h.b16 %v541
      %v996 = vunpack.c.l.b16 %v542
      %v997 = vunpack.c.h.b16 %v542
      %v998 = vunpack.c.l.b16 %v543
      %v999 = vunpack.c.h.b16 %v543
      %v1000 = vunpack.c.l.b16 %v544
      %v1001 = vunpack.c.h.b16 %v544
      %v1002 = vunpack.c.l.b16 %v545
      %v1003 = vunpack.c.h.b16 %v545
      %v1004 = vunpack.c.l.b16 %v546
      %v1005 = vunpack.c.h.b16 %v546
      %v1006 = vunpack.c.l.b16 %v547
      %v1007 = vunpack.c.h.b16 %v547
      %v1008 = vunpack.c.l.b16 %v548
      %v1009 = vunpack.c.h.b16 %v548
      %v1010 = vunpack.c.l.b16 %v549
      %v1011 = vunpack.c.h.b16 %v549
      %v1012 = vunpack.c.l.b16 %v550
      %v1013 = vunpack.c.h.b16 %v550
      %v1014 = vunpack.c.l.b16 %v551
      %v1015 = vunpack.c.h.b16 %v551
      %v1016 = vpack.c.b16 %v764, %v760
      %v1017 = vpack.c.b16 %v765, %v761
      %v1018 = vpack.c.b16 %v766, %v762
      %v1019 = vpack.c.b16 %v767, %v763
      %v1020 = vpack.c.b16 %v772, %v768
      %v1021 = vpack.c.b16 %v773, %v769
      %v1022 = vpack.c.b16 %v774, %v770
      %v1023 = vpack.c.b16 %v775, %v771
      %v1024 = vpack.c.b16 %v780, %v776
      %v1025 = vpack.c.b16 %v781, %v777
      %v1026 = vpack.c.b16 %v782, %v778
      %v1027 = vpack.c.b16 %v783, %v779
      %v1028 = vpack.c.b16 %v788, %v784
      %v1029 = vpack.c.b16 %v789, %v785
      %v1030 = vpack.c.b16 %v790, %v786
      %v1031 = vpack.c.b16 %v791, %v787
      %v1032 = vpack.c.b16 %v796, %v792
      %v1033 = vpack.c.b16 %v797, %v793
      %v1034 = vpack.c.b16 %v798, %v794
      %v1035 = vpack.c.b16 %v799, %v795
      %v1036 = vpack.c.b16 %v804, %v800
      %v1037 = vpack.c.b16 %v805, %v801
      %v1038 = vpack.c.b16 %v806, %v802
      %v1039 = vpack.c.b16 %v807, %v803
      %v1040 = vpack.c.b16 %v812, %v808
      %v1041 = vpack.c.b16 %v813, %v809
      %v1042 = vpack.c.b16 %v814, %v810
      %v1043 = vpack.c.b16 %v815, %v811
      %v1044 = vpack.c.b16 %v820, %v816
      %v1045 = vpack.c.b16 %v821, %v817
      %v1046 = vpack.c.b16 %v822, %v818
      %v1047 = vpack.c.b16 %v823, %v819
      %v1048 = vpack.c.b16 %v828, %v824
      %v1049 = vpack.c.b16 %v829, %v825
      %v1050 = vpack.c.b16 %v830, %v826
      %v1051 = vpack.c.b16 %v831, %v827
      %v1052 = vpack.c.b16 %v836, %v832
      %v1053 = vpack.c.b16 %v837, %v833
      %v1054 = vpack.c.b16 %v838, %v834
      %v1055 = vpack.c.b16 %v839, %v835
      %v1056 = vpack.c.b16 %v844, %v840
      %v1057 = vpack.c.b16 %v845, %v841
      %v1058 = vpack.c.b16 %v846, %v842
      %v1059 = vpack.c.b16 %v847, %v843
      %v1060 = vpack.c.b16 %v852, %v848
      %v1061 = vpack.c.b16 %v853, %v849
      %v1062 = vpack.c.b16 %v854, %v850
      %v1063 = vpack.c.b16 %v855, %v851
      %v1064 = vpack.c.b16 %v860, %v856
      %v1065 = vpack.c.b16 %v861, %v857
      %v1066 = vpack.c.b16 %v862, %v858
      %v1067 = vpack.c.b16 %v863, %v859
      %v1068 = vpack.c.b16 %v868, %v864
      %v1069 = vpack.c.b16 %v869, %v865
      %v1070 = vpack.c.b16 %v870, %v866
      %v1071 = vpack.c.b16 %v871, %v867
      %v1072 = vpack.c.b16 %v876, %v872
      %v1073 = vpack.c.b16 %v877, %v873
      %v1074 = vpack.c.b16 %v878, %v874
      %v1075 = vpack.c.b16 %v879, %v875
      %v1076 = vpack.c.b16 %v884, %v880
      %v1077 = vpack.c.b16 %v885, %v881
      %v1078 = vpack.c.b16 %v886, %v882
      %v1079 = vpack.c.b16 %v887, %v883
      %v1080 = vpack.c.b16 %v892, %v888
      %v1081 = vpack.c.b16 %v893, %v889
      %v1082 = vpack.c.b16 %v894, %v890
      %v1083 = vpack.c.b16 %v895, %v891
      %v1084 = vpack.c.b16 %v900, %v896
      %v1085 = vpack.c.b16 %v901, %v897
      %v1086 = vpack.c.b16 %v902, %v898
      %v1087 = vpack.c.b16 %v903, %v899
      %v1088 = vpack.c.b16 %v908, %v904
      %v1089 = vpack.c.b16 %v909, %v905
      %v1090 = vpack.c.b16 %v910, %v906
      %v1091 = vpack.c.b16 %v911, %v907
      %v1092 = vpack.c.b16 %v916, %v912
      %v1093 = vpack.c.b16 %v917, %v913
      %v1094 = vpack.c.b16 %v918, %v914
      %v1095 = vpack.c.b16 %v919, %v915
      %v1096 = vpack.c.b16 %v924, %v920
      %v1097 = vpack.c.b16 %v925, %v921
      %v1098 = vpack.c.b16 %v926, %v922
      %v1099 = vpack.c.b16 %v927, %v923
      %v1100 = vpack.c.b16 %v932, %v928
      %v1101 = vpack.c.b16 %v933, %v929
      %v1102 = vpack.c.b16 %v934, %v930
      %v1103 = vpack.c.b16 %v935, %v931
      %v1104 = vpack.c.b16 %v940, %v936
      %v1105 = vpack.c.b16 %v941, %v937
      %v1106 = vpack.c.b16 %v942, %v938
      %v1107 = vpack.c.b16 %v943, %v939
      %v1108 = vpack.c.b16 %v948, %v944
      %v1109 = vpack.c.b16 %v949, %v945
      %v1110 = vpack.c.b16 %v950, %v946
      %v1111 = vpack.c.b16 %v951, %v947
      %v1112 = vpack.c.b16 %v956, %v952
      %v1113 = vpack.c.b16 %v957, %v953
      %v1114 = vpack.c.b16 %v958, %v954
      %v1115 = vpack.c.b16 %v959, %v955
      %v1116 = vpack.c.b16 %v964, %v960
      %v1117 = vpack.c.b16 %v965, %v961
      %v1118 = vpack.c.b16 %v966, %v962
      %v1119 = vpack.c.b16 %v967, %v963
      %v1120 = vpack.c.b16 %v972, %v968
      %v1121 = vpack.c.b16 %v973, %v969
      %v1122 = vpack.c.b16 %v974, %v970
      %v1123 = vpack.c.b16 %v975, %v971
      %v1124 = vpack.c.b16 %v980, %v976
      %v1125 = vpack.c.b16 %v981, %v977
      %v1126 = vpack.c.b16 %v982, %v978
      %v1127 = vpack.c.b16 %v983, %v979
      %v1128 = vpack.c.b16 %v988, %v984
      %v1129 = vpack.c.b16 %v989, %v985
      %v1130 = vpack.c.b16 %v990, %v986
      %v1131 = vpack.c.b16 %v991, %v987
      %v1132 = vpack.c.b16 %v996, %v992
      %v1133 = vpack.c.b16 %v997, %v993
      %v1134 = vpack.c.b16 %v998, %v994
      %v1135 = vpack.c.b16 %v999, %v995
      %v1136 = vpack.c.b16 %v1004, %v1000
      %v1137 = vpack.c.b16 %v1005, %v1001
      %v1138 = vpack.c.b16 %v1006, %v1002
      %v1139 = vpack.c.b16 %v1007, %v1003
      %v1140 = vpack.c.b16 %v1012, %v1008
      %v1141 = vpack.c.b16 %v1013, %v1009
      %v1142 = vpack.c.b16 %v1014, %v1010
      %v1143 = vpack.c.b16 %v1015, %v1011
      %1272 = vmatprep.subr.bf16.mxu0 %v1017
      %1273 = vmatpush1.bf16.msra.mxu0 %v1016
      %1274 = vmatprep.subr.bf16.mxu0 %v1021
      %1275 = vmatpush1.bf16.msra.mxu0 %v1020
      %1276 = vmatprep.subr.bf16.mxu0 %v1025
      %1277 = vmatpush1.bf16.msra.mxu0 %v1024
      %1278 = vmatprep.subr.bf16.mxu0 %v1029
      %1279 = vmatpush1.bf16.msra.mxu0 %v1028
      %1280 = vmatprep.subr.bf16.mxu0 %v1033
      %1281 = vmatpush1.bf16.msra.mxu0 %v1032
      %1282 = vmatprep.subr.bf16.mxu0 %v1037
      %1283 = vmatpush1.bf16.msra.mxu0 %v1036
      %1284 = vmatprep.subr.bf16.mxu0 %v1041
      %1285 = vmatpush1.bf16.msra.mxu0 %v1040
      %1286 = vmatprep.subr.bf16.mxu0 %v1045
      %1287 = vmatpush1.bf16.msra.mxu0 %v1044
      %1288 = vmatprep.subr.bf16.mxu0 %v1049
      %1289 = vmatpush1.bf16.msra.mxu0 %v1048
      %1290 = vmatprep.subr.bf16.mxu0 %v1053
      %1291 = vmatpush1.bf16.msra.mxu0 %v1052
      %1292 = vmatprep.subr.bf16.mxu0 %v1057
      %1293 = vmatpush1.bf16.msra.mxu0 %v1056
      %1294 = vmatprep.subr.bf16.mxu0 %v1061
      %1295 = vmatpush1.bf16.msra.mxu0 %v1060
      %1296 = vmatprep.subr.bf16.mxu0 %v1065
      %1297 = vmatpush1.bf16.msra.mxu0 %v1064
      %1298 = vmatprep.subr.bf16.mxu0 %v1069
      %1299 = vmatpush1.bf16.msra.mxu0 %v1068
      %1300 = vmatprep.subr.bf16.mxu0 %v1073
      %1301 = vmatpush1.bf16.msra.mxu0 %v1072
      %1302 = vmatprep.subr.bf16.mxu0 %v1077
      %1303 = vmatpush1.bf16.msra.mxu0 %v1076
      %1304 = vmatprep.mubr.bf16.mxu0 %v601
      %1305 = vmatmul.mubr.bf16.gmra.mrb[0].mxu0 %v600
      %v1306 = vpop.f32.mrb[0].mxu0
      %v1307 = vadd.f32 0.0, %v1306
      %v1308 = vpop.f32.mrb[0].mxu0
      %v1309 = vadd.f32 0.0, %v1308
      %v1310 = vpop.f32.mrb[0].mxu0
      %v1311 = vadd.f32 0.0, %v1310
      %v1312 = vpop.f32.mrb[0].mxu0
      %v1313 = vadd.f32 0.0, %v1312
      %1314 = vmatprep.mubr.bf16.mxu0 %v605
      %1315 = vmatmul.mubr.bf16.gmra.mrb[0].mxu0 %v604
      %v1316 = vpop.f32.mrb[0].mxu0
      %v1317 = vadd.f32 0.0, %v1316
      %v1318 = vpop.f32.mrb[0].mxu0
      %v1319 = vadd.f32 0.0, %v1318
      %v1320 = vpop.f32.mrb[0].mxu0
      %v1321 = vadd.f32 0.0, %v1320
      %v1322 = vpop.f32.mrb[0].mxu0
      %v1323 = vadd.f32 0.0, %v1322
      %1324 = vmatprep.mubr.bf16.mxu0 %v609
      %1325 = vmatmul.mubr.bf16.gmra.mrb[0].mxu0 %v608
      %v1326 = vpop.f32.mrb[0].mxu0
      %v1327 = vadd.f32 0.0, %v1326
      %v1328 = vpop.f32.mrb[0].mxu0
      %v1329 = vadd.f32 0.0, %v1328
      %v1330 = vpop.f32.mrb[0].mxu0
      %v1331 = vadd.f32 0.0, %v1330
      %v1332 = vpop.f32.mrb[0].mxu0
      %v1333 = vadd.f32 0.0, %v1332
      %1334 = vmatprep.mubr.bf16.mxu0 %v613
      %1335 = vmatmul.mubr.bf16.gmra.mrb[0].mxu0 %v612
      %v1336 = vpop.f32.mrb[0].mxu0
      %v1337 = vadd.f32 0.0, %v1336
      %v1338 = vpop.f32.mrb[0].mxu0
      %v1339 = vadd.f32 0.0, %v1338
      %v1340 = vpop.f32.mrb[0].mxu0
      %v1341 = vadd.f32 0.0, %v1340
      %v1342 = vpop.f32.mrb[0].mxu0
      %v1343 = vadd.f32 0.0, %v1342
      %1344 = vdwg.mxu0
      %1345 = vmatprep.subr.bf16.mxu0 %v1081
      %1346 = vmatpush1.bf16.msra.mxu0 %v1080
      %1347 = vmatprep.subr.bf16.mxu0 %v1085
      %1348 = vmatpush1.bf16.msra.mxu0 %v1084
      %1349 = vmatprep.subr.bf16.mxu0 %v1089
      %1350 = vmatpush1.bf16.msra.mxu0 %v1088
      %1351 = vmatprep.subr.bf16.mxu0 %v1093
      %1352 = vmatpush1.bf16.msra.mxu0 %v1092
      %1353 = vmatprep.subr.bf16.mxu0 %v1097
      %1354 = vmatpush1.bf16.msra.mxu0 %v1096
      %1355 = vmatprep.subr.bf16.mxu0 %v1101
      %1356 = vmatpush1.bf16.msra.mxu0 %v1100
      %1357 = vmatprep.subr.bf16.mxu0 %v1105
      %1358 = vmatpush1.bf16.msra.mxu0 %v1104
      %1359 = vmatprep.subr.bf16.mxu0 %v1109
      %1360 = vmatpush1.bf16.msra.mxu0 %v1108
      %1361 = vmatprep.subr.bf16.mxu0 %v1113
      %1362 = vmatpush1.bf16.msra.mxu0 %v1112
      %1363 = vmatprep.subr.bf16.mxu0 %v1117
      %1364 = vmatpush1.bf16.msra.mxu0 %v1116
      %1365 = vmatprep.subr.bf16.mxu0 %v1121
      %1366 = vmatpush1.bf16.msra.mxu0 %v1120
      %1367 = vmatprep.subr.bf16.mxu0 %v1125
      %1368 = vmatpush1.bf16.msra.mxu0 %v1124
      %1369 = vmatprep.subr.bf16.mxu0 %v1129
      %1370 = vmatpush1.bf16.msra.mxu0 %v1128
      %1371 = vmatprep.subr.bf16.mxu0 %v1133
      %1372 = vmatpush1.bf16.msra.mxu0 %v1132
      %1373 = vmatprep.subr.bf16.mxu0 %v1137
      %1374 = vmatpush1.bf16.msra.mxu0 %v1136
      %1375 = vmatprep.subr.bf16.mxu0 %v1141
      %1376 = vmatpush1.bf16.msra.mxu0 %v1140
      %1377 = vmatprep.mubr.bf16.mxu0 %v603
      %1378 = vmatmul.mubr.bf16.gmra.mrb[0].mxu0 %v602
      %v1379 = vpop.f32.mrb[0].mxu0
      %v1380 = vadd.f32 %v1307, %v1379
      %v1381 = vpop.f32.mrb[0].mxu0
      %v1382 = vadd.f32 %v1309, %v1381
      %v1383 = vpop.f32.mrb[0].mxu0
      %v1384 = vadd.f32 %v1311, %v1383
      %v1385 = vpop.f32.mrb[0].mxu0
      %v1386 = vadd.f32 %v1313, %v1385
      %1387 = vmatprep.mubr.bf16.mxu0 %v607
      %1388 = vmatmul.mubr.bf16.gmra.mrb[0].mxu0 %v606
      %v1389 = vpop.f32.mrb[0].mxu0
      %v1390 = vadd.f32 %v1317, %v1389
      %v1391 = vpop.f32.mrb[0].mxu0
      %v1392 = vadd.f32 %v1319, %v1391
      %v1393 = vpop.f32.mrb[0].mxu0
      %v1394 = vadd.f32 %v1321, %v1393
      %v1395 = vpop.f32.mrb[0].mxu0
      %v1396 = vadd.f32 %v1323, %v1395
      %1397 = vmatprep.mubr.bf16.mxu0 %v611
      %1398 = vmatmul.mubr.bf16.gmra.mrb[0].mxu0 %v610
      %v1399 = vpop.f32.mrb[0].mxu0
      %v1400 = vadd.f32 %v1327, %v1399
      %v1401 = vpop.f32.mrb[0].mxu0
      %v1402 = vadd.f32 %v1329, %v1401
      %v1403 = vpop.f32.mrb[0].mxu0
      %v1404 = vadd.f32 %v1331, %v1403
      %v1405 = vpop.f32.mrb[0].mxu0
      %v1406 = vadd.f32 %v1333, %v1405
      %1407 = vmatprep.mubr.bf16.mxu0 %v615
      %1408 = vmatmul.mubr.bf16.gmra.mrb[0].mxu0 %v614
      %v1409 = vpop.f32.mrb[0].mxu0
      %v1410 = vadd.f32 %v1337, %v1409
      %v1411 = vpop.f32.mrb[0].mxu0
      %v1412 = vadd.f32 %v1339, %v1411
      %v1413 = vpop.f32.mrb[0].mxu0
      %v1414 = vadd.f32 %v1341, %v1413
      %v1415 = vpop.f32.mrb[0].mxu0
      %v1416 = vadd.f32 %v1343, %v1415
      %1417 = vdwg.mxu0
      %1418 = vmatprep.subr.bf16.mxu0 %v1019
      %1419 = vmatpush1.bf16.msra.mxu0 %v1018
      %1420 = vmatprep.subr.bf16.mxu0 %v1023
      %1421 = vmatpush1.bf16.msra.mxu0 %v1022
      %1422 = vmatprep.subr.bf16.mxu0 %v1027
      %1423 = vmatpush1.bf16.msra.mxu0 %v1026
      %1424 = vmatprep.subr.bf16.mxu0 %v1031
      %1425 = vmatpush1.bf16.msra.mxu0 %v1030
      %1426 = vmatprep.subr.bf16.mxu0 %v1035
      %1427 = vmatpush1.bf16.msra.mxu0 %v1034
      %1428 = vmatprep.subr.bf16.mxu0 %v1039
      %1429 = vmatpush1.bf16.msra.mxu0 %v1038
      %1430 = vmatprep.subr.bf16.mxu0 %v1043
      %1431 = vmatpush1.bf16.msra.mxu0 %v1042
      %1432 = vmatprep.subr.bf16.mxu0 %v1047
      %1433 = vmatpush1.bf16.msra.mxu0 %v1046
      %1434 = vmatprep.subr.bf16.mxu0 %v1051
      %1435 = vmatpush1.bf16.msra.mxu0 %v1050
      %1436 = vmatprep.subr.bf16.mxu0 %v1055
      %1437 = vmatpush1.bf16.msra.mxu0 %v1054
      %1438 = vmatprep.subr.bf16.mxu0 %v1059
      %1439 = vmatpush1.bf16.msra.mxu0 %v1058
      %1440 = vmatprep.subr.bf16.mxu0 %v1063
      %1441 = vmatpush1.bf16.msra.mxu0 %v1062
      %1442 = vmatprep.subr.bf16.mxu0 %v1067
      %1443 = vmatpush1.bf16.msra.mxu0 %v1066
      %1444 = vmatprep.subr.bf16.mxu0 %v1071
      %1445 = vmatpush1.bf16.msra.mxu0 %v1070
      %1446 = vmatprep.subr.bf16.mxu0 %v1075
      %1447 = vmatpush1.bf16.msra.mxu0 %v1074
      %1448 = vmatprep.subr.bf16.mxu0 %v1079
      %1449 = vmatpush1.bf16.msra.mxu0 %v1078
      %1450 = vmatprep.mubr.bf16.mxu0 %v601
      %1451 = vmatmul.mubr.bf16.gmra.mrb[0].mxu0 %v600
      %v1452 = vpop.f32.mrb[0].mxu0
      %v1453 = vadd.f32 0.0, %v1452
      %v1454 = vpop.f32.mrb[0].mxu0
      %v1455 = vadd.f32 0.0, %v1454
      %v1456 = vpop.f32.mrb[0].mxu0
      %v1457 = vadd.f32 0.0, %v1456
      %v1458 = vpop.f32.mrb[0].mxu0
      %v1459 = vadd.f32 0.0, %v1458
      %1460 = vmatprep.mubr.bf16.mxu0 %v605
      %1461 = vmatmul.mubr.bf16.gmra.mrb[0].mxu0 %v604
      %v1462 = vpop.f32.mrb[0].mxu0
      %v1463 = vadd.f32 0.0, %v1462
      %v1464 = vpop.f32.mrb[0].mxu0
      %v1465 = vadd.f32 0.0, %v1464
      %v1466 = vpop.f32.mrb[0].mxu0
      %v1467 = vadd.f32 0.0, %v1466
      %v1468 = vpop.f32.mrb[0].mxu0
      %v1469 = vadd.f32 0.0, %v1468
      %1470 = vmatprep.mubr.bf16.mxu0 %v609
      %1471 = vmatmul.mubr.bf16.gmra.mrb[0].mxu0 %v608
      %v1472 = vpop.f32.mrb[0].mxu0
      %v1473 = vadd.f32 0.0, %v1472
      %v1474 = vpop.f32.mrb[0].mxu0
      %v1475 = vadd.f32 0.0, %v1474
      %v1476 = vpop.f32.mrb[0].mxu0
      %v1477 = vadd.f32 0.0, %v1476
      %v1478 = vpop.f32.mrb[0].mxu0
      %v1479 = vadd.f32 0.0, %v1478
      %1480 = vmatprep.mubr.bf16.mxu0 %v613
      %1481 = vmatmul.mubr.bf16.gmra.mrb[0].mxu0 %v612
      %v1482 = vpop.f32.mrb[0].mxu0
      %v1483 = vadd.f32 0.0, %v1482
      %v1484 = vpop.f32.mrb[0].mxu0
      %v1485 = vadd.f32 0.0, %v1484
      %v1486 = vpop.f32.mrb[0].mxu0
      %v1487 = vadd.f32 0.0, %v1486
      %v1488 = vpop.f32.mrb[0].mxu0
      %v1489 = vadd.f32 0.0, %v1488
      %1490 = vdwg.mxu0
      %1491 = vmatprep.subr.bf16.mxu0 %v1083
      %1492 = vmatpush1.bf16.msra.mxu0 %v1082
      %1493 = vmatprep.subr.bf16.mxu0 %v1087
      %1494 = vmatpush1.bf16.msra.mxu0 %v1086
      %1495 = vmatprep.subr.bf16.mxu0 %v1091
      %1496 = vmatpush1.bf16.msra.mxu0 %v1090
      %1497 = vmatprep.subr.bf16.mxu0 %v1095
      %1498 = vmatpush1.bf16.msra.mxu0 %v1094
      %1499 = vmatprep.subr.bf16.mxu0 %v1099
      %1500 = vmatpush1.bf16.msra.mxu0 %v1098
      %1501 = vmatprep.subr.bf16.mxu0 %v1103
      %1502 = vmatpush1.bf16.msra.mxu0 %v1102
      %1503 = vmatprep.subr.bf16.mxu0 %v1107
      %1504 = vmatpush1.bf16.msra.mxu0 %v1106
      %1505 = vmatprep.subr.bf16.mxu0 %v1111
      %1506 = vmatpush1.bf16.msra.mxu0 %v1110
      %1507 = vmatprep.subr.bf16.mxu0 %v1115
      %1508 = vmatpush1.bf16.msra.mxu0 %v1114
      %1509 = vmatprep.subr.bf16.mxu0 %v1119
      %1510 = vmatpush1.bf16.msra.mxu0 %v1118
      %1511 = vmatprep.subr.bf16.mxu0 %v1123
      %1512 = vmatpush1.bf16.msra.mxu0 %v1122
      %1513 = vmatprep.subr.bf16.mxu0 %v1127
      %1514 = vmatpush1.bf16.msra.mxu0 %v1126
      %1515 = vmatprep.subr.bf16.mxu0 %v1131
      %1516 = vmatpush1.bf16.msra.mxu0 %v1130
      %1517 = vmatprep.subr.bf16.mxu0 %v1135
      %1518 = vmatpush1.bf16.msra.mxu0 %v1134
      %1519 = vmatprep.subr.bf16.mxu0 %v1139
      %1520 = vmatpush1.bf16.msra.mxu0 %v1138
      %1521 = vmatprep.subr.bf16.mxu0 %v1143
      %1522 = vmatpush1.bf16.msra.mxu0 %v1142
      %1523 = vmatprep.mubr.bf16.mxu0 %v603
      %1524 = vmatmul.mubr.bf16.gmra.mrb[0].mxu0 %v602
      %v1525 = vpop.f32.mrb[0].mxu0
      %v1526 = vadd.f32 %v1453, %v1525
      %v1527 = vpop.f32.mrb[0].mxu0
      %v1528 = vadd.f32 %v1455, %v1527
      %v1529 = vpop.f32.mrb[0].mxu0
      %v1530 = vadd.f32 %v1457, %v1529
      %v1531 = vpop.f32.mrb[0].mxu0
      %v1532 = vadd.f32 %v1459, %v1531
      %1533 = vmatprep.mubr.bf16.mxu0 %v607
      %1534 = vmatmul.mubr.bf16.gmra.mrb[0].mxu0 %v606
      %v1535 = vpop.f32.mrb[0].mxu0
      %v1536 = vadd.f32 %v1463, %v1535
      %v1537 = vpop.f32.mrb[0].mxu0
      %v1538 = vadd.f32 %v1465, %v1537
      %v1539 = vpop.f32.mrb[0].mxu0
      %v1540 = vadd.f32 %v1467, %v1539
      %v1541 = vpop.f32.mrb[0].mxu0
      %v1542 = vadd.f32 %v1469, %v1541
      %1543 = vmatprep.mubr.bf16.mxu0 %v611
      %1544 = vmatmul.mubr.bf16.gmra.mrb[0].mxu0 %v610
      %v1545 = vpop.f32.mrb[0].mxu0
      %v1546 = vadd.f32 %v1473, %v1545
      %v1547 = vpop.f32.mrb[0].mxu0
      %v1548 = vadd.f32 %v1475, %v1547
      %v1549 = vpop.f32.mrb[0].mxu0
      %v1550 = vadd.f32 %v1477, %v1549
      %v1551 = vpop.f32.mrb[0].mxu0
      %v1552 = vadd.f32 %v1479, %v1551
      %1553 = vmatprep.mubr.bf16.mxu0 %v615
      %1554 = vmatmul.mubr.bf16.gmra.mrb[0].mxu0 %v614
      %v1555 = vpop.f32.mrb[0].mxu0
      %v1556 = vadd.f32 %v1483, %v1555
      %v1557 = vpop.f32.mrb[0].mxu0
      %v1558 = vadd.f32 %v1485, %v1557
      %v1559 = vpop.f32.mrb[0].mxu0
      %v1560 = vadd.f32 %v1487, %v1559
      %v1561 = vpop.f32.mrb[0].mxu0
      %v1562 = vadd.f32 %v1489, %v1561
      %1563 = vdwg.mxu0
      %v1564 = vld [vmem:[%s3] sm:$0xf]
      %v1566 = vlaneseq
      %v1567 = vshrl.u32 %v1566, 7
      %v1568 = vsub.s32 0, %v1567
      %v1569 = vrot.slane %v1564, %v1568
      %v1570 = vlaneseq
      %v1571 = vshrl.u32 %v1570, 7
      %v1572 = vsub.s32 1, %v1571
      %v1573 = vrot.slane %v1564, %v1572
      %v1574 = vlaneseq
      %v1575 = vshrl.u32 %v1574, 7
      %v1576 = vsub.s32 2, %v1575
      %v1577 = vrot.slane %v1564, %v1576
      %v1578 = vlaneseq
      %v1579 = vshrl.u32 %v1578, 7
      %v1580 = vsub.s32 3, %v1579
      %v1581 = vrot.slane %v1564, %v1580
      %v1586 = vmul.f32 %v1380, %v1569
      %v1587 = vmul.f32 %v1382, %v1573
      %v1588 = vmul.f32 %v1526, %v1577
      %v1589 = vmul.f32 %v1528, %v1581
      %v1590 = vmul.f32 %v1384, %v1569
      %v1591 = vmul.f32 %v1386, %v1573
      %v1592 = vmul.f32 %v1530, %v1577
      %v1593 = vmul.f32 %v1532, %v1581
      %v1594 = vmul.f32 %v1390, %v1569
      %v1595 = vmul.f32 %v1392, %v1573
      %v1596 = vmul.f32 %v1536, %v1577
      %v1597 = vmul.f32 %v1538, %v1581
      %v1598 = vmul.f32 %v1394, %v1569
      %v1599 = vmul.f32 %v1396, %v1573
      %v1600 = vmul.f32 %v1540, %v1577
      %v1601 = vmul.f32 %v1542, %v1581
      %v1602 = vmul.f32 %v1400, %v1569
      %v1603 = vmul.f32 %v1402, %v1573
      %v1604 = vmul.f32 %v1546, %v1577
      %v1605 = vmul.f32 %v1548, %v1581
      %v1606 = vmul.f32 %v1404, %v1569
      %v1607 = vmul.f32 %v1406, %v1573
      %v1608 = vmul.f32 %v1550, %v1577
      %v1609 = vmul.f32 %v1552, %v1581
      %v1610 = vmul.f32 %v1410, %v1569
      %v1611 = vmul.f32 %v1412, %v1573
      %v1612 = vmul.f32 %v1556, %v1577
      %v1613 = vmul.f32 %v1558, %v1581
      %v1614 = vmul.f32 %v1414, %v1569
      %v1615 = vmul.f32 %v1416, %v1573
      %v1616 = vmul.f32 %v1560, %v1577
      %v1617 = vmul.f32 %v1562, %v1581
      %v1618 = vld [vmem:[%s4] sm:$0xf]
      %v1620 = vlaneseq
      %v1621 = vshrl.u32 %v1620, 7
      %v1622 = vsub.s32 0, %v1621
      %v1623 = vrot.slane %v1618, %v1622
      %v1624 = vlaneseq
      %v1625 = vshrl.u32 %v1624, 7
      %v1626 = vsub.s32 1, %v1625
      %v1627 = vrot.slane %v1618, %v1626
      %v1628 = vlaneseq
      %v1629 = vshrl.u32 %v1628, 7
      %v1630 = vsub.s32 2, %v1629
      %v1631 = vrot.slane %v1618, %v1630
      %v1632 = vlaneseq
      %v1633 = vshrl.u32 %v1632, 7
      %v1634 = vsub.s32 3, %v1633
      %v1635 = vrot.slane %v1618, %v1634
      %v1640 = vadd.f32 %v1586, %v1623
      %v1641 = vadd.f32 %v1587, %v1627
      %v1642 = vadd.f32 %v1588, %v1631
      %v1643 = vadd.f32 %v1589, %v1635
      %v1644 = vadd.f32 %v1590, %v1623
      %v1645 = vadd.f32 %v1591, %v1627
      %v1646 = vadd.f32 %v1592, %v1631
      %v1647 = vadd.f32 %v1593, %v1635
      %v1648 = vadd.f32 %v1594, %v1623
      %v1649 = vadd.f32 %v1595, %v1627
      %v1650 = vadd.f32 %v1596, %v1631
      %v1651 = vadd.f32 %v1597, %v1635
      %v1652 = vadd.f32 %v1598, %v1623
      %v1653 = vadd.f32 %v1599, %v1627
      %v1654 = vadd.f32 %v1600, %v1631
      %v1655 = vadd.f32 %v1601, %v1635
      %v1656 = vadd.f32 %v1602, %v1623
      %v1657 = vadd.f32 %v1603, %v1627
      %v1658 = vadd.f32 %v1604, %v1631
      %v1659 = vadd.f32 %v1605, %v1635
      %v1660 = vadd.f32 %v1606, %v1623
      %v1661 = vadd.f32 %v1607, %v1627
      %v1662 = vadd.f32 %v1608, %v1631
      %v1663 = vadd.f32 %v1609, %v1635
      %v1664 = vadd.f32 %v1610, %v1623
      %v1665 = vadd.f32 %v1611, %v1627
      %v1666 = vadd.f32 %v1612, %v1631
      %v1667 = vadd.f32 %v1613, %v1635
      %v1668 = vadd.f32 %v1614, %v1623
      %v1669 = vadd.f32 %v1615, %v1627
      %v1670 = vadd.f32 %v1616, %v1631
      %v1671 = vadd.f32 %v1617, %v1635
      %v1672 = vmax.f32 %v1640, 0.0
      %v1673 = vmax.f32 %v1641, 0.0
      %v1674 = vmax.f32 %v1642, 0.0
      %v1675 = vmax.f32 %v1643, 0.0
      %v1676 = vmax.f32 %v1644, 0.0
      %v1677 = vmax.f32 %v1645, 0.0
      %v1678 = vmax.f32 %v1646, 0.0
      %v1679 = vmax.f32 %v1647, 0.0
      %v1680 = vmax.f32 %v1648, 0.0
      %v1681 = vmax.f32 %v1649, 0.0
      %v1682 = vmax.f32 %v1650, 0.0
      %v1683 = vmax.f32 %v1651, 0.0
      %v1684 = vmax.f32 %v1652, 0.0
      %v1685 = vmax.f32 %v1653, 0.0
      %v1686 = vmax.f32 %v1654, 0.0
      %v1687 = vmax.f32 %v1655, 0.0
      %v1688 = vmax.f32 %v1656, 0.0
      %v1689 = vmax.f32 %v1657, 0.0
      %v1690 = vmax.f32 %v1658, 0.0
      %v1691 = vmax.f32 %v1659, 0.0
      %v1692 = vmax.f32 %v1660, 0.0
      %v1693 = vmax.f32 %v1661, 0.0
      %v1694 = vmax.f32 %v1662, 0.0
      %v1695 = vmax.f32 %v1663, 0.0
      %v1696 = vmax.f32 %v1664, 0.0
      %v1697 = vmax.f32 %v1665, 0.0
      %v1698 = vmax.f32 %v1666, 0.0
      %v1699 = vmax.f32 %v1667, 0.0
      %v1700 = vmax.f32 %v1668, 0.0
      %v1701 = vmax.f32 %v1669, 0.0
      %v1702 = vmax.f32 %v1670, 0.0
      %v1703 = vmax.f32 %v1671, 0.0
      %v1704 = vpack.c.bf16 %v1676, %v1672
      %v1705 = vpack.c.bf16 %v1677, %v1673
      %v1706 = vpack.c.bf16 %v1678, %v1674
      %v1707 = vpack.c.bf16 %v1679, %v1675
      %v1708 = vpack.c.bf16 %v1684, %v1680
      %v1709 = vpack.c.bf16 %v1685, %v1681
      %v1710 = vpack.c.bf16 %v1686, %v1682
      %v1711 = vpack.c.bf16 %v1687, %v1683
      %v1712 = vpack.c.bf16 %v1692, %v1688
      %v1713 = vpack.c.bf16 %v1693, %v1689
      %v1714 = vpack.c.bf16 %v1694, %v1690
      %v1715 = vpack.c.bf16 %v1695, %v1691
      %v1716 = vpack.c.bf16 %v1700, %v1696
      %v1717 = vpack.c.bf16 %v1701, %v1697
      %v1718 = vpack.c.bf16 %v1702, %v1698
      %v1719 = vpack.c.bf16 %v1703, %v1699
      %v1720 = vld [vmem:[%s8] sm:$0xf]
      %v1721 = vld [vmem:[%s8 + $0x4] sm:$0xf]
      %v1722 = vld [vmem:[%s8 + $0x8] sm:$0xf]
      %v1723 = vld [vmem:[%s8 + $0xc] sm:$0xf]
      %v1724 = vld [vmem:[%s8 + $0x10] sm:$0xf]
      %v1725 = vld [vmem:[%s8 + $0x14] sm:$0xf]
      %v1726 = vld [vmem:[%s8 + $0x18] sm:$0xf]
      %v1727 = vld [vmem:[%s8 + $0x1c] sm:$0xf]
      %v1728 = vld [vmem:[%s8 + $0x20] sm:$0xf]
      %v1729 = vld [vmem:[%s8 + $0x24] sm:$0xf]
      %v1730 = vld [vmem:[%s8 + $0x28] sm:$0xf]
      %v1731 = vld [vmem:[%s8 + $0x2c] sm:$0xf]
      %v1732 = vld [vmem:[%s8 + $0x30] sm:$0xf]
      %v1733 = vld [vmem:[%s8 + $0x34] sm:$0xf]
      %v1734 = vld [vmem:[%s8 + $0x38] sm:$0xf]
      %v1735 = vld [vmem:[%s8 + $0x3c] sm:$0xf]
      %v1736 = vld [vmem:[%s8 + $0x40] sm:$0xf]
      %v1737 = vld [vmem:[%s8 + $0x44] sm:$0xf]
      %v1738 = vld [vmem:[%s8 + $0x48] sm:$0xf]
      %v1739 = vld [vmem:[%s8 + $0x4c] sm:$0xf]
      %v1740 = vld [vmem:[%s8 + $0x50] sm:$0xf]
      %v1741 = vld [vmem:[%s8 + $0x54] sm:$0xf]
      %v1742 = vld [vmem:[%s8 + $0x58] sm:$0xf]
      %v1743 = vld [vmem:[%s8 + $0x5c] sm:$0xf]
      %v1744 = vld [vmem:[%s8 + $0x60] sm:$0xf]
      %v1745 = vld [vmem:[%s8 + $0x64] sm:$0xf]
      %v1746 = vld [vmem:[%s8 + $0x68] sm:$0xf]
      %v1747 = vld [vmem:[%s8 + $0x6c] sm:$0xf]
      %v1748 = vld [vmem:[%s8 + $0x70] sm:$0xf]
      %v1749 = vld [vmem:[%s8 + $0x74] sm:$0xf]
      %v1750 = vld [vmem:[%s8 + $0x78] sm:$0xf]
      %v1751 = vld [vmem:[%s8 + $0x7c] sm:$0xf]
      %v1752 = vld [vmem:[%s8 + $0x80] sm:$0xf]
      %v1753 = vld [vmem:[%s8 + $0x84] sm:$0xf]
      %v1754 = vld [vmem:[%s8 + $0x88] sm:$0xf]
      %v1755 = vld [vmem:[%s8 + $0x8c] sm:$0xf]
      %v1756 = vld [vmem:[%s8 + $0x90] sm:$0xf]
      %v1757 = vld [vmem:[%s8 + $0x94] sm:$0xf]
      %v1758 = vld [vmem:[%s8 + $0x98] sm:$0xf]
      %v1759 = vld [vmem:[%s8 + $0x9c] sm:$0xf]
      %v1760 = vld [vmem:[%s8 + $0xa0] sm:$0xf]
      %v1761 = vld [vmem:[%s8 + $0xa4] sm:$0xf]
      %v1762 = vld [vmem:[%s8 + $0xa8] sm:$0xf]
      %v1763 = vld [vmem:[%s8 + $0xac] sm:$0xf]
      %v1764 = vld [vmem:[%s8 + $0xb0] sm:$0xf]
      %v1765 = vld [vmem:[%s8 + $0xb4] sm:$0xf]
      %v1766 = vld [vmem:[%s8 + $0xb8] sm:$0xf]
      %v1767 = vld [vmem:[%s8 + $0xbc] sm:$0xf]
      %v1768 = vld [vmem:[%s8 + $0xc0] sm:$0xf]
      %v1769 = vld [vmem:[%s8 + $0xc4] sm:$0xf]
      %v1770 = vld [vmem:[%s8 + $0xc8] sm:$0xf]
      %v1771 = vld [vmem:[%s8 + $0xcc] sm:$0xf]
      %v1772 = vld [vmem:[%s8 + $0xd0] sm:$0xf]
      %v1773 = vld [vmem:[%s8 + $0xd4] sm:$0xf]
      %v1774 = vld [vmem:[%s8 + $0xd8] sm:$0xf]
      %v1775 = vld [vmem:[%s8 + $0xdc] sm:$0xf]
      %v1776 = vld [vmem:[%s8 + $0xe0] sm:$0xf]
      %v1777 = vld [vmem:[%s8 + $0xe4] sm:$0xf]
      %v1778 = vld [vmem:[%s8 + $0xe8] sm:$0xf]
      %v1779 = vld [vmem:[%s8 + $0xec] sm:$0xf]
      %v1780 = vld [vmem:[%s8 + $0xf0] sm:$0xf]
      %v1781 = vld [vmem:[%s8 + $0xf4] sm:$0xf]
      %v1782 = vld [vmem:[%s8 + $0xf8] sm:$0xf]
      %v1783 = vld [vmem:[%s8 + $0xfc] sm:$0xf]
      %v1784 = vld [vmem:[%s401] sm:$0xf]
      %v1785 = vld [vmem:[%s401 + $0x4] sm:$0xf]
      %v1786 = vld [vmem:[%s401 + $0x8] sm:$0xf]
      %v1787 = vld [vmem:[%s401 + $0xc] sm:$0xf]
      %v1788 = vld [vmem:[%s401 + $0x10] sm:$0xf]
      %v1789 = vld [vmem:[%s401 + $0x14] sm:$0xf]
      %v1790 = vld [vmem:[%s401 + $0x18] sm:$0xf]
      %v1791 = vld [vmem:[%s401 + $0x1c] sm:$0xf]
      %v1792 = vld [vmem:[%s5] sm:$0xff]
      %v1793 = vld [vmem:[%s5 + $0x8] sm:$0xff]
      %v1794 = vld [vmem:[%s5 + $0x10] sm:$0xff]
      %v1795 = vld [vmem:[%s5 + $0x18] sm:$0xff]
      %v1796 = vld [vmem:[%s5 + $0x20] sm:$0xff]
      %v1797 = vld [vmem:[%s5 + $0x28] sm:$0xff]
      %v1798 = vld [vmem:[%s5 + $0x30] sm:$0xff]
      %v1799 = vld [vmem:[%s5 + $0x38] sm:$0xff]
      %v1800 = vld [vmem:[%s5 + $0x40] sm:$0xff]
      %v1801 = vld [vmem:[%s5 + $0x48] sm:$0xff]
      %v1802 = vld [vmem:[%s5 + $0x50] sm:$0xff]
      %v1803 = vld [vmem:[%s5 + $0x58] sm:$0xff]
      %v1804 = vld [vmem:[%s5 + $0x60] sm:$0xff]
      %v1805 = vld [vmem:[%s5 + $0x68] sm:$0xff]
      %v1806 = vld [vmem:[%s5 + $0x70] sm:$0xff]
      %v1807 = vld [vmem:[%s5 + $0x78] sm:$0xff]
      %v1808 = vld [vmem:[%s5 + $0x80] sm:$0xff]
      %v1809 = vld [vmem:[%s5 + $0x88] sm:$0xff]
      %v1810 = vld [vmem:[%s5 + $0x90] sm:$0xff]
      %v1811 = vld [vmem:[%s5 + $0x98] sm:$0xff]
      %v1812 = vld [vmem:[%s5 + $0xa0] sm:$0xff]
      %v1813 = vld [vmem:[%s5 + $0xa8] sm:$0xff]
      %v1814 = vld [vmem:[%s5 + $0xb0] sm:$0xff]
      %v1815 = vld [vmem:[%s5 + $0xb8] sm:$0xff]
      %v1816 = vld [vmem:[%s5 + $0xc0] sm:$0xff]
      %v1817 = vld [vmem:[%s5 + $0xc8] sm:$0xff]
      %v1818 = vld [vmem:[%s5 + $0xd0] sm:$0xff]
      %v1819 = vld [vmem:[%s5 + $0xd8] sm:$0xff]
      %v1820 = vld [vmem:[%s5 + $0xe0] sm:$0xff]
      %v1821 = vld [vmem:[%s5 + $0xe8] sm:$0xff]
      %v1822 = vld [vmem:[%s5 + $0xf0] sm:$0xff]
      %v1823 = vld [vmem:[%s5 + $0xf8] sm:$0xff]
      %v1832 = vunpack.c.l.b16 %v1784
      %v1833 = vunpack.c.l.b16 %v1785
      %v1834 = vunpack.c.l.b16 %v1786
      %v1835 = vunpack.c.l.b16 %v1787
      %v1836 = vunpack.c.l.b16 %v1788
      %v1837 = vunpack.c.l.b16 %v1789
      %v1838 = vunpack.c.l.b16 %v1790
      %v1839 = vunpack.c.l.b16 %v1791
      %v1840 = vpack.c.b16 %v1833, %v1832
      %v1841 = vpack.c.b16 %v1835, %v1834
      %v1842 = vpack.c.b16 %v1837, %v1836
      %v1843 = vpack.c.b16 %v1839, %v1838
      %v1880 = vunpack.c.l.b16 %v1792
      %v1881 = vunpack.c.h.b16 %v1792
      %v1882 = vunpack.c.l.b16 %v1793
      %v1883 = vunpack.c.h.b16 %v1793
      %v1884 = vunpack.c.l.b16 %v1794
      %v1885 = vunpack.c.h.b16 %v1794
      %v1886 = vunpack.c.l.b16 %v1795
      %v1887 = vunpack.c.h.b16 %v1795
      %v1888 = vunpack.c.l.b16 %v1796
      %v1889 = vunpack.c.h.b16 %v1796
      %v1890 = vunpack.c.l.b16 %v1797
      %v1891 = vunpack.c.h.b16 %v1797
      %v1892 = vunpack.c.l.b16 %v1798
      %v1893 = vunpack.c.h.b16 %v1798
      %v1894 = vunpack.c.l.b16 %v1799
      %v1895 = vunpack.c.h.b16 %v1799
      %v1896 = vunpack.c.l.b16 %v1800
      %v1897 = vunpack.c.h.b16 %v1800
      %v1898 = vunpack.c.l.b16 %v1801
      %v1899 = vunpack.c.h.b16 %v1801
      %v1900 = vunpack.c.l.b16 %v1802
      %v1901 = vunpack.c.h.b16 %v1802
      %v1902 = vunpack.c.l.b16 %v1803
      %v1903 = vunpack.c.h.b16 %v1803
      %v1904 = vunpack.c.l.b16 %v1804
      %v1905 = vunpack.c.h.b16 %v1804
      %v1906 = vunpack.c.l.b16 %v1805
      %v1907 = vunpack.c.h.b16 %v1805
      %v1908 = vunpack.c.l.b16 %v1806
      %v1909 = vunpack.c.h.b16 %v1806
      %v1910 = vunpack.c.l.b16 %v1807
      %v1911 = vunpack.c.h.b16 %v1807
      %v1912 = vunpack.c.l.b16 %v1808
      %v1913 = vunpack.c.h.b16 %v1808
      %v1914 = vunpack.c.l.b16 %v1809
      %v1915 = vunpack.c.h.b16 %v1809
      %v1916 = vunpack.c.l.b16 %v1810
      %v1917 = vunpack.c.h.b16 %v1810
      %v1918 = vunpack.c.l.b16 %v1811
      %v1919 = vunpack.c.h.b16 %v1811
      %v1920 = vunpack.c.l.b16 %v1812
      %v1921 = vunpack.c.h.b16 %v1812
      %v1922 = vunpack.c.l.b16 %v1813
      %v1923 = vunpack.c.h.b16 %v1813
      %v1924 = vunpack.c.l.b16 %v1814
      %v1925 = vunpack.c.h.b16 %v1814
      %v1926 = vunpack.c.l.b16 %v1815
      %v1927 = vunpack.c.h.b16 %v1815
      %v1928 = vunpack.c.l.b16 %v1816
      %v1929 = vunpack.c.h.b16 %v1816
      %v1930 = vunpack.c.l.b16 %v1817
      %v1931 = vunpack.c.h.b16 %v1817
      %v1932 = vunpack.c.l.b16 %v1818
      %v1933 = vunpack.c.h.b16 %v1818
      %v1934 = vunpack.c.l.b16 %v1819
      %v1935 = vunpack.c.h.b16 %v1819
      %v1936 = vunpack.c.l.b16 %v1820
      %v1937 = vunpack.c.h.b16 %v1820
      %v1938 = vunpack.c.l.b16 %v1821
      %v1939 = vunpack.c.h.b16 %v1821
      %v1940 = vunpack.c.l.b16 %v1822
      %v1941 = vunpack.c.h.b16 %v1822
      %v1942 = vunpack.c.l.b16 %v1823
      %v1943 = vunpack.c.h.b16 %v1823
      %v1944 = vpack.c.b16 %v1884, %v1880
      %v1945 = vpack.c.b16 %v1885, %v1881
      %v1946 = vpack.c.b16 %v1886, %v1882
      %v1947 = vpack.c.b16 %v1887, %v1883
      %v1948 = vpack.c.b16 %v1892, %v1888
      %v1949 = vpack.c.b16 %v1893, %v1889
      %v1950 = vpack.c.b16 %v1894, %v1890
      %v1951 = vpack.c.b16 %v1895, %v1891
      %v1952 = vpack.c.b16 %v1900, %v1896
      %v1953 = vpack.c.b16 %v1901, %v1897
      %v1954 = vpack.c.b16 %v1902, %v1898
      %v1955 = vpack.c.b16 %v1903, %v1899
      %v1956 = vpack.c.b16 %v1908, %v1904
      %v1957 = vpack.c.b16 %v1909, %v1905
      %v1958 = vpack.c.b16 %v1910, %v1906
      %v1959 = vpack.c.b16 %v1911, %v1907
      %v1960 = vpack.c.b16 %v1916, %v1912
      %v1961 = vpack.c.b16 %v1917, %v1913
      %v1962 = vpack.c.b16 %v1918, %v1914
      %v1963 = vpack.c.b16 %v1919, %v1915
      %v1964 = vpack.c.b16 %v1924, %v1920
      %v1965 = vpack.c.b16 %v1925, %v1921
      %v1966 = vpack.c.b16 %v1926, %v1922
      %v1967 = vpack.c.b16 %v1927, %v1923
      %v1968 = vpack.c.b16 %v1932, %v1928
      %v1969 = vpack.c.b16 %v1933, %v1929
      %v1970 = vpack.c.b16 %v1934, %v1930
      %v1971 = vpack.c.b16 %v1935, %v1931
      %v1972 = vpack.c.b16 %v1940, %v1936
      %v1973 = vpack.c.b16 %v1941, %v1937
      %v1974 = vpack.c.b16 %v1942, %v1938
      %v1975 = vpack.c.b16 %v1943, %v1939
      %2008 = vmatprep.subr.bf16.mxu0 %v1945
      %2009 = vmatpush1.bf16.msra.mxu0 %v1944
      %2010 = vmatprep.subr.bf16.mxu0 %v1949
      %2011 = vmatpush1.bf16.msra.mxu0 %v1948
      %2012 = vmatprep.subr.bf16.mxu0 %v1953
      %2013 = vmatpush1.bf16.msra.mxu0 %v1952
      %2014 = vmatprep.subr.bf16.mxu0 %v1957
      %2015 = vmatpush1.bf16.msra.mxu0 %v1956
      %2016 = vmatprep.subr.bf16.mxu0 %v1961
      %2017 = vmatpush1.bf16.msra.mxu0 %v1960
      %2018 = vmatprep.subr.bf16.mxu0 %v1965
      %2019 = vmatpush1.bf16.msra.mxu0 %v1964
      %2020 = vmatprep.subr.bf16.mxu0 %v1969
      %2021 = vmatpush1.bf16.msra.mxu0 %v1968
      %2022 = vmatprep.subr.bf16.mxu0 %v1973
      %2023 = vmatpush1.bf16.msra.mxu0 %v1972
      %2024 = vmatprep.subr.bf16.mxu0 0
      %2025 = vmatpush1.bf16.msra.mxu0 0
      %2026 = vmatprep.subr.bf16.mxu0 0
      %2027 = vmatpush1.bf16.msra.mxu0 0
      %2028 = vmatprep.subr.bf16.mxu0 0
      %2029 = vmatpush1.bf16.msra.mxu0 0
      %2030 = vmatprep.subr.bf16.mxu0 0
      %2031 = vmatpush1.bf16.msra.mxu0 0
      %2032 = vmatprep.subr.bf16.mxu0 0
      %2033 = vmatpush1.bf16.msra.mxu0 0
      %2034 = vmatprep.subr.bf16.mxu0 0
      %2035 = vmatpush1.bf16.msra.mxu0 0
      %2036 = vmatprep.subr.bf16.mxu0 0
      %2037 = vmatpush1.bf16.msra.mxu0 0
      %2038 = vmatprep.subr.bf16.mxu0 0
      %2039 = vmatpush1.bf16.msra.mxu0 0
      %2040 = vmatprep.mubr.bf16.mxu0 0
      %2041 = vmatmul.mubr.bf16.gmra.mrb[0].mxu0 %v1840
      %v2042 = vpop.f32.mrb[0].mxu0
      %v2043 = vadd.f32 0.0, %v2042
      %v2044 = vpop.f32.mrb[0].mxu0
      %v2045 = vadd.f32 0.0, %v2044
      %v2046 = vpop.f32.mrb[0].mxu0
      %v2047 = vadd.f32 0.0, %v2046
      %v2048 = vpop.f32.mrb[0].mxu0
      %v2049 = vadd.f32 0.0, %v2048
      %2050 = vmatprep.mubr.bf16.mxu0 0
      %2051 = vmatmul.mubr.bf16.gmra.mrb[0].mxu0 %v1841
      %v2052 = vpop.f32.mrb[0].mxu0
      %v2053 = vadd.f32 0.0, %v2052
      %v2054 = vpop.f32.mrb[0].mxu0
      %v2055 = vadd.f32 0.0, %v2054
      %v2056 = vpop.f32.mrb[0].mxu0
      %v2057 = vadd.f32 0.0, %v2056
      %v2058 = vpop.f32.mrb[0].mxu0
      %v2059 = vadd.f32 0.0, %v2058
      %2060 = vmatprep.mubr.bf16.mxu0 0
      %2061 = vmatmul.mubr.bf16.gmra.mrb[0].mxu0 %v1842
      %v2062 = vpop.f32.mrb[0].mxu0
      %v2063 = vadd.f32 0.0, %v2062
      %v2064 = vpop.f32.mrb[0].mxu0
      %v2065 = vadd.f32 0.0, %v2064
      %v2066 = vpop.f32.mrb[0].mxu0
      %v2067 = vadd.f32 0.0, %v2066
      %v2068 = vpop.f32.mrb[0].mxu0
      %v2069 = vadd.f32 0.0, %v2068
      %2070 = vmatprep.mubr.bf16.mxu0 0
      %2071 = vmatmul.mubr.bf16.gmra.mrb[0].mxu0 %v1843
      %v2072 = vpop.f32.mrb[0].mxu0
      %v2073 = vadd.f32 0.0, %v2072
      %v2074 = vpop.f32.mrb[0].mxu0
      %v2075 = vadd.f32 0.0, %v2074
      %v2076 = vpop.f32.mrb[0].mxu0
      %v2077 = vadd.f32 0.0, %v2076
      %v2078 = vpop.f32.mrb[0].mxu0
      %v2079 = vadd.f32 0.0, %v2078
      %2080 = vdwg.mxu0
      %2081 = vmatprep.subr.bf16.mxu0 %v1947
      %2082 = vmatpush1.bf16.msra.mxu0 %v1946
      %2083 = vmatprep.subr.bf16.mxu0 %v1951
      %2084 = vmatpush1.bf16.msra.mxu0 %v1950
      %2085 = vmatprep.subr.bf16.mxu0 %v1955
      %2086 = vmatpush1.bf16.msra.mxu0 %v1954
      %2087 = vmatprep.subr.bf16.mxu0 %v1959
      %2088 = vmatpush1.bf16.msra.mxu0 %v1958
      %2089 = vmatprep.subr.bf16.mxu0 %v1963
      %2090 = vmatpush1.bf16.msra.mxu0 %v1962
      %2091 = vmatprep.subr.bf16.mxu0 %v1967
      %2092 = vmatpush1.bf16.msra.mxu0 %v1966
      %2093 = vmatprep.subr.bf16.mxu0 %v1971
      %2094 = vmatpush1.bf16.msra.mxu0 %v1970
      %2095 = vmatprep.subr.bf16.mxu0 %v1975
      %2096 = vmatpush1.bf16.msra.mxu0 %v1974
      %2097 = vmatprep.subr.bf16.mxu0 0
      %2098 = vmatpush1.bf16.msra.mxu0 0
      %2099 = vmatprep.subr.bf16.mxu0 0
      %2100 = vmatpush1.bf16.msra.mxu0 0
      %2101 = vmatprep.subr.bf16.mxu0 0
      %2102 = vmatpush1.bf16.msra.mxu0 0
      %2103 = vmatprep.subr.bf16.mxu0 0
      %2104 = vmatpush1.bf16.msra.mxu0 0
      %2105 = vmatprep.subr.bf16.mxu0 0
      %2106 = vmatpush1.bf16.msra.mxu0 0
      %2107 = vmatprep.subr.bf16.mxu0 0
      %2108 = vmatpush1.bf16.msra.mxu0 0
      %2109 = vmatprep.subr.bf16.mxu0 0
      %2110 = vmatpush1.bf16.msra.mxu0 0
      %2111 = vmatprep.subr.bf16.mxu0 0
      %2112 = vmatpush1.bf16.msra.mxu0 0
      %2113 = vmatprep.mubr.bf16.mxu0 0
      %2114 = vmatmul.mubr.bf16.gmra.mrb[0].mxu0 %v1840
      %v2115 = vpop.f32.mrb[0].mxu0
      %v2116 = vadd.f32 0.0, %v2115
      %v2117 = vpop.f32.mrb[0].mxu0
      %v2118 = vadd.f32 0.0, %v2117
      %v2119 = vpop.f32.mrb[0].mxu0
      %v2120 = vadd.f32 0.0, %v2119
      %v2121 = vpop.f32.mrb[0].mxu0
      %v2122 = vadd.f32 0.0, %v2121
      %2123 = vmatprep.mubr.bf16.mxu0 0
      %2124 = vmatmul.mubr.bf16.gmra.mrb[0].mxu0 %v1841
      %v2125 = vpop.f32.mrb[0].mxu0
      %v2126 = vadd.f32 0.0, %v2125
      %v2127 = vpop.f32.mrb[0].mxu0
      %v2128 = vadd.f32 0.0, %v2127
      %v2129 = vpop.f32.mrb[0].mxu0
      %v2130 = vadd.f32 0.0, %v2129
      %v2131 = vpop.f32.mrb[0].mxu0
      %v2132 = vadd.f32 0.0, %v2131
      %2133 = vmatprep.mubr.bf16.mxu0 0
      %2134 = vmatmul.mubr.bf16.gmra.mrb[0].mxu0 %v1842
      %v2135 = vpop.f32.mrb[0].mxu0
      %v2136 = vadd.f32 0.0, %v2135
      %v2137 = vpop.f32.mrb[0].mxu0
      %v2138 = vadd.f32 0.0, %v2137
      %v2139 = vpop.f32.mrb[0].mxu0
      %v2140 = vadd.f32 0.0, %v2139
      %v2141 = vpop.f32.mrb[0].mxu0
      %v2142 = vadd.f32 0.0, %v2141
      %2143 = vmatprep.mubr.bf16.mxu0 0
      %2144 = vmatmul.mubr.bf16.gmra.mrb[0].mxu0 %v1843
      %v2145 = vpop.f32.mrb[0].mxu0
      %v2146 = vadd.f32 0.0, %v2145
      %v2147 = vpop.f32.mrb[0].mxu0
      %v2148 = vadd.f32 0.0, %v2147
      %v2149 = vpop.f32.mrb[0].mxu0
      %v2150 = vadd.f32 0.0, %v2149
      %v2151 = vpop.f32.mrb[0].mxu0
      %v2152 = vadd.f32 0.0, %v2151
      %2153 = vdwg.mxu0
      %v2154 = vld [vmem:[%s6] sm:$0xf]
      %v2156 = vlaneseq
      %v2157 = vshrl.u32 %v2156, 7
      %v2158 = vsub.s32 0, %v2157
      %v2159 = vrot.slane %v2154, %v2158
      %v2160 = vlaneseq
      %v2161 = vshrl.u32 %v2160, 7
      %v2162 = vsub.s32 1, %v2161
      %v2163 = vrot.slane %v2154, %v2162
      %v2164 = vlaneseq
      %v2165 = vshrl.u32 %v2164, 7
      %v2166 = vsub.s32 2, %v2165
      %v2167 = vrot.slane %v2154, %v2166
      %v2168 = vlaneseq
      %v2169 = vshrl.u32 %v2168, 7
      %v2170 = vsub.s32 3, %v2169
      %v2171 = vrot.slane %v2154, %v2170
      %v2176 = vmul.f32 %v2043, %v2159
      %v2177 = vmul.f32 %v2045, %v2163
      %v2178 = vmul.f32 %v2116, %v2167
      %v2179 = vmul.f32 %v2118, %v2171
      %v2180 = vmul.f32 %v2047, %v2159
      %v2181 = vmul.f32 %v2049, %v2163
      %v2182 = vmul.f32 %v2120, %v2167
      %v2183 = vmul.f32 %v2122, %v2171
      %v2184 = vmul.f32 %v2053, %v2159
      %v2185 = vmul.f32 %v2055, %v2163
      %v2186 = vmul.f32 %v2126, %v2167
      %v2187 = vmul.f32 %v2128, %v2171
      %v2188 = vmul.f32 %v2057, %v2159
      %v2189 = vmul.f32 %v2059, %v2163
      %v2190 = vmul.f32 %v2130, %v2167
      %v2191 = vmul.f32 %v2132, %v2171
      %v2192 = vmul.f32 %v2063, %v2159
      %v2193 = vmul.f32 %v2065, %v2163
      %v2194 = vmul.f32 %v2136, %v2167
      %v2195 = vmul.f32 %v2138, %v2171
      %v2196 = vmul.f32 %v2067, %v2159
      %v2197 = vmul.f32 %v2069, %v2163
      %v2198 = vmul.f32 %v2140, %v2167
      %v2199 = vmul.f32 %v2142, %v2171
      %v2200 = vmul.f32 %v2073, %v2159
      %v2201 = vmul.f32 %v2075, %v2163
      %v2202 = vmul.f32 %v2146, %v2167
      %v2203 = vmul.f32 %v2148, %v2171
      %v2204 = vmul.f32 %v2077, %v2159
      %v2205 = vmul.f32 %v2079, %v2163
      %v2206 = vmul.f32 %v2150, %v2167
      %v2207 = vmul.f32 %v2152, %v2171
      %v2208 = vld [vmem:[%s7] sm:$0xf]
      %v2210 = vlaneseq
      %v2211 = vshrl.u32 %v2210, 7
      %v2212 = vsub.s32 0, %v2211
      %v2213 = vrot.slane %v2208, %v2212
      %v2214 = vlaneseq
      %v2215 = vshrl.u32 %v2214, 7
      %v2216 = vsub.s32 1, %v2215
      %v2217 = vrot.slane %v2208, %v2216
      %v2218 = vlaneseq
      %v2219 = vshrl.u32 %v2218, 7
      %v2220 = vsub.s32 2, %v2219
      %v2221 = vrot.slane %v2208, %v2220
      %v2222 = vlaneseq
      %v2223 = vshrl.u32 %v2222, 7
      %v2224 = vsub.s32 3, %v2223
      %v2225 = vrot.slane %v2208, %v2224
      %v2230 = vadd.f32 %v2176, %v2213
      %v2231 = vadd.f32 %v2177, %v2217
      %v2232 = vadd.f32 %v2178, %v2221
      %v2233 = vadd.f32 %v2179, %v2225
      %v2234 = vadd.f32 %v2180, %v2213
      %v2235 = vadd.f32 %v2181, %v2217
      %v2236 = vadd.f32 %v2182, %v2221
      %v2237 = vadd.f32 %v2183, %v2225
      %v2238 = vadd.f32 %v2184, %v2213
      %v2239 = vadd.f32 %v2185, %v2217
      %v2240 = vadd.f32 %v2186, %v2221
      %v2241 = vadd.f32 %v2187, %v2225
      %v2242 = vadd.f32 %v2188, %v2213
      %v2243 = vadd.f32 %v2189, %v2217
      %v2244 = vadd.f32 %v2190, %v2221
      %v2245 = vadd.f32 %v2191, %v2225
      %v2246 = vadd.f32 %v2192, %v2213
      %v2247 = vadd.f32 %v2193, %v2217
      %v2248 = vadd.f32 %v2194, %v2221
      %v2249 = vadd.f32 %v2195, %v2225
      %v2250 = vadd.f32 %v2196, %v2213
      %v2251 = vadd.f32 %v2197, %v2217
      %v2252 = vadd.f32 %v2198, %v2221
      %v2253 = vadd.f32 %v2199, %v2225
      %v2254 = vadd.f32 %v2200, %v2213
      %v2255 = vadd.f32 %v2201, %v2217
      %v2256 = vadd.f32 %v2202, %v2221
      %v2257 = vadd.f32 %v2203, %v2225
      %v2258 = vadd.f32 %v2204, %v2213
      %v2259 = vadd.f32 %v2205, %v2217
      %v2260 = vadd.f32 %v2206, %v2221
      %v2261 = vadd.f32 %v2207, %v2225
      %v2262 = vmax.f32 %v2230, 0.0
      %v2263 = vmax.f32 %v2231, 0.0
      %v2264 = vmax.f32 %v2232, 0.0
      %v2265 = vmax.f32 %v2233, 0.0
      %v2266 = vmax.f32 %v2234, 0.0
      %v2267 = vmax.f32 %v2235, 0.0
      %v2268 = vmax.f32 %v2236, 0.0
      %v2269 = vmax.f32 %v2237, 0.0
      %v2270 = vmax.f32 %v2238, 0.0
      %v2271 = vmax.f32 %v2239, 0.0
      %v2272 = vmax.f32 %v2240, 0.0
      %v2273 = vmax.f32 %v2241, 0.0
      %v2274 = vmax.f32 %v2242, 0.0
      %v2275 = vmax.f32 %v2243, 0.0
      %v2276 = vmax.f32 %v2244, 0.0
      %v2277 = vmax.f32 %v2245, 0.0
      %v2278 = vmax.f32 %v2246, 0.0
      %v2279 = vmax.f32 %v2247, 0.0
      %v2280 = vmax.f32 %v2248, 0.0
      %v2281 = vmax.f32 %v2249, 0.0
      %v2282 = vmax.f32 %v2250, 0.0
      %v2283 = vmax.f32 %v2251, 0.0
      %v2284 = vmax.f32 %v2252, 0.0
      %v2285 = vmax.f32 %v2253, 0.0
      %v2286 = vmax.f32 %v2254, 0.0
      %v2287 = vmax.f32 %v2255, 0.0
      %v2288 = vmax.f32 %v2256, 0.0
      %v2289 = vmax.f32 %v2257, 0.0
      %v2290 = vmax.f32 %v2258, 0.0
      %v2291 = vmax.f32 %v2259, 0.0
      %v2292 = vmax.f32 %v2260, 0.0
      %v2293 = vmax.f32 %v2261, 0.0
      %v2294 = vpack.c.bf16 %v2266, %v2262
      %v2295 = vpack.c.bf16 %v2267, %v2263
      %v2296 = vpack.c.bf16 %v2268, %v2264
      %v2297 = vpack.c.bf16 %v2269, %v2265
      %v2298 = vpack.c.bf16 %v2274, %v2270
      %v2299 = vpack.c.bf16 %v2275, %v2271
      %v2300 = vpack.c.bf16 %v2276, %v2272
      %v2301 = vpack.c.bf16 %v2277, %v2273
      %v2302 = vpack.c.bf16 %v2282, %v2278
      %v2303 = vpack.c.bf16 %v2283, %v2279
      %v2304 = vpack.c.bf16 %v2284, %v2280
      %v2305 = vpack.c.bf16 %v2285, %v2281
      %v2306 = vpack.c.bf16 %v2290, %v2286
      %v2307 = vpack.c.bf16 %v2291, %v2287
      %v2308 = vpack.c.bf16 %v2292, %v2288
      %v2309 = vpack.c.bf16 %v2293, %v2289
      %v2310 = vld [vmem:[%s9] sm:$0xf]
      %v2311 = vld [vmem:[%s9 + $0x4] sm:$0xf]
      %v2312 = vld [vmem:[%s9 + $0x8] sm:$0xf]
      %v2313 = vld [vmem:[%s9 + $0xc] sm:$0xf]
      %v2314 = vld [vmem:[%s9 + $0x10] sm:$0xf]
      %v2315 = vld [vmem:[%s9 + $0x14] sm:$0xf]
      %v2316 = vld [vmem:[%s9 + $0x18] sm:$0xf]
      %v2317 = vld [vmem:[%s9 + $0x1c] sm:$0xf]
      %v2318 = vld [vmem:[%s9 + $0x20] sm:$0xf]
      %v2319 = vld [vmem:[%s9 + $0x24] sm:$0xf]
      %v2320 = vld [vmem:[%s9 + $0x28] sm:$0xf]
      %v2321 = vld [vmem:[%s9 + $0x2c] sm:$0xf]
      %v2322 = vld [vmem:[%s9 + $0x30] sm:$0xf]
      %v2323 = vld [vmem:[%s9 + $0x34] sm:$0xf]
      %v2324 = vld [vmem:[%s9 + $0x38] sm:$0xf]
      %v2325 = vld [vmem:[%s9 + $0x3c] sm:$0xf]
      %v2326 = vld [vmem:[%s9 + $0x40] sm:$0xf]
      %v2327 = vld [vmem:[%s9 + $0x44] sm:$0xf]
      %v2328 = vld [vmem:[%s9 + $0x48] sm:$0xf]
      %v2329 = vld [vmem:[%s9 + $0x4c] sm:$0xf]
      %v2330 = vld [vmem:[%s9 + $0x50] sm:$0xf]
      %v2331 = vld [vmem:[%s9 + $0x54] sm:$0xf]
      %v2332 = vld [vmem:[%s9 + $0x58] sm:$0xf]
      %v2333 = vld [vmem:[%s9 + $0x5c] sm:$0xf]
      %v2334 = vld [vmem:[%s9 + $0x60] sm:$0xf]
      %v2335 = vld [vmem:[%s9 + $0x64] sm:$0xf]
      %v2336 = vld [vmem:[%s9 + $0x68] sm:$0xf]
      %v2337 = vld [vmem:[%s9 + $0x6c] sm:$0xf]
      %v2338 = vld [vmem:[%s9 + $0x70] sm:$0xf]
      %v2339 = vld [vmem:[%s9 + $0x74] sm:$0xf]
      %v2340 = vld [vmem:[%s9 + $0x78] sm:$0xf]
      %v2341 = vld [vmem:[%s9 + $0x7c] sm:$0xf]
      %v2342 = vld [vmem:[%s9 + $0x80] sm:$0xf]
      %v2343 = vld [vmem:[%s9 + $0x84] sm:$0xf]
      %v2344 = vld [vmem:[%s9 + $0x88] sm:$0xf]
      %v2345 = vld [vmem:[%s9 + $0x8c] sm:$0xf]
      %v2346 = vld [vmem:[%s9 + $0x90] sm:$0xf]
      %v2347 = vld [vmem:[%s9 + $0x94] sm:$0xf]
      %v2348 = vld [vmem:[%s9 + $0x98] sm:$0xf]
      %v2349 = vld [vmem:[%s9 + $0x9c] sm:$0xf]
      %v2350 = vld [vmem:[%s9 + $0xa0] sm:$0xf]
      %v2351 = vld [vmem:[%s9 + $0xa4] sm:$0xf]
      %v2352 = vld [vmem:[%s9 + $0xa8] sm:$0xf]
      %v2353 = vld [vmem:[%s9 + $0xac] sm:$0xf]
      %v2354 = vld [vmem:[%s9 + $0xb0] sm:$0xf]
      %v2355 = vld [vmem:[%s9 + $0xb4] sm:$0xf]
      %v2356 = vld [vmem:[%s9 + $0xb8] sm:$0xf]
      %v2357 = vld [vmem:[%s9 + $0xbc] sm:$0xf]
      %v2358 = vld [vmem:[%s9 + $0xc0] sm:$0xf]
      %v2359 = vld [vmem:[%s9 + $0xc4] sm:$0xf]
      %v2360 = vld [vmem:[%s9 + $0xc8] sm:$0xf]
      %v2361 = vld [vmem:[%s9 + $0xcc] sm:$0xf]
      %v2362 = vld [vmem:[%s9 + $0xd0] sm:$0xf]
      %v2363 = vld [vmem:[%s9 + $0xd4] sm:$0xf]
      %v2364 = vld [vmem:[%s9 + $0xd8] sm:$0xf]
      %v2365 = vld [vmem:[%s9 + $0xdc] sm:$0xf]
      %v2366 = vld [vmem:[%s9 + $0xe0] sm:$0xf]
      %v2367 = vld [vmem:[%s9 + $0xe4] sm:$0xf]
      %v2368 = vld [vmem:[%s9 + $0xe8] sm:$0xf]
      %v2369 = vld [vmem:[%s9 + $0xec] sm:$0xf]
      %v2370 = vld [vmem:[%s9 + $0xf0] sm:$0xf]
      %v2371 = vld [vmem:[%s9 + $0xf4] sm:$0xf]
      %v2372 = vld [vmem:[%s9 + $0xf8] sm:$0xf]
      %v2373 = vld [vmem:[%s9 + $0xfc] sm:$0xf]
      %v2438 = vunpack.c.l.b16 %v2310
      %v2439 = vunpack.c.l.b16 %v2311
      %v2440 = vunpack.c.l.b16 %v2312
      %v2441 = vunpack.c.l.b16 %v2313
      %v2442 = vunpack.c.l.b16 %v2314
      %v2443 = vunpack.c.l.b16 %v2315
      %v2444 = vunpack.c.l.b16 %v2316
      %v2445 = vunpack.c.l.b16 %v2317
      %v2446 = vunpack.c.l.b16 %v2318
      %v2447 = vunpack.c.l.b16 %v2319
      %v2448 = vunpack.c.l.b16 %v2320
      %v2449 = vunpack.c.l.b16 %v2321
      %v2450 = vunpack.c.l.b16 %v2322
      %v2451 = vunpack.c.l.b16 %v2323
      %v2452 = vunpack.c.l.b16 %v2324
      %v2453 = vunpack.c.l.b16 %v2325
      %v2454 = vunpack.c.l.b16 %v2326
      %v2455 = vunpack.c.l.b16 %v2327
      %v2456 = vunpack.c.l.b16 %v2328
      %v2457 = vunpack.c.l.b16 %v2329
      %v2458 = vunpack.c.l.b16 %v2330
      %v2459 = vunpack.c.l.b16 %v2331
      %v2460 = vunpack.c.l.b16 %v2332
      %v2461 = vunpack.c.l.b16 %v2333
      %v2462 = vunpack.c.l.b16 %v2334
      %v2463 = vunpack.c.l.b16 %v2335
      %v2464 = vunpack.c.l.b16 %v2336
      %v2465 = vunpack.c.l.b16 %v2337
      %v2466 = vunpack.c.l.b16 %v2338
      %v2467 = vunpack.c.l.b16 %v2339
      %v2468 = vunpack.c.l.b16 %v2340
      %v2469 = vunpack.c.l.b16 %v2341
      %v2470 = vunpack.c.l.b16 %v2342
      %v2471 = vunpack.c.l.b16 %v2343
      %v2472 = vunpack.c.l.b16 %v2344
      %v2473 = vunpack.c.l.b16 %v2345
      %v2474 = vunpack.c.l.b16 %v2346
      %v2475 = vunpack.c.l.b16 %v2347
      %v2476 = vunpack.c.l.b16 %v2348
      %v2477 = vunpack.c.l.b16 %v2349
      %v2478 = vunpack.c.l.b16 %v2350
      %v2479 = vunpack.c.l.b16 %v2351
      %v2480 = vunpack.c.l.b16 %v2352
      %v2481 = vunpack.c.l.b16 %v2353
      %v2482 = vunpack.c.l.b16 %v2354
      %v2483 = vunpack.c.l.b16 %v2355
      %v2484 = vunpack.c.l.b16 %v2356
      %v2485 = vunpack.c.l.b16 %v2357
      %v2486 = vunpack.c.l.b16 %v2358
      %v2487 = vunpack.c.l.b16 %v2359
      %v2488 = vunpack.c.l.b16 %v2360
      %v2489 = vunpack.c.l.b16 %v2361
      %v2490 = vunpack.c.l.b16 %v2362
      %v2491 = vunpack.c.l.b16 %v2363
      %v2492 = vunpack.c.l.b16 %v2364
      %v2493 = vunpack.c.l.b16 %v2365
      %v2494 = vunpack.c.l.b16 %v2366
      %v2495 = vunpack.c.l.b16 %v2367
      %v2496 = vunpack.c.l.b16 %v2368
      %v2497 = vunpack.c.l.b16 %v2369
      %v2498 = vunpack.c.l.b16 %v2370
      %v2499 = vunpack.c.l.b16 %v2371
      %v2500 = vunpack.c.l.b16 %v2372
      %v2501 = vunpack.c.l.b16 %v2373
      %v2502 = vpack.c.b16 %v2439, %v2438
      %v2503 = vpack.c.b16 %v2441, %v2440
      %v2504 = vpack.c.b16 %v2443, %v2442
      %v2505 = vpack.c.b16 %v2445, %v2444
      %v2506 = vpack.c.b16 %v2447, %v2446
      %v2507 = vpack.c.b16 %v2449, %v2448
      %v2508 = vpack.c.b16 %v2451, %v2450
      %v2509 = vpack.c.b16 %v2453, %v2452
      %v2510 = vpack.c.b16 %v2455, %v2454
      %v2511 = vpack.c.b16 %v2457, %v2456
      %v2512 = vpack.c.b16 %v2459, %v2458
      %v2513 = vpack.c.b16 %v2461, %v2460
      %v2514 = vpack.c.b16 %v2463, %v2462
      %v2515 = vpack.c.b16 %v2465, %v2464
      %v2516 = vpack.c.b16 %v2467, %v2466
      %v2517 = vpack.c.b16 %v2469, %v2468
      %v2518 = vpack.c.b16 %v2471, %v2470
      %v2519 = vpack.c.b16 %v2473, %v2472
      %v2520 = vpack.c.b16 %v2475, %v2474
      %v2521 = vpack.c.b16 %v2477, %v2476
      %v2522 = vpack.c.b16 %v2479, %v2478
      %v2523 = vpack.c.b16 %v2481, %v2480
      %v2524 = vpack.c.b16 %v2483, %v2482
      %v2525 = vpack.c.b16 %v2485, %v2484
      %v2526 = vpack.c.b16 %v2487, %v2486
      %v2527 = vpack.c.b16 %v2489, %v2488
      %v2528 = vpack.c.b16 %v2491, %v2490
      %v2529 = vpack.c.b16 %v2493, %v2492
      %v2530 = vpack.c.b16 %v2495, %v2494
      %v2531 = vpack.c.b16 %v2497, %v2496
      %v2532 = vpack.c.b16 %v2499, %v2498
      %v2533 = vpack.c.b16 %v2501, %v2500
      %2566 = vmatprep.subr.bf16.mxu0 0
      %2567 = vmatpush1.bf16.msra.mxu0 %v2502
      %2568 = vmatprep.subr.bf16.mxu0 0
      %2569 = vmatpush1.bf16.msra.mxu0 %v2503
      %2570 = vmatprep.subr.bf16.mxu0 0
      %2571 = vmatpush1.bf16.msra.mxu0 %v2504
      %2572 = vmatprep.subr.bf16.mxu0 0
      %2573 = vmatpush1.bf16.msra.mxu0 %v2505
      %2574 = vmatprep.subr.bf16.mxu0 0
      %2575 = vmatpush1.bf16.msra.mxu0 %v2506
      %2576 = vmatprep.subr.bf16.mxu0 0
      %2577 = vmatpush1.bf16.msra.mxu0 %v2507
      %2578 = vmatprep.subr.bf16.mxu0 0
      %2579 = vmatpush1.bf16.msra.mxu0 %v2508
      %2580 = vmatprep.subr.bf16.mxu0 0
      %2581 = vmatpush1.bf16.msra.mxu0 %v2509
      %2582 = vmatprep.subr.bf16.mxu0 0
      %2583 = vmatpush1.bf16.msra.mxu0 %v2510
      %2584 = vmatprep.subr.bf16.mxu0 0
      %2585 = vmatpush1.bf16.msra.mxu0 %v2511
      %2586 = vmatprep.subr.bf16.mxu0 0
      %2587 = vmatpush1.bf16.msra.mxu0 %v2512
      %2588 = vmatprep.subr.bf16.mxu0 0
      %2589 = vmatpush1.bf16.msra.mxu0 %v2513
      %2590 = vmatprep.subr.bf16.mxu0 0
      %2591 = vmatpush1.bf16.msra.mxu0 %v2514
      %2592 = vmatprep.subr.bf16.mxu0 0
      %2593 = vmatpush1.bf16.msra.mxu0 %v2515
      %2594 = vmatprep.subr.bf16.mxu0 0
      %2595 = vmatpush1.bf16.msra.mxu0 %v2516
      %2596 = vmatprep.subr.bf16.mxu0 0
      %2597 = vmatpush1.bf16.msra.mxu0 %v2517
      %2598 = vmatprep.mubr.bf16.mxu0 %v2295
      %2599 = vmatmul.mubr.bf16.gmra.mrb[0].mxu0 %v2294
      %v2600 = vpop.f32.mrb[0].mxu0
      %v2601 = vadd.f32 0.0, %v2600
      %v2602 = vpop.f32.mrb[0].mxu0
      %v2603 = vpop.f32.mrb[0].mxu0
      %v2604 = vadd.f32 0.0, %v2603
      %v2605 = vpop.f32.mrb[0].mxu0
      %2606 = vmatprep.mubr.bf16.mxu0 %v2299
      %2607 = vmatmul.mubr.bf16.gmra.mrb[0].mxu0 %v2298
      %v2608 = vpop.f32.mrb[0].mxu0
      %v2609 = vadd.f32 0.0, %v2608
      %v2610 = vpop.f32.mrb[0].mxu0
      %v2611 = vpop.f32.mrb[0].mxu0
      %v2612 = vadd.f32 0.0, %v2611
      %v2613 = vpop.f32.mrb[0].mxu0
      %2614 = vmatprep.mubr.bf16.mxu0 %v2303
      %2615 = vmatmul.mubr.bf16.gmra.mrb[0].mxu0 %v2302
      %v2616 = vpop.f32.mrb[0].mxu0
      %v2617 = vadd.f32 0.0, %v2616
      %v2618 = vpop.f32.mrb[0].mxu0
      %v2619 = vpop.f32.mrb[0].mxu0
      %v2620 = vadd.f32 0.0, %v2619
      %v2621 = vpop.f32.mrb[0].mxu0
      %2622 = vmatprep.mubr.bf16.mxu0 %v2307
      %2623 = vmatmul.mubr.bf16.gmra.mrb[0].mxu0 %v2306
      %v2624 = vpop.f32.mrb[0].mxu0
      %v2625 = vadd.f32 0.0, %v2624
      %v2626 = vpop.f32.mrb[0].mxu0
      %v2627 = vpop.f32.mrb[0].mxu0
      %v2628 = vadd.f32 0.0, %v2627
      %v2629 = vpop.f32.mrb[0].mxu0
      %2630 = vdwg.mxu0
      %2631 = vmatprep.subr.bf16.mxu0 0
      %2632 = vmatpush1.bf16.msra.mxu0 %v2518
      %2633 = vmatprep.subr.bf16.mxu0 0
      %2634 = vmatpush1.bf16.msra.mxu0 %v2519
      %2635 = vmatprep.subr.bf16.mxu0 0
      %2636 = vmatpush1.bf16.msra.mxu0 %v2520
      %2637 = vmatprep.subr.bf16.mxu0 0
      %2638 = vmatpush1.bf16.msra.mxu0 %v2521
      %2639 = vmatprep.subr.bf16.mxu0 0
      %2640 = vmatpush1.bf16.msra.mxu0 %v2522
      %2641 = vmatprep.subr.bf16.mxu0 0
      %2642 = vmatpush1.bf16.msra.mxu0 %v2523
      %2643 = vmatprep.subr.bf16.mxu0 0
      %2644 = vmatpush1.bf16.msra.mxu0 %v2524
      %2645 = vmatprep.subr.bf16.mxu0 0
      %2646 = vmatpush1.bf16.msra.mxu0 %v2525
      %2647 = vmatprep.subr.bf16.mxu0 0
      %2648 = vmatpush1.bf16.msra.mxu0 %v2526
      %2649 = vmatprep.subr.bf16.mxu0 0
      %2650 = vmatpush1.bf16.msra.mxu0 %v2527
      %2651 = vmatprep.subr.bf16.mxu0 0
      %2652 = vmatpush1.bf16.msra.mxu0 %v2528
      %2653 = vmatprep.subr.bf16.mxu0 0
      %2654 = vmatpush1.bf16.msra.mxu0 %v2529
      %2655 = vmatprep.subr.bf16.mxu0 0
      %2656 = vmatpush1.bf16.msra.mxu0 %v2530
      %2657 = vmatprep.subr.bf16.mxu0 0
      %2658 = vmatpush1.bf16.msra.mxu0 %v2531
      %2659 = vmatprep.subr.bf16.mxu0 0
      %2660 = vmatpush1.bf16.msra.mxu0 %v2532
      %2661 = vmatprep.subr.bf16.mxu0 0
      %2662 = vmatpush1.bf16.msra.mxu0 %v2533
      %2663 = vmatprep.mubr.bf16.mxu0 %v2297
      %2664 = vmatmul.mubr.bf16.gmra.mrb[0].mxu0 %v2296
      %v2665 = vpop.f32.mrb[0].mxu0
      %v2666 = vadd.f32 %v2601, %v2665
      %v2667 = vpop.f32.mrb[0].mxu0
      %v2668 = vpop.f32.mrb[0].mxu0
      %v2669 = vadd.f32 %v2604, %v2668
      %v2670 = vpop.f32.mrb[0].mxu0
      %2671 = vmatprep.mubr.bf16.mxu0 %v2301
      %2672 = vmatmul.mubr.bf16.gmra.mrb[0].mxu0 %v2300
      %v2673 = vpop.f32.mrb[0].mxu0
      %v2674 = vadd.f32 %v2609, %v2673
      %v2675 = vpop.f32.mrb[0].mxu0
      %v2676 = vpop.f32.mrb[0].mxu0
      %v2677 = vadd.f32 %v2612, %v2676
      %v2678 = vpop.f32.mrb[0].mxu0
      %2679 = vmatprep.mubr.bf16.mxu0 %v2305
      %2680 = vmatmul.mubr.bf16.gmra.mrb[0].mxu0 %v2304
      %v2681 = vpop.f32.mrb[0].mxu0
      %v2682 = vadd.f32 %v2617, %v2681
      %v2683 = vpop.f32.mrb[0].mxu0
      %v2684 = vpop.f32.mrb[0].mxu0
      %v2685 = vadd.f32 %v2620, %v2684
      %v2686 = vpop.f32.mrb[0].mxu0
      %2687 = vmatprep.mubr.bf16.mxu0 %v2309
      %2688 = vmatmul.mubr.bf16.gmra.mrb[0].mxu0 %v2308
      %v2689 = vpop.f32.mrb[0].mxu0
      %v2690 = vadd.f32 %v2625, %v2689
      %v2691 = vpop.f32.mrb[0].mxu0
      %v2692 = vpop.f32.mrb[0].mxu0
      %v2693 = vadd.f32 %v2628, %v2692
      %v2694 = vpop.f32.mrb[0].mxu0
      %2695 = vdwg.mxu0
      %v2760 = vunpack.c.l.b16 %v1720
      %v2761 = vunpack.c.l.b16 %v1721
      %v2762 = vunpack.c.l.b16 %v1722
      %v2763 = vunpack.c.l.b16 %v1723
      %v2764 = vunpack.c.l.b16 %v1724
      %v2765 = vunpack.c.l.b16 %v1725
      %v2766 = vunpack.c.l.b16 %v1726
      %v2767 = vunpack.c.l.b16 %v1727
      %v2768 = vunpack.c.l.b16 %v1728
      %v2769 = vunpack.c.l.b16 %v1729
      %v2770 = vunpack.c.l.b16 %v1730
      %v2771 = vunpack.c.l.b16 %v1731
      %v2772 = vunpack.c.l.b16 %v1732
      %v2773 = vunpack.c.l.b16 %v1733
      %v2774 = vunpack.c.l.b16 %v1734
      %v2775 = vunpack.c.l.b16 %v1735
      %v2776 = vunpack.c.l.b16 %v1736
      %v2777 = vunpack.c.l.b16 %v1737
      %v2778 = vunpack.c.l.b16 %v1738
      %v2779 = vunpack.c.l.b16 %v1739
      %v2780 = vunpack.c.l.b16 %v1740
      %v2781 = vunpack.c.l.b16 %v1741
      %v2782 = vunpack.c.l.b16 %v1742
      %v2783 = vunpack.c.l.b16 %v1743
      %v2784 = vunpack.c.l.b16 %v1744
      %v2785 = vunpack.c.l.b16 %v1745
      %v2786 = vunpack.c.l.b16 %v1746
      %v2787 = vunpack.c.l.b16 %v1747
      %v2788 = vunpack.c.l.b16 %v1748
      %v2789 = vunpack.c.l.b16 %v1749
      %v2790 = vunpack.c.l.b16 %v1750
      %v2791 = vunpack.c.l.b16 %v1751
      %v2792 = vunpack.c.l.b16 %v1752
      %v2793 = vunpack.c.l.b16 %v1753
      %v2794 = vunpack.c.l.b16 %v1754
      %v2795 = vunpack.c.l.b16 %v1755
      %v2796 = vunpack.c.l.b16 %v1756
      %v2797 = vunpack.c.l.b16 %v1757
      %v2798 = vunpack.c.l.b16 %v1758
      %v2799 = vunpack.c.l.b16 %v1759
      %v2800 = vunpack.c.l.b16 %v1760
      %v2801 = vunpack.c.l.b16 %v1761
      %v2802 = vunpack.c.l.b16 %v1762
      %v2803 = vunpack.c.l.b16 %v1763
      %v2804 = vunpack.c.l.b16 %v1764
      %v2805 = vunpack.c.l.b16 %v1765
      %v2806 = vunpack.c.l.b16 %v1766
      %v2807 = vunpack.c.l.b16 %v1767
      %v2808 = vunpack.c.l.b16 %v1768
      %v2809 = vunpack.c.l.b16 %v1769
      %v2810 = vunpack.c.l.b16 %v1770
      %v2811 = vunpack.c.l.b16 %v1771
      %v2812 = vunpack.c.l.b16 %v1772
      %v2813 = vunpack.c.l.b16 %v1773
      %v2814 = vunpack.c.l.b16 %v1774
      %v2815 = vunpack.c.l.b16 %v1775
      %v2816 = vunpack.c.l.b16 %v1776
      %v2817 = vunpack.c.l.b16 %v1777
      %v2818 = vunpack.c.l.b16 %v1778
      %v2819 = vunpack.c.l.b16 %v1779
      %v2820 = vunpack.c.l.b16 %v1780
      %v2821 = vunpack.c.l.b16 %v1781
      %v2822 = vunpack.c.l.b16 %v1782
      %v2823 = vunpack.c.l.b16 %v1783
      %v2824 = vpack.c.b16 %v2761, %v2760
      %v2825 = vpack.c.b16 %v2763, %v2762
      %v2826 = vpack.c.b16 %v2765, %v2764
      %v2827 = vpack.c.b16 %v2767, %v2766
      %v2828 = vpack.c.b16 %v2769, %v2768
      %v2829 = vpack.c.b16 %v2771, %v2770
      %v2830 = vpack.c.b16 %v2773, %v2772
      %v2831 = vpack.c.b16 %v2775, %v2774
      %v2832 = vpack.c.b16 %v2777, %v2776
      %v2833 = vpack.c.b16 %v2779, %v2778
      %v2834 = vpack.c.b16 %v2781, %v2780
      %v2835 = vpack.c.b16 %v2783, %v2782
      %v2836 = vpack.c.b16 %v2785, %v2784
      %v2837 = vpack.c.b16 %v2787, %v2786
      %v2838 = vpack.c.b16 %v2789, %v2788
      %v2839 = vpack.c.b16 %v2791, %v2790
      %v2840 = vpack.c.b16 %v2793, %v2792
      %v2841 = vpack.c.b16 %v2795, %v2794
      %v2842 = vpack.c.b16 %v2797, %v2796
      %v2843 = vpack.c.b16 %v2799, %v2798
      %v2844 = vpack.c.b16 %v2801, %v2800
      %v2845 = vpack.c.b16 %v2803, %v2802
      %v2846 = vpack.c.b16 %v2805, %v2804
      %v2847 = vpack.c.b16 %v2807, %v2806
      %v2848 = vpack.c.b16 %v2809, %v2808
      %v2849 = vpack.c.b16 %v2811, %v2810
      %v2850 = vpack.c.b16 %v2813, %v2812
      %v2851 = vpack.c.b16 %v2815, %v2814
      %v2852 = vpack.c.b16 %v2817, %v2816
      %v2853 = vpack.c.b16 %v2819, %v2818
      %v2854 = vpack.c.b16 %v2821, %v2820
      %v2855 = vpack.c.b16 %v2823, %v2822
      %2888 = vmatprep.subr.bf16.mxu0 0
      %2889 = vmatpush1.bf16.msra.mxu0 %v2824
      %2890 = vmatprep.subr.bf16.mxu0 0
      %2891 = vmatpush1.bf16.msra.mxu0 %v2825
      %2892 = vmatprep.subr.bf16.mxu0 0
      %2893 = vmatpush1.bf16.msra.mxu0 %v2826
      %2894 = vmatprep.subr.bf16.mxu0 0
      %2895 = vmatpush1.bf16.msra.mxu0 %v2827
      %2896 = vmatprep.subr.bf16.mxu0 0
      %2897 = vmatpush1.bf16.msra.mxu0 %v2828
      %2898 = vmatprep.subr.bf16.mxu0 0
      %2899 = vmatpush1.bf16.msra.mxu0 %v2829
      %2900 = vmatprep.subr.bf16.mxu0 0
      %2901 = vmatpush1.bf16.msra.mxu0 %v2830
      %2902 = vmatprep.subr.bf16.mxu0 0
      %2903 = vmatpush1.bf16.msra.mxu0 %v2831
      %2904 = vmatprep.subr.bf16.mxu0 0
      %2905 = vmatpush1.bf16.msra.mxu0 %v2832
      %2906 = vmatprep.subr.bf16.mxu0 0
      %2907 = vmatpush1.bf16.msra.mxu0 %v2833
      %2908 = vmatprep.subr.bf16.mxu0 0
      %2909 = vmatpush1.bf16.msra.mxu0 %v2834
      %2910 = vmatprep.subr.bf16.mxu0 0
      %2911 = vmatpush1.bf16.msra.mxu0 %v2835
      %2912 = vmatprep.subr.bf16.mxu0 0
      %2913 = vmatpush1.bf16.msra.mxu0 %v2836
      %2914 = vmatprep.subr.bf16.mxu0 0
      %2915 = vmatpush1.bf16.msra.mxu0 %v2837
      %2916 = vmatprep.subr.bf16.mxu0 0
      %2917 = vmatpush1.bf16.msra.mxu0 %v2838
      %2918 = vmatprep.subr.bf16.mxu0 0
      %2919 = vmatpush1.bf16.msra.mxu0 %v2839
      %2920 = vmatprep.mubr.bf16.mxu0 %v1705
      %2921 = vmatmul.mubr.bf16.gmra.mrb[0].mxu0 %v1704
      %v2922 = vpop.f32.mrb[0].mxu0
      %v2923 = vadd.f32 %v2666, %v2922
      %v2924 = vpop.f32.mrb[0].mxu0
      %v2925 = vpop.f32.mrb[0].mxu0
      %v2926 = vadd.f32 %v2669, %v2925
      %v2927 = vpop.f32.mrb[0].mxu0
      %2928 = vmatprep.mubr.bf16.mxu0 %v1709
      %2929 = vmatmul.mubr.bf16.gmra.mrb[0].mxu0 %v1708
      %v2930 = vpop.f32.mrb[0].mxu0
      %v2931 = vadd.f32 %v2674, %v2930
      %v2932 = vpop.f32.mrb[0].mxu0
      %v2933 = vpop.f32.mrb[0].mxu0
      %v2934 = vadd.f32 %v2677, %v2933
      %v2935 = vpop.f32.mrb[0].mxu0
      %2936 = vmatprep.mubr.bf16.mxu0 %v1713
      %2937 = vmatmul.mubr.bf16.gmra.mrb[0].mxu0 %v1712
      %v2938 = vpop.f32.mrb[0].mxu0
      %v2939 = vadd.f32 %v2682, %v2938
      %v2940 = vpop.f32.mrb[0].mxu0
      %v2941 = vpop.f32.mrb[0].mxu0
      %v2942 = vadd.f32 %v2685, %v2941
      %v2943 = vpop.f32.mrb[0].mxu0
      %2944 = vmatprep.mubr.bf16.mxu0 %v1717
      %2945 = vmatmul.mubr.bf16.gmra.mrb[0].mxu0 %v1716
      %v2946 = vpop.f32.mrb[0].mxu0
      %v2947 = vadd.f32 %v2690, %v2946
      %v2948 = vpop.f32.mrb[0].mxu0
      %v2949 = vpop.f32.mrb[0].mxu0
      %v2950 = vadd.f32 %v2693, %v2949
      %v2951 = vpop.f32.mrb[0].mxu0
      %2952 = vdwg.mxu0
      %2953 = vmatprep.subr.bf16.mxu0 0
      %2954 = vmatpush1.bf16.msra.mxu0 %v2840
      %2955 = vmatprep.subr.bf16.mxu0 0
      %2956 = vmatpush1.bf16.msra.mxu0 %v2841
      %2957 = vmatprep.subr.bf16.mxu0 0
      %2958 = vmatpush1.bf16.msra.mxu0 %v2842
      %2959 = vmatprep.subr.bf16.mxu0 0
      %2960 = vmatpush1.bf16.msra.mxu0 %v2843
      %2961 = vmatprep.subr.bf16.mxu0 0
      %2962 = vmatpush1.bf16.msra.mxu0 %v2844
      %2963 = vmatprep.subr.bf16.mxu0 0
      %2964 = vmatpush1.bf16.msra.mxu0 %v2845
      %2965 = vmatprep.subr.bf16.mxu0 0
      %2966 = vmatpush1.bf16.msra.mxu0 %v2846
      %2967 = vmatprep.subr.bf16.mxu0 0
      %2968 = vmatpush1.bf16.msra.mxu0 %v2847
      %2969 = vmatprep.subr.bf16.mxu0 0
      %2970 = vmatpush1.bf16.msra.mxu0 %v2848
      %2971 = vmatprep.subr.bf16.mxu0 0
      %2972 = vmatpush1.bf16.msra.mxu0 %v2849
      %2973 = vmatprep.subr.bf16.mxu0 0
      %2974 = vmatpush1.bf16.msra.mxu0 %v2850
      %2975 = vmatprep.subr.bf16.mxu0 0
      %2976 = vmatpush1.bf16.msra.mxu0 %v2851
      %2977 = vmatprep.subr.bf16.mxu0 0
      %2978 = vmatpush1.bf16.msra.mxu0 %v2852
      %2979 = vmatprep.subr.bf16.mxu0 0
      %2980 = vmatpush1.bf16.msra.mxu0 %v2853
      %2981 = vmatprep.subr.bf16.mxu0 0
      %2982 = vmatpush1.bf16.msra.mxu0 %v2854
      %2983 = vmatprep.subr.bf16.mxu0 0
      %2984 = vmatpush1.bf16.msra.mxu0 %v2855
      %2985 = vmatprep.mubr.bf16.mxu0 %v1707
      %2986 = vmatmul.mubr.bf16.gmra.mrb[0].mxu0 %v1706
      %v2987 = vpop.f32.mrb[0].mxu0
      %v2988 = vadd.f32 %v2923, %v2987
      %v2989 = vpop.f32.mrb[0].mxu0
      %v2990 = vpop.f32.mrb[0].mxu0
      %v2991 = vadd.f32 %v2926, %v2990
      %v2992 = vpop.f32.mrb[0].mxu0
      %2993 = vmatprep.mubr.bf16.mxu0 %v1711
      %2994 = vmatmul.mubr.bf16.gmra.mrb[0].mxu0 %v1710
      %v2995 = vpop.f32.mrb[0].mxu0
      %v2996 = vadd.f32 %v2931, %v2995
      %v2997 = vpop.f32.mrb[0].mxu0
      %v2998 = vpop.f32.mrb[0].mxu0
      %v2999 = vadd.f32 %v2934, %v2998
      %v3000 = vpop.f32.mrb[0].mxu0
      %3001 = vmatprep.mubr.bf16.mxu0 %v1715
      %3002 = vmatmul.mubr.bf16.gmra.mrb[0].mxu0 %v1714
      %v3003 = vpop.f32.mrb[0].mxu0
      %v3004 = vadd.f32 %v2939, %v3003
      %v3005 = vpop.f32.mrb[0].mxu0
      %v3006 = vpop.f32.mrb[0].mxu0
      %v3007 = vadd.f32 %v2942, %v3006
      %v3008 = vpop.f32.mrb[0].mxu0
      %3009 = vmatprep.mubr.bf16.mxu0 %v1719
      %3010 = vmatmul.mubr.bf16.gmra.mrb[0].mxu0 %v1718
      %v3011 = vpop.f32.mrb[0].mxu0
      %v3012 = vadd.f32 %v2947, %v3011
      %v3013 = vpop.f32.mrb[0].mxu0
      %v3014 = vpop.f32.mrb[0].mxu0
      %v3015 = vadd.f32 %v2950, %v3014
      %v3016 = vpop.f32.mrb[0].mxu0
      %3017 = vdwg.mxu0
      %v3018 = vld [vmem:[%s10] sm:$0x1]
      %v3020 = vlaneseq
      %v3021 = vshrl.u32 %v3020, 7
      %v3022 = vsub.s32 0, %v3021
      %v3023 = vrot.slane %v3018, %v3022
      %v3025 = vadd.f32 %v2988, %v3023
      %v3026 = vadd.f32 %v2991, %v3023
      %v3027 = vadd.f32 %v2996, %v3023
      %v3028 = vadd.f32 %v2999, %v3023
      %v3029 = vadd.f32 %v3004, %v3023
      %v3030 = vadd.f32 %v3007, %v3023
      %v3031 = vadd.f32 %v3012, %v3023
      %v3032 = vadd.f32 %v3015, %v3023
      %vm3033 = vcmask 523264
      %3034 = vst.msk [vmem:[%s406] sm:$0xff] %vm3033, %v3025
      %3035 = vst.msk [vmem:[%s406 + $0x8] sm:$0xff] %vm3033, %v3026
      %3036 = vst.msk [vmem:[%s406 + $0x10] sm:$0xff] %vm3033, %v3027
      %3037 = vst.msk [vmem:[%s406 + $0x18] sm:$0xff] %vm3033, %v3028
      %3038 = vst.msk [vmem:[%s406 + $0x20] sm:$0xff] %vm3033, %v3029
      %3039 = vst.msk [vmem:[%s406 + $0x28] sm:$0xff] %vm3033, %v3030
      %3040 = vst.msk [vmem:[%s406 + $0x30] sm:$0xff] %vm3033, %v3031
      %3041 = vst.msk [vmem:[%s406 + $0x38] sm:$0xff] %vm3033, %v3032
      %p3042 = scmp.lt.s32.totalorder %s22, 1
      %s3043 = scalar_select %p3042, %s22, 1
      %s3044 = smul.addr %s3043, 8
      %s3045 = smul.addr %s3044, 8
      %s3046 = scalar_lea.vmem %s11, %s3045
      // Predicated region
      $region65: #{point_pillar_forward.7} parent=63 // pred_check
        %p3047 = pneg %p281
      $region66: #{point_pillar_forward.7} parent=63 // pred_check_branch
        %3049 = sbr.rel (%p3047) target = $region68
      $region67: #{point_pillar_forward.7} parent=63 // pred_region
        _
      $region68: #{point_pillar_forward.7} parent=63 // pred_fallthru
        _
    $region64: #{point_pillar_forward.7} parent=5 // pred_fallthru
      _
    %p3050 = scmp.le.s32.totalorder 2, %s17
    // Predicated region
    $region69: #{point_pillar_forward.7} parent=5 // pred_check
      %p3051 = pneg %p3050
    $region70: #{point_pillar_forward.7} parent=5 // pred_check_branch
      %3053 = sbr.rel (%p3051) target = $region72
    $region71: #{point_pillar_forward.7} parent=5 // pred_region
      %s3054 = ssub.s32 %s17, 2
      // Predicated region
      $region73: #{point_pillar_forward.7} parent=71 // pred_check
        %p3055 = pneg %p287
      $region74: #{point_pillar_forward.7} parent=71 // pred_check_branch
        %3057 = sbr.rel (%p3055) target = $region76
      $region75: #{point_pillar_forward.7} parent=71 // pred_region
        %p3058 = scmp.lt.s32.totalorder %s23, 1
        %s3059 = scalar_select %p3058, %s23, 1
        %s3060 = smul.addr %s3059, 8
        %s3061 = smul.addr %s3060, 8
        %s3062 = scalar_lea.vmem %s11, %s3061
      $region76: #{point_pillar_forward.7} parent=71 // pred_fallthru
        _
    $region72: #{point_pillar_forward.7} parent=5 // pred_fallthru
      _
  $region6: #{point_pillar_forward.7} parent=0 // loop_footer
    %s21 = sadd.s32 1, %s17
  $region7: #{point_pillar_forward.7} parent=0 // loop_footer_branch
    %16 = sbr.rel target = $region3
  $region8: #{point_pillar_forward.7} parent=0 // loop_exit
    _

</llo_original>
